<compile_context>
chip_gen: v7x
topology: tpu7x:2x2x1
jax: 0.10.0
libtpu: 0.0.40
codegen_flags: <defaults>
</compile_context>

<pallas_src>
import functools

import jax
import jax.numpy as jnp
from jax.experimental import pallas as pl
from jax.experimental.pallas import tpu as pltpu

DIM = 256  # hardcoded `dim = 256` in the PyTorch module


def _leaky_relu(x, neg_slope):
    return jnp.where(x >= 0, x, neg_slope * x)


def _disc_kernel(acts2_ref, x0_ref, x1_ref,
                 w_emb_ref, b_emb_ref,
                 w_conv_ref, b_conv_ref,
                 w1_ref, b1_ref, w2_ref, b2_ref,
                 w_rec_ref, b_rec_ref,
                 out_ref,
                 *, neg_slope, action_space, z_dim, x0_cols, batch, slab):
    # transit_vecs = Reshape(LeakyReLU(conv(cat(x_t0, x_t1)))).  Conv output is
    # 1x1 spatially -> one matmul; the channel-concat is avoided by splitting
    # the (channel-major flattened) conv weight rows between x_t0 / x_t1.
    t = (jnp.dot(x0_ref[...], w_conv_ref[:x0_cols, :],
                 preferred_element_type=jnp.float32)
         + jnp.dot(x1_ref[...], w_conv_ref[x0_cols:, :],
                   preferred_element_type=jnp.float32)
         + b_conv_ref[...])
    t = _leaky_relu(t, neg_slope)               # (B, 256), f32
    t_bf = t.astype(jnp.bfloat16)

    # action embeddings: positive and negative actions are stacked to (2B, A)
    # in the wrapper so the shared Linear runs once.
    ae2 = jnp.dot(acts2_ref[...], w_emb_ref[...],
                  preferred_element_type=jnp.float32) + b_emb_ref[...]  # (2B, 256)

    # last_linear_given_act(cat([emb, t], dim=1)):
    #   Linear(512,512) -> LeakyReLU -> Linear(512,1)
    # The concat is avoided by splitting W1 into emb-rows / transit-rows.  The
    # transit contribution (+ b1) is computed once and reused for both heads.
    tb = jnp.dot(t_bf, w1_ref[DIM:, :],
                 preferred_element_type=jnp.float32) + b1_ref[...]      # (B, 512)
    tb2 = jnp.concatenate([tb, tb], axis=0)                             # (2B, 512)
    h = jnp.dot(ae2.astype(jnp.bfloat16), w1_ref[:DIM, :],
                preferred_element_type=jnp.float32) + tb2
    h = _leaky_relu(h, neg_slope)
    preds2 = jnp.dot(h.astype(jnp.bfloat16), w2_ref[...],
                     preferred_element_type=jnp.float32) + b2_ref[...]  # (2B, 1)

    # reconstruct_action_z(transit_vecs) -> (B, A+Z); split happens in wrapper.
    rec = jnp.dot(t_bf, w_rec_ref[...],
                  preferred_element_type=jnp.float32) + b_rec_ref[...]

    # Pack everything into one lane-dense (B, slab) output:
    #   [act_preds | neg_act_preds | act_z_recon | zero padding]
    act_preds = preds2[:batch, :]
    neg_preds = preds2[batch:, :]
    parts = [act_preds, neg_preds, rec]
    pad = slab - (2 + action_space + z_dim)
    if pad > 0:
        parts.append(jnp.zeros((batch, pad), jnp.float32))
    out_ref[...] = jnp.concatenate(parts, axis=-1)


def _linear_init(key, out_f, in_f):
    k1, k2 = jax.random.split(key)
    bound = 1.0 / float(in_f) ** 0.5
    w = jax.random.uniform(k1, (out_f, in_f), jnp.float32, -bound, bound)
    b = jax.random.uniform(k2, (out_f,), jnp.float32, -bound, bound)
    return w, b


def _conv_init(key, out_c, in_c, kh, kw):
    k1, k2 = jax.random.split(key)
    fan_in = in_c * kh * kw
    bound = 1.0 / float(fan_in) ** 0.5
    w = jax.random.uniform(k1, (out_c, in_c, kh, kw), jnp.float32, -bound, bound)
    b = jax.random.uniform(k2, (out_c,), jnp.float32, -bound, bound)
    return w, b


def _spectral_normalize(w2d, key, n_iters=30):
    # Eval-time semantics of torch.nn.utils.spectral_norm: divide the weight
    # (viewed as (out, -1)) by its top singular value (power iteration).
    u = jax.random.normal(key, (w2d.shape[0],), jnp.float32)
    u = u / (jnp.linalg.norm(u) + 1e-12)
    v = jnp.zeros((w2d.shape[1],), jnp.float32)
    for _ in range(n_iters):
        v = w2d.T @ u
        v = v / (jnp.linalg.norm(v) + 1e-12)
        u = w2d @ v
        u = u / (jnp.linalg.norm(u) + 1e-12)
    sigma = u @ (w2d @ v)
    return w2d / sigma


class PallasActionConditionedDiscriminator:
    def __init__(self, action_space, img_size, hidden_dim, neg_slope, z_dim, key):
        self.action_space = action_space
        self.z_dim = z_dim
        self.hidden_dim = hidden_dim
        self.neg_slope = float(neg_slope)
        # The PyTorch forward only type-checks when hidden_dim == 2*dim
        # (Linear(hidden_dim,.) is applied to cat([act_emb(dim), transit(dim)])).
        assert hidden_dim == 2 * DIM, "forward requires hidden_dim == 512"

        if img_size[0] == 48 and img_size[1] == 80:
            self.kernel_size = (3, 5)
        else:
            self.kernel_size = (4, 4)
        kh, kw = self.kernel_size

        ks = jax.random.split(key, 9)
        # nn.Linear(action_space, dim)
        w_emb, b_emb = _linear_init(ks[0], DIM, action_space)
        # SN(nn.Conv2d(hidden_dim, dim, kernel_size, padding=0))
        w_conv, b_conv = _conv_init(ks[1], DIM, hidden_dim, kh, kw)
        w_conv2d = _spectral_normalize(w_conv.reshape(DIM, -1), ks[2])
        # SN(nn.Linear(hidden_dim, hidden_dim)), SN(nn.Linear(hidden_dim, 1))
        w1, b1 = _linear_init(ks[3], hidden_dim, hidden_dim)
        w1 = _spectral_normalize(w1, ks[4])
        w2, b2 = _linear_init(ks[5], 1, hidden_dim)
        w2 = _spectral_normalize(w2, ks[6])
        # nn.Linear(dim, action_space + z_dim)
        w_rec, b_rec = _linear_init(ks[7], action_space + z_dim, DIM)

        # Pre-transpose everything to (in, out) for x @ W inside the kernel.
        # Weights are streamed in bf16 (halves the dominant w_conv DMA);
        # biases stay f32 (elementwise math stays f32 on all generations).
        self.params = (
            jnp.asarray(w_emb.T, jnp.bfloat16),        # (A, 256)
            b_emb.reshape(1, DIM),
            jnp.asarray(w_conv2d.T, jnp.bfloat16),     # (hidden_dim*kh*kw, 256)
            b_conv.reshape(1, DIM),
            jnp.asarray(w1.T, jnp.bfloat16),           # (512, 512)
            b1.reshape(1, hidden_dim),
            jnp.asarray(w2.T, jnp.bfloat16),           # (512, 1)
            b2.reshape(1, 1),
            jnp.asarray(w_rec.T, jnp.bfloat16),        # (256, A+Z)
            b_rec.reshape(1, action_space + z_dim),
        )

    def __call__(self, actions, x_t0_fmaps, x_t1_fmaps, neg_actions):
        act = jnp.concatenate(list(actions), axis=0)
        has_neg = neg_actions is not None
        neg = jnp.concatenate(list(neg_actions), axis=0) if has_neg else act
        # Stack positive / negative actions so the shared head runs once.
        acts2 = jnp.concatenate([act, neg], axis=0).astype(jnp.bfloat16)

        B, C0, H, W = x_t0_fmaps.shape
        _, C1, _, _ = x_t1_fmaps.shape
        kh, kw = self.kernel_size
        assert C0 + C1 == self.hidden_dim
        # TODO(synk): general Reshape((-1, dim)) over a >1x1 conv output (raw
        # NCHW memory reshape) not implemented; assumes fmap spatial == kernel.
        assert (H, W) == (kh, kw), "fmap spatial must equal conv kernel size"
        # Channel-major flatten of each half; the conv weight rows are split at
        # x0_cols inside the kernel, so the channel-concat never materializes.
        x0_flat = x_t0_fmaps.reshape(B, C0 * H * W).astype(jnp.bfloat16)
        x1_flat = x_t1_fmaps.reshape(B, C1 * H * W).astype(jnp.bfloat16)
        x0_cols = C0 * H * W

        A, Z = self.action_space, self.z_dim
        slab = max(128, pl.cdiv(2 + A + Z, 128) * 128)  # lane-dense output width

        vmem = pl.BlockSpec(memory_space=pltpu.MemorySpace.VMEM)
        kern = functools.partial(_disc_kernel,
                                 neg_slope=self.neg_slope,
                                 action_space=A, z_dim=Z,
                                 x0_cols=x0_cols, batch=B, slab=slab)
        # TODO(synk): for large batches add a 1-D grid over B with
        # dimension_semantics=("parallel",) to use both v7x TensorCores;
        # at B=2 a single invocation is optimal.
        packed = pl.pallas_call(
            kern,
            out_shape=jax.ShapeDtypeStruct((B, slab), jnp.float32),
            in_specs=[vmem] * 13,
            out_specs=vmem,
            compiler_params=pltpu.CompilerParams(vmem_limit_bytes=24 << 20),
        )(acts2, x0_flat, x1_flat, *self.params)

        # Free XLA slices: unpack the lane-dense slab.
        act_preds = packed[:, 0:1]
        neg_act_preds = packed[:, 1:2] if has_neg else None
        act_recon = packed[:, 2:2 + A]
        z_recon = packed[:, 2 + A:2 + A + Z]
        return act_preds, neg_act_preds, act_recon, z_recon


if __name__ == "__main__":
    action_space = 8
    z_dim = 8
    hidden_dim = 512          # forced by dim=256 hardcoded in the module
    img_size = (64, 64)       # not (48, 80) -> kernel_size = 4
    neg_slope = 0.2
    B = 2

    root = jax.random.PRNGKey(0)
    k_model, k_a, k_na, k_x0, k_x1 = jax.random.split(root, 5)

    model = PallasActionConditionedDiscriminator(
        action_space, img_size, hidden_dim, neg_slope, z_dim, k_model)

    actions = [jax.random.normal(k_a, (B, action_space), jnp.float32)]
    neg_actions = [jax.random.normal(k_na, (B, action_space), jnp.float32)]
    # cat([x_t0, x_t1], dim=1) must have hidden_dim channels -> 256 each.
    x_t0 = jax.random.normal(k_x0, (B, hidden_dim // 2, 4, 4), jnp.float32)
    x_t1 = jax.random.normal(k_x1, (B, hidden_dim // 2, 4, 4), jnp.float32)

    out = model(actions, x_t0, x_t1, neg_actions)
    jax.block_until_ready(out)
    act_preds, neg_act_preds, act_recon, z_recon = out
    assert act_preds.shape == (B, 1)
    assert neg_act_preds.shape == (B, 1)
    assert act_recon.shape == (B, action_space)
    assert z_recon.shape == (B, z_dim)
    print("KERNEL_OK")
</pallas_src>

<mosaic_0001>
module attributes {stable_mosaic.version = 11 : i64} {
  func.func @_disc_kernel(%arg0: memref<4x8xbf16, #tpu.memory_space<vmem>>, %arg1: memref<2x4096xbf16, #tpu.memory_space<vmem>>, %arg2: memref<2x4096xbf16, #tpu.memory_space<vmem>>, %arg3: memref<8x256xbf16, #tpu.memory_space<vmem>>, %arg4: memref<1x256xf32, #tpu.memory_space<vmem>>, %arg5: memref<8192x256xbf16, #tpu.memory_space<vmem>>, %arg6: memref<1x256xf32, #tpu.memory_space<vmem>>, %arg7: memref<512x512xbf16, #tpu.memory_space<vmem>>, %arg8: memref<1x512xf32, #tpu.memory_space<vmem>>, %arg9: memref<512x1xbf16, #tpu.memory_space<vmem>>, %arg10: memref<1x1xf32, #tpu.memory_space<vmem>>, %arg11: memref<256x16xbf16, #tpu.memory_space<vmem>>, %arg12: memref<1x16xf32, #tpu.memory_space<vmem>>, %arg13: memref<2x128xf32, #tpu.memory_space<vmem>>) attributes {dimension_semantics = [], scalar_prefetch = 0 : i64, scratch_operands = 0 : i64, tpu.core_type = #tpu.core_type<tc>} {
    %c0 = arith.constant 0 : index
    %c0_0 = arith.constant 0 : index
    %0 = vector.load %arg1[%c0, %c0_0] : memref<2x4096xbf16, #tpu.memory_space<vmem>>, vector<2x4096xbf16>
    %c0_1 = arith.constant 0 : index
    %c0_2 = arith.constant 0 : index
    %1 = vector.load %arg5[%c0_1, %c0_2] : memref<8192x256xbf16, #tpu.memory_space<vmem>>, vector<4096x256xbf16>
    %cst = arith.constant dense<0.000000e+00> : vector<2x256xf32>
    %2 = tpu.matmul %0, %1, %cst {dimension_numbers = #tpu.dot_dimension_numbers<[1], [0], [0], [1], [0, 0, 1, 1], [], []>} : vector<2x4096xbf16>, vector<4096x256xbf16>, vector<2x256xf32> -> vector<2x256xf32>
    %c0_3 = arith.constant 0 : index
    %c0_4 = arith.constant 0 : index
    %3 = vector.load %arg2[%c0_3, %c0_4] : memref<2x4096xbf16, #tpu.memory_space<vmem>>, vector<2x4096xbf16>
    %c4096 = arith.constant 4096 : index
    %c0_5 = arith.constant 0 : index
    %4 = vector.load %arg5[%c4096, %c0_5] : memref<8192x256xbf16, #tpu.memory_space<vmem>>, vector<4096x256xbf16>
    %cst_6 = arith.constant dense<0.000000e+00> : vector<2x256xf32>
    %5 = tpu.matmul %3, %4, %cst_6 {dimension_numbers = #tpu.dot_dimension_numbers<[1], [0], [0], [1], [0, 0, 1, 1], [], []>} : vector<2x4096xbf16>, vector<4096x256xbf16>, vector<2x256xf32> -> vector<2x256xf32>
    %6 = arith.addf %2, %5 : vector<2x256xf32>
    %c0_7 = arith.constant 0 : index
    %c0_8 = arith.constant 0 : index
    %7 = vector.load %arg6[%c0_7, %c0_8] : memref<1x256xf32, #tpu.memory_space<vmem>>, vector<1x256xf32>
    %8 = vector.broadcast %7 : vector<1x256xf32> to vector<2x256xf32>
    %9 = arith.addf %6, %8 : vector<2x256xf32>
    %cst_9 = arith.constant 0.000000e+00 : f32
    %10 = vector.broadcast %cst_9 : f32 to vector<2x256xf32>
    %11 = arith.cmpf oge, %9, %10 : vector<2x256xf32>
    %cst_10 = arith.constant 2.000000e-01 : f32
    %12 = vector.broadcast %cst_10 : f32 to vector<2x256xf32>
    %13 = arith.mulf %12, %9 : vector<2x256xf32>
    %14 = arith.select %11, %9, %13 : vector<2x256xi1>, vector<2x256xf32>
    %15 = arith.truncf %14 : vector<2x256xf32> to vector<2x256xbf16>
    %c0_11 = arith.constant 0 : index
    %c0_12 = arith.constant 0 : index
    %16 = vector.load %arg0[%c0_11, %c0_12] : memref<4x8xbf16, #tpu.memory_space<vmem>>, vector<4x8xbf16>
    %c0_13 = arith.constant 0 : index
    %c0_14 = arith.constant 0 : index
    %17 = vector.load %arg3[%c0_13, %c0_14] : memref<8x256xbf16, #tpu.memory_space<vmem>>, vector<8x256xbf16>
    %cst_15 = arith.constant dense<0.000000e+00> : vector<4x256xf32>
    %18 = tpu.matmul %16, %17, %cst_15 {dimension_numbers = #tpu.dot_dimension_numbers<[1], [0], [0], [1], [0, 0, 1, 1], [], []>} : vector<4x8xbf16>, vector<8x256xbf16>, vector<4x256xf32> -> vector<4x256xf32>
    %c0_16 = arith.constant 0 : index
    %c0_17 = arith.constant 0 : index
    %19 = vector.load %arg4[%c0_16, %c0_17] : memref<1x256xf32, #tpu.memory_space<vmem>>, vector<1x256xf32>
    %20 = vector.broadcast %19 : vector<1x256xf32> to vector<4x256xf32>
    %21 = arith.addf %18, %20 : vector<4x256xf32>
    %c256 = arith.constant 256 : index
    %c0_18 = arith.constant 0 : index
    %22 = vector.load %arg7[%c256, %c0_18] : memref<512x512xbf16, #tpu.memory_space<vmem>>, vector<256x512xbf16>
    %cst_19 = arith.constant dense<0.000000e+00> : vector<2x512xf32>
    %23 = tpu.matmul %15, %22, %cst_19 {dimension_numbers = #tpu.dot_dimension_numbers<[1], [0], [0], [1], [0, 0, 1, 1], [], []>} : vector<2x256xbf16>, vector<256x512xbf16>, vector<2x512xf32> -> vector<2x512xf32>
    %c0_20 = arith.constant 0 : index
    %c0_21 = arith.constant 0 : index
    %24 = vector.load %arg8[%c0_20, %c0_21] : memref<1x512xf32, #tpu.memory_space<vmem>>, vector<1x512xf32>
    %25 = vector.broadcast %24 : vector<1x512xf32> to vector<2x512xf32>
    %26 = arith.addf %23, %25 : vector<2x512xf32>
    %27 = tpu.concatenate %26, %26 in 0 : vector<2x512xf32>, vector<2x512xf32> -> vector<4x512xf32>
    %28 = arith.truncf %21 : vector<4x256xf32> to vector<4x256xbf16>
    %c0_22 = arith.constant 0 : index
    %c0_23 = arith.constant 0 : index
    %29 = vector.load %arg7[%c0_22, %c0_23] : memref<512x512xbf16, #tpu.memory_space<vmem>>, vector<256x512xbf16>
    %cst_24 = arith.constant dense<0.000000e+00> : vector<4x512xf32>
    %30 = tpu.matmul %28, %29, %cst_24 {dimension_numbers = #tpu.dot_dimension_numbers<[1], [0], [0], [1], [0, 0, 1, 1], [], []>} : vector<4x256xbf16>, vector<256x512xbf16>, vector<4x512xf32> -> vector<4x512xf32>
    %31 = arith.addf %30, %27 : vector<4x512xf32>
    %cst_25 = arith.constant 0.000000e+00 : f32
    %32 = vector.broadcast %cst_25 : f32 to vector<4x512xf32>
    %33 = arith.cmpf oge, %31, %32 : vector<4x512xf32>
    %cst_26 = arith.constant 2.000000e-01 : f32
    %34 = vector.broadcast %cst_26 : f32 to vector<4x512xf32>
    %35 = arith.mulf %34, %31 : vector<4x512xf32>
    %36 = arith.select %33, %31, %35 : vector<4x512xi1>, vector<4x512xf32>
    %37 = arith.truncf %36 : vector<4x512xf32> to vector<4x512xbf16>
    %c0_27 = arith.constant 0 : index
    %c0_28 = arith.constant 0 : index
    %38 = vector.load %arg9[%c0_27, %c0_28] : memref<512x1xbf16, #tpu.memory_space<vmem>>, vector<512x1xbf16>
    %cst_29 = arith.constant dense<0.000000e+00> : vector<4x1xf32>
    %39 = tpu.matmul %37, %38, %cst_29 {dimension_numbers = #tpu.dot_dimension_numbers<[1], [0], [0], [1], [0, 0, 1, 1], [], []>} : vector<4x512xbf16>, vector<512x1xbf16>, vector<4x1xf32> -> vector<4x1xf32>
    %c0_30 = arith.constant 0 : index
    %c0_31 = arith.constant 0 : index
    %40 = vector.load %arg10[%c0_30, %c0_31] : memref<1x1xf32, #tpu.memory_space<vmem>>, vector<1x1xf32>
    %41 = vector.broadcast %40 : vector<1x1xf32> to vector<4x1xf32>
    %42 = arith.addf %39, %41 : vector<4x1xf32>
    %c0_32 = arith.constant 0 : index
    %c0_33 = arith.constant 0 : index
    %43 = vector.load %arg11[%c0_32, %c0_33] : memref<256x16xbf16, #tpu.memory_space<vmem>>, vector<256x16xbf16>
    %cst_34 = arith.constant dense<0.000000e+00> : vector<2x16xf32>
    %44 = tpu.matmul %15, %43, %cst_34 {dimension_numbers = #tpu.dot_dimension_numbers<[1], [0], [0], [1], [0, 0, 1, 1], [], []>} : vector<2x256xbf16>, vector<256x16xbf16>, vector<2x16xf32> -> vector<2x16xf32>
    %c0_35 = arith.constant 0 : index
    %c0_36 = arith.constant 0 : index
    %45 = vector.load %arg12[%c0_35, %c0_36] : memref<1x16xf32, #tpu.memory_space<vmem>>, vector<1x16xf32>
    %46 = vector.broadcast %45 : vector<1x16xf32> to vector<2x16xf32>
    %47 = arith.addf %44, %46 : vector<2x16xf32>
    %48 = vector.extract_strided_slice %42 {offsets = [0, 0], sizes = [2, 1], strides = [1, 1]} : vector<4x1xf32> to vector<2x1xf32>
    %49 = vector.extract_strided_slice %42 {offsets = [2, 0], sizes = [2, 1], strides = [1, 1]} : vector<4x1xf32> to vector<2x1xf32>
    %cst_37 = arith.constant 0.000000e+00 : f32
    %50 = vector.broadcast %cst_37 : f32 to vector<2x110xf32>
    %51 = tpu.concatenate %48, %49, %47, %50 in 1 : vector<2x1xf32>, vector<2x1xf32>, vector<2x16xf32>, vector<2x110xf32> -> vector<2x128xf32>
    %c0_38 = arith.constant 0 : index
    %c0_39 = arith.constant 0 : index
    %52 = vector.load %arg13[%c0_38, %c0_39] : memref<2x128xf32, #tpu.memory_space<vmem>>, vector<2x128xf32>
    tpu.vector_store %arg13[%c0_38, %c0_39], %51 {strides = array<i32>} : memref<2x128xf32, #tpu.memory_space<vmem>>, vector<2x128xf32>,
    return
  }
}

</mosaic_0001>

<llo_original>
// kernel: tpu_custom_call.1
$region0: #{tpu_custom_call.1}
  #allocation0 [shape = 'u32[]', space=smem, size = 0x4, offset = 0x4, fixed_abs, tag = 'smem constant byte address 0x4 - core index']
  #allocation1 [shape = 'u32[144,128]{1,0:T(1,128)}', space=vmem, size = 0x12000, scoped, tag = 'internal scratch']
  #allocation2 [shape = 'f32[1,1]{1,0:T(1,128)S(1)}', space=vmem, size = 0x200, scoped, tag = 'scoped memory for tpu_custom_call.1']
  %s0 = inlined_call_operand.hbm [shape: bf16[4,8], index: 0, kind: input, shape index: {}]
  %s1 = inlined_call_operand.hbm [shape: bf16[2,4096], index: 1, kind: input, shape index: {}]
  %s2 = inlined_call_operand.hbm [shape: bf16[2,4096], index: 2, kind: input, shape index: {}]
  %s3 = inlined_call_operand.hbm [shape: bf16[8,256], index: 3, kind: input, shape index: {}]
  %s4 = inlined_call_operand.hbm [shape: f32[1,256], index: 4, kind: input, shape index: {}]
  %s5 = inlined_call_operand.hbm [shape: bf16[8192,256], index: 5, kind: input, shape index: {}]
  %s6 = inlined_call_operand.hbm [shape: f32[1,256], index: 6, kind: input, shape index: {}]
  %s7 = inlined_call_operand.hbm [shape: bf16[512,512], index: 7, kind: input, shape index: {}]
  %s8 = inlined_call_operand.hbm [shape: f32[1,512], index: 8, kind: input, shape index: {}]
  %s9 = inlined_call_operand.vmem [shape: bf16[512,1], index: 9, kind: input, shape index: {}]
  %s10 = inlined_call_operand.<no memory space> [shape: f32[1,1], index: 10, kind: input, shape index: {}]
  %s11 = inlined_call_operand.vmem [shape: bf16[256,16], index: 11, kind: input, shape index: {}]
  %s12 = inlined_call_operand.hbm [shape: f32[1,16], index: 12, kind: input, shape index: {}]
  %s13 = inlined_call_operand.hbm [shape: f32[2,128], index: 13, kind: output, shape index: {}]
  %s14 = sld [smem:[#allocation0]]
  $region102: #{tpu_custom_call.1} parent=0
    _
  %s16 = ssub.s32 1, %s14
  %s17 = scalar_select 0, %s16, %s14
  %v18 = vstv %s10
  %19 = vst [vmem:[#allocation2] sm:$0x1] %v18
  $region1: #{tpu_custom_call.1} parent=0
    #allocation3 [shape = 'u8[1024]{0}', space=vmem, size = 0x400, scoped, tag = 'input window, operand 0, single buffered']
    #allocation4 [shape = 's32[1]{0}', space=sflag, size = 0x4, scoped, tag = 'scoped memory for tpu_custom_call.1']
    #allocation5 [shape = 's32[1]{0}', space=sflag, size = 0x4, scoped, tag = 'scoped memory for tpu_custom_call.1']
    #allocation6 [shape = 'u8[16384]{0}', space=vmem, size = 0x4000, scoped, tag = 'input window, operand 1, single buffered']
    #allocation7 [shape = 's32[1]{0}', space=sflag, size = 0x4, scoped, tag = 'scoped memory for tpu_custom_call.1']
    #allocation8 [shape = 'u8[16384]{0}', space=vmem, size = 0x4000, scoped, tag = 'input window, operand 2, single buffered']
    #allocation9 [shape = 'u8[4096]{0}', space=vmem, size = 0x1000, scoped, tag = 'input window, operand 3, single buffered']
    #allocation10 [shape = 's32[1]{0}', space=sflag, size = 0x4, scoped, tag = 'scoped memory for tpu_custom_call.1']
    #allocation11 [shape = 'u8[1024]{0}', space=vmem, size = 0x400, scoped, tag = 'input window, operand 4, single buffered']
    #allocation12 [shape = 'u8[4194304]{0}', space=vmem, size = 0x400000, scoped, tag = 'input window, operand 5, single buffered']
    #allocation13 [shape = 's32[1]{0}', space=sflag, size = 0x4, scoped, tag = 'scoped memory for tpu_custom_call.1']
    #allocation14 [shape = 'u8[1024]{0}', space=vmem, size = 0x400, scoped, tag = 'input window, operand 6, single buffered']
    #allocation15 [shape = 'u8[524288]{0}', space=vmem, size = 0x80000, scoped, tag = 'input window, operand 7, single buffered']
    #allocation16 [shape = 's32[1]{0}', space=sflag, size = 0x4, scoped, tag = 'scoped memory for tpu_custom_call.1']
    #allocation17 [shape = 'u8[2048]{0}', space=vmem, size = 0x800, scoped, tag = 'input window, operand 8, single buffered']
    #allocation18 [shape = 'u8[512]{0}', space=vmem, size = 0x400, scoped, tag = 'input window, operand 12, single buffered']
    #allocation19 [shape = 's32[1]{0}', space=sflag, size = 0x4, scoped, tag = 'scoped memory for tpu_custom_call.1']
    #allocation20 [shape = 'u8[1024]{0}', space=vmem, size = 0x400, scoped, tag = 'output window, operand 0, single buffered']
    %20 = vsyncpa [#allocation4], 0
    %21 = vsyncpa [#allocation7], 0
    %22 = vsyncpa [#allocation10], 0
    %23 = vsyncpa [#allocation13], 0
    %24 = vsyncpa [#allocation16], 0
    %25 = vsyncpa [#allocation19], 0
    %26 = vsyncpa [#allocation5], 0
    // Predicated region
    $region2: #{tpu_custom_call.1} parent=1 // pred_check
      _
    $region3: #{tpu_custom_call.1} parent=1 // pred_check_branch
      %28 = sbr.rel (0) target = $region5
    $region4: #{tpu_custom_call.1} parent=1 // pred_region
      %s30 = ssub.s32 32, 32
      %31 = vsyncadd [#allocation4], %s30
      %s33 = sshll.u32 [#allocation3], 4
      %s34 = int_to_ptr.vmem [resolvable:$true] %s33
      %36 = dma.hbm_to_vmem [thread:$0]  %s0, 32, %s34, [#allocation4]
    $region5: #{tpu_custom_call.1} parent=1 // pred_fallthru
      _
    // Predicated region
    $region6: #{tpu_custom_call.1} parent=1 // pred_check
      _
    $region7: #{tpu_custom_call.1} parent=1 // pred_check_branch
      %38 = sbr.rel (0) target = $region9
    $region8: #{tpu_custom_call.1} parent=1 // pred_region
      %s40 = ssub.s32 512, 512
      %41 = vsyncadd [#allocation7], %s40
      %s43 = sshll.u32 [#allocation6], 4
      %s44 = int_to_ptr.vmem [resolvable:$true] %s43
      %46 = dma.hbm_to_vmem [thread:$0]  %s1, 512, %s44, [#allocation7]
    $region9: #{tpu_custom_call.1} parent=1 // pred_fallthru
      _
    // Predicated region
    $region10: #{tpu_custom_call.1} parent=1 // pred_check
      _
    $region11: #{tpu_custom_call.1} parent=1 // pred_check_branch
      %48 = sbr.rel (0) target = $region13
    $region12: #{tpu_custom_call.1} parent=1 // pred_region
      %s50 = ssub.s32 512, 512
      %51 = vsyncadd [#allocation7], %s50
      %s53 = sshll.u32 [#allocation8], 4
      %s54 = int_to_ptr.vmem [resolvable:$true] %s53
      %56 = dma.hbm_to_vmem [thread:$0]  %s2, 512, %s54, [#allocation7]
    $region13: #{tpu_custom_call.1} parent=1 // pred_fallthru
      _
    // Predicated region
    $region14: #{tpu_custom_call.1} parent=1 // pred_check
      _
    $region15: #{tpu_custom_call.1} parent=1 // pred_check_branch
      %58 = sbr.rel (0) target = $region17
    $region16: #{tpu_custom_call.1} parent=1 // pred_region
      %s60 = ssub.s32 128, 128
      %61 = vsyncadd [#allocation10], %s60
      %s63 = sshll.u32 [#allocation9], 4
      %s64 = int_to_ptr.vmem [resolvable:$true] %s63
      %66 = dma.hbm_to_vmem [thread:$0]  %s3, 128, %s64, [#allocation10]
    $region17: #{tpu_custom_call.1} parent=1 // pred_fallthru
      _
    // Predicated region
    $region18: #{tpu_custom_call.1} parent=1 // pred_check
      _
    $region19: #{tpu_custom_call.1} parent=1 // pred_check_branch
      %68 = sbr.rel (0) target = $region21
    $region20: #{tpu_custom_call.1} parent=1 // pred_region
      %s70 = ssub.s32 32, 32
      %71 = vsyncadd [#allocation10], %s70
      %s73 = sshll.u32 [#allocation11], 4
      %s74 = int_to_ptr.vmem [resolvable:$true] %s73
      %76 = dma.hbm_to_vmem [thread:$0]  %s4, 32, %s74, [#allocation10]
    $region21: #{tpu_custom_call.1} parent=1 // pred_fallthru
      _
    // Predicated region
    $region22: #{tpu_custom_call.1} parent=1 // pred_check
      _
    $region23: #{tpu_custom_call.1} parent=1 // pred_check_branch
      %78 = sbr.rel (0) target = $region25
    $region24: #{tpu_custom_call.1} parent=1 // pred_region
      %s80 = ssub.s32 131072, 131072
      %81 = vsyncadd [#allocation13], %s80
      %s82 = sshll.u32 [#allocation12], 4
      %s83 = int_to_ptr.vmem [resolvable:$true] %s82
      %88 = dma.hbm_to_vmem [thread:$0]  %s5, 131072, %s83, [#allocation13], 128, 128, 8
    $region25: #{tpu_custom_call.1} parent=1 // pred_fallthru
      _
    // Predicated region
    $region26: #{tpu_custom_call.1} parent=1 // pred_check
      _
    $region27: #{tpu_custom_call.1} parent=1 // pred_check_branch
      %90 = sbr.rel (0) target = $region29
    $region28: #{tpu_custom_call.1} parent=1 // pred_region
      %s92 = ssub.s32 32, 32
      %93 = vsyncadd [#allocation13], %s92
      %s95 = sshll.u32 [#allocation14], 4
      %s96 = int_to_ptr.vmem [resolvable:$true] %s95
      %98 = dma.hbm_to_vmem [thread:$0]  %s6, 32, %s96, [#allocation13]
    $region29: #{tpu_custom_call.1} parent=1 // pred_fallthru
      _
    // Predicated region
    $region30: #{tpu_custom_call.1} parent=1 // pred_check
      _
    $region31: #{tpu_custom_call.1} parent=1 // pred_check_branch
      %100 = sbr.rel (0) target = $region33
    $region32: #{tpu_custom_call.1} parent=1 // pred_region
      %s102 = ssub.s32 16384, 16384
      %103 = vsyncadd [#allocation16], %s102
      %s104 = sshll.u32 [#allocation15], 4
      %s105 = int_to_ptr.vmem [resolvable:$true] %s104
      %110 = dma.hbm_to_vmem [thread:$0]  %s7, 16384, %s105, [#allocation16], 256, 256, 16
    $region33: #{tpu_custom_call.1} parent=1 // pred_fallthru
      _
    // Predicated region
    $region34: #{tpu_custom_call.1} parent=1 // pred_check
      _
    $region35: #{tpu_custom_call.1} parent=1 // pred_check_branch
      %112 = sbr.rel (0) target = $region37
    $region36: #{tpu_custom_call.1} parent=1 // pred_region
      %s114 = ssub.s32 64, 64
      %115 = vsyncadd [#allocation16], %s114
      %s117 = sshll.u32 [#allocation17], 4
      %s118 = int_to_ptr.vmem [resolvable:$true] %s117
      %120 = dma.hbm_to_vmem [thread:$0]  %s8, 64, %s118, [#allocation16]
    $region37: #{tpu_custom_call.1} parent=1 // pred_fallthru
      _
    // Predicated region
    $region38: #{tpu_custom_call.1} parent=1 // pred_check
      _
    $region39: #{tpu_custom_call.1} parent=1 // pred_check_branch
      %122 = sbr.rel (0) target = $region41
    $region40: #{tpu_custom_call.1} parent=1 // pred_region
      _
    $region41: #{tpu_custom_call.1} parent=1 // pred_fallthru
      _
    // Predicated region
    $region42: #{tpu_custom_call.1} parent=1 // pred_check
      _
    $region43: #{tpu_custom_call.1} parent=1 // pred_check_branch
      %124 = sbr.rel (0) target = $region45
    $region44: #{tpu_custom_call.1} parent=1 // pred_region
      _
    $region45: #{tpu_custom_call.1} parent=1 // pred_fallthru
      _
    // Predicated region
    $region46: #{tpu_custom_call.1} parent=1 // pred_check
      _
    $region47: #{tpu_custom_call.1} parent=1 // pred_check_branch
      %126 = sbr.rel (0) target = $region49
    $region48: #{tpu_custom_call.1} parent=1 // pred_region
      _
    $region49: #{tpu_custom_call.1} parent=1 // pred_fallthru
      _
    // Predicated region
    $region50: #{tpu_custom_call.1} parent=1 // pred_check
      _
    $region51: #{tpu_custom_call.1} parent=1 // pred_check_branch
      %128 = sbr.rel (0) target = $region53
    $region52: #{tpu_custom_call.1} parent=1 // pred_region
      %s130 = ssub.s32 16, 16
      %131 = vsyncadd [#allocation19], %s130
      %s133 = sshll.u32 [#allocation18], 4
      %s134 = int_to_ptr.vmem [resolvable:$true] %s133
      %136 = dma.hbm_to_vmem [thread:$0]  %s12, 16, %s134, [#allocation19]
    $region53: #{tpu_custom_call.1} parent=1 // pred_fallthru
      _
    // Predicated region
    $region54: #{tpu_custom_call.1} parent=1 // pred_check
      _
    $region55: #{tpu_custom_call.1} parent=1 // pred_check_branch
      %138 = sbr.rel (0) target = $region57
    $region56: #{tpu_custom_call.1} parent=1 // pred_region
      %139 = dma.done [#allocation4], 32
    $region57: #{tpu_custom_call.1} parent=1 // pred_fallthru
      _
    // Predicated region
    $region58: #{tpu_custom_call.1} parent=1 // pred_check
      _
    $region59: #{tpu_custom_call.1} parent=1 // pred_check_branch
      %141 = sbr.rel (0) target = $region61
    $region60: #{tpu_custom_call.1} parent=1 // pred_region
      %142 = dma.done [#allocation7], 512
    $region61: #{tpu_custom_call.1} parent=1 // pred_fallthru
      _
    // Predicated region
    $region62: #{tpu_custom_call.1} parent=1 // pred_check
      _
    $region63: #{tpu_custom_call.1} parent=1 // pred_check_branch
      %144 = sbr.rel (0) target = $region65
    $region64: #{tpu_custom_call.1} parent=1 // pred_region
      %145 = dma.done [#allocation7], 512
    $region65: #{tpu_custom_call.1} parent=1 // pred_fallthru
      _
    // Predicated region
    $region66: #{tpu_custom_call.1} parent=1 // pred_check
      _
    $region67: #{tpu_custom_call.1} parent=1 // pred_check_branch
      %147 = sbr.rel (0) target = $region69
    $region68: #{tpu_custom_call.1} parent=1 // pred_region
      %148 = dma.done [#allocation10], 128
    $region69: #{tpu_custom_call.1} parent=1 // pred_fallthru
      _
    // Predicated region
    $region70: #{tpu_custom_call.1} parent=1 // pred_check
      _
    $region71: #{tpu_custom_call.1} parent=1 // pred_check_branch
      %150 = sbr.rel (0) target = $region73
    $region72: #{tpu_custom_call.1} parent=1 // pred_region
      %151 = dma.done [#allocation10], 32
    $region73: #{tpu_custom_call.1} parent=1 // pred_fallthru
      _
    // Predicated region
    $region74: #{tpu_custom_call.1} parent=1 // pred_check
      _
    $region75: #{tpu_custom_call.1} parent=1 // pred_check_branch
      %153 = sbr.rel (0) target = $region77
    $region76: #{tpu_custom_call.1} parent=1 // pred_region
      %154 = dma.done [#allocation13], 131072
    $region77: #{tpu_custom_call.1} parent=1 // pred_fallthru
      _
    // Predicated region
    $region78: #{tpu_custom_call.1} parent=1 // pred_check
      _
    $region79: #{tpu_custom_call.1} parent=1 // pred_check_branch
      %156 = sbr.rel (0) target = $region81
    $region80: #{tpu_custom_call.1} parent=1 // pred_region
      %157 = dma.done [#allocation13], 32
    $region81: #{tpu_custom_call.1} parent=1 // pred_fallthru
      _
    // Predicated region
    $region82: #{tpu_custom_call.1} parent=1 // pred_check
      _
    $region83: #{tpu_custom_call.1} parent=1 // pred_check_branch
      %159 = sbr.rel (0) target = $region85
    $region84: #{tpu_custom_call.1} parent=1 // pred_region
      %160 = dma.done [#allocation16], 16384
    $region85: #{tpu_custom_call.1} parent=1 // pred_fallthru
      _
    // Predicated region
    $region86: #{tpu_custom_call.1} parent=1 // pred_check
      _
    $region87: #{tpu_custom_call.1} parent=1 // pred_check_branch
      %162 = sbr.rel (0) target = $region89
    $region88: #{tpu_custom_call.1} parent=1 // pred_region
      %163 = dma.done [#allocation16], 64
    $region89: #{tpu_custom_call.1} parent=1 // pred_fallthru
      _
    // Predicated region
    $region90: #{tpu_custom_call.1} parent=1 // pred_check
      _
    $region91: #{tpu_custom_call.1} parent=1 // pred_check_branch
      %165 = sbr.rel (0) target = $region93
    $region92: #{tpu_custom_call.1} parent=1 // pred_region
      %166 = dma.done [#allocation19], 16
    $region93: #{tpu_custom_call.1} parent=1 // pred_fallthru
      _
    %v168 = vld [vmem:[#allocation6] sm:$0xff]
    %v169 = vld [vmem:[#allocation6 + $0x8] sm:$0xff]
    %v170 = vld [vmem:[#allocation6 + $0x10] sm:$0xff]
    %v171 = vld [vmem:[#allocation6 + $0x18] sm:$0xff]
    %v172 = vld [vmem:[#allocation12] sm:$0xff]
    %v173 = vld [vmem:[#allocation12 + $0x8] sm:$0xff]
    %v174 = vld [vmem:[#allocation12 + $0x10] sm:$0xff]
    %v175 = vld [vmem:[#allocation12 + $0x18] sm:$0xff]
    %v176 = vld [vmem:[#allocation12 + $0x20] sm:$0xff]
    %v177 = vld [vmem:[#allocation12 + $0x28] sm:$0xff]
    %v178 = vld [vmem:[#allocation12 + $0x30] sm:$0xff]
    %v179 = vld [vmem:[#allocation12 + $0x38] sm:$0xff]
    %v180 = vld [vmem:[#allocation12 + $0x40] sm:$0xff]
    %v181 = vld [vmem:[#allocation12 + $0x48] sm:$0xff]
    %v182 = vld [vmem:[#allocation12 + $0x50] sm:$0xff]
    %v183 = vld [vmem:[#allocation12 + $0x58] sm:$0xff]
    %v184 = vld [vmem:[#allocation12 + $0x60] sm:$0xff]
    %v185 = vld [vmem:[#allocation12 + $0x68] sm:$0xff]
    %v186 = vld [vmem:[#allocation12 + $0x70] sm:$0xff]
    %v187 = vld [vmem:[#allocation12 + $0x78] sm:$0xff]
    %v188 = vld [vmem:[#allocation12 + $0x80] sm:$0xff]
    %v189 = vld [vmem:[#allocation12 + $0x88] sm:$0xff]
    %v190 = vld [vmem:[#allocation12 + $0x90] sm:$0xff]
    %v191 = vld [vmem:[#allocation12 + $0x98] sm:$0xff]
    %v192 = vld [vmem:[#allocation12 + $0xa0] sm:$0xff]
    %v193 = vld [vmem:[#allocation12 + $0xa8] sm:$0xff]
    %v194 = vld [vmem:[#allocation12 + $0xb0] sm:$0xff]
    %v195 = vld [vmem:[#allocation12 + $0xb8] sm:$0xff]
    %v196 = vld [vmem:[#allocation12 + $0xc0] sm:$0xff]
    %v197 = vld [vmem:[#allocation12 + $0xc8] sm:$0xff]
    %v198 = vld [vmem:[#allocation12 + $0xd0] sm:$0xff]
    %v199 = vld [vmem:[#allocation12 + $0xd8] sm:$0xff]
    %v200 = vld [vmem:[#allocation12 + $0xe0] sm:$0xff]
    %v201 = vld [vmem:[#allocation12 + $0xe8] sm:$0xff]
    %v202 = vld [vmem:[#allocation12 + $0xf0] sm:$0xff]
    %v203 = vld [vmem:[#allocation12 + $0xf8] sm:$0xff]
    %v204 = vld [vmem:[#allocation12 + $0x100] sm:$0xff]
    %v205 = vld [vmem:[#allocation12 + $0x108] sm:$0xff]
    %v206 = vld [vmem:[#allocation12 + $0x110] sm:$0xff]
    %v207 = vld [vmem:[#allocation12 + $0x118] sm:$0xff]
    %v208 = vld [vmem:[#allocation12 + $0x120] sm:$0xff]
    %v209 = vld [vmem:[#allocation12 + $0x128] sm:$0xff]
    %v210 = vld [vmem:[#allocation12 + $0x130] sm:$0xff]
    %v211 = vld [vmem:[#allocation12 + $0x138] sm:$0xff]
    %v212 = vld [vmem:[#allocation12 + $0x140] sm:$0xff]
    %v213 = vld [vmem:[#allocation12 + $0x148] sm:$0xff]
    %v214 = vld [vmem:[#allocation12 + $0x150] sm:$0xff]
    %v215 = vld [vmem:[#allocation12 + $0x158] sm:$0xff]
    %v216 = vld [vmem:[#allocation12 + $0x160] sm:$0xff]
    %v217 = vld [vmem:[#allocation12 + $0x168] sm:$0xff]
    %v218 = vld [vmem:[#allocation12 + $0x170] sm:$0xff]
    %v219 = vld [vmem:[#allocation12 + $0x178] sm:$0xff]
    %v220 = vld [vmem:[#allocation12 + $0x180] sm:$0xff]
    %v221 = vld [vmem:[#allocation12 + $0x188] sm:$0xff]
    %v222 = vld [vmem:[#allocation12 + $0x190] sm:$0xff]
    %v223 = vld [vmem:[#allocation12 + $0x198] sm:$0xff]
    %v224 = vld [vmem:[#allocation12 + $0x1a0] sm:$0xff]
    %v225 = vld [vmem:[#allocation12 + $0x1a8] sm:$0xff]
    %v226 = vld [vmem:[#allocation12 + $0x1b0] sm:$0xff]
    %v227 = vld [vmem:[#allocation12 + $0x1b8] sm:$0xff]
    %v228 = vld [vmem:[#allocation12 + $0x1c0] sm:$0xff]
    %v229 = vld [vmem:[#allocation12 + $0x1c8] sm:$0xff]
    %v230 = vld [vmem:[#allocation12 + $0x1d0] sm:$0xff]
    %v231 = vld [vmem:[#allocation12 + $0x1d8] sm:$0xff]
    %v232 = vld [vmem:[#allocation12 + $0x1e0] sm:$0xff]
    %v233 = vld [vmem:[#allocation12 + $0x1e8] sm:$0xff]
    %v234 = vld [vmem:[#allocation12 + $0x1f0] sm:$0xff]
    %v235 = vld [vmem:[#allocation12 + $0x1f8] sm:$0xff]
    %v236 = vld [vmem:[#allocation12 + $0x200] sm:$0xff]
    %v237 = vld [vmem:[#allocation12 + $0x208] sm:$0xff]
    %v238 = vld [vmem:[#allocation12 + $0x210] sm:$0xff]
    %v239 = vld [vmem:[#allocation12 + $0x218] sm:$0xff]
    %v240 = vld [vmem:[#allocation12 + $0x220] sm:$0xff]
    %v241 = vld [vmem:[#allocation12 + $0x228] sm:$0xff]
    %v242 = vld [vmem:[#allocation12 + $0x230] sm:$0xff]
    %v243 = vld [vmem:[#allocation12 + $0x238] sm:$0xff]
    %v244 = vld [vmem:[#allocation12 + $0x240] sm:$0xff]
    %v245 = vld [vmem:[#allocation12 + $0x248] sm:$0xff]
    %v246 = vld [vmem:[#allocation12 + $0x250] sm:$0xff]
    %v247 = vld [vmem:[#allocation12 + $0x258] sm:$0xff]
    %v248 = vld [vmem:[#allocation12 + $0x260] sm:$0xff]
    %v249 = vld [vmem:[#allocation12 + $0x268] sm:$0xff]
    %v250 = vld [vmem:[#allocation12 + $0x270] sm:$0xff]
    %v251 = vld [vmem:[#allocation12 + $0x278] sm:$0xff]
    %v252 = vld [vmem:[#allocation12 + $0x280] sm:$0xff]
    %v253 = vld [vmem:[#allocation12 + $0x288] sm:$0xff]
    %v254 = vld [vmem:[#allocation12 + $0x290] sm:$0xff]
    %v255 = vld [vmem:[#allocation12 + $0x298] sm:$0xff]
    %v256 = vld [vmem:[#allocation12 + $0x2a0] sm:$0xff]
    %v257 = vld [vmem:[#allocation12 + $0x2a8] sm:$0xff]
    %v258 = vld [vmem:[#allocation12 + $0x2b0] sm:$0xff]
    %v259 = vld [vmem:[#allocation12 + $0x2b8] sm:$0xff]
    %v260 = vld [vmem:[#allocation12 + $0x2c0] sm:$0xff]
    %v261 = vld [vmem:[#allocation12 + $0x2c8] sm:$0xff]
    %v262 = vld [vmem:[#allocation12 + $0x2d0] sm:$0xff]
    %v263 = vld [vmem:[#allocation12 + $0x2d8] sm:$0xff]
    %v264 = vld [vmem:[#allocation12 + $0x2e0] sm:$0xff]
    %v265 = vld [vmem:[#allocation12 + $0x2e8] sm:$0xff]
    %v266 = vld [vmem:[#allocation12 + $0x2f0] sm:$0xff]
    %v267 = vld [vmem:[#allocation12 + $0x2f8] sm:$0xff]
    %v268 = vld [vmem:[#allocation12 + $0x300] sm:$0xff]
    %v269 = vld [vmem:[#allocation12 + $0x308] sm:$0xff]
    %v270 = vld [vmem:[#allocation12 + $0x310] sm:$0xff]
    %v271 = vld [vmem:[#allocation12 + $0x318] sm:$0xff]
    %v272 = vld [vmem:[#allocation12 + $0x320] sm:$0xff]
    %v273 = vld [vmem:[#allocation12 + $0x328] sm:$0xff]
    %v274 = vld [vmem:[#allocation12 + $0x330] sm:$0xff]
    %v275 = vld [vmem:[#allocation12 + $0x338] sm:$0xff]
    %v276 = vld [vmem:[#allocation12 + $0x340] sm:$0xff]
    %v277 = vld [vmem:[#allocation12 + $0x348] sm:$0xff]
    %v278 = vld [vmem:[#allocation12 + $0x350] sm:$0xff]
    %v279 = vld [vmem:[#allocation12 + $0x358] sm:$0xff]
    %v280 = vld [vmem:[#allocation12 + $0x360] sm:$0xff]
    %v281 = vld [vmem:[#allocation12 + $0x368] sm:$0xff]
    %v282 = vld [vmem:[#allocation12 + $0x370] sm:$0xff]
    %v283 = vld [vmem:[#allocation12 + $0x378] sm:$0xff]
    %v284 = vld [vmem:[#allocation12 + $0x380] sm:$0xff]
    %v285 = vld [vmem:[#allocation12 + $0x388] sm:$0xff]
    %v286 = vld [vmem:[#allocation12 + $0x390] sm:$0xff]
    %v287 = vld [vmem:[#allocation12 + $0x398] sm:$0xff]
    %v288 = vld [vmem:[#allocation12 + $0x3a0] sm:$0xff]
    %v289 = vld [vmem:[#allocation12 + $0x3a8] sm:$0xff]
    %v290 = vld [vmem:[#allocation12 + $0x3b0] sm:$0xff]
    %v291 = vld [vmem:[#allocation12 + $0x3b8] sm:$0xff]
    %v292 = vld [vmem:[#allocation12 + $0x3c0] sm:$0xff]
    %v293 = vld [vmem:[#allocation12 + $0x3c8] sm:$0xff]
    %v294 = vld [vmem:[#allocation12 + $0x3d0] sm:$0xff]
    %v295 = vld [vmem:[#allocation12 + $0x3d8] sm:$0xff]
    %v296 = vld [vmem:[#allocation12 + $0x3e0] sm:$0xff]
    %v297 = vld [vmem:[#allocation12 + $0x3e8] sm:$0xff]
    %v298 = vld [vmem:[#allocation12 + $0x3f0] sm:$0xff]
    %v299 = vld [vmem:[#allocation12 + $0x3f8] sm:$0xff]
    %v300 = vld [vmem:[#allocation12 + $0x400] sm:$0xff]
    %v301 = vld [vmem:[#allocation12 + $0x408] sm:$0xff]
    %v302 = vld [vmem:[#allocation12 + $0x410] sm:$0xff]
    %v303 = vld [vmem:[#allocation12 + $0x418] sm:$0xff]
    %v304 = vld [vmem:[#allocation12 + $0x420] sm:$0xff]
    %v305 = vld [vmem:[#allocation12 + $0x428] sm:$0xff]
    %v306 = vld [vmem:[#allocation12 + $0x430] sm:$0xff]
    %v307 = vld [vmem:[#allocation12 + $0x438] sm:$0xff]
    %v308 = vld [vmem:[#allocation12 + $0x440] sm:$0xff]
    %v309 = vld [vmem:[#allocation12 + $0x448] sm:$0xff]
    %v310 = vld [vmem:[#allocation12 + $0x450] sm:$0xff]
    %v311 = vld [vmem:[#allocation12 + $0x458] sm:$0xff]
    %v312 = vld [vmem:[#allocation12 + $0x460] sm:$0xff]
    %v313 = vld [vmem:[#allocation12 + $0x468] sm:$0xff]
    %v314 = vld [vmem:[#allocation12 + $0x470] sm:$0xff]
    %v315 = vld [vmem:[#allocation12 + $0x478] sm:$0xff]
    %v316 = vld [vmem:[#allocation12 + $0x480] sm:$0xff]
    %v317 = vld [vmem:[#allocation12 + $0x488] sm:$0xff]
    %v318 = vld [vmem:[#allocation12 + $0x490] sm:$0xff]
    %v319 = vld [vmem:[#allocation12 + $0x498] sm:$0xff]
    %v320 = vld [vmem:[#allocation12 + $0x4a0] sm:$0xff]
    %v321 = vld [vmem:[#allocation12 + $0x4a8] sm:$0xff]
    %v322 = vld [vmem:[#allocation12 + $0x4b0] sm:$0xff]
    %v323 = vld [vmem:[#allocation12 + $0x4b8] sm:$0xff]
    %v324 = vld [vmem:[#allocation12 + $0x4c0] sm:$0xff]
    %v325 = vld [vmem:[#allocation12 + $0x4c8] sm:$0xff]
    %v326 = vld [vmem:[#allocation12 + $0x4d0] sm:$0xff]
    %v327 = vld [vmem:[#allocation12 + $0x4d8] sm:$0xff]
    %v328 = vld [vmem:[#allocation12 + $0x4e0] sm:$0xff]
    %v329 = vld [vmem:[#allocation12 + $0x4e8] sm:$0xff]
    %v330 = vld [vmem:[#allocation12 + $0x4f0] sm:$0xff]
    %v331 = vld [vmem:[#allocation12 + $0x4f8] sm:$0xff]
    %v332 = vld [vmem:[#allocation12 + $0x500] sm:$0xff]
    %v333 = vld [vmem:[#allocation12 + $0x508] sm:$0xff]
    %v334 = vld [vmem:[#allocation12 + $0x510] sm:$0xff]
    %v335 = vld [vmem:[#allocation12 + $0x518] sm:$0xff]
    %v336 = vld [vmem:[#allocation12 + $0x520] sm:$0xff]
    %v337 = vld [vmem:[#allocation12 + $0x528] sm:$0xff]
    %v338 = vld [vmem:[#allocation12 + $0x530] sm:$0xff]
    %v339 = vld [vmem:[#allocation12 + $0x538] sm:$0xff]
    %v340 = vld [vmem:[#allocation12 + $0x540] sm:$0xff]
    %v341 = vld [vmem:[#allocation12 + $0x548] sm:$0xff]
    %v342 = vld [vmem:[#allocation12 + $0x550] sm:$0xff]
    %v343 = vld [vmem:[#allocation12 + $0x558] sm:$0xff]
    %v344 = vld [vmem:[#allocation12 + $0x560] sm:$0xff]
    %v345 = vld [vmem:[#allocation12 + $0x568] sm:$0xff]
    %v346 = vld [vmem:[#allocation12 + $0x570] sm:$0xff]
    %v347 = vld [vmem:[#allocation12 + $0x578] sm:$0xff]
    %v348 = vld [vmem:[#allocation12 + $0x580] sm:$0xff]
    %v349 = vld [vmem:[#allocation12 + $0x588] sm:$0xff]
    %v350 = vld [vmem:[#allocation12 + $0x590] sm:$0xff]
    %v351 = vld [vmem:[#allocation12 + $0x598] sm:$0xff]
    %v352 = vld [vmem:[#allocation12 + $0x5a0] sm:$0xff]
    %v353 = vld [vmem:[#allocation12 + $0x5a8] sm:$0xff]
    %v354 = vld [vmem:[#allocation12 + $0x5b0] sm:$0xff]
    %v355 = vld [vmem:[#allocation12 + $0x5b8] sm:$0xff]
    %v356 = vld [vmem:[#allocation12 + $0x5c0] sm:$0xff]
    %v357 = vld [vmem:[#allocation12 + $0x5c8] sm:$0xff]
    %v358 = vld [vmem:[#allocation12 + $0x5d0] sm:$0xff]
    %v359 = vld [vmem:[#allocation12 + $0x5d8] sm:$0xff]
    %v360 = vld [vmem:[#allocation12 + $0x5e0] sm:$0xff]
    %v361 = vld [vmem:[#allocation12 + $0x5e8] sm:$0xff]
    %v362 = vld [vmem:[#allocation12 + $0x5f0] sm:$0xff]
    %v363 = vld [vmem:[#allocation12 + $0x5f8] sm:$0xff]
    %v364 = vld [vmem:[#allocation12 + $0x600] sm:$0xff]
    %v365 = vld [vmem:[#allocation12 + $0x608] sm:$0xff]
    %v366 = vld [vmem:[#allocation12 + $0x610] sm:$0xff]
    %v367 = vld [vmem:[#allocation12 + $0x618] sm:$0xff]
    %v368 = vld [vmem:[#allocation12 + $0x620] sm:$0xff]
    %v369 = vld [vmem:[#allocation12 + $0x628] sm:$0xff]
    %v370 = vld [vmem:[#allocation12 + $0x630] sm:$0xff]
    %v371 = vld [vmem:[#allocation12 + $0x638] sm:$0xff]
    %v372 = vld [vmem:[#allocation12 + $0x640] sm:$0xff]
    %v373 = vld [vmem:[#allocation12 + $0x648] sm:$0xff]
    %v374 = vld [vmem:[#allocation12 + $0x650] sm:$0xff]
    %v375 = vld [vmem:[#allocation12 + $0x658] sm:$0xff]
    %v376 = vld [vmem:[#allocation12 + $0x660] sm:$0xff]
    %v377 = vld [vmem:[#allocation12 + $0x668] sm:$0xff]
    %v378 = vld [vmem:[#allocation12 + $0x670] sm:$0xff]
    %v379 = vld [vmem:[#allocation12 + $0x678] sm:$0xff]
    %v380 = vld [vmem:[#allocation12 + $0x680] sm:$0xff]
    %v381 = vld [vmem:[#allocation12 + $0x688] sm:$0xff]
    %v382 = vld [vmem:[#allocation12 + $0x690] sm:$0xff]
    %v383 = vld [vmem:[#allocation12 + $0x698] sm:$0xff]
    %v384 = vld [vmem:[#allocation12 + $0x6a0] sm:$0xff]
    %v385 = vld [vmem:[#allocation12 + $0x6a8] sm:$0xff]
    %v386 = vld [vmem:[#allocation12 + $0x6b0] sm:$0xff]
    %v387 = vld [vmem:[#allocation12 + $0x6b8] sm:$0xff]
    %v388 = vld [vmem:[#allocation12 + $0x6c0] sm:$0xff]
    %v389 = vld [vmem:[#allocation12 + $0x6c8] sm:$0xff]
    %v390 = vld [vmem:[#allocation12 + $0x6d0] sm:$0xff]
    %v391 = vld [vmem:[#allocation12 + $0x6d8] sm:$0xff]
    %v392 = vld [vmem:[#allocation12 + $0x6e0] sm:$0xff]
    %v393 = vld [vmem:[#allocation12 + $0x6e8] sm:$0xff]
    %v394 = vld [vmem:[#allocation12 + $0x6f0] sm:$0xff]
    %v395 = vld [vmem:[#allocation12 + $0x6f8] sm:$0xff]
    %v396 = vld [vmem:[#allocation12 + $0x700] sm:$0xff]
    %v397 = vld [vmem:[#allocation12 + $0x708] sm:$0xff]
    %v398 = vld [vmem:[#allocation12 + $0x710] sm:$0xff]
    %v399 = vld [vmem:[#allocation12 + $0x718] sm:$0xff]
    %v400 = vld [vmem:[#allocation12 + $0x720] sm:$0xff]
    %v401 = vld [vmem:[#allocation12 + $0x728] sm:$0xff]
    %v402 = vld [vmem:[#allocation12 + $0x730] sm:$0xff]
    %v403 = vld [vmem:[#allocation12 + $0x738] sm:$0xff]
    %v404 = vld [vmem:[#allocation12 + $0x740] sm:$0xff]
    %v405 = vld [vmem:[#allocation12 + $0x748] sm:$0xff]
    %v406 = vld [vmem:[#allocation12 + $0x750] sm:$0xff]
    %v407 = vld [vmem:[#allocation12 + $0x758] sm:$0xff]
    %v408 = vld [vmem:[#allocation12 + $0x760] sm:$0xff]
    %v409 = vld [vmem:[#allocation12 + $0x768] sm:$0xff]
    %v410 = vld [vmem:[#allocation12 + $0x770] sm:$0xff]
    %v411 = vld [vmem:[#allocation12 + $0x778] sm:$0xff]
    %v412 = vld [vmem:[#allocation12 + $0x780] sm:$0xff]
    %v413 = vld [vmem:[#allocation12 + $0x788] sm:$0xff]
    %v414 = vld [vmem:[#allocation12 + $0x790] sm:$0xff]
    %v415 = vld [vmem:[#allocation12 + $0x798] sm:$0xff]
    %v416 = vld [vmem:[#allocation12 + $0x7a0] sm:$0xff]
    %v417 = vld [vmem:[#allocation12 + $0x7a8] sm:$0xff]
    %v418 = vld [vmem:[#allocation12 + $0x7b0] sm:$0xff]
    %v419 = vld [vmem:[#allocation12 + $0x7b8] sm:$0xff]
    %v420 = vld [vmem:[#allocation12 + $0x7c0] sm:$0xff]
    %v421 = vld [vmem:[#allocation12 + $0x7c8] sm:$0xff]
    %v422 = vld [vmem:[#allocation12 + $0x7d0] sm:$0xff]
    %v423 = vld [vmem:[#allocation12 + $0x7d8] sm:$0xff]
    %v424 = vld [vmem:[#allocation12 + $0x7e0] sm:$0xff]
    %v425 = vld [vmem:[#allocation12 + $0x7e8] sm:$0xff]
    %v426 = vld [vmem:[#allocation12 + $0x7f0] sm:$0xff]
    %v427 = vld [vmem:[#allocation12 + $0x7f8] sm:$0xff]
    %v428 = vld [vmem:[#allocation12 + $0x800] sm:$0xff]
    %v429 = vld [vmem:[#allocation12 + $0x808] sm:$0xff]
    %v430 = vld [vmem:[#allocation12 + $0x810] sm:$0xff]
    %v431 = vld [vmem:[#allocation12 + $0x818] sm:$0xff]
    %v432 = vld [vmem:[#allocation12 + $0x820] sm:$0xff]
    %v433 = vld [vmem:[#allocation12 + $0x828] sm:$0xff]
    %v434 = vld [vmem:[#allocation12 + $0x830] sm:$0xff]
    %v435 = vld [vmem:[#allocation12 + $0x838] sm:$0xff]
    %v436 = vld [vmem:[#allocation12 + $0x840] sm:$0xff]
    %v437 = vld [vmem:[#allocation12 + $0x848] sm:$0xff]
    %v438 = vld [vmem:[#allocation12 + $0x850] sm:$0xff]
    %v439 = vld [vmem:[#allocation12 + $0x858] sm:$0xff]
    %v440 = vld [vmem:[#allocation12 + $0x860] sm:$0xff]
    %v441 = vld [vmem:[#allocation12 + $0x868] sm:$0xff]
    %v442 = vld [vmem:[#allocation12 + $0x870] sm:$0xff]
    %v443 = vld [vmem:[#allocation12 + $0x878] sm:$0xff]
    %v444 = vld [vmem:[#allocation12 + $0x880] sm:$0xff]
    %v445 = vld [vmem:[#allocation12 + $0x888] sm:$0xff]
    %v446 = vld [vmem:[#allocation12 + $0x890] sm:$0xff]
    %v447 = vld [vmem:[#allocation12 + $0x898] sm:$0xff]
    %v448 = vld [vmem:[#allocation12 + $0x8a0] sm:$0xff]
    %v449 = vld [vmem:[#allocation12 + $0x8a8] sm:$0xff]
    %v450 = vld [vmem:[#allocation12 + $0x8b0] sm:$0xff]
    %v451 = vld [vmem:[#allocation12 + $0x8b8] sm:$0xff]
    %v452 = vld [vmem:[#allocation12 + $0x8c0] sm:$0xff]
    %v453 = vld [vmem:[#allocation12 + $0x8c8] sm:$0xff]
    %v454 = vld [vmem:[#allocation12 + $0x8d0] sm:$0xff]
    %v455 = vld [vmem:[#allocation12 + $0x8d8] sm:$0xff]
    %v456 = vld [vmem:[#allocation12 + $0x8e0] sm:$0xff]
    %v457 = vld [vmem:[#allocation12 + $0x8e8] sm:$0xff]
    %v458 = vld [vmem:[#allocation12 + $0x8f0] sm:$0xff]
    %v459 = vld [vmem:[#allocation12 + $0x8f8] sm:$0xff]
    %v460 = vld [vmem:[#allocation12 + $0x900] sm:$0xff]
    %v461 = vld [vmem:[#allocation12 + $0x908] sm:$0xff]
    %v462 = vld [vmem:[#allocation12 + $0x910] sm:$0xff]
    %v463 = vld [vmem:[#allocation12 + $0x918] sm:$0xff]
    %v464 = vld [vmem:[#allocation12 + $0x920] sm:$0xff]
    %v465 = vld [vmem:[#allocation12 + $0x928] sm:$0xff]
    %v466 = vld [vmem:[#allocation12 + $0x930] sm:$0xff]
    %v467 = vld [vmem:[#allocation12 + $0x938] sm:$0xff]
    %v468 = vld [vmem:[#allocation12 + $0x940] sm:$0xff]
    %v469 = vld [vmem:[#allocation12 + $0x948] sm:$0xff]
    %v470 = vld [vmem:[#allocation12 + $0x950] sm:$0xff]
    %v471 = vld [vmem:[#allocation12 + $0x958] sm:$0xff]
    %v472 = vld [vmem:[#allocation12 + $0x960] sm:$0xff]
    %v473 = vld [vmem:[#allocation12 + $0x968] sm:$0xff]
    %v474 = vld [vmem:[#allocation12 + $0x970] sm:$0xff]
    %v475 = vld [vmem:[#allocation12 + $0x978] sm:$0xff]
    %v476 = vld [vmem:[#allocation12 + $0x980] sm:$0xff]
    %v477 = vld [vmem:[#allocation12 + $0x988] sm:$0xff]
    %v478 = vld [vmem:[#allocation12 + $0x990] sm:$0xff]
    %v479 = vld [vmem:[#allocation12 + $0x998] sm:$0xff]
    %v480 = vld [vmem:[#allocation12 + $0x9a0] sm:$0xff]
    %v481 = vld [vmem:[#allocation12 + $0x9a8] sm:$0xff]
    %v482 = vld [vmem:[#allocation12 + $0x9b0] sm:$0xff]
    %v483 = vld [vmem:[#allocation12 + $0x9b8] sm:$0xff]
    %v484 = vld [vmem:[#allocation12 + $0x9c0] sm:$0xff]
    %v485 = vld [vmem:[#allocation12 + $0x9c8] sm:$0xff]
    %v486 = vld [vmem:[#allocation12 + $0x9d0] sm:$0xff]
    %v487 = vld [vmem:[#allocation12 + $0x9d8] sm:$0xff]
    %v488 = vld [vmem:[#allocation12 + $0x9e0] sm:$0xff]
    %v489 = vld [vmem:[#allocation12 + $0x9e8] sm:$0xff]
    %v490 = vld [vmem:[#allocation12 + $0x9f0] sm:$0xff]
    %v491 = vld [vmem:[#allocation12 + $0x9f8] sm:$0xff]
    %v492 = vld [vmem:[#allocation12 + $0xa00] sm:$0xff]
    %v493 = vld [vmem:[#allocation12 + $0xa08] sm:$0xff]
    %v494 = vld [vmem:[#allocation12 + $0xa10] sm:$0xff]
    %v495 = vld [vmem:[#allocation12 + $0xa18] sm:$0xff]
    %v496 = vld [vmem:[#allocation12 + $0xa20] sm:$0xff]
    %v497 = vld [vmem:[#allocation12 + $0xa28] sm:$0xff]
    %v498 = vld [vmem:[#allocation12 + $0xa30] sm:$0xff]
    %v499 = vld [vmem:[#allocation12 + $0xa38] sm:$0xff]
    %v500 = vld [vmem:[#allocation12 + $0xa40] sm:$0xff]
    %v501 = vld [vmem:[#allocation12 + $0xa48] sm:$0xff]
    %v502 = vld [vmem:[#allocation12 + $0xa50] sm:$0xff]
    %v503 = vld [vmem:[#allocation12 + $0xa58] sm:$0xff]
    %v504 = vld [vmem:[#allocation12 + $0xa60] sm:$0xff]
    %v505 = vld [vmem:[#allocation12 + $0xa68] sm:$0xff]
    %v506 = vld [vmem:[#allocation12 + $0xa70] sm:$0xff]
    %v507 = vld [vmem:[#allocation12 + $0xa78] sm:$0xff]
    %v508 = vld [vmem:[#allocation12 + $0xa80] sm:$0xff]
    %v509 = vld [vmem:[#allocation12 + $0xa88] sm:$0xff]
    %v510 = vld [vmem:[#allocation12 + $0xa90] sm:$0xff]
    %v511 = vld [vmem:[#allocation12 + $0xa98] sm:$0xff]
    %v512 = vld [vmem:[#allocation12 + $0xaa0] sm:$0xff]
    %v513 = vld [vmem:[#allocation12 + $0xaa8] sm:$0xff]
    %v514 = vld [vmem:[#allocation12 + $0xab0] sm:$0xff]
    %v515 = vld [vmem:[#allocation12 + $0xab8] sm:$0xff]
    %v516 = vld [vmem:[#allocation12 + $0xac0] sm:$0xff]
    %v517 = vld [vmem:[#allocation12 + $0xac8] sm:$0xff]
    %v518 = vld [vmem:[#allocation12 + $0xad0] sm:$0xff]
    %v519 = vld [vmem:[#allocation12 + $0xad8] sm:$0xff]
    %v520 = vld [vmem:[#allocation12 + $0xae0] sm:$0xff]
    %v521 = vld [vmem:[#allocation12 + $0xae8] sm:$0xff]
    %v522 = vld [vmem:[#allocation12 + $0xaf0] sm:$0xff]
    %v523 = vld [vmem:[#allocation12 + $0xaf8] sm:$0xff]
    %v524 = vld [vmem:[#allocation12 + $0xb00] sm:$0xff]
    %v525 = vld [vmem:[#allocation12 + $0xb08] sm:$0xff]
    %v526 = vld [vmem:[#allocation12 + $0xb10] sm:$0xff]
    %v527 = vld [vmem:[#allocation12 + $0xb18] sm:$0xff]
    %v528 = vld [vmem:[#allocation12 + $0xb20] sm:$0xff]
    %v529 = vld [vmem:[#allocation12 + $0xb28] sm:$0xff]
    %v530 = vld [vmem:[#allocation12 + $0xb30] sm:$0xff]
    %v531 = vld [vmem:[#allocation12 + $0xb38] sm:$0xff]
    %v532 = vld [vmem:[#allocation12 + $0xb40] sm:$0xff]
    %v533 = vld [vmem:[#allocation12 + $0xb48] sm:$0xff]
    %v534 = vld [vmem:[#allocation12 + $0xb50] sm:$0xff]
    %v535 = vld [vmem:[#allocation12 + $0xb58] sm:$0xff]
    %v536 = vld [vmem:[#allocation12 + $0xb60] sm:$0xff]
    %v537 = vld [vmem:[#allocation12 + $0xb68] sm:$0xff]
    %v538 = vld [vmem:[#allocation12 + $0xb70] sm:$0xff]
    %v539 = vld [vmem:[#allocation12 + $0xb78] sm:$0xff]
    %v540 = vld [vmem:[#allocation12 + $0xb80] sm:$0xff]
    %v541 = vld [vmem:[#allocation12 + $0xb88] sm:$0xff]
    %v542 = vld [vmem:[#allocation12 + $0xb90] sm:$0xff]
    %v543 = vld [vmem:[#allocation12 + $0xb98] sm:$0xff]
    %v544 = vld [vmem:[#allocation12 + $0xba0] sm:$0xff]
    %v545 = vld [vmem:[#allocation12 + $0xba8] sm:$0xff]
    %v546 = vld [vmem:[#allocation12 + $0xbb0] sm:$0xff]
    %v547 = vld [vmem:[#allocation12 + $0xbb8] sm:$0xff]
    %v548 = vld [vmem:[#allocation12 + $0xbc0] sm:$0xff]
    %v549 = vld [vmem:[#allocation12 + $0xbc8] sm:$0xff]
    %v550 = vld [vmem:[#allocation12 + $0xbd0] sm:$0xff]
    %v551 = vld [vmem:[#allocation12 + $0xbd8] sm:$0xff]
    %v552 = vld [vmem:[#allocation12 + $0xbe0] sm:$0xff]
    %v553 = vld [vmem:[#allocation12 + $0xbe8] sm:$0xff]
    %v554 = vld [vmem:[#allocation12 + $0xbf0] sm:$0xff]
    %v555 = vld [vmem:[#allocation12 + $0xbf8] sm:$0xff]
    %v556 = vld [vmem:[#allocation12 + $0xc00] sm:$0xff]
    %v557 = vld [vmem:[#allocation12 + $0xc08] sm:$0xff]
    %v558 = vld [vmem:[#allocation12 + $0xc10] sm:$0xff]
    %v559 = vld [vmem:[#allocation12 + $0xc18] sm:$0xff]
    %v560 = vld [vmem:[#allocation12 + $0xc20] sm:$0xff]
    %v561 = vld [vmem:[#allocation12 + $0xc28] sm:$0xff]
    %v562 = vld [vmem:[#allocation12 + $0xc30] sm:$0xff]
    %v563 = vld [vmem:[#allocation12 + $0xc38] sm:$0xff]
    %v564 = vld [vmem:[#allocation12 + $0xc40] sm:$0xff]
    %v565 = vld [vmem:[#allocation12 + $0xc48] sm:$0xff]
    %v566 = vld [vmem:[#allocation12 + $0xc50] sm:$0xff]
    %v567 = vld [vmem:[#allocation12 + $0xc58] sm:$0xff]
    %v568 = vld [vmem:[#allocation12 + $0xc60] sm:$0xff]
    %v569 = vld [vmem:[#allocation12 + $0xc68] sm:$0xff]
    %v570 = vld [vmem:[#allocation12 + $0xc70] sm:$0xff]
    %v571 = vld [vmem:[#allocation12 + $0xc78] sm:$0xff]
    %v572 = vld [vmem:[#allocation12 + $0xc80] sm:$0xff]
    %v573 = vld [vmem:[#allocation12 + $0xc88] sm:$0xff]
    %v574 = vld [vmem:[#allocation12 + $0xc90] sm:$0xff]
    %v575 = vld [vmem:[#allocation12 + $0xc98] sm:$0xff]
    %v576 = vld [vmem:[#allocation12 + $0xca0] sm:$0xff]
    %v577 = vld [vmem:[#allocation12 + $0xca8] sm:$0xff]
    %v578 = vld [vmem:[#allocation12 + $0xcb0] sm:$0xff]
    %v579 = vld [vmem:[#allocation12 + $0xcb8] sm:$0xff]
    %v580 = vld [vmem:[#allocation12 + $0xcc0] sm:$0xff]
    %v581 = vld [vmem:[#allocation12 + $0xcc8] sm:$0xff]
    %v582 = vld [vmem:[#allocation12 + $0xcd0] sm:$0xff]
    %v583 = vld [vmem:[#allocation12 + $0xcd8] sm:$0xff]
    %v584 = vld [vmem:[#allocation12 + $0xce0] sm:$0xff]
    %v585 = vld [vmem:[#allocation12 + $0xce8] sm:$0xff]
    %v586 = vld [vmem:[#allocation12 + $0xcf0] sm:$0xff]
    %v587 = vld [vmem:[#allocation12 + $0xcf8] sm:$0xff]
    %v588 = vld [vmem:[#allocation12 + $0xd00] sm:$0xff]
    %v589 = vld [vmem:[#allocation12 + $0xd08] sm:$0xff]
    %v590 = vld [vmem:[#allocation12 + $0xd10] sm:$0xff]
    %v591 = vld [vmem:[#allocation12 + $0xd18] sm:$0xff]
    %v592 = vld [vmem:[#allocation12 + $0xd20] sm:$0xff]
    %v593 = vld [vmem:[#allocation12 + $0xd28] sm:$0xff]
    %v594 = vld [vmem:[#allocation12 + $0xd30] sm:$0xff]
    %v595 = vld [vmem:[#allocation12 + $0xd38] sm:$0xff]
    %v596 = vld [vmem:[#allocation12 + $0xd40] sm:$0xff]
    %v597 = vld [vmem:[#allocation12 + $0xd48] sm:$0xff]
    %v598 = vld [vmem:[#allocation12 + $0xd50] sm:$0xff]
    %v599 = vld [vmem:[#allocation12 + $0xd58] sm:$0xff]
    %v600 = vld [vmem:[#allocation12 + $0xd60] sm:$0xff]
    %v601 = vld [vmem:[#allocation12 + $0xd68] sm:$0xff]
    %v602 = vld [vmem:[#allocation12 + $0xd70] sm:$0xff]
    %v603 = vld [vmem:[#allocation12 + $0xd78] sm:$0xff]
    %v604 = vld [vmem:[#allocation12 + $0xd80] sm:$0xff]
    %v605 = vld [vmem:[#allocation12 + $0xd88] sm:$0xff]
    %v606 = vld [vmem:[#allocation12 + $0xd90] sm:$0xff]
    %v607 = vld [vmem:[#allocation12 + $0xd98] sm:$0xff]
    %v608 = vld [vmem:[#allocation12 + $0xda0] sm:$0xff]
    %v609 = vld [vmem:[#allocation12 + $0xda8] sm:$0xff]
    %v610 = vld [vmem:[#allocation12 + $0xdb0] sm:$0xff]
    %v611 = vld [vmem:[#allocation12 + $0xdb8] sm:$0xff]
    %v612 = vld [vmem:[#allocation12 + $0xdc0] sm:$0xff]
    %v613 = vld [vmem:[#allocation12 + $0xdc8] sm:$0xff]
    %v614 = vld [vmem:[#allocation12 + $0xdd0] sm:$0xff]
    %v615 = vld [vmem:[#allocation12 + $0xdd8] sm:$0xff]
    %v616 = vld [vmem:[#allocation12 + $0xde0] sm:$0xff]
    %v617 = vld [vmem:[#allocation12 + $0xde8] sm:$0xff]
    %v618 = vld [vmem:[#allocation12 + $0xdf0] sm:$0xff]
    %v619 = vld [vmem:[#allocation12 + $0xdf8] sm:$0xff]
    %v620 = vld [vmem:[#allocation12 + $0xe00] sm:$0xff]
    %v621 = vld [vmem:[#allocation12 + $0xe08] sm:$0xff]
    %v622 = vld [vmem:[#allocation12 + $0xe10] sm:$0xff]
    %v623 = vld [vmem:[#allocation12 + $0xe18] sm:$0xff]
    %v624 = vld [vmem:[#allocation12 + $0xe20] sm:$0xff]
    %v625 = vld [vmem:[#allocation12 + $0xe28] sm:$0xff]
    %v626 = vld [vmem:[#allocation12 + $0xe30] sm:$0xff]
    %v627 = vld [vmem:[#allocation12 + $0xe38] sm:$0xff]
    %v628 = vld [vmem:[#allocation12 + $0xe40] sm:$0xff]
    %v629 = vld [vmem:[#allocation12 + $0xe48] sm:$0xff]
    %v630 = vld [vmem:[#allocation12 + $0xe50] sm:$0xff]
    %v631 = vld [vmem:[#allocation12 + $0xe58] sm:$0xff]
    %v632 = vld [vmem:[#allocation12 + $0xe60] sm:$0xff]
    %v633 = vld [vmem:[#allocation12 + $0xe68] sm:$0xff]
    %v634 = vld [vmem:[#allocation12 + $0xe70] sm:$0xff]
    %v635 = vld [vmem:[#allocation12 + $0xe78] sm:$0xff]
    %v636 = vld [vmem:[#allocation12 + $0xe80] sm:$0xff]
    %v637 = vld [vmem:[#allocation12 + $0xe88] sm:$0xff]
    %v638 = vld [vmem:[#allocation12 + $0xe90] sm:$0xff]
    %v639 = vld [vmem:[#allocation12 + $0xe98] sm:$0xff]
    %v640 = vld [vmem:[#allocation12 + $0xea0] sm:$0xff]
    %v641 = vld [vmem:[#allocation12 + $0xea8] sm:$0xff]
    %v642 = vld [vmem:[#allocation12 + $0xeb0] sm:$0xff]
    %v643 = vld [vmem:[#allocation12 + $0xeb8] sm:$0xff]
    %v644 = vld [vmem:[#allocation12 + $0xec0] sm:$0xff]
    %v645 = vld [vmem:[#allocation12 + $0xec8] sm:$0xff]
    %v646 = vld [vmem:[#allocation12 + $0xed0] sm:$0xff]
    %v647 = vld [vmem:[#allocation12 + $0xed8] sm:$0xff]
    %v648 = vld [vmem:[#allocation12 + $0xee0] sm:$0xff]
    %v649 = vld [vmem:[#allocation12 + $0xee8] sm:$0xff]
    %v650 = vld [vmem:[#allocation12 + $0xef0] sm:$0xff]
    %v651 = vld [vmem:[#allocation12 + $0xef8] sm:$0xff]
    %v652 = vld [vmem:[#allocation12 + $0xf00] sm:$0xff]
    %v653 = vld [vmem:[#allocation12 + $0xf08] sm:$0xff]
    %v654 = vld [vmem:[#allocation12 + $0xf10] sm:$0xff]
    %v655 = vld [vmem:[#allocation12 + $0xf18] sm:$0xff]
    %v656 = vld [vmem:[#allocation12 + $0xf20] sm:$0xff]
    %v657 = vld [vmem:[#allocation12 + $0xf28] sm:$0xff]
    %v658 = vld [vmem:[#allocation12 + $0xf30] sm:$0xff]
    %v659 = vld [vmem:[#allocation12 + $0xf38] sm:$0xff]
    %v660 = vld [vmem:[#allocation12 + $0xf40] sm:$0xff]
    %v661 = vld [vmem:[#allocation12 + $0xf48] sm:$0xff]
    %v662 = vld [vmem:[#allocation12 + $0xf50] sm:$0xff]
    %v663 = vld [vmem:[#allocation12 + $0xf58] sm:$0xff]
    %v664 = vld [vmem:[#allocation12 + $0xf60] sm:$0xff]
    %v665 = vld [vmem:[#allocation12 + $0xf68] sm:$0xff]
    %v666 = vld [vmem:[#allocation12 + $0xf70] sm:$0xff]
    %v667 = vld [vmem:[#allocation12 + $0xf78] sm:$0xff]
    %v668 = vld [vmem:[#allocation12 + $0xf80] sm:$0xff]
    %v669 = vld [vmem:[#allocation12 + $0xf88] sm:$0xff]
    %v670 = vld [vmem:[#allocation12 + $0xf90] sm:$0xff]
    %v671 = vld [vmem:[#allocation12 + $0xf98] sm:$0xff]
    %v672 = vld [vmem:[#allocation12 + $0xfa0] sm:$0xff]
    %v673 = vld [vmem:[#allocation12 + $0xfa8] sm:$0xff]
    %v674 = vld [vmem:[#allocation12 + $0xfb0] sm:$0xff]
    %v675 = vld [vmem:[#allocation12 + $0xfb8] sm:$0xff]
    %v676 = vld [vmem:[#allocation12 + $0xfc0] sm:$0xff]
    %v677 = vld [vmem:[#allocation12 + $0xfc8] sm:$0xff]
    %v678 = vld [vmem:[#allocation12 + $0xfd0] sm:$0xff]
    %v679 = vld [vmem:[#allocation12 + $0xfd8] sm:$0xff]
    %v680 = vld [vmem:[#allocation12 + $0xfe0] sm:$0xff]
    %v681 = vld [vmem:[#allocation12 + $0xfe8] sm:$0xff]
    %v682 = vld [vmem:[#allocation12 + $0xff0] sm:$0xff]
    %v683 = vld [vmem:[#allocation12 + $0xff8] sm:$0xff]
    %v684 = vld [vmem:[#allocation8] sm:$0xff]
    %v685 = vld [vmem:[#allocation8 + $0x8] sm:$0xff]
    %v686 = vld [vmem:[#allocation8 + $0x10] sm:$0xff]
    %v687 = vld [vmem:[#allocation8 + $0x18] sm:$0xff]
    %v688 = vld [vmem:[#allocation12 + $0x1000] sm:$0xff]
    %v689 = vld [vmem:[#allocation12 + $0x1008] sm:$0xff]
    %v690 = vld [vmem:[#allocation12 + $0x1010] sm:$0xff]
    %v691 = vld [vmem:[#allocation12 + $0x1018] sm:$0xff]
    %v692 = vld [vmem:[#allocation12 + $0x1020] sm:$0xff]
    %v693 = vld [vmem:[#allocation12 + $0x1028] sm:$0xff]
    %v694 = vld [vmem:[#allocation12 + $0x1030] sm:$0xff]
    %v695 = vld [vmem:[#allocation12 + $0x1038] sm:$0xff]
    %v696 = vld [vmem:[#allocation12 + $0x1040] sm:$0xff]
    %v697 = vld [vmem:[#allocation12 + $0x1048] sm:$0xff]
    %v698 = vld [vmem:[#allocation12 + $0x1050] sm:$0xff]
    %v699 = vld [vmem:[#allocation12 + $0x1058] sm:$0xff]
    %v700 = vld [vmem:[#allocation12 + $0x1060] sm:$0xff]
    %v701 = vld [vmem:[#allocation12 + $0x1068] sm:$0xff]
    %v702 = vld [vmem:[#allocation12 + $0x1070] sm:$0xff]
    %v703 = vld [vmem:[#allocation12 + $0x1078] sm:$0xff]
    %v704 = vld [vmem:[#allocation12 + $0x1080] sm:$0xff]
    %v705 = vld [vmem:[#allocation12 + $0x1088] sm:$0xff]
    %v706 = vld [vmem:[#allocation12 + $0x1090] sm:$0xff]
    %v707 = vld [vmem:[#allocation12 + $0x1098] sm:$0xff]
    %v708 = vld [vmem:[#allocation12 + $0x10a0] sm:$0xff]
    %v709 = vld [vmem:[#allocation12 + $0x10a8] sm:$0xff]
    %v710 = vld [vmem:[#allocation12 + $0x10b0] sm:$0xff]
    %v711 = vld [vmem:[#allocation12 + $0x10b8] sm:$0xff]
    %v712 = vld [vmem:[#allocation12 + $0x10c0] sm:$0xff]
    %v713 = vld [vmem:[#allocation12 + $0x10c8] sm:$0xff]
    %v714 = vld [vmem:[#allocation12 + $0x10d0] sm:$0xff]
    %v715 = vld [vmem:[#allocation12 + $0x10d8] sm:$0xff]
    %v716 = vld [vmem:[#allocation12 + $0x10e0] sm:$0xff]
    %v717 = vld [vmem:[#allocation12 + $0x10e8] sm:$0xff]
    %v718 = vld [vmem:[#allocation12 + $0x10f0] sm:$0xff]
    %v719 = vld [vmem:[#allocation12 + $0x10f8] sm:$0xff]
    %v720 = vld [vmem:[#allocation12 + $0x1100] sm:$0xff]
    %v721 = vld [vmem:[#allocation12 + $0x1108] sm:$0xff]
    %v722 = vld [vmem:[#allocation12 + $0x1110] sm:$0xff]
    %v723 = vld [vmem:[#allocation12 + $0x1118] sm:$0xff]
    %v724 = vld [vmem:[#allocation12 + $0x1120] sm:$0xff]
    %v725 = vld [vmem:[#allocation12 + $0x1128] sm:$0xff]
    %v726 = vld [vmem:[#allocation12 + $0x1130] sm:$0xff]
    %v727 = vld [vmem:[#allocation12 + $0x1138] sm:$0xff]
    %v728 = vld [vmem:[#allocation12 + $0x1140] sm:$0xff]
    %v729 = vld [vmem:[#allocation12 + $0x1148] sm:$0xff]
    %v730 = vld [vmem:[#allocation12 + $0x1150] sm:$0xff]
    %v731 = vld [vmem:[#allocation12 + $0x1158] sm:$0xff]
    %v732 = vld [vmem:[#allocation12 + $0x1160] sm:$0xff]
    %v733 = vld [vmem:[#allocation12 + $0x1168] sm:$0xff]
    %v734 = vld [vmem:[#allocation12 + $0x1170] sm:$0xff]
    %v735 = vld [vmem:[#allocation12 + $0x1178] sm:$0xff]
    %v736 = vld [vmem:[#allocation12 + $0x1180] sm:$0xff]
    %v737 = vld [vmem:[#allocation12 + $0x1188] sm:$0xff]
    %v738 = vld [vmem:[#allocation12 + $0x1190] sm:$0xff]
    %v739 = vld [vmem:[#allocation12 + $0x1198] sm:$0xff]
    %v740 = vld [vmem:[#allocation12 + $0x11a0] sm:$0xff]
    %v741 = vld [vmem:[#allocation12 + $0x11a8] sm:$0xff]
    %v742 = vld [vmem:[#allocation12 + $0x11b0] sm:$0xff]
    %v743 = vld [vmem:[#allocation12 + $0x11b8] sm:$0xff]
    %v744 = vld [vmem:[#allocation12 + $0x11c0] sm:$0xff]
    %v745 = vld [vmem:[#allocation12 + $0x11c8] sm:$0xff]
    %v746 = vld [vmem:[#allocation12 + $0x11d0] sm:$0xff]
    %v747 = vld [vmem:[#allocation12 + $0x11d8] sm:$0xff]
    %v748 = vld [vmem:[#allocation12 + $0x11e0] sm:$0xff]
    %v749 = vld [vmem:[#allocation12 + $0x11e8] sm:$0xff]
    %v750 = vld [vmem:[#allocation12 + $0x11f0] sm:$0xff]
    %v751 = vld [vmem:[#allocation12 + $0x11f8] sm:$0xff]
    %v752 = vld [vmem:[#allocation12 + $0x1200] sm:$0xff]
    %v753 = vld [vmem:[#allocation12 + $0x1208] sm:$0xff]
    %v754 = vld [vmem:[#allocation12 + $0x1210] sm:$0xff]
    %v755 = vld [vmem:[#allocation12 + $0x1218] sm:$0xff]
    %v756 = vld [vmem:[#allocation12 + $0x1220] sm:$0xff]
    %v757 = vld [vmem:[#allocation12 + $0x1228] sm:$0xff]
    %v758 = vld [vmem:[#allocation12 + $0x1230] sm:$0xff]
    %v759 = vld [vmem:[#allocation12 + $0x1238] sm:$0xff]
    %v760 = vld [vmem:[#allocation12 + $0x1240] sm:$0xff]
    %v761 = vld [vmem:[#allocation12 + $0x1248] sm:$0xff]
    %v762 = vld [vmem:[#allocation12 + $0x1250] sm:$0xff]
    %v763 = vld [vmem:[#allocation12 + $0x1258] sm:$0xff]
    %v764 = vld [vmem:[#allocation12 + $0x1260] sm:$0xff]
    %v765 = vld [vmem:[#allocation12 + $0x1268] sm:$0xff]
    %v766 = vld [vmem:[#allocation12 + $0x1270] sm:$0xff]
    %v767 = vld [vmem:[#allocation12 + $0x1278] sm:$0xff]
    %v768 = vld [vmem:[#allocation12 + $0x1280] sm:$0xff]
    %v769 = vld [vmem:[#allocation12 + $0x1288] sm:$0xff]
    %v770 = vld [vmem:[#allocation12 + $0x1290] sm:$0xff]
    %v771 = vld [vmem:[#allocation12 + $0x1298] sm:$0xff]
    %v772 = vld [vmem:[#allocation12 + $0x12a0] sm:$0xff]
    %v773 = vld [vmem:[#allocation12 + $0x12a8] sm:$0xff]
    %v774 = vld [vmem:[#allocation12 + $0x12b0] sm:$0xff]
    %v775 = vld [vmem:[#allocation12 + $0x12b8] sm:$0xff]
    %v776 = vld [vmem:[#allocation12 + $0x12c0] sm:$0xff]
    %v777 = vld [vmem:[#allocation12 + $0x12c8] sm:$0xff]
    %v778 = vld [vmem:[#allocation12 + $0x12d0] sm:$0xff]
    %v779 = vld [vmem:[#allocation12 + $0x12d8] sm:$0xff]
    %v780 = vld [vmem:[#allocation12 + $0x12e0] sm:$0xff]
    %v781 = vld [vmem:[#allocation12 + $0x12e8] sm:$0xff]
    %v782 = vld [vmem:[#allocation12 + $0x12f0] sm:$0xff]
    %v783 = vld [vmem:[#allocation12 + $0x12f8] sm:$0xff]
    %v784 = vld [vmem:[#allocation12 + $0x1300] sm:$0xff]
    %v785 = vld [vmem:[#allocation12 + $0x1308] sm:$0xff]
    %v786 = vld [vmem:[#allocation12 + $0x1310] sm:$0xff]
    %v787 = vld [vmem:[#allocation12 + $0x1318] sm:$0xff]
    %v788 = vld [vmem:[#allocation12 + $0x1320] sm:$0xff]
    %v789 = vld [vmem:[#allocation12 + $0x1328] sm:$0xff]
    %v790 = vld [vmem:[#allocation12 + $0x1330] sm:$0xff]
    %v791 = vld [vmem:[#allocation12 + $0x1338] sm:$0xff]
    %v792 = vld [vmem:[#allocation12 + $0x1340] sm:$0xff]
    %v793 = vld [vmem:[#allocation12 + $0x1348] sm:$0xff]
    %v794 = vld [vmem:[#allocation12 + $0x1350] sm:$0xff]
    %v795 = vld [vmem:[#allocation12 + $0x1358] sm:$0xff]
    %v796 = vld [vmem:[#allocation12 + $0x1360] sm:$0xff]
    %v797 = vld [vmem:[#allocation12 + $0x1368] sm:$0xff]
    %v798 = vld [vmem:[#allocation12 + $0x1370] sm:$0xff]
    %v799 = vld [vmem:[#allocation12 + $0x1378] sm:$0xff]
    %v800 = vld [vmem:[#allocation12 + $0x1380] sm:$0xff]
    %v801 = vld [vmem:[#allocation12 + $0x1388] sm:$0xff]
    %v802 = vld [vmem:[#allocation12 + $0x1390] sm:$0xff]
    %v803 = vld [vmem:[#allocation12 + $0x1398] sm:$0xff]
    %v804 = vld [vmem:[#allocation12 + $0x13a0] sm:$0xff]
    %v805 = vld [vmem:[#allocation12 + $0x13a8] sm:$0xff]
    %v806 = vld [vmem:[#allocation12 + $0x13b0] sm:$0xff]
    %v807 = vld [vmem:[#allocation12 + $0x13b8] sm:$0xff]
    %v808 = vld [vmem:[#allocation12 + $0x13c0] sm:$0xff]
    %v809 = vld [vmem:[#allocation12 + $0x13c8] sm:$0xff]
    %v810 = vld [vmem:[#allocation12 + $0x13d0] sm:$0xff]
    %v811 = vld [vmem:[#allocation12 + $0x13d8] sm:$0xff]
    %v812 = vld [vmem:[#allocation12 + $0x13e0] sm:$0xff]
    %v813 = vld [vmem:[#allocation12 + $0x13e8] sm:$0xff]
    %v814 = vld [vmem:[#allocation12 + $0x13f0] sm:$0xff]
    %v815 = vld [vmem:[#allocation12 + $0x13f8] sm:$0xff]
    %v816 = vld [vmem:[#allocation12 + $0x1400] sm:$0xff]
    %v817 = vld [vmem:[#allocation12 + $0x1408] sm:$0xff]
    %v818 = vld [vmem:[#allocation12 + $0x1410] sm:$0xff]
    %v819 = vld [vmem:[#allocation12 + $0x1418] sm:$0xff]
    %v820 = vld [vmem:[#allocation12 + $0x1420] sm:$0xff]
    %v821 = vld [vmem:[#allocation12 + $0x1428] sm:$0xff]
    %v822 = vld [vmem:[#allocation12 + $0x1430] sm:$0xff]
    %v823 = vld [vmem:[#allocation12 + $0x1438] sm:$0xff]
    %v824 = vld [vmem:[#allocation12 + $0x1440] sm:$0xff]
    %v825 = vld [vmem:[#allocation12 + $0x1448] sm:$0xff]
    %v826 = vld [vmem:[#allocation12 + $0x1450] sm:$0xff]
    %v827 = vld [vmem:[#allocation12 + $0x1458] sm:$0xff]
    %v828 = vld [vmem:[#allocation12 + $0x1460] sm:$0xff]
    %v829 = vld [vmem:[#allocation12 + $0x1468] sm:$0xff]
    %v830 = vld [vmem:[#allocation12 + $0x1470] sm:$0xff]
    %v831 = vld [vmem:[#allocation12 + $0x1478] sm:$0xff]
    %v832 = vld [vmem:[#allocation12 + $0x1480] sm:$0xff]
    %v833 = vld [vmem:[#allocation12 + $0x1488] sm:$0xff]
    %v834 = vld [vmem:[#allocation12 + $0x1490] sm:$0xff]
    %v835 = vld [vmem:[#allocation12 + $0x1498] sm:$0xff]
    %v836 = vld [vmem:[#allocation12 + $0x14a0] sm:$0xff]
    %v837 = vld [vmem:[#allocation12 + $0x14a8] sm:$0xff]
    %v838 = vld [vmem:[#allocation12 + $0x14b0] sm:$0xff]
    %v839 = vld [vmem:[#allocation12 + $0x14b8] sm:$0xff]
    %v840 = vld [vmem:[#allocation12 + $0x14c0] sm:$0xff]
    %v841 = vld [vmem:[#allocation12 + $0x14c8] sm:$0xff]
    %v842 = vld [vmem:[#allocation12 + $0x14d0] sm:$0xff]
    %v843 = vld [vmem:[#allocation12 + $0x14d8] sm:$0xff]
    %v844 = vld [vmem:[#allocation12 + $0x14e0] sm:$0xff]
    %v845 = vld [vmem:[#allocation12 + $0x14e8] sm:$0xff]
    %v846 = vld [vmem:[#allocation12 + $0x14f0] sm:$0xff]
    %v847 = vld [vmem:[#allocation12 + $0x14f8] sm:$0xff]
    %v848 = vld [vmem:[#allocation12 + $0x1500] sm:$0xff]
    %v849 = vld [vmem:[#allocation12 + $0x1508] sm:$0xff]
    %v850 = vld [vmem:[#allocation12 + $0x1510] sm:$0xff]
    %v851 = vld [vmem:[#allocation12 + $0x1518] sm:$0xff]
    %v852 = vld [vmem:[#allocation12 + $0x1520] sm:$0xff]
    %v853 = vld [vmem:[#allocation12 + $0x1528] sm:$0xff]
    %v854 = vld [vmem:[#allocation12 + $0x1530] sm:$0xff]
    %v855 = vld [vmem:[#allocation12 + $0x1538] sm:$0xff]
    %v856 = vld [vmem:[#allocation12 + $0x1540] sm:$0xff]
    %v857 = vld [vmem:[#allocation12 + $0x1548] sm:$0xff]
    %v858 = vld [vmem:[#allocation12 + $0x1550] sm:$0xff]
    %v859 = vld [vmem:[#allocation12 + $0x1558] sm:$0xff]
    %v860 = vld [vmem:[#allocation12 + $0x1560] sm:$0xff]
    %v861 = vld [vmem:[#allocation12 + $0x1568] sm:$0xff]
    %v862 = vld [vmem:[#allocation12 + $0x1570] sm:$0xff]
    %v863 = vld [vmem:[#allocation12 + $0x1578] sm:$0xff]
    %v864 = vld [vmem:[#allocation12 + $0x1580] sm:$0xff]
    %v865 = vld [vmem:[#allocation12 + $0x1588] sm:$0xff]
    %v866 = vld [vmem:[#allocation12 + $0x1590] sm:$0xff]
    %v867 = vld [vmem:[#allocation12 + $0x1598] sm:$0xff]
    %v868 = vld [vmem:[#allocation12 + $0x15a0] sm:$0xff]
    %v869 = vld [vmem:[#allocation12 + $0x15a8] sm:$0xff]
    %v870 = vld [vmem:[#allocation12 + $0x15b0] sm:$0xff]
    %v871 = vld [vmem:[#allocation12 + $0x15b8] sm:$0xff]
    %v872 = vld [vmem:[#allocation12 + $0x15c0] sm:$0xff]
    %v873 = vld [vmem:[#allocation12 + $0x15c8] sm:$0xff]
    %v874 = vld [vmem:[#allocation12 + $0x15d0] sm:$0xff]
    %v875 = vld [vmem:[#allocation12 + $0x15d8] sm:$0xff]
    %v876 = vld [vmem:[#allocation12 + $0x15e0] sm:$0xff]
    %v877 = vld [vmem:[#allocation12 + $0x15e8] sm:$0xff]
    %v878 = vld [vmem:[#allocation12 + $0x15f0] sm:$0xff]
    %v879 = vld [vmem:[#allocation12 + $0x15f8] sm:$0xff]
    %v880 = vld [vmem:[#allocation12 + $0x1600] sm:$0xff]
    %v881 = vld [vmem:[#allocation12 + $0x1608] sm:$0xff]
    %v882 = vld [vmem:[#allocation12 + $0x1610] sm:$0xff]
    %v883 = vld [vmem:[#allocation12 + $0x1618] sm:$0xff]
    %v884 = vld [vmem:[#allocation12 + $0x1620] sm:$0xff]
    %v885 = vld [vmem:[#allocation12 + $0x1628] sm:$0xff]
    %v886 = vld [vmem:[#allocation12 + $0x1630] sm:$0xff]
    %v887 = vld [vmem:[#allocation12 + $0x1638] sm:$0xff]
    %v888 = vld [vmem:[#allocation12 + $0x1640] sm:$0xff]
    %v889 = vld [vmem:[#allocation12 + $0x1648] sm:$0xff]
    %v890 = vld [vmem:[#allocation12 + $0x1650] sm:$0xff]
    %v891 = vld [vmem:[#allocation12 + $0x1658] sm:$0xff]
    %v892 = vld [vmem:[#allocation12 + $0x1660] sm:$0xff]
    %v893 = vld [vmem:[#allocation12 + $0x1668] sm:$0xff]
    %v894 = vld [vmem:[#allocation12 + $0x1670] sm:$0xff]
    %v895 = vld [vmem:[#allocation12 + $0x1678] sm:$0xff]
    %v896 = vld [vmem:[#allocation12 + $0x1680] sm:$0xff]
    %v897 = vld [vmem:[#allocation12 + $0x1688] sm:$0xff]
    %v898 = vld [vmem:[#allocation12 + $0x1690] sm:$0xff]
    %v899 = vld [vmem:[#allocation12 + $0x1698] sm:$0xff]
    %v900 = vld [vmem:[#allocation12 + $0x16a0] sm:$0xff]
    %v901 = vld [vmem:[#allocation12 + $0x16a8] sm:$0xff]
    %v902 = vld [vmem:[#allocation12 + $0x16b0] sm:$0xff]
    %v903 = vld [vmem:[#allocation12 + $0x16b8] sm:$0xff]
    %v904 = vld [vmem:[#allocation12 + $0x16c0] sm:$0xff]
    %v905 = vld [vmem:[#allocation12 + $0x16c8] sm:$0xff]
    %v906 = vld [vmem:[#allocation12 + $0x16d0] sm:$0xff]
    %v907 = vld [vmem:[#allocation12 + $0x16d8] sm:$0xff]
    %v908 = vld [vmem:[#allocation12 + $0x16e0] sm:$0xff]
    %v909 = vld [vmem:[#allocation12 + $0x16e8] sm:$0xff]
    %v910 = vld [vmem:[#allocation12 + $0x16f0] sm:$0xff]
    %v911 = vld [vmem:[#allocation12 + $0x16f8] sm:$0xff]
    %v912 = vld [vmem:[#allocation12 + $0x1700] sm:$0xff]
    %v913 = vld [vmem:[#allocation12 + $0x1708] sm:$0xff]
    %v914 = vld [vmem:[#allocation12 + $0x1710] sm:$0xff]
    %v915 = vld [vmem:[#allocation12 + $0x1718] sm:$0xff]
    %v916 = vld [vmem:[#allocation12 + $0x1720] sm:$0xff]
    %v917 = vld [vmem:[#allocation12 + $0x1728] sm:$0xff]
    %v918 = vld [vmem:[#allocation12 + $0x1730] sm:$0xff]
    %v919 = vld [vmem:[#allocation12 + $0x1738] sm:$0xff]
    %v920 = vld [vmem:[#allocation12 + $0x1740] sm:$0xff]
    %v921 = vld [vmem:[#allocation12 + $0x1748] sm:$0xff]
    %v922 = vld [vmem:[#allocation12 + $0x1750] sm:$0xff]
    %v923 = vld [vmem:[#allocation12 + $0x1758] sm:$0xff]
    %v924 = vld [vmem:[#allocation12 + $0x1760] sm:$0xff]
    %v925 = vld [vmem:[#allocation12 + $0x1768] sm:$0xff]
    %v926 = vld [vmem:[#allocation12 + $0x1770] sm:$0xff]
    %v927 = vld [vmem:[#allocation12 + $0x1778] sm:$0xff]
    %v928 = vld [vmem:[#allocation12 + $0x1780] sm:$0xff]
    %v929 = vld [vmem:[#allocation12 + $0x1788] sm:$0xff]
    %v930 = vld [vmem:[#allocation12 + $0x1790] sm:$0xff]
    %v931 = vld [vmem:[#allocation12 + $0x1798] sm:$0xff]
    %v932 = vld [vmem:[#allocation12 + $0x17a0] sm:$0xff]
    %v933 = vld [vmem:[#allocation12 + $0x17a8] sm:$0xff]
    %v934 = vld [vmem:[#allocation12 + $0x17b0] sm:$0xff]
    %v935 = vld [vmem:[#allocation12 + $0x17b8] sm:$0xff]
    %v936 = vld [vmem:[#allocation12 + $0x17c0] sm:$0xff]
    %v937 = vld [vmem:[#allocation12 + $0x17c8] sm:$0xff]
    %v938 = vld [vmem:[#allocation12 + $0x17d0] sm:$0xff]
    %v939 = vld [vmem:[#allocation12 + $0x17d8] sm:$0xff]
    %v940 = vld [vmem:[#allocation12 + $0x17e0] sm:$0xff]
    %v941 = vld [vmem:[#allocation12 + $0x17e8] sm:$0xff]
    %v942 = vld [vmem:[#allocation12 + $0x17f0] sm:$0xff]
    %v943 = vld [vmem:[#allocation12 + $0x17f8] sm:$0xff]
    %v944 = vld [vmem:[#allocation12 + $0x1800] sm:$0xff]
    %v945 = vld [vmem:[#allocation12 + $0x1808] sm:$0xff]
    %v946 = vld [vmem:[#allocation12 + $0x1810] sm:$0xff]
    %v947 = vld [vmem:[#allocation12 + $0x1818] sm:$0xff]
    %v948 = vld [vmem:[#allocation12 + $0x1820] sm:$0xff]
    %v949 = vld [vmem:[#allocation12 + $0x1828] sm:$0xff]
    %v950 = vld [vmem:[#allocation12 + $0x1830] sm:$0xff]
    %v951 = vld [vmem:[#allocation12 + $0x1838] sm:$0xff]
    %v952 = vld [vmem:[#allocation12 + $0x1840] sm:$0xff]
    %v953 = vld [vmem:[#allocation12 + $0x1848] sm:$0xff]
    %v954 = vld [vmem:[#allocation12 + $0x1850] sm:$0xff]
    %v955 = vld [vmem:[#allocation12 + $0x1858] sm:$0xff]
    %v956 = vld [vmem:[#allocation12 + $0x1860] sm:$0xff]
    %v957 = vld [vmem:[#allocation12 + $0x1868] sm:$0xff]
    %v958 = vld [vmem:[#allocation12 + $0x1870] sm:$0xff]
    %v959 = vld [vmem:[#allocation12 + $0x1878] sm:$0xff]
    %v960 = vld [vmem:[#allocation12 + $0x1880] sm:$0xff]
    %v961 = vld [vmem:[#allocation12 + $0x1888] sm:$0xff]
    %v962 = vld [vmem:[#allocation12 + $0x1890] sm:$0xff]
    %v963 = vld [vmem:[#allocation12 + $0x1898] sm:$0xff]
    %v964 = vld [vmem:[#allocation12 + $0x18a0] sm:$0xff]
    %v965 = vld [vmem:[#allocation12 + $0x18a8] sm:$0xff]
    %v966 = vld [vmem:[#allocation12 + $0x18b0] sm:$0xff]
    %v967 = vld [vmem:[#allocation12 + $0x18b8] sm:$0xff]
    %v968 = vld [vmem:[#allocation12 + $0x18c0] sm:$0xff]
    %v969 = vld [vmem:[#allocation12 + $0x18c8] sm:$0xff]
    %v970 = vld [vmem:[#allocation12 + $0x18d0] sm:$0xff]
    %v971 = vld [vmem:[#allocation12 + $0x18d8] sm:$0xff]
    %v972 = vld [vmem:[#allocation12 + $0x18e0] sm:$0xff]
    %v973 = vld [vmem:[#allocation12 + $0x18e8] sm:$0xff]
    %v974 = vld [vmem:[#allocation12 + $0x18f0] sm:$0xff]
    %v975 = vld [vmem:[#allocation12 + $0x18f8] sm:$0xff]
    %v976 = vld [vmem:[#allocation12 + $0x1900] sm:$0xff]
    %v977 = vld [vmem:[#allocation12 + $0x1908] sm:$0xff]
    %v978 = vld [vmem:[#allocation12 + $0x1910] sm:$0xff]
    %v979 = vld [vmem:[#allocation12 + $0x1918] sm:$0xff]
    %v980 = vld [vmem:[#allocation12 + $0x1920] sm:$0xff]
    %v981 = vld [vmem:[#allocation12 + $0x1928] sm:$0xff]
    %v982 = vld [vmem:[#allocation12 + $0x1930] sm:$0xff]
    %v983 = vld [vmem:[#allocation12 + $0x1938] sm:$0xff]
    %v984 = vld [vmem:[#allocation12 + $0x1940] sm:$0xff]
    %v985 = vld [vmem:[#allocation12 + $0x1948] sm:$0xff]
    %v986 = vld [vmem:[#allocation12 + $0x1950] sm:$0xff]
    %v987 = vld [vmem:[#allocation12 + $0x1958] sm:$0xff]
    %v988 = vld [vmem:[#allocation12 + $0x1960] sm:$0xff]
    %v989 = vld [vmem:[#allocation12 + $0x1968] sm:$0xff]
    %v990 = vld [vmem:[#allocation12 + $0x1970] sm:$0xff]
    %v991 = vld [vmem:[#allocation12 + $0x1978] sm:$0xff]
    %v992 = vld [vmem:[#allocation12 + $0x1980] sm:$0xff]
    %v993 = vld [vmem:[#allocation12 + $0x1988] sm:$0xff]
    %v994 = vld [vmem:[#allocation12 + $0x1990] sm:$0xff]
    %v995 = vld [vmem:[#allocation12 + $0x1998] sm:$0xff]
    %v996 = vld [vmem:[#allocation12 + $0x19a0] sm:$0xff]
    %v997 = vld [vmem:[#allocation12 + $0x19a8] sm:$0xff]
    %v998 = vld [vmem:[#allocation12 + $0x19b0] sm:$0xff]
    %v999 = vld [vmem:[#allocation12 + $0x19b8] sm:$0xff]
    %v1000 = vld [vmem:[#allocation12 + $0x19c0] sm:$0xff]
    %v1001 = vld [vmem:[#allocation12 + $0x19c8] sm:$0xff]
    %v1002 = vld [vmem:[#allocation12 + $0x19d0] sm:$0xff]
    %v1003 = vld [vmem:[#allocation12 + $0x19d8] sm:$0xff]
    %v1004 = vld [vmem:[#allocation12 + $0x19e0] sm:$0xff]
    %v1005 = vld [vmem:[#allocation12 + $0x19e8] sm:$0xff]
    %v1006 = vld [vmem:[#allocation12 + $0x19f0] sm:$0xff]
    %v1007 = vld [vmem:[#allocation12 + $0x19f8] sm:$0xff]
    %v1008 = vld [vmem:[#allocation12 + $0x1a00] sm:$0xff]
    %v1009 = vld [vmem:[#allocation12 + $0x1a08] sm:$0xff]
    %v1010 = vld [vmem:[#allocation12 + $0x1a10] sm:$0xff]
    %v1011 = vld [vmem:[#allocation12 + $0x1a18] sm:$0xff]
    %v1012 = vld [vmem:[#allocation12 + $0x1a20] sm:$0xff]
    %v1013 = vld [vmem:[#allocation12 + $0x1a28] sm:$0xff]
    %v1014 = vld [vmem:[#allocation12 + $0x1a30] sm:$0xff]
    %v1015 = vld [vmem:[#allocation12 + $0x1a38] sm:$0xff]
    %v1016 = vld [vmem:[#allocation12 + $0x1a40] sm:$0xff]
    %v1017 = vld [vmem:[#allocation12 + $0x1a48] sm:$0xff]
    %v1018 = vld [vmem:[#allocation12 + $0x1a50] sm:$0xff]
    %v1019 = vld [vmem:[#allocation12 + $0x1a58] sm:$0xff]
    %v1020 = vld [vmem:[#allocation12 + $0x1a60] sm:$0xff]
    %v1021 = vld [vmem:[#allocation12 + $0x1a68] sm:$0xff]
    %v1022 = vld [vmem:[#allocation12 + $0x1a70] sm:$0xff]
    %v1023 = vld [vmem:[#allocation12 + $0x1a78] sm:$0xff]
    %v1024 = vld [vmem:[#allocation12 + $0x1a80] sm:$0xff]
    %v1025 = vld [vmem:[#allocation12 + $0x1a88] sm:$0xff]
    %v1026 = vld [vmem:[#allocation12 + $0x1a90] sm:$0xff]
    %v1027 = vld [vmem:[#allocation12 + $0x1a98] sm:$0xff]
    %v1028 = vld [vmem:[#allocation12 + $0x1aa0] sm:$0xff]
    %v1029 = vld [vmem:[#allocation12 + $0x1aa8] sm:$0xff]
    %v1030 = vld [vmem:[#allocation12 + $0x1ab0] sm:$0xff]
    %v1031 = vld [vmem:[#allocation12 + $0x1ab8] sm:$0xff]
    %v1032 = vld [vmem:[#allocation12 + $0x1ac0] sm:$0xff]
    %v1033 = vld [vmem:[#allocation12 + $0x1ac8] sm:$0xff]
    %v1034 = vld [vmem:[#allocation12 + $0x1ad0] sm:$0xff]
    %v1035 = vld [vmem:[#allocation12 + $0x1ad8] sm:$0xff]
    %v1036 = vld [vmem:[#allocation12 + $0x1ae0] sm:$0xff]
    %v1037 = vld [vmem:[#allocation12 + $0x1ae8] sm:$0xff]
    %v1038 = vld [vmem:[#allocation12 + $0x1af0] sm:$0xff]
    %v1039 = vld [vmem:[#allocation12 + $0x1af8] sm:$0xff]
    %v1040 = vld [vmem:[#allocation12 + $0x1b00] sm:$0xff]
    %v1041 = vld [vmem:[#allocation12 + $0x1b08] sm:$0xff]
    %v1042 = vld [vmem:[#allocation12 + $0x1b10] sm:$0xff]
    %v1043 = vld [vmem:[#allocation12 + $0x1b18] sm:$0xff]
    %v1044 = vld [vmem:[#allocation12 + $0x1b20] sm:$0xff]
    %v1045 = vld [vmem:[#allocation12 + $0x1b28] sm:$0xff]
    %v1046 = vld [vmem:[#allocation12 + $0x1b30] sm:$0xff]
    %v1047 = vld [vmem:[#allocation12 + $0x1b38] sm:$0xff]
    %v1048 = vld [vmem:[#allocation12 + $0x1b40] sm:$0xff]
    %v1049 = vld [vmem:[#allocation12 + $0x1b48] sm:$0xff]
    %v1050 = vld [vmem:[#allocation12 + $0x1b50] sm:$0xff]
    %v1051 = vld [vmem:[#allocation12 + $0x1b58] sm:$0xff]
    %v1052 = vld [vmem:[#allocation12 + $0x1b60] sm:$0xff]
    %v1053 = vld [vmem:[#allocation12 + $0x1b68] sm:$0xff]
    %v1054 = vld [vmem:[#allocation12 + $0x1b70] sm:$0xff]
    %v1055 = vld [vmem:[#allocation12 + $0x1b78] sm:$0xff]
    %v1056 = vld [vmem:[#allocation12 + $0x1b80] sm:$0xff]
    %v1057 = vld [vmem:[#allocation12 + $0x1b88] sm:$0xff]
    %v1058 = vld [vmem:[#allocation12 + $0x1b90] sm:$0xff]
    %v1059 = vld [vmem:[#allocation12 + $0x1b98] sm:$0xff]
    %v1060 = vld [vmem:[#allocation12 + $0x1ba0] sm:$0xff]
    %v1061 = vld [vmem:[#allocation12 + $0x1ba8] sm:$0xff]
    %v1062 = vld [vmem:[#allocation12 + $0x1bb0] sm:$0xff]
    %v1063 = vld [vmem:[#allocation12 + $0x1bb8] sm:$0xff]
    %v1064 = vld [vmem:[#allocation12 + $0x1bc0] sm:$0xff]
    %v1065 = vld [vmem:[#allocation12 + $0x1bc8] sm:$0xff]
    %v1066 = vld [vmem:[#allocation12 + $0x1bd0] sm:$0xff]
    %v1067 = vld [vmem:[#allocation12 + $0x1bd8] sm:$0xff]
    %v1068 = vld [vmem:[#allocation12 + $0x1be0] sm:$0xff]
    %v1069 = vld [vmem:[#allocation12 + $0x1be8] sm:$0xff]
    %v1070 = vld [vmem:[#allocation12 + $0x1bf0] sm:$0xff]
    %v1071 = vld [vmem:[#allocation12 + $0x1bf8] sm:$0xff]
    %v1072 = vld [vmem:[#allocation12 + $0x1c00] sm:$0xff]
    %v1073 = vld [vmem:[#allocation12 + $0x1c08] sm:$0xff]
    %v1074 = vld [vmem:[#allocation12 + $0x1c10] sm:$0xff]
    %v1075 = vld [vmem:[#allocation12 + $0x1c18] sm:$0xff]
    %v1076 = vld [vmem:[#allocation12 + $0x1c20] sm:$0xff]
    %v1077 = vld [vmem:[#allocation12 + $0x1c28] sm:$0xff]
    %v1078 = vld [vmem:[#allocation12 + $0x1c30] sm:$0xff]
    %v1079 = vld [vmem:[#allocation12 + $0x1c38] sm:$0xff]
    %v1080 = vld [vmem:[#allocation12 + $0x1c40] sm:$0xff]
    %v1081 = vld [vmem:[#allocation12 + $0x1c48] sm:$0xff]
    %v1082 = vld [vmem:[#allocation12 + $0x1c50] sm:$0xff]
    %v1083 = vld [vmem:[#allocation12 + $0x1c58] sm:$0xff]
    %v1084 = vld [vmem:[#allocation12 + $0x1c60] sm:$0xff]
    %v1085 = vld [vmem:[#allocation12 + $0x1c68] sm:$0xff]
    %v1086 = vld [vmem:[#allocation12 + $0x1c70] sm:$0xff]
    %v1087 = vld [vmem:[#allocation12 + $0x1c78] sm:$0xff]
    %v1088 = vld [vmem:[#allocation12 + $0x1c80] sm:$0xff]
    %v1089 = vld [vmem:[#allocation12 + $0x1c88] sm:$0xff]
    %v1090 = vld [vmem:[#allocation12 + $0x1c90] sm:$0xff]
    %v1091 = vld [vmem:[#allocation12 + $0x1c98] sm:$0xff]
    %v1092 = vld [vmem:[#allocation12 + $0x1ca0] sm:$0xff]
    %v1093 = vld [vmem:[#allocation12 + $0x1ca8] sm:$0xff]
    %v1094 = vld [vmem:[#allocation12 + $0x1cb0] sm:$0xff]
    %v1095 = vld [vmem:[#allocation12 + $0x1cb8] sm:$0xff]
    %v1096 = vld [vmem:[#allocation12 + $0x1cc0] sm:$0xff]
    %v1097 = vld [vmem:[#allocation12 + $0x1cc8] sm:$0xff]
    %v1098 = vld [vmem:[#allocation12 + $0x1cd0] sm:$0xff]
    %v1099 = vld [vmem:[#allocation12 + $0x1cd8] sm:$0xff]
    %v1100 = vld [vmem:[#allocation12 + $0x1ce0] sm:$0xff]
    %v1101 = vld [vmem:[#allocation12 + $0x1ce8] sm:$0xff]
    %v1102 = vld [vmem:[#allocation12 + $0x1cf0] sm:$0xff]
    %v1103 = vld [vmem:[#allocation12 + $0x1cf8] sm:$0xff]
    %v1104 = vld [vmem:[#allocation12 + $0x1d00] sm:$0xff]
    %v1105 = vld [vmem:[#allocation12 + $0x1d08] sm:$0xff]
    %v1106 = vld [vmem:[#allocation12 + $0x1d10] sm:$0xff]
    %v1107 = vld [vmem:[#allocation12 + $0x1d18] sm:$0xff]
    %v1108 = vld [vmem:[#allocation12 + $0x1d20] sm:$0xff]
    %v1109 = vld [vmem:[#allocation12 + $0x1d28] sm:$0xff]
    %v1110 = vld [vmem:[#allocation12 + $0x1d30] sm:$0xff]
    %v1111 = vld [vmem:[#allocation12 + $0x1d38] sm:$0xff]
    %v1112 = vld [vmem:[#allocation12 + $0x1d40] sm:$0xff]
    %v1113 = vld [vmem:[#allocation12 + $0x1d48] sm:$0xff]
    %v1114 = vld [vmem:[#allocation12 + $0x1d50] sm:$0xff]
    %v1115 = vld [vmem:[#allocation12 + $0x1d58] sm:$0xff]
    %v1116 = vld [vmem:[#allocation12 + $0x1d60] sm:$0xff]
    %v1117 = vld [vmem:[#allocation12 + $0x1d68] sm:$0xff]
    %v1118 = vld [vmem:[#allocation12 + $0x1d70] sm:$0xff]
    %v1119 = vld [vmem:[#allocation12 + $0x1d78] sm:$0xff]
    %v1120 = vld [vmem:[#allocation12 + $0x1d80] sm:$0xff]
    %v1121 = vld [vmem:[#allocation12 + $0x1d88] sm:$0xff]
    %v1122 = vld [vmem:[#allocation12 + $0x1d90] sm:$0xff]
    %v1123 = vld [vmem:[#allocation12 + $0x1d98] sm:$0xff]
    %v1124 = vld [vmem:[#allocation12 + $0x1da0] sm:$0xff]
    %v1125 = vld [vmem:[#allocation12 + $0x1da8] sm:$0xff]
    %v1126 = vld [vmem:[#allocation12 + $0x1db0] sm:$0xff]
    %v1127 = vld [vmem:[#allocation12 + $0x1db8] sm:$0xff]
    %v1128 = vld [vmem:[#allocation12 + $0x1dc0] sm:$0xff]
    %v1129 = vld [vmem:[#allocation12 + $0x1dc8] sm:$0xff]
    %v1130 = vld [vmem:[#allocation12 + $0x1dd0] sm:$0xff]
    %v1131 = vld [vmem:[#allocation12 + $0x1dd8] sm:$0xff]
    %v1132 = vld [vmem:[#allocation12 + $0x1de0] sm:$0xff]
    %v1133 = vld [vmem:[#allocation12 + $0x1de8] sm:$0xff]
    %v1134 = vld [vmem:[#allocation12 + $0x1df0] sm:$0xff]
    %v1135 = vld [vmem:[#allocation12 + $0x1df8] sm:$0xff]
    %v1136 = vld [vmem:[#allocation12 + $0x1e00] sm:$0xff]
    %v1137 = vld [vmem:[#allocation12 + $0x1e08] sm:$0xff]
    %v1138 = vld [vmem:[#allocation12 + $0x1e10] sm:$0xff]
    %v1139 = vld [vmem:[#allocation12 + $0x1e18] sm:$0xff]
    %v1140 = vld [vmem:[#allocation12 + $0x1e20] sm:$0xff]
    %v1141 = vld [vmem:[#allocation12 + $0x1e28] sm:$0xff]
    %v1142 = vld [vmem:[#allocation12 + $0x1e30] sm:$0xff]
    %v1143 = vld [vmem:[#allocation12 + $0x1e38] sm:$0xff]
    %v1144 = vld [vmem:[#allocation12 + $0x1e40] sm:$0xff]
    %v1145 = vld [vmem:[#allocation12 + $0x1e48] sm:$0xff]
    %v1146 = vld [vmem:[#allocation12 + $0x1e50] sm:$0xff]
    %v1147 = vld [vmem:[#allocation12 + $0x1e58] sm:$0xff]
    %v1148 = vld [vmem:[#allocation12 + $0x1e60] sm:$0xff]
    %v1149 = vld [vmem:[#allocation12 + $0x1e68] sm:$0xff]
    %v1150 = vld [vmem:[#allocation12 + $0x1e70] sm:$0xff]
    %v1151 = vld [vmem:[#allocation12 + $0x1e78] sm:$0xff]
    %v1152 = vld [vmem:[#allocation12 + $0x1e80] sm:$0xff]
    %v1153 = vld [vmem:[#allocation12 + $0x1e88] sm:$0xff]
    %v1154 = vld [vmem:[#allocation12 + $0x1e90] sm:$0xff]
    %v1155 = vld [vmem:[#allocation12 + $0x1e98] sm:$0xff]
    %v1156 = vld [vmem:[#allocation12 + $0x1ea0] sm:$0xff]
    %v1157 = vld [vmem:[#allocation12 + $0x1ea8] sm:$0xff]
    %v1158 = vld [vmem:[#allocation12 + $0x1eb0] sm:$0xff]
    %v1159 = vld [vmem:[#allocation12 + $0x1eb8] sm:$0xff]
    %v1160 = vld [vmem:[#allocation12 + $0x1ec0] sm:$0xff]
    %v1161 = vld [vmem:[#allocation12 + $0x1ec8] sm:$0xff]
    %v1162 = vld [vmem:[#allocation12 + $0x1ed0] sm:$0xff]
    %v1163 = vld [vmem:[#allocation12 + $0x1ed8] sm:$0xff]
    %v1164 = vld [vmem:[#allocation12 + $0x1ee0] sm:$0xff]
    %v1165 = vld [vmem:[#allocation12 + $0x1ee8] sm:$0xff]
    %v1166 = vld [vmem:[#allocation12 + $0x1ef0] sm:$0xff]
    %v1167 = vld [vmem:[#allocation12 + $0x1ef8] sm:$0xff]
    %v1168 = vld [vmem:[#allocation12 + $0x1f00] sm:$0xff]
    %v1169 = vld [vmem:[#allocation12 + $0x1f08] sm:$0xff]
    %v1170 = vld [vmem:[#allocation12 + $0x1f10] sm:$0xff]
    %v1171 = vld [vmem:[#allocation12 + $0x1f18] sm:$0xff]
    %v1172 = vld [vmem:[#allocation12 + $0x1f20] sm:$0xff]
    %v1173 = vld [vmem:[#allocation12 + $0x1f28] sm:$0xff]
    %v1174 = vld [vmem:[#allocation12 + $0x1f30] sm:$0xff]
    %v1175 = vld [vmem:[#allocation12 + $0x1f38] sm:$0xff]
    %v1176 = vld [vmem:[#allocation12 + $0x1f40] sm:$0xff]
    %v1177 = vld [vmem:[#allocation12 + $0x1f48] sm:$0xff]
    %v1178 = vld [vmem:[#allocation12 + $0x1f50] sm:$0xff]
    %v1179 = vld [vmem:[#allocation12 + $0x1f58] sm:$0xff]
    %v1180 = vld [vmem:[#allocation12 + $0x1f60] sm:$0xff]
    %v1181 = vld [vmem:[#allocation12 + $0x1f68] sm:$0xff]
    %v1182 = vld [vmem:[#allocation12 + $0x1f70] sm:$0xff]
    %v1183 = vld [vmem:[#allocation12 + $0x1f78] sm:$0xff]
    %v1184 = vld [vmem:[#allocation12 + $0x1f80] sm:$0xff]
    %v1185 = vld [vmem:[#allocation12 + $0x1f88] sm:$0xff]
    %v1186 = vld [vmem:[#allocation12 + $0x1f90] sm:$0xff]
    %v1187 = vld [vmem:[#allocation12 + $0x1f98] sm:$0xff]
    %v1188 = vld [vmem:[#allocation12 + $0x1fa0] sm:$0xff]
    %v1189 = vld [vmem:[#allocation12 + $0x1fa8] sm:$0xff]
    %v1190 = vld [vmem:[#allocation12 + $0x1fb0] sm:$0xff]
    %v1191 = vld [vmem:[#allocation12 + $0x1fb8] sm:$0xff]
    %v1192 = vld [vmem:[#allocation12 + $0x1fc0] sm:$0xff]
    %v1193 = vld [vmem:[#allocation12 + $0x1fc8] sm:$0xff]
    %v1194 = vld [vmem:[#allocation12 + $0x1fd0] sm:$0xff]
    %v1195 = vld [vmem:[#allocation12 + $0x1fd8] sm:$0xff]
    %v1196 = vld [vmem:[#allocation12 + $0x1fe0] sm:$0xff]
    %v1197 = vld [vmem:[#allocation12 + $0x1fe8] sm:$0xff]
    %v1198 = vld [vmem:[#allocation12 + $0x1ff0] sm:$0xff]
    %v1199 = vld [vmem:[#allocation12 + $0x1ff8] sm:$0xff]
    %v1204 = vcombine.high %v684, %v684
    %v1206 = vunpack.c.l.s4 1966171168
    %v1207 = vunpack.c.0.s8 %v1206
    %v1208 = vlaneseq
    %v1209 = vshrl.u32 %v1208, 7
    %v1210 = vsub.s32 %v1207, %v1209
    %v1211 = vrot.slane %v684, %v1210
    %v1213 = vunpack.c.l.s4 1966171168
    %v1214 = vunpack.c.0.s8 %v1213
    %v1215 = vlaneseq
    %v1216 = vshrl.u32 %v1215, 7
    %v1217 = vsub.s32 %v1214, %v1216
    %v1218 = vrot.slane %v1204, %v1217
    %v1219 = vcombine.high %v1211, %v1211
    %v1220 = vcombine.high %v1218, %v1218
    %v1222 = vunpack.c.l.s4 1966171168
    %v1223 = vunpack.c.0.s8 %v1222
    %v1224 = vlaneseq
    %v1225 = vshrl.u32 %v1224, 7
    %v1226 = vsub.s32 %v1223, %v1225
    %v1227 = vrot.slane %v1211, %v1226
    %v1229 = vunpack.c.l.s4 1966171168
    %v1230 = vunpack.c.0.s8 %v1229
    %v1231 = vlaneseq
    %v1232 = vshrl.u32 %v1231, 7
    %v1233 = vsub.s32 %v1230, %v1232
    %v1234 = vrot.slane %v1218, %v1233
    %v1236 = vunpack.c.l.s4 1966171168
    %v1237 = vunpack.c.0.s8 %v1236
    %v1238 = vlaneseq
    %v1239 = vshrl.u32 %v1238, 7
    %v1240 = vsub.s32 %v1237, %v1239
    %v1241 = vrot.slane %v1219, %v1240
    %v1243 = vunpack.c.l.s4 1966171168
    %v1244 = vunpack.c.0.s8 %v1243
    %v1245 = vlaneseq
    %v1246 = vshrl.u32 %v1245, 7
    %v1247 = vsub.s32 %v1244, %v1246
    %v1248 = vrot.slane %v1220, %v1247
    %v1249 = vcombine.high %v1227, %v1227
    %v1250 = vcombine.high %v1234, %v1234
    %v1251 = vcombine.high %v1241, %v1241
    %v1252 = vcombine.high %v1248, %v1248
    %v1253 = vcombine.high %v685, %v685
    %v1255 = vunpack.c.l.s4 1966171168
    %v1256 = vunpack.c.0.s8 %v1255
    %v1257 = vlaneseq
    %v1258 = vshrl.u32 %v1257, 7
    %v1259 = vsub.s32 %v1256, %v1258
    %v1260 = vrot.slane %v685, %v1259
    %v1262 = vunpack.c.l.s4 1966171168
    %v1263 = vunpack.c.0.s8 %v1262
    %v1264 = vlaneseq
    %v1265 = vshrl.u32 %v1264, 7
    %v1266 = vsub.s32 %v1263, %v1265
    %v1267 = vrot.slane %v1253, %v1266
    %v1268 = vcombine.high %v1260, %v1260
    %v1269 = vcombine.high %v1267, %v1267
    %v1271 = vunpack.c.l.s4 1966171168
    %v1272 = vunpack.c.0.s8 %v1271
    %v1273 = vlaneseq
    %v1274 = vshrl.u32 %v1273, 7
    %v1275 = vsub.s32 %v1272, %v1274
    %v1276 = vrot.slane %v1260, %v1275
    %v1278 = vunpack.c.l.s4 1966171168
    %v1279 = vunpack.c.0.s8 %v1278
    %v1280 = vlaneseq
    %v1281 = vshrl.u32 %v1280, 7
    %v1282 = vsub.s32 %v1279, %v1281
    %v1283 = vrot.slane %v1267, %v1282
    %v1285 = vunpack.c.l.s4 1966171168
    %v1286 = vunpack.c.0.s8 %v1285
    %v1287 = vlaneseq
    %v1288 = vshrl.u32 %v1287, 7
    %v1289 = vsub.s32 %v1286, %v1288
    %v1290 = vrot.slane %v1268, %v1289
    %v1292 = vunpack.c.l.s4 1966171168
    %v1293 = vunpack.c.0.s8 %v1292
    %v1294 = vlaneseq
    %v1295 = vshrl.u32 %v1294, 7
    %v1296 = vsub.s32 %v1293, %v1295
    %v1297 = vrot.slane %v1269, %v1296
    %v1298 = vcombine.high %v1276, %v1276
    %v1299 = vcombine.high %v1283, %v1283
    %v1300 = vcombine.high %v1290, %v1290
    %v1301 = vcombine.high %v1297, %v1297
    %v1302 = vcombine.high %v686, %v686
    %v1304 = vunpack.c.l.s4 1966171168
    %v1305 = vunpack.c.0.s8 %v1304
    %v1306 = vlaneseq
    %v1307 = vshrl.u32 %v1306, 7
    %v1308 = vsub.s32 %v1305, %v1307
    %v1309 = vrot.slane %v686, %v1308
    %v1311 = vunpack.c.l.s4 1966171168
    %v1312 = vunpack.c.0.s8 %v1311
    %v1313 = vlaneseq
    %v1314 = vshrl.u32 %v1313, 7
    %v1315 = vsub.s32 %v1312, %v1314
    %v1316 = vrot.slane %v1302, %v1315
    %v1317 = vcombine.high %v1309, %v1309
    %v1318 = vcombine.high %v1316, %v1316
    %v1320 = vunpack.c.l.s4 1966171168
    %v1321 = vunpack.c.0.s8 %v1320
    %v1322 = vlaneseq
    %v1323 = vshrl.u32 %v1322, 7
    %v1324 = vsub.s32 %v1321, %v1323
    %v1325 = vrot.slane %v1309, %v1324
    %v1327 = vunpack.c.l.s4 1966171168
    %v1328 = vunpack.c.0.s8 %v1327
    %v1329 = vlaneseq
    %v1330 = vshrl.u32 %v1329, 7
    %v1331 = vsub.s32 %v1328, %v1330
    %v1332 = vrot.slane %v1316, %v1331
    %v1334 = vunpack.c.l.s4 1966171168
    %v1335 = vunpack.c.0.s8 %v1334
    %v1336 = vlaneseq
    %v1337 = vshrl.u32 %v1336, 7
    %v1338 = vsub.s32 %v1335, %v1337
    %v1339 = vrot.slane %v1317, %v1338
    %v1341 = vunpack.c.l.s4 1966171168
    %v1342 = vunpack.c.0.s8 %v1341
    %v1343 = vlaneseq
    %v1344 = vshrl.u32 %v1343, 7
    %v1345 = vsub.s32 %v1342, %v1344
    %v1346 = vrot.slane %v1318, %v1345
    %v1347 = vcombine.high %v1325, %v1325
    %v1348 = vcombine.high %v1332, %v1332
    %v1349 = vcombine.high %v1339, %v1339
    %v1350 = vcombine.high %v1346, %v1346
    %v1351 = vcombine.high %v687, %v687
    %v1353 = vunpack.c.l.s4 1966171168
    %v1354 = vunpack.c.0.s8 %v1353
    %v1355 = vlaneseq
    %v1356 = vshrl.u32 %v1355, 7
    %v1357 = vsub.s32 %v1354, %v1356
    %v1358 = vrot.slane %v687, %v1357
    %v1360 = vunpack.c.l.s4 1966171168
    %v1361 = vunpack.c.0.s8 %v1360
    %v1362 = vlaneseq
    %v1363 = vshrl.u32 %v1362, 7
    %v1364 = vsub.s32 %v1361, %v1363
    %v1365 = vrot.slane %v1351, %v1364
    %v1366 = vcombine.high %v1358, %v1358
    %v1367 = vcombine.high %v1365, %v1365
    %v1369 = vunpack.c.l.s4 1966171168
    %v1370 = vunpack.c.0.s8 %v1369
    %v1371 = vlaneseq
    %v1372 = vshrl.u32 %v1371, 7
    %v1373 = vsub.s32 %v1370, %v1372
    %v1374 = vrot.slane %v1358, %v1373
    %v1376 = vunpack.c.l.s4 1966171168
    %v1377 = vunpack.c.0.s8 %v1376
    %v1378 = vlaneseq
    %v1379 = vshrl.u32 %v1378, 7
    %v1380 = vsub.s32 %v1377, %v1379
    %v1381 = vrot.slane %v1365, %v1380
    %v1383 = vunpack.c.l.s4 1966171168
    %v1384 = vunpack.c.0.s8 %v1383
    %v1385 = vlaneseq
    %v1386 = vshrl.u32 %v1385, 7
    %v1387 = vsub.s32 %v1384, %v1386
    %v1388 = vrot.slane %v1366, %v1387
    %v1390 = vunpack.c.l.s4 1966171168
    %v1391 = vunpack.c.0.s8 %v1390
    %v1392 = vlaneseq
    %v1393 = vshrl.u32 %v1392, 7
    %v1394 = vsub.s32 %v1391, %v1393
    %v1395 = vrot.slane %v1367, %v1394
    %v1396 = vcombine.high %v1374, %v1374
    %v1397 = vcombine.high %v1381, %v1381
    %v1398 = vcombine.high %v1388, %v1388
    %v1399 = vcombine.high %v1395, %v1395
    %v1944 = vunpack.c.l.b16 %v688
    %v1945 = vunpack.c.h.b16 %v688
    %v1946 = vunpack.c.l.b16 %v689
    %v1947 = vunpack.c.h.b16 %v689
    %v1948 = vunpack.c.l.b16 %v690
    %v1949 = vunpack.c.h.b16 %v690
    %v1950 = vunpack.c.l.b16 %v691
    %v1951 = vunpack.c.h.b16 %v691
    %v1952 = vunpack.c.l.b16 %v692
    %v1953 = vunpack.c.h.b16 %v692
    %v1954 = vunpack.c.l.b16 %v693
    %v1955 = vunpack.c.h.b16 %v693
    %v1956 = vunpack.c.l.b16 %v694
    %v1957 = vunpack.c.h.b16 %v694
    %v1958 = vunpack.c.l.b16 %v695
    %v1959 = vunpack.c.h.b16 %v695
    %v1960 = vunpack.c.l.b16 %v696
    %v1961 = vunpack.c.h.b16 %v696
    %v1962 = vunpack.c.l.b16 %v697
    %v1963 = vunpack.c.h.b16 %v697
    %v1964 = vunpack.c.l.b16 %v698
    %v1965 = vunpack.c.h.b16 %v698
    %v1966 = vunpack.c.l.b16 %v699
    %v1967 = vunpack.c.h.b16 %v699
    %v1968 = vunpack.c.l.b16 %v700
    %v1969 = vunpack.c.h.b16 %v700
    %v1970 = vunpack.c.l.b16 %v701
    %v1971 = vunpack.c.h.b16 %v701
    %v1972 = vunpack.c.l.b16 %v702
    %v1973 = vunpack.c.h.b16 %v702
    %v1974 = vunpack.c.l.b16 %v703
    %v1975 = vunpack.c.h.b16 %v703
    %v1976 = vunpack.c.l.b16 %v704
    %v1977 = vunpack.c.h.b16 %v704
    %v1978 = vunpack.c.l.b16 %v705
    %v1979 = vunpack.c.h.b16 %v705
    %v1980 = vunpack.c.l.b16 %v706
    %v1981 = vunpack.c.h.b16 %v706
    %v1982 = vunpack.c.l.b16 %v707
    %v1983 = vunpack.c.h.b16 %v707
    %v1984 = vunpack.c.l.b16 %v708
    %v1985 = vunpack.c.h.b16 %v708
    %v1986 = vunpack.c.l.b16 %v709
    %v1987 = vunpack.c.h.b16 %v709
    %v1988 = vunpack.c.l.b16 %v710
    %v1989 = vunpack.c.h.b16 %v710
    %v1990 = vunpack.c.l.b16 %v711
    %v1991 = vunpack.c.h.b16 %v711
    %v1992 = vunpack.c.l.b16 %v712
    %v1993 = vunpack.c.h.b16 %v712
    %v1994 = vunpack.c.l.b16 %v713
    %v1995 = vunpack.c.h.b16 %v713
    %v1996 = vunpack.c.l.b16 %v714
    %v1997 = vunpack.c.h.b16 %v714
    %v1998 = vunpack.c.l.b16 %v715
    %v1999 = vunpack.c.h.b16 %v715
    %v2000 = vunpack.c.l.b16 %v716
    %v2001 = vunpack.c.h.b16 %v716
    %v2002 = vunpack.c.l.b16 %v717
    %v2003 = vunpack.c.h.b16 %v717
    %v2004 = vunpack.c.l.b16 %v718
    %v2005 = vunpack.c.h.b16 %v718
    %v2006 = vunpack.c.l.b16 %v719
    %v2007 = vunpack.c.h.b16 %v719
    %v2008 = vunpack.c.l.b16 %v720
    %v2009 = vunpack.c.h.b16 %v720
    %v2010 = vunpack.c.l.b16 %v721
    %v2011 = vunpack.c.h.b16 %v721
    %v2012 = vunpack.c.l.b16 %v722
    %v2013 = vunpack.c.h.b16 %v722
    %v2014 = vunpack.c.l.b16 %v723
    %v2015 = vunpack.c.h.b16 %v723
    %v2016 = vunpack.c.l.b16 %v724
    %v2017 = vunpack.c.h.b16 %v724
    %v2018 = vunpack.c.l.b16 %v725
    %v2019 = vunpack.c.h.b16 %v725
    %v2020 = vunpack.c.l.b16 %v726
    %v2021 = vunpack.c.h.b16 %v726
    %v2022 = vunpack.c.l.b16 %v727
    %v2023 = vunpack.c.h.b16 %v727
    %v2024 = vunpack.c.l.b16 %v728
    %v2025 = vunpack.c.h.b16 %v728
    %v2026 = vunpack.c.l.b16 %v729
    %v2027 = vunpack.c.h.b16 %v729
    %v2028 = vunpack.c.l.b16 %v730
    %v2029 = vunpack.c.h.b16 %v730
    %v2030 = vunpack.c.l.b16 %v731
    %v2031 = vunpack.c.h.b16 %v731
    %v2032 = vunpack.c.l.b16 %v732
    %v2033 = vunpack.c.h.b16 %v732
    %v2034 = vunpack.c.l.b16 %v733
    %v2035 = vunpack.c.h.b16 %v733
    %v2036 = vunpack.c.l.b16 %v734
    %v2037 = vunpack.c.h.b16 %v734
    %v2038 = vunpack.c.l.b16 %v735
    %v2039 = vunpack.c.h.b16 %v735
    %v2040 = vunpack.c.l.b16 %v736
    %v2041 = vunpack.c.h.b16 %v736
    %v2042 = vunpack.c.l.b16 %v737
    %v2043 = vunpack.c.h.b16 %v737
    %v2044 = vunpack.c.l.b16 %v738
    %v2045 = vunpack.c.h.b16 %v738
    %v2046 = vunpack.c.l.b16 %v739
    %v2047 = vunpack.c.h.b16 %v739
    %v2048 = vunpack.c.l.b16 %v740
    %v2049 = vunpack.c.h.b16 %v740
    %v2050 = vunpack.c.l.b16 %v741
    %v2051 = vunpack.c.h.b16 %v741
    %v2052 = vunpack.c.l.b16 %v742
    %v2053 = vunpack.c.h.b16 %v742
    %v2054 = vunpack.c.l.b16 %v743
    %v2055 = vunpack.c.h.b16 %v743
    %v2056 = vunpack.c.l.b16 %v744
    %v2057 = vunpack.c.h.b16 %v744
    %v2058 = vunpack.c.l.b16 %v745
    %v2059 = vunpack.c.h.b16 %v745
    %v2060 = vunpack.c.l.b16 %v746
    %v2061 = vunpack.c.h.b16 %v746
    %v2062 = vunpack.c.l.b16 %v747
    %v2063 = vunpack.c.h.b16 %v747
    %v2064 = vunpack.c.l.b16 %v748
    %v2065 = vunpack.c.h.b16 %v748
    %v2066 = vunpack.c.l.b16 %v749
    %v2067 = vunpack.c.h.b16 %v749
    %v2068 = vunpack.c.l.b16 %v750
    %v2069 = vunpack.c.h.b16 %v750
    %v2070 = vunpack.c.l.b16 %v751
    %v2071 = vunpack.c.h.b16 %v751
    %v2072 = vunpack.c.l.b16 %v752
    %v2073 = vunpack.c.h.b16 %v752
    %v2074 = vunpack.c.l.b16 %v753
    %v2075 = vunpack.c.h.b16 %v753
    %v2076 = vunpack.c.l.b16 %v754
    %v2077 = vunpack.c.h.b16 %v754
    %v2078 = vunpack.c.l.b16 %v755
    %v2079 = vunpack.c.h.b16 %v755
    %v2080 = vunpack.c.l.b16 %v756
    %v2081 = vunpack.c.h.b16 %v756
    %v2082 = vunpack.c.l.b16 %v757
    %v2083 = vunpack.c.h.b16 %v757
    %v2084 = vunpack.c.l.b16 %v758
    %v2085 = vunpack.c.h.b16 %v758
    %v2086 = vunpack.c.l.b16 %v759
    %v2087 = vunpack.c.h.b16 %v759
    %v2088 = vunpack.c.l.b16 %v760
    %v2089 = vunpack.c.h.b16 %v760
    %v2090 = vunpack.c.l.b16 %v761
    %v2091 = vunpack.c.h.b16 %v761
    %v2092 = vunpack.c.l.b16 %v762
    %v2093 = vunpack.c.h.b16 %v762
    %v2094 = vunpack.c.l.b16 %v763
    %v2095 = vunpack.c.h.b16 %v763
    %v2096 = vunpack.c.l.b16 %v764
    %v2097 = vunpack.c.h.b16 %v764
    %v2098 = vunpack.c.l.b16 %v765
    %v2099 = vunpack.c.h.b16 %v765
    %v2100 = vunpack.c.l.b16 %v766
    %v2101 = vunpack.c.h.b16 %v766
    %v2102 = vunpack.c.l.b16 %v767
    %v2103 = vunpack.c.h.b16 %v767
    %v2104 = vunpack.c.l.b16 %v768
    %v2105 = vunpack.c.h.b16 %v768
    %v2106 = vunpack.c.l.b16 %v769
    %v2107 = vunpack.c.h.b16 %v769
    %v2108 = vunpack.c.l.b16 %v770
    %v2109 = vunpack.c.h.b16 %v770
    %v2110 = vunpack.c.l.b16 %v771
    %v2111 = vunpack.c.h.b16 %v771
    %v2112 = vunpack.c.l.b16 %v772
    %v2113 = vunpack.c.h.b16 %v772
    %v2114 = vunpack.c.l.b16 %v773
    %v2115 = vunpack.c.h.b16 %v773
    %v2116 = vunpack.c.l.b16 %v774
    %v2117 = vunpack.c.h.b16 %v774
    %v2118 = vunpack.c.l.b16 %v775
    %v2119 = vunpack.c.h.b16 %v775
    %v2120 = vunpack.c.l.b16 %v776
    %v2121 = vunpack.c.h.b16 %v776
    %v2122 = vunpack.c.l.b16 %v777
    %v2123 = vunpack.c.h.b16 %v777
    %v2124 = vunpack.c.l.b16 %v778
    %v2125 = vunpack.c.h.b16 %v778
    %v2126 = vunpack.c.l.b16 %v779
    %v2127 = vunpack.c.h.b16 %v779
    %v2128 = vunpack.c.l.b16 %v780
    %v2129 = vunpack.c.h.b16 %v780
    %v2130 = vunpack.c.l.b16 %v781
    %v2131 = vunpack.c.h.b16 %v781
    %v2132 = vunpack.c.l.b16 %v782
    %v2133 = vunpack.c.h.b16 %v782
    %v2134 = vunpack.c.l.b16 %v783
    %v2135 = vunpack.c.h.b16 %v783
    %v2136 = vunpack.c.l.b16 %v784
    %v2137 = vunpack.c.h.b16 %v784
    %v2138 = vunpack.c.l.b16 %v785
    %v2139 = vunpack.c.h.b16 %v785
    %v2140 = vunpack.c.l.b16 %v786
    %v2141 = vunpack.c.h.b16 %v786
    %v2142 = vunpack.c.l.b16 %v787
    %v2143 = vunpack.c.h.b16 %v787
    %v2144 = vunpack.c.l.b16 %v788
    %v2145 = vunpack.c.h.b16 %v788
    %v2146 = vunpack.c.l.b16 %v789
    %v2147 = vunpack.c.h.b16 %v789
    %v2148 = vunpack.c.l.b16 %v790
    %v2149 = vunpack.c.h.b16 %v790
    %v2150 = vunpack.c.l.b16 %v791
    %v2151 = vunpack.c.h.b16 %v791
    %v2152 = vunpack.c.l.b16 %v792
    %v2153 = vunpack.c.h.b16 %v792
    %v2154 = vunpack.c.l.b16 %v793
    %v2155 = vunpack.c.h.b16 %v793
    %v2156 = vunpack.c.l.b16 %v794
    %v2157 = vunpack.c.h.b16 %v794
    %v2158 = vunpack.c.l.b16 %v795
    %v2159 = vunpack.c.h.b16 %v795
    %v2160 = vunpack.c.l.b16 %v796
    %v2161 = vunpack.c.h.b16 %v796
    %v2162 = vunpack.c.l.b16 %v797
    %v2163 = vunpack.c.h.b16 %v797
    %v2164 = vunpack.c.l.b16 %v798
    %v2165 = vunpack.c.h.b16 %v798
    %v2166 = vunpack.c.l.b16 %v799
    %v2167 = vunpack.c.h.b16 %v799
    %v2168 = vunpack.c.l.b16 %v800
    %v2169 = vunpack.c.h.b16 %v800
    %v2170 = vunpack.c.l.b16 %v801
    %v2171 = vunpack.c.h.b16 %v801
    %v2172 = vunpack.c.l.b16 %v802
    %v2173 = vunpack.c.h.b16 %v802
    %v2174 = vunpack.c.l.b16 %v803
    %v2175 = vunpack.c.h.b16 %v803
    %v2176 = vunpack.c.l.b16 %v804
    %v2177 = vunpack.c.h.b16 %v804
    %v2178 = vunpack.c.l.b16 %v805
    %v2179 = vunpack.c.h.b16 %v805
    %v2180 = vunpack.c.l.b16 %v806
    %v2181 = vunpack.c.h.b16 %v806
    %v2182 = vunpack.c.l.b16 %v807
    %v2183 = vunpack.c.h.b16 %v807
    %v2184 = vunpack.c.l.b16 %v808
    %v2185 = vunpack.c.h.b16 %v808
    %v2186 = vunpack.c.l.b16 %v809
    %v2187 = vunpack.c.h.b16 %v809
    %v2188 = vunpack.c.l.b16 %v810
    %v2189 = vunpack.c.h.b16 %v810
    %v2190 = vunpack.c.l.b16 %v811
    %v2191 = vunpack.c.h.b16 %v811
    %v2192 = vunpack.c.l.b16 %v812
    %v2193 = vunpack.c.h.b16 %v812
    %v2194 = vunpack.c.l.b16 %v813
    %v2195 = vunpack.c.h.b16 %v813
    %v2196 = vunpack.c.l.b16 %v814
    %v2197 = vunpack.c.h.b16 %v814
    %v2198 = vunpack.c.l.b16 %v815
    %v2199 = vunpack.c.h.b16 %v815
    %v2200 = vunpack.c.l.b16 %v816
    %v2201 = vunpack.c.h.b16 %v816
    %v2202 = vunpack.c.l.b16 %v817
    %v2203 = vunpack.c.h.b16 %v817
    %v2204 = vunpack.c.l.b16 %v818
    %v2205 = vunpack.c.h.b16 %v818
    %v2206 = vunpack.c.l.b16 %v819
    %v2207 = vunpack.c.h.b16 %v819
    %v2208 = vunpack.c.l.b16 %v820
    %v2209 = vunpack.c.h.b16 %v820
    %v2210 = vunpack.c.l.b16 %v821
    %v2211 = vunpack.c.h.b16 %v821
    %v2212 = vunpack.c.l.b16 %v822
    %v2213 = vunpack.c.h.b16 %v822
    %v2214 = vunpack.c.l.b16 %v823
    %v2215 = vunpack.c.h.b16 %v823
    %v2216 = vunpack.c.l.b16 %v824
    %v2217 = vunpack.c.h.b16 %v824
    %v2218 = vunpack.c.l.b16 %v825
    %v2219 = vunpack.c.h.b16 %v825
    %v2220 = vunpack.c.l.b16 %v826
    %v2221 = vunpack.c.h.b16 %v826
    %v2222 = vunpack.c.l.b16 %v827
    %v2223 = vunpack.c.h.b16 %v827
    %v2224 = vunpack.c.l.b16 %v828
    %v2225 = vunpack.c.h.b16 %v828
    %v2226 = vunpack.c.l.b16 %v829
    %v2227 = vunpack.c.h.b16 %v829
    %v2228 = vunpack.c.l.b16 %v830
    %v2229 = vunpack.c.h.b16 %v830
    %v2230 = vunpack.c.l.b16 %v831
    %v2231 = vunpack.c.h.b16 %v831
    %v2232 = vunpack.c.l.b16 %v832
    %v2233 = vunpack.c.h.b16 %v832
    %v2234 = vunpack.c.l.b16 %v833
    %v2235 = vunpack.c.h.b16 %v833
    %v2236 = vunpack.c.l.b16 %v834
    %v2237 = vunpack.c.h.b16 %v834
    %v2238 = vunpack.c.l.b16 %v835
    %v2239 = vunpack.c.h.b16 %v835
    %v2240 = vunpack.c.l.b16 %v836
    %v2241 = vunpack.c.h.b16 %v836
    %v2242 = vunpack.c.l.b16 %v837
    %v2243 = vunpack.c.h.b16 %v837
    %v2244 = vunpack.c.l.b16 %v838
    %v2245 = vunpack.c.h.b16 %v838
    %v2246 = vunpack.c.l.b16 %v839
    %v2247 = vunpack.c.h.b16 %v839
    %v2248 = vunpack.c.l.b16 %v840
    %v2249 = vunpack.c.h.b16 %v840
    %v2250 = vunpack.c.l.b16 %v841
    %v2251 = vunpack.c.h.b16 %v841
    %v2252 = vunpack.c.l.b16 %v842
    %v2253 = vunpack.c.h.b16 %v842
    %v2254 = vunpack.c.l.b16 %v843
    %v2255 = vunpack.c.h.b16 %v843
    %v2256 = vunpack.c.l.b16 %v844
    %v2257 = vunpack.c.h.b16 %v844
    %v2258 = vunpack.c.l.b16 %v845
    %v2259 = vunpack.c.h.b16 %v845
    %v2260 = vunpack.c.l.b16 %v846
    %v2261 = vunpack.c.h.b16 %v846
    %v2262 = vunpack.c.l.b16 %v847
    %v2263 = vunpack.c.h.b16 %v847
    %v2264 = vunpack.c.l.b16 %v848
    %v2265 = vunpack.c.h.b16 %v848
    %v2266 = vunpack.c.l.b16 %v849
    %v2267 = vunpack.c.h.b16 %v849
    %v2268 = vunpack.c.l.b16 %v850
    %v2269 = vunpack.c.h.b16 %v850
    %v2270 = vunpack.c.l.b16 %v851
    %v2271 = vunpack.c.h.b16 %v851
    %v2272 = vunpack.c.l.b16 %v852
    %v2273 = vunpack.c.h.b16 %v852
    %v2274 = vunpack.c.l.b16 %v853
    %v2275 = vunpack.c.h.b16 %v853
    %v2276 = vunpack.c.l.b16 %v854
    %v2277 = vunpack.c.h.b16 %v854
    %v2278 = vunpack.c.l.b16 %v855
    %v2279 = vunpack.c.h.b16 %v855
    %v2280 = vunpack.c.l.b16 %v856
    %v2281 = vunpack.c.h.b16 %v856
    %v2282 = vunpack.c.l.b16 %v857
    %v2283 = vunpack.c.h.b16 %v857
    %v2284 = vunpack.c.l.b16 %v858
    %v2285 = vunpack.c.h.b16 %v858
    %v2286 = vunpack.c.l.b16 %v859
    %v2287 = vunpack.c.h.b16 %v859
    %v2288 = vunpack.c.l.b16 %v860
    %v2289 = vunpack.c.h.b16 %v860
    %v2290 = vunpack.c.l.b16 %v861
    %v2291 = vunpack.c.h.b16 %v861
    %v2292 = vunpack.c.l.b16 %v862
    %v2293 = vunpack.c.h.b16 %v862
    %v2294 = vunpack.c.l.b16 %v863
    %v2295 = vunpack.c.h.b16 %v863
    %v2296 = vunpack.c.l.b16 %v864
    %v2297 = vunpack.c.h.b16 %v864
    %v2298 = vunpack.c.l.b16 %v865
    %v2299 = vunpack.c.h.b16 %v865
    %v2300 = vunpack.c.l.b16 %v866
    %v2301 = vunpack.c.h.b16 %v866
    %v2302 = vunpack.c.l.b16 %v867
    %v2303 = vunpack.c.h.b16 %v867
    %v2304 = vunpack.c.l.b16 %v868
    %v2305 = vunpack.c.h.b16 %v868
    %v2306 = vunpack.c.l.b16 %v869
    %v2307 = vunpack.c.h.b16 %v869
    %v2308 = vunpack.c.l.b16 %v870
    %v2309 = vunpack.c.h.b16 %v870
    %v2310 = vunpack.c.l.b16 %v871
    %v2311 = vunpack.c.h.b16 %v871
    %v2312 = vunpack.c.l.b16 %v872
    %v2313 = vunpack.c.h.b16 %v872
    %v2314 = vunpack.c.l.b16 %v873
    %v2315 = vunpack.c.h.b16 %v873
    %v2316 = vunpack.c.l.b16 %v874
    %v2317 = vunpack.c.h.b16 %v874
    %v2318 = vunpack.c.l.b16 %v875
    %v2319 = vunpack.c.h.b16 %v875
    %v2320 = vunpack.c.l.b16 %v876
    %v2321 = vunpack.c.h.b16 %v876
    %v2322 = vunpack.c.l.b16 %v877
    %v2323 = vunpack.c.h.b16 %v877
    %v2324 = vunpack.c.l.b16 %v878
    %v2325 = vunpack.c.h.b16 %v878
    %v2326 = vunpack.c.l.b16 %v879
    %v2327 = vunpack.c.h.b16 %v879
    %v2328 = vunpack.c.l.b16 %v880
    %v2329 = vunpack.c.h.b16 %v880
    %v2330 = vunpack.c.l.b16 %v881
    %v2331 = vunpack.c.h.b16 %v881
    %v2332 = vunpack.c.l.b16 %v882
    %v2333 = vunpack.c.h.b16 %v882
    %v2334 = vunpack.c.l.b16 %v883
    %v2335 = vunpack.c.h.b16 %v883
    %v2336 = vunpack.c.l.b16 %v884
    %v2337 = vunpack.c.h.b16 %v884
    %v2338 = vunpack.c.l.b16 %v885
    %v2339 = vunpack.c.h.b16 %v885
    %v2340 = vunpack.c.l.b16 %v886
    %v2341 = vunpack.c.h.b16 %v886
    %v2342 = vunpack.c.l.b16 %v887
    %v2343 = vunpack.c.h.b16 %v887
    %v2344 = vunpack.c.l.b16 %v888
    %v2345 = vunpack.c.h.b16 %v888
    %v2346 = vunpack.c.l.b16 %v889
    %v2347 = vunpack.c.h.b16 %v889
    %v2348 = vunpack.c.l.b16 %v890
    %v2349 = vunpack.c.h.b16 %v890
    %v2350 = vunpack.c.l.b16 %v891
    %v2351 = vunpack.c.h.b16 %v891
    %v2352 = vunpack.c.l.b16 %v892
    %v2353 = vunpack.c.h.b16 %v892
    %v2354 = vunpack.c.l.b16 %v893
    %v2355 = vunpack.c.h.b16 %v893
    %v2356 = vunpack.c.l.b16 %v894
    %v2357 = vunpack.c.h.b16 %v894
    %v2358 = vunpack.c.l.b16 %v895
    %v2359 = vunpack.c.h.b16 %v895
    %v2360 = vunpack.c.l.b16 %v896
    %v2361 = vunpack.c.h.b16 %v896
    %v2362 = vunpack.c.l.b16 %v897
    %v2363 = vunpack.c.h.b16 %v897
    %v2364 = vunpack.c.l.b16 %v898
    %v2365 = vunpack.c.h.b16 %v898
    %v2366 = vunpack.c.l.b16 %v899
    %v2367 = vunpack.c.h.b16 %v899
    %v2368 = vunpack.c.l.b16 %v900
    %v2369 = vunpack.c.h.b16 %v900
    %v2370 = vunpack.c.l.b16 %v901
    %v2371 = vunpack.c.h.b16 %v901
    %v2372 = vunpack.c.l.b16 %v902
    %v2373 = vunpack.c.h.b16 %v902
    %v2374 = vunpack.c.l.b16 %v903
    %v2375 = vunpack.c.h.b16 %v903
    %v2376 = vunpack.c.l.b16 %v904
    %v2377 = vunpack.c.h.b16 %v904
    %v2378 = vunpack.c.l.b16 %v905
    %v2379 = vunpack.c.h.b16 %v905
    %v2380 = vunpack.c.l.b16 %v906
    %v2381 = vunpack.c.h.b16 %v906
    %v2382 = vunpack.c.l.b16 %v907
    %v2383 = vunpack.c.h.b16 %v907
    %v2384 = vunpack.c.l.b16 %v908
    %v2385 = vunpack.c.h.b16 %v908
    %v2386 = vunpack.c.l.b16 %v909
    %v2387 = vunpack.c.h.b16 %v909
    %v2388 = vunpack.c.l.b16 %v910
    %v2389 = vunpack.c.h.b16 %v910
    %v2390 = vunpack.c.l.b16 %v911
    %v2391 = vunpack.c.h.b16 %v911
    %v2392 = vunpack.c.l.b16 %v912
    %v2393 = vunpack.c.h.b16 %v912
    %v2394 = vunpack.c.l.b16 %v913
    %v2395 = vunpack.c.h.b16 %v913
    %v2396 = vunpack.c.l.b16 %v914
    %v2397 = vunpack.c.h.b16 %v914
    %v2398 = vunpack.c.l.b16 %v915
    %v2399 = vunpack.c.h.b16 %v915
    %v2400 = vunpack.c.l.b16 %v916
    %v2401 = vunpack.c.h.b16 %v916
    %v2402 = vunpack.c.l.b16 %v917
    %v2403 = vunpack.c.h.b16 %v917
    %v2404 = vunpack.c.l.b16 %v918
    %v2405 = vunpack.c.h.b16 %v918
    %v2406 = vunpack.c.l.b16 %v919
    %v2407 = vunpack.c.h.b16 %v919
    %v2408 = vunpack.c.l.b16 %v920
    %v2409 = vunpack.c.h.b16 %v920
    %v2410 = vunpack.c.l.b16 %v921
    %v2411 = vunpack.c.h.b16 %v921
    %v2412 = vunpack.c.l.b16 %v922
    %v2413 = vunpack.c.h.b16 %v922
    %v2414 = vunpack.c.l.b16 %v923
    %v2415 = vunpack.c.h.b16 %v923
    %v2416 = vunpack.c.l.b16 %v924
    %v2417 = vunpack.c.h.b16 %v924
    %v2418 = vunpack.c.l.b16 %v925
    %v2419 = vunpack.c.h.b16 %v925
    %v2420 = vunpack.c.l.b16 %v926
    %v2421 = vunpack.c.h.b16 %v926
    %v2422 = vunpack.c.l.b16 %v927
    %v2423 = vunpack.c.h.b16 %v927
    %v2424 = vunpack.c.l.b16 %v928
    %v2425 = vunpack.c.h.b16 %v928
    %v2426 = vunpack.c.l.b16 %v929
    %v2427 = vunpack.c.h.b16 %v929
    %v2428 = vunpack.c.l.b16 %v930
    %v2429 = vunpack.c.h.b16 %v930
    %v2430 = vunpack.c.l.b16 %v931
    %v2431 = vunpack.c.h.b16 %v931
    %v2432 = vunpack.c.l.b16 %v932
    %v2433 = vunpack.c.h.b16 %v932
    %v2434 = vunpack.c.l.b16 %v933
    %v2435 = vunpack.c.h.b16 %v933
    %v2436 = vunpack.c.l.b16 %v934
    %v2437 = vunpack.c.h.b16 %v934
    %v2438 = vunpack.c.l.b16 %v935
    %v2439 = vunpack.c.h.b16 %v935
    %v2440 = vunpack.c.l.b16 %v936
    %v2441 = vunpack.c.h.b16 %v936
    %v2442 = vunpack.c.l.b16 %v937
    %v2443 = vunpack.c.h.b16 %v937
    %v2444 = vunpack.c.l.b16 %v938
    %v2445 = vunpack.c.h.b16 %v938
    %v2446 = vunpack.c.l.b16 %v939
    %v2447 = vunpack.c.h.b16 %v939
    %v2448 = vunpack.c.l.b16 %v940
    %v2449 = vunpack.c.h.b16 %v940
    %v2450 = vunpack.c.l.b16 %v941
    %v2451 = vunpack.c.h.b16 %v941
    %v2452 = vunpack.c.l.b16 %v942
    %v2453 = vunpack.c.h.b16 %v942
    %v2454 = vunpack.c.l.b16 %v943
    %v2455 = vunpack.c.h.b16 %v943
    %v2456 = vunpack.c.l.b16 %v944
    %v2457 = vunpack.c.h.b16 %v944
    %v2458 = vunpack.c.l.b16 %v945
    %v2459 = vunpack.c.h.b16 %v945
    %v2460 = vunpack.c.l.b16 %v946
    %v2461 = vunpack.c.h.b16 %v946
    %v2462 = vunpack.c.l.b16 %v947
    %v2463 = vunpack.c.h.b16 %v947
    %v2464 = vunpack.c.l.b16 %v948
    %v2465 = vunpack.c.h.b16 %v948
    %v2466 = vunpack.c.l.b16 %v949
    %v2467 = vunpack.c.h.b16 %v949
    %v2468 = vunpack.c.l.b16 %v950
    %v2469 = vunpack.c.h.b16 %v950
    %v2470 = vunpack.c.l.b16 %v951
    %v2471 = vunpack.c.h.b16 %v951
    %v2472 = vunpack.c.l.b16 %v952
    %v2473 = vunpack.c.h.b16 %v952
    %v2474 = vunpack.c.l.b16 %v953
    %v2475 = vunpack.c.h.b16 %v953
    %v2476 = vunpack.c.l.b16 %v954
    %v2477 = vunpack.c.h.b16 %v954
    %v2478 = vunpack.c.l.b16 %v955
    %v2479 = vunpack.c.h.b16 %v955
    %v2480 = vunpack.c.l.b16 %v956
    %v2481 = vunpack.c.h.b16 %v956
    %v2482 = vunpack.c.l.b16 %v957
    %v2483 = vunpack.c.h.b16 %v957
    %v2484 = vunpack.c.l.b16 %v958
    %v2485 = vunpack.c.h.b16 %v958
    %v2486 = vunpack.c.l.b16 %v959
    %v2487 = vunpack.c.h.b16 %v959
    %v2488 = vunpack.c.l.b16 %v960
    %v2489 = vunpack.c.h.b16 %v960
    %v2490 = vunpack.c.l.b16 %v961
    %v2491 = vunpack.c.h.b16 %v961
    %v2492 = vunpack.c.l.b16 %v962
    %v2493 = vunpack.c.h.b16 %v962
    %v2494 = vunpack.c.l.b16 %v963
    %v2495 = vunpack.c.h.b16 %v963
    %v2496 = vunpack.c.l.b16 %v964
    %v2497 = vunpack.c.h.b16 %v964
    %v2498 = vunpack.c.l.b16 %v965
    %v2499 = vunpack.c.h.b16 %v965
    %v2500 = vunpack.c.l.b16 %v966
    %v2501 = vunpack.c.h.b16 %v966
    %v2502 = vunpack.c.l.b16 %v967
    %v2503 = vunpack.c.h.b16 %v967
    %v2504 = vunpack.c.l.b16 %v968
    %v2505 = vunpack.c.h.b16 %v968
    %v2506 = vunpack.c.l.b16 %v969
    %v2507 = vunpack.c.h.b16 %v969
    %v2508 = vunpack.c.l.b16 %v970
    %v2509 = vunpack.c.h.b16 %v970
    %v2510 = vunpack.c.l.b16 %v971
    %v2511 = vunpack.c.h.b16 %v971
    %v2512 = vunpack.c.l.b16 %v972
    %v2513 = vunpack.c.h.b16 %v972
    %v2514 = vunpack.c.l.b16 %v973
    %v2515 = vunpack.c.h.b16 %v973
    %v2516 = vunpack.c.l.b16 %v974
    %v2517 = vunpack.c.h.b16 %v974
    %v2518 = vunpack.c.l.b16 %v975
    %v2519 = vunpack.c.h.b16 %v975
    %v2520 = vunpack.c.l.b16 %v976
    %v2521 = vunpack.c.h.b16 %v976
    %v2522 = vunpack.c.l.b16 %v977
    %v2523 = vunpack.c.h.b16 %v977
    %v2524 = vunpack.c.l.b16 %v978
    %v2525 = vunpack.c.h.b16 %v978
    %v2526 = vunpack.c.l.b16 %v979
    %v2527 = vunpack.c.h.b16 %v979
    %v2528 = vunpack.c.l.b16 %v980
    %v2529 = vunpack.c.h.b16 %v980
    %v2530 = vunpack.c.l.b16 %v981
    %v2531 = vunpack.c.h.b16 %v981
    %v2532 = vunpack.c.l.b16 %v982
    %v2533 = vunpack.c.h.b16 %v982
    %v2534 = vunpack.c.l.b16 %v983
    %v2535 = vunpack.c.h.b16 %v983
    %v2536 = vunpack.c.l.b16 %v984
    %v2537 = vunpack.c.h.b16 %v984
    %v2538 = vunpack.c.l.b16 %v985
    %v2539 = vunpack.c.h.b16 %v985
    %v2540 = vunpack.c.l.b16 %v986
    %v2541 = vunpack.c.h.b16 %v986
    %v2542 = vunpack.c.l.b16 %v987
    %v2543 = vunpack.c.h.b16 %v987
    %v2544 = vunpack.c.l.b16 %v988
    %v2545 = vunpack.c.h.b16 %v988
    %v2546 = vunpack.c.l.b16 %v989
    %v2547 = vunpack.c.h.b16 %v989
    %v2548 = vunpack.c.l.b16 %v990
    %v2549 = vunpack.c.h.b16 %v990
    %v2550 = vunpack.c.l.b16 %v991
    %v2551 = vunpack.c.h.b16 %v991
    %v2552 = vunpack.c.l.b16 %v992
    %v2553 = vunpack.c.h.b16 %v992
    %v2554 = vunpack.c.l.b16 %v993
    %v2555 = vunpack.c.h.b16 %v993
    %v2556 = vunpack.c.l.b16 %v994
    %v2557 = vunpack.c.h.b16 %v994
    %v2558 = vunpack.c.l.b16 %v995
    %v2559 = vunpack.c.h.b16 %v995
    %v2560 = vunpack.c.l.b16 %v996
    %v2561 = vunpack.c.h.b16 %v996
    %v2562 = vunpack.c.l.b16 %v997
    %v2563 = vunpack.c.h.b16 %v997
    %v2564 = vunpack.c.l.b16 %v998
    %v2565 = vunpack.c.h.b16 %v998
    %v2566 = vunpack.c.l.b16 %v999
    %v2567 = vunpack.c.h.b16 %v999
    %v2568 = vunpack.c.l.b16 %v1000
    %v2569 = vunpack.c.h.b16 %v1000
    %v2570 = vunpack.c.l.b16 %v1001
    %v2571 = vunpack.c.h.b16 %v1001
    %v2572 = vunpack.c.l.b16 %v1002
    %v2573 = vunpack.c.h.b16 %v1002
    %v2574 = vunpack.c.l.b16 %v1003
    %v2575 = vunpack.c.h.b16 %v1003
    %v2576 = vunpack.c.l.b16 %v1004
    %v2577 = vunpack.c.h.b16 %v1004
    %v2578 = vunpack.c.l.b16 %v1005
    %v2579 = vunpack.c.h.b16 %v1005
    %v2580 = vunpack.c.l.b16 %v1006
    %v2581 = vunpack.c.h.b16 %v1006
    %v2582 = vunpack.c.l.b16 %v1007
    %v2583 = vunpack.c.h.b16 %v1007
    %v2584 = vunpack.c.l.b16 %v1008
    %v2585 = vunpack.c.h.b16 %v1008
    %v2586 = vunpack.c.l.b16 %v1009
    %v2587 = vunpack.c.h.b16 %v1009
    %v2588 = vunpack.c.l.b16 %v1010
    %v2589 = vunpack.c.h.b16 %v1010
    %v2590 = vunpack.c.l.b16 %v1011
    %v2591 = vunpack.c.h.b16 %v1011
    %v2592 = vunpack.c.l.b16 %v1012
    %v2593 = vunpack.c.h.b16 %v1012
    %v2594 = vunpack.c.l.b16 %v1013
    %v2595 = vunpack.c.h.b16 %v1013
    %v2596 = vunpack.c.l.b16 %v1014
    %v2597 = vunpack.c.h.b16 %v1014
    %v2598 = vunpack.c.l.b16 %v1015
    %v2599 = vunpack.c.h.b16 %v1015
    %v2600 = vunpack.c.l.b16 %v1016
    %v2601 = vunpack.c.h.b16 %v1016
    %v2602 = vunpack.c.l.b16 %v1017
    %v2603 = vunpack.c.h.b16 %v1017
    %v2604 = vunpack.c.l.b16 %v1018
    %v2605 = vunpack.c.h.b16 %v1018
    %v2606 = vunpack.c.l.b16 %v1019
    %v2607 = vunpack.c.h.b16 %v1019
    %v2608 = vunpack.c.l.b16 %v1020
    %v2609 = vunpack.c.h.b16 %v1020
    %v2610 = vunpack.c.l.b16 %v1021
    %v2611 = vunpack.c.h.b16 %v1021
    %v2612 = vunpack.c.l.b16 %v1022
    %v2613 = vunpack.c.h.b16 %v1022
    %v2614 = vunpack.c.l.b16 %v1023
    %v2615 = vunpack.c.h.b16 %v1023
    %v2616 = vunpack.c.l.b16 %v1024
    %v2617 = vunpack.c.h.b16 %v1024
    %v2618 = vunpack.c.l.b16 %v1025
    %v2619 = vunpack.c.h.b16 %v1025
    %v2620 = vunpack.c.l.b16 %v1026
    %v2621 = vunpack.c.h.b16 %v1026
    %v2622 = vunpack.c.l.b16 %v1027
    %v2623 = vunpack.c.h.b16 %v1027
    %v2624 = vunpack.c.l.b16 %v1028
    %v2625 = vunpack.c.h.b16 %v1028
    %v2626 = vunpack.c.l.b16 %v1029
    %v2627 = vunpack.c.h.b16 %v1029
    %v2628 = vunpack.c.l.b16 %v1030
    %v2629 = vunpack.c.h.b16 %v1030
    %v2630 = vunpack.c.l.b16 %v1031
    %v2631 = vunpack.c.h.b16 %v1031
    %v2632 = vunpack.c.l.b16 %v1032
    %v2633 = vunpack.c.h.b16 %v1032
    %v2634 = vunpack.c.l.b16 %v1033
    %v2635 = vunpack.c.h.b16 %v1033
    %v2636 = vunpack.c.l.b16 %v1034
    %v2637 = vunpack.c.h.b16 %v1034
    %v2638 = vunpack.c.l.b16 %v1035
    %v2639 = vunpack.c.h.b16 %v1035
    %v2640 = vunpack.c.l.b16 %v1036
    %v2641 = vunpack.c.h.b16 %v1036
    %v2642 = vunpack.c.l.b16 %v1037
    %v2643 = vunpack.c.h.b16 %v1037
    %v2644 = vunpack.c.l.b16 %v1038
    %v2645 = vunpack.c.h.b16 %v1038
    %v2646 = vunpack.c.l.b16 %v1039
    %v2647 = vunpack.c.h.b16 %v1039
    %v2648 = vunpack.c.l.b16 %v1040
    %v2649 = vunpack.c.h.b16 %v1040
    %v2650 = vunpack.c.l.b16 %v1041
    %v2651 = vunpack.c.h.b16 %v1041
    %v2652 = vunpack.c.l.b16 %v1042
    %v2653 = vunpack.c.h.b16 %v1042
    %v2654 = vunpack.c.l.b16 %v1043
    %v2655 = vunpack.c.h.b16 %v1043
    %v2656 = vunpack.c.l.b16 %v1044
    %v2657 = vunpack.c.h.b16 %v1044
    %v2658 = vunpack.c.l.b16 %v1045
    %v2659 = vunpack.c.h.b16 %v1045
    %v2660 = vunpack.c.l.b16 %v1046
    %v2661 = vunpack.c.h.b16 %v1046
    %v2662 = vunpack.c.l.b16 %v1047
    %v2663 = vunpack.c.h.b16 %v1047
    %v2664 = vunpack.c.l.b16 %v1048
    %v2665 = vunpack.c.h.b16 %v1048
    %v2666 = vunpack.c.l.b16 %v1049
    %v2667 = vunpack.c.h.b16 %v1049
    %v2668 = vunpack.c.l.b16 %v1050
    %v2669 = vunpack.c.h.b16 %v1050
    %v2670 = vunpack.c.l.b16 %v1051
    %v2671 = vunpack.c.h.b16 %v1051
    %v2672 = vunpack.c.l.b16 %v1052
    %v2673 = vunpack.c.h.b16 %v1052
    %v2674 = vunpack.c.l.b16 %v1053
    %v2675 = vunpack.c.h.b16 %v1053
    %v2676 = vunpack.c.l.b16 %v1054
    %v2677 = vunpack.c.h.b16 %v1054
    %v2678 = vunpack.c.l.b16 %v1055
    %v2679 = vunpack.c.h.b16 %v1055
    %v2680 = vunpack.c.l.b16 %v1056
    %v2681 = vunpack.c.h.b16 %v1056
    %v2682 = vunpack.c.l.b16 %v1057
    %v2683 = vunpack.c.h.b16 %v1057
    %v2684 = vunpack.c.l.b16 %v1058
    %v2685 = vunpack.c.h.b16 %v1058
    %v2686 = vunpack.c.l.b16 %v1059
    %v2687 = vunpack.c.h.b16 %v1059
    %v2688 = vunpack.c.l.b16 %v1060
    %v2689 = vunpack.c.h.b16 %v1060
    %v2690 = vunpack.c.l.b16 %v1061
    %v2691 = vunpack.c.h.b16 %v1061
    %v2692 = vunpack.c.l.b16 %v1062
    %v2693 = vunpack.c.h.b16 %v1062
    %v2694 = vunpack.c.l.b16 %v1063
    %v2695 = vunpack.c.h.b16 %v1063
    %v2696 = vunpack.c.l.b16 %v1064
    %v2697 = vunpack.c.h.b16 %v1064
    %v2698 = vunpack.c.l.b16 %v1065
    %v2699 = vunpack.c.h.b16 %v1065
    %v2700 = vunpack.c.l.b16 %v1066
    %v2701 = vunpack.c.h.b16 %v1066
    %v2702 = vunpack.c.l.b16 %v1067
    %v2703 = vunpack.c.h.b16 %v1067
    %v2704 = vunpack.c.l.b16 %v1068
    %v2705 = vunpack.c.h.b16 %v1068
    %v2706 = vunpack.c.l.b16 %v1069
    %v2707 = vunpack.c.h.b16 %v1069
    %v2708 = vunpack.c.l.b16 %v1070
    %v2709 = vunpack.c.h.b16 %v1070
    %v2710 = vunpack.c.l.b16 %v1071
    %v2711 = vunpack.c.h.b16 %v1071
    %v2712 = vunpack.c.l.b16 %v1072
    %v2713 = vunpack.c.h.b16 %v1072
    %v2714 = vunpack.c.l.b16 %v1073
    %v2715 = vunpack.c.h.b16 %v1073
    %v2716 = vunpack.c.l.b16 %v1074
    %v2717 = vunpack.c.h.b16 %v1074
    %v2718 = vunpack.c.l.b16 %v1075
    %v2719 = vunpack.c.h.b16 %v1075
    %v2720 = vunpack.c.l.b16 %v1076
    %v2721 = vunpack.c.h.b16 %v1076
    %v2722 = vunpack.c.l.b16 %v1077
    %v2723 = vunpack.c.h.b16 %v1077
    %v2724 = vunpack.c.l.b16 %v1078
    %v2725 = vunpack.c.h.b16 %v1078
    %v2726 = vunpack.c.l.b16 %v1079
    %v2727 = vunpack.c.h.b16 %v1079
    %v2728 = vunpack.c.l.b16 %v1080
    %v2729 = vunpack.c.h.b16 %v1080
    %v2730 = vunpack.c.l.b16 %v1081
    %v2731 = vunpack.c.h.b16 %v1081
    %v2732 = vunpack.c.l.b16 %v1082
    %v2733 = vunpack.c.h.b16 %v1082
    %v2734 = vunpack.c.l.b16 %v1083
    %v2735 = vunpack.c.h.b16 %v1083
    %v2736 = vunpack.c.l.b16 %v1084
    %v2737 = vunpack.c.h.b16 %v1084
    %v2738 = vunpack.c.l.b16 %v1085
    %v2739 = vunpack.c.h.b16 %v1085
    %v2740 = vunpack.c.l.b16 %v1086
    %v2741 = vunpack.c.h.b16 %v1086
    %v2742 = vunpack.c.l.b16 %v1087
    %v2743 = vunpack.c.h.b16 %v1087
    %v2744 = vunpack.c.l.b16 %v1088
    %v2745 = vunpack.c.h.b16 %v1088
    %v2746 = vunpack.c.l.b16 %v1089
    %v2747 = vunpack.c.h.b16 %v1089
    %v2748 = vunpack.c.l.b16 %v1090
    %v2749 = vunpack.c.h.b16 %v1090
    %v2750 = vunpack.c.l.b16 %v1091
    %v2751 = vunpack.c.h.b16 %v1091
    %v2752 = vunpack.c.l.b16 %v1092
    %v2753 = vunpack.c.h.b16 %v1092
    %v2754 = vunpack.c.l.b16 %v1093
    %v2755 = vunpack.c.h.b16 %v1093
    %v2756 = vunpack.c.l.b16 %v1094
    %v2757 = vunpack.c.h.b16 %v1094
    %v2758 = vunpack.c.l.b16 %v1095
    %v2759 = vunpack.c.h.b16 %v1095
    %v2760 = vunpack.c.l.b16 %v1096
    %v2761 = vunpack.c.h.b16 %v1096
    %v2762 = vunpack.c.l.b16 %v1097
    %v2763 = vunpack.c.h.b16 %v1097
    %v2764 = vunpack.c.l.b16 %v1098
    %v2765 = vunpack.c.h.b16 %v1098
    %v2766 = vunpack.c.l.b16 %v1099
    %v2767 = vunpack.c.h.b16 %v1099
    %v2768 = vunpack.c.l.b16 %v1100
    %v2769 = vunpack.c.h.b16 %v1100
    %v2770 = vunpack.c.l.b16 %v1101
    %v2771 = vunpack.c.h.b16 %v1101
    %v2772 = vunpack.c.l.b16 %v1102
    %v2773 = vunpack.c.h.b16 %v1102
    %v2774 = vunpack.c.l.b16 %v1103
    %v2775 = vunpack.c.h.b16 %v1103
    %v2776 = vunpack.c.l.b16 %v1104
    %v2777 = vunpack.c.h.b16 %v1104
    %v2778 = vunpack.c.l.b16 %v1105
    %v2779 = vunpack.c.h.b16 %v1105
    %v2780 = vunpack.c.l.b16 %v1106
    %v2781 = vunpack.c.h.b16 %v1106
    %v2782 = vunpack.c.l.b16 %v1107
    %v2783 = vunpack.c.h.b16 %v1107
    %v2784 = vunpack.c.l.b16 %v1108
    %v2785 = vunpack.c.h.b16 %v1108
    %v2786 = vunpack.c.l.b16 %v1109
    %v2787 = vunpack.c.h.b16 %v1109
    %v2788 = vunpack.c.l.b16 %v1110
    %v2789 = vunpack.c.h.b16 %v1110
    %v2790 = vunpack.c.l.b16 %v1111
    %v2791 = vunpack.c.h.b16 %v1111
    %v2792 = vunpack.c.l.b16 %v1112
    %v2793 = vunpack.c.h.b16 %v1112
    %v2794 = vunpack.c.l.b16 %v1113
    %v2795 = vunpack.c.h.b16 %v1113
    %v2796 = vunpack.c.l.b16 %v1114
    %v2797 = vunpack.c.h.b16 %v1114
    %v2798 = vunpack.c.l.b16 %v1115
    %v2799 = vunpack.c.h.b16 %v1115
    %v2800 = vunpack.c.l.b16 %v1116
    %v2801 = vunpack.c.h.b16 %v1116
    %v2802 = vunpack.c.l.b16 %v1117
    %v2803 = vunpack.c.h.b16 %v1117
    %v2804 = vunpack.c.l.b16 %v1118
    %v2805 = vunpack.c.h.b16 %v1118
    %v2806 = vunpack.c.l.b16 %v1119
    %v2807 = vunpack.c.h.b16 %v1119
    %v2808 = vunpack.c.l.b16 %v1120
    %v2809 = vunpack.c.h.b16 %v1120
    %v2810 = vunpack.c.l.b16 %v1121
    %v2811 = vunpack.c.h.b16 %v1121
    %v2812 = vunpack.c.l.b16 %v1122
    %v2813 = vunpack.c.h.b16 %v1122
    %v2814 = vunpack.c.l.b16 %v1123
    %v2815 = vunpack.c.h.b16 %v1123
    %v2816 = vunpack.c.l.b16 %v1124
    %v2817 = vunpack.c.h.b16 %v1124
    %v2818 = vunpack.c.l.b16 %v1125
    %v2819 = vunpack.c.h.b16 %v1125
    %v2820 = vunpack.c.l.b16 %v1126
    %v2821 = vunpack.c.h.b16 %v1126
    %v2822 = vunpack.c.l.b16 %v1127
    %v2823 = vunpack.c.h.b16 %v1127
    %v2824 = vunpack.c.l.b16 %v1128
    %v2825 = vunpack.c.h.b16 %v1128
    %v2826 = vunpack.c.l.b16 %v1129
    %v2827 = vunpack.c.h.b16 %v1129
    %v2828 = vunpack.c.l.b16 %v1130
    %v2829 = vunpack.c.h.b16 %v1130
    %v2830 = vunpack.c.l.b16 %v1131
    %v2831 = vunpack.c.h.b16 %v1131
    %v2832 = vunpack.c.l.b16 %v1132
    %v2833 = vunpack.c.h.b16 %v1132
    %v2834 = vunpack.c.l.b16 %v1133
    %v2835 = vunpack.c.h.b16 %v1133
    %v2836 = vunpack.c.l.b16 %v1134
    %v2837 = vunpack.c.h.b16 %v1134
    %v2838 = vunpack.c.l.b16 %v1135
    %v2839 = vunpack.c.h.b16 %v1135
    %v2840 = vunpack.c.l.b16 %v1136
    %v2841 = vunpack.c.h.b16 %v1136
    %v2842 = vunpack.c.l.b16 %v1137
    %v2843 = vunpack.c.h.b16 %v1137
    %v2844 = vunpack.c.l.b16 %v1138
    %v2845 = vunpack.c.h.b16 %v1138
    %v2846 = vunpack.c.l.b16 %v1139
    %v2847 = vunpack.c.h.b16 %v1139
    %v2848 = vunpack.c.l.b16 %v1140
    %v2849 = vunpack.c.h.b16 %v1140
    %v2850 = vunpack.c.l.b16 %v1141
    %v2851 = vunpack.c.h.b16 %v1141
    %v2852 = vunpack.c.l.b16 %v1142
    %v2853 = vunpack.c.h.b16 %v1142
    %v2854 = vunpack.c.l.b16 %v1143
    %v2855 = vunpack.c.h.b16 %v1143
    %v2856 = vunpack.c.l.b16 %v1144
    %v2857 = vunpack.c.h.b16 %v1144
    %v2858 = vunpack.c.l.b16 %v1145
    %v2859 = vunpack.c.h.b16 %v1145
    %v2860 = vunpack.c.l.b16 %v1146
    %v2861 = vunpack.c.h.b16 %v1146
    %v2862 = vunpack.c.l.b16 %v1147
    %v2863 = vunpack.c.h.b16 %v1147
    %v2864 = vunpack.c.l.b16 %v1148
    %v2865 = vunpack.c.h.b16 %v1148
    %v2866 = vunpack.c.l.b16 %v1149
    %v2867 = vunpack.c.h.b16 %v1149
    %v2868 = vunpack.c.l.b16 %v1150
    %v2869 = vunpack.c.h.b16 %v1150
    %v2870 = vunpack.c.l.b16 %v1151
    %v2871 = vunpack.c.h.b16 %v1151
    %v2872 = vunpack.c.l.b16 %v1152
    %v2873 = vunpack.c.h.b16 %v1152
    %v2874 = vunpack.c.l.b16 %v1153
    %v2875 = vunpack.c.h.b16 %v1153
    %v2876 = vunpack.c.l.b16 %v1154
    %v2877 = vunpack.c.h.b16 %v1154
    %v2878 = vunpack.c.l.b16 %v1155
    %v2879 = vunpack.c.h.b16 %v1155
    %v2880 = vunpack.c.l.b16 %v1156
    %v2881 = vunpack.c.h.b16 %v1156
    %v2882 = vunpack.c.l.b16 %v1157
    %v2883 = vunpack.c.h.b16 %v1157
    %v2884 = vunpack.c.l.b16 %v1158
    %v2885 = vunpack.c.h.b16 %v1158
    %v2886 = vunpack.c.l.b16 %v1159
    %v2887 = vunpack.c.h.b16 %v1159
    %v2888 = vunpack.c.l.b16 %v1160
    %v2889 = vunpack.c.h.b16 %v1160
    %v2890 = vunpack.c.l.b16 %v1161
    %v2891 = vunpack.c.h.b16 %v1161
    %v2892 = vunpack.c.l.b16 %v1162
    %v2893 = vunpack.c.h.b16 %v1162
    %v2894 = vunpack.c.l.b16 %v1163
    %v2895 = vunpack.c.h.b16 %v1163
    %v2896 = vunpack.c.l.b16 %v1164
    %v2897 = vunpack.c.h.b16 %v1164
    %v2898 = vunpack.c.l.b16 %v1165
    %v2899 = vunpack.c.h.b16 %v1165
    %v2900 = vunpack.c.l.b16 %v1166
    %v2901 = vunpack.c.h.b16 %v1166
    %v2902 = vunpack.c.l.b16 %v1167
    %v2903 = vunpack.c.h.b16 %v1167
    %v2904 = vunpack.c.l.b16 %v1168
    %v2905 = vunpack.c.h.b16 %v1168
    %v2906 = vunpack.c.l.b16 %v1169
    %v2907 = vunpack.c.h.b16 %v1169
    %v2908 = vunpack.c.l.b16 %v1170
    %v2909 = vunpack.c.h.b16 %v1170
    %v2910 = vunpack.c.l.b16 %v1171
    %v2911 = vunpack.c.h.b16 %v1171
    %v2912 = vunpack.c.l.b16 %v1172
    %v2913 = vunpack.c.h.b16 %v1172
    %v2914 = vunpack.c.l.b16 %v1173
    %v2915 = vunpack.c.h.b16 %v1173
    %v2916 = vunpack.c.l.b16 %v1174
    %v2917 = vunpack.c.h.b16 %v1174
    %v2918 = vunpack.c.l.b16 %v1175
    %v2919 = vunpack.c.h.b16 %v1175
    %v2920 = vunpack.c.l.b16 %v1176
    %v2921 = vunpack.c.h.b16 %v1176
    %v2922 = vunpack.c.l.b16 %v1177
    %v2923 = vunpack.c.h.b16 %v1177
    %v2924 = vunpack.c.l.b16 %v1178
    %v2925 = vunpack.c.h.b16 %v1178
    %v2926 = vunpack.c.l.b16 %v1179
    %v2927 = vunpack.c.h.b16 %v1179
    %v2928 = vunpack.c.l.b16 %v1180
    %v2929 = vunpack.c.h.b16 %v1180
    %v2930 = vunpack.c.l.b16 %v1181
    %v2931 = vunpack.c.h.b16 %v1181
    %v2932 = vunpack.c.l.b16 %v1182
    %v2933 = vunpack.c.h.b16 %v1182
    %v2934 = vunpack.c.l.b16 %v1183
    %v2935 = vunpack.c.h.b16 %v1183
    %v2936 = vunpack.c.l.b16 %v1184
    %v2937 = vunpack.c.h.b16 %v1184
    %v2938 = vunpack.c.l.b16 %v1185
    %v2939 = vunpack.c.h.b16 %v1185
    %v2940 = vunpack.c.l.b16 %v1186
    %v2941 = vunpack.c.h.b16 %v1186
    %v2942 = vunpack.c.l.b16 %v1187
    %v2943 = vunpack.c.h.b16 %v1187
    %v2944 = vunpack.c.l.b16 %v1188
    %v2945 = vunpack.c.h.b16 %v1188
    %v2946 = vunpack.c.l.b16 %v1189
    %v2947 = vunpack.c.h.b16 %v1189
    %v2948 = vunpack.c.l.b16 %v1190
    %v2949 = vunpack.c.h.b16 %v1190
    %v2950 = vunpack.c.l.b16 %v1191
    %v2951 = vunpack.c.h.b16 %v1191
    %v2952 = vunpack.c.l.b16 %v1192
    %v2953 = vunpack.c.h.b16 %v1192
    %v2954 = vunpack.c.l.b16 %v1193
    %v2955 = vunpack.c.h.b16 %v1193
    %v2956 = vunpack.c.l.b16 %v1194
    %v2957 = vunpack.c.h.b16 %v1194
    %v2958 = vunpack.c.l.b16 %v1195
    %v2959 = vunpack.c.h.b16 %v1195
    %v2960 = vunpack.c.l.b16 %v1196
    %v2961 = vunpack.c.h.b16 %v1196
    %v2962 = vunpack.c.l.b16 %v1197
    %v2963 = vunpack.c.h.b16 %v1197
    %v2964 = vunpack.c.l.b16 %v1198
    %v2965 = vunpack.c.h.b16 %v1198
    %v2966 = vunpack.c.l.b16 %v1199
    %v2967 = vunpack.c.h.b16 %v1199
    %v2968 = vpack.c.b16 %v1946, %v1944
    %v2969 = vpack.c.b16 %v1947, %v1945
    %v2970 = vpack.c.b16 %v1950, %v1948
    %v2971 = vpack.c.b16 %v1951, %v1949
    %v2972 = vpack.c.b16 %v1954, %v1952
    %v2973 = vpack.c.b16 %v1955, %v1953
    %v2974 = vpack.c.b16 %v1958, %v1956
    %v2975 = vpack.c.b16 %v1959, %v1957
    %v2976 = vpack.c.b16 %v1962, %v1960
    %v2977 = vpack.c.b16 %v1963, %v1961
    %v2978 = vpack.c.b16 %v1966, %v1964
    %v2979 = vpack.c.b16 %v1967, %v1965
    %v2980 = vpack.c.b16 %v1970, %v1968
    %v2981 = vpack.c.b16 %v1971, %v1969
    %v2982 = vpack.c.b16 %v1974, %v1972
    %v2983 = vpack.c.b16 %v1975, %v1973
    %v2984 = vpack.c.b16 %v1978, %v1976
    %v2985 = vpack.c.b16 %v1979, %v1977
    %v2986 = vpack.c.b16 %v1982, %v1980
    %v2987 = vpack.c.b16 %v1983, %v1981
    %v2988 = vpack.c.b16 %v1986, %v1984
    %v2989 = vpack.c.b16 %v1987, %v1985
    %v2990 = vpack.c.b16 %v1990, %v1988
    %v2991 = vpack.c.b16 %v1991, %v1989
    %v2992 = vpack.c.b16 %v1994, %v1992
    %v2993 = vpack.c.b16 %v1995, %v1993
    %v2994 = vpack.c.b16 %v1998, %v1996
    %v2995 = vpack.c.b16 %v1999, %v1997
    %v2996 = vpack.c.b16 %v2002, %v2000
    %v2997 = vpack.c.b16 %v2003, %v2001
    %v2998 = vpack.c.b16 %v2006, %v2004
    %v2999 = vpack.c.b16 %v2007, %v2005
    %v3000 = vpack.c.b16 %v2010, %v2008
    %v3001 = vpack.c.b16 %v2011, %v2009
    %v3002 = vpack.c.b16 %v2014, %v2012
    %v3003 = vpack.c.b16 %v2015, %v2013
    %v3004 = vpack.c.b16 %v2018, %v2016
    %v3005 = vpack.c.b16 %v2019, %v2017
    %v3006 = vpack.c.b16 %v2022, %v2020
    %v3007 = vpack.c.b16 %v2023, %v2021
    %v3008 = vpack.c.b16 %v2026, %v2024
    %v3009 = vpack.c.b16 %v2027, %v2025
    %v3010 = vpack.c.b16 %v2030, %v2028
    %v3011 = vpack.c.b16 %v2031, %v2029
    %v3012 = vpack.c.b16 %v2034, %v2032
    %v3013 = vpack.c.b16 %v2035, %v2033
    %v3014 = vpack.c.b16 %v2038, %v2036
    %v3015 = vpack.c.b16 %v2039, %v2037
    %v3016 = vpack.c.b16 %v2042, %v2040
    %v3017 = vpack.c.b16 %v2043, %v2041
    %v3018 = vpack.c.b16 %v2046, %v2044
    %v3019 = vpack.c.b16 %v2047, %v2045
    %v3020 = vpack.c.b16 %v2050, %v2048
    %v3021 = vpack.c.b16 %v2051, %v2049
    %v3022 = vpack.c.b16 %v2054, %v2052
    %v3023 = vpack.c.b16 %v2055, %v2053
    %v3024 = vpack.c.b16 %v2058, %v2056
    %v3025 = vpack.c.b16 %v2059, %v2057
    %v3026 = vpack.c.b16 %v2062, %v2060
    %v3027 = vpack.c.b16 %v2063, %v2061
    %v3028 = vpack.c.b16 %v2066, %v2064
    %v3029 = vpack.c.b16 %v2067, %v2065
    %v3030 = vpack.c.b16 %v2070, %v2068
    %v3031 = vpack.c.b16 %v2071, %v2069
    %v3032 = vpack.c.b16 %v2074, %v2072
    %v3033 = vpack.c.b16 %v2075, %v2073
    %v3034 = vpack.c.b16 %v2078, %v2076
    %v3035 = vpack.c.b16 %v2079, %v2077
    %v3036 = vpack.c.b16 %v2082, %v2080
    %v3037 = vpack.c.b16 %v2083, %v2081
    %v3038 = vpack.c.b16 %v2086, %v2084
    %v3039 = vpack.c.b16 %v2087, %v2085
    %v3040 = vpack.c.b16 %v2090, %v2088
    %v3041 = vpack.c.b16 %v2091, %v2089
    %v3042 = vpack.c.b16 %v2094, %v2092
    %v3043 = vpack.c.b16 %v2095, %v2093
    %v3044 = vpack.c.b16 %v2098, %v2096
    %v3045 = vpack.c.b16 %v2099, %v2097
    %v3046 = vpack.c.b16 %v2102, %v2100
    %v3047 = vpack.c.b16 %v2103, %v2101
    %v3048 = vpack.c.b16 %v2106, %v2104
    %v3049 = vpack.c.b16 %v2107, %v2105
    %v3050 = vpack.c.b16 %v2110, %v2108
    %v3051 = vpack.c.b16 %v2111, %v2109
    %v3052 = vpack.c.b16 %v2114, %v2112
    %v3053 = vpack.c.b16 %v2115, %v2113
    %v3054 = vpack.c.b16 %v2118, %v2116
    %v3055 = vpack.c.b16 %v2119, %v2117
    %v3056 = vpack.c.b16 %v2122, %v2120
    %v3057 = vpack.c.b16 %v2123, %v2121
    %v3058 = vpack.c.b16 %v2126, %v2124
    %v3059 = vpack.c.b16 %v2127, %v2125
    %v3060 = vpack.c.b16 %v2130, %v2128
    %v3061 = vpack.c.b16 %v2131, %v2129
    %v3062 = vpack.c.b16 %v2134, %v2132
    %v3063 = vpack.c.b16 %v2135, %v2133
    %v3064 = vpack.c.b16 %v2138, %v2136
    %v3065 = vpack.c.b16 %v2139, %v2137
    %v3066 = vpack.c.b16 %v2142, %v2140
    %v3067 = vpack.c.b16 %v2143, %v2141
    %v3068 = vpack.c.b16 %v2146, %v2144
    %v3069 = vpack.c.b16 %v2147, %v2145
    %v3070 = vpack.c.b16 %v2150, %v2148
    %v3071 = vpack.c.b16 %v2151, %v2149
    %v3072 = vpack.c.b16 %v2154, %v2152
    %v3073 = vpack.c.b16 %v2155, %v2153
    %v3074 = vpack.c.b16 %v2158, %v2156
    %v3075 = vpack.c.b16 %v2159, %v2157
    %v3076 = vpack.c.b16 %v2162, %v2160
    %v3077 = vpack.c.b16 %v2163, %v2161
    %v3078 = vpack.c.b16 %v2166, %v2164
    %v3079 = vpack.c.b16 %v2167, %v2165
    %v3080 = vpack.c.b16 %v2170, %v2168
    %v3081 = vpack.c.b16 %v2171, %v2169
    %v3082 = vpack.c.b16 %v2174, %v2172
    %v3083 = vpack.c.b16 %v2175, %v2173
    %v3084 = vpack.c.b16 %v2178, %v2176
    %v3085 = vpack.c.b16 %v2179, %v2177
    %v3086 = vpack.c.b16 %v2182, %v2180
    %v3087 = vpack.c.b16 %v2183, %v2181
    %v3088 = vpack.c.b16 %v2186, %v2184
    %v3089 = vpack.c.b16 %v2187, %v2185
    %v3090 = vpack.c.b16 %v2190, %v2188
    %v3091 = vpack.c.b16 %v2191, %v2189
    %v3092 = vpack.c.b16 %v2194, %v2192
    %v3093 = vpack.c.b16 %v2195, %v2193
    %v3094 = vpack.c.b16 %v2198, %v2196
    %v3095 = vpack.c.b16 %v2199, %v2197
    %v3096 = vpack.c.b16 %v2202, %v2200
    %v3097 = vpack.c.b16 %v2203, %v2201
    %v3098 = vpack.c.b16 %v2206, %v2204
    %v3099 = vpack.c.b16 %v2207, %v2205
    %v3100 = vpack.c.b16 %v2210, %v2208
    %v3101 = vpack.c.b16 %v2211, %v2209
    %v3102 = vpack.c.b16 %v2214, %v2212
    %v3103 = vpack.c.b16 %v2215, %v2213
    %v3104 = vpack.c.b16 %v2218, %v2216
    %v3105 = vpack.c.b16 %v2219, %v2217
    %v3106 = vpack.c.b16 %v2222, %v2220
    %v3107 = vpack.c.b16 %v2223, %v2221
    %v3108 = vpack.c.b16 %v2226, %v2224
    %v3109 = vpack.c.b16 %v2227, %v2225
    %v3110 = vpack.c.b16 %v2230, %v2228
    %v3111 = vpack.c.b16 %v2231, %v2229
    %v3112 = vpack.c.b16 %v2234, %v2232
    %v3113 = vpack.c.b16 %v2235, %v2233
    %v3114 = vpack.c.b16 %v2238, %v2236
    %v3115 = vpack.c.b16 %v2239, %v2237
    %v3116 = vpack.c.b16 %v2242, %v2240
    %v3117 = vpack.c.b16 %v2243, %v2241
    %v3118 = vpack.c.b16 %v2246, %v2244
    %v3119 = vpack.c.b16 %v2247, %v2245
    %v3120 = vpack.c.b16 %v2250, %v2248
    %v3121 = vpack.c.b16 %v2251, %v2249
    %v3122 = vpack.c.b16 %v2254, %v2252
    %v3123 = vpack.c.b16 %v2255, %v2253
    %v3124 = vpack.c.b16 %v2258, %v2256
    %v3125 = vpack.c.b16 %v2259, %v2257
    %v3126 = vpack.c.b16 %v2262, %v2260
    %v3127 = vpack.c.b16 %v2263, %v2261
    %v3128 = vpack.c.b16 %v2266, %v2264
    %v3129 = vpack.c.b16 %v2267, %v2265
    %v3130 = vpack.c.b16 %v2270, %v2268
    %v3131 = vpack.c.b16 %v2271, %v2269
    %v3132 = vpack.c.b16 %v2274, %v2272
    %v3133 = vpack.c.b16 %v2275, %v2273
    %v3134 = vpack.c.b16 %v2278, %v2276
    %v3135 = vpack.c.b16 %v2279, %v2277
    %v3136 = vpack.c.b16 %v2282, %v2280
    %v3137 = vpack.c.b16 %v2283, %v2281
    %v3138 = vpack.c.b16 %v2286, %v2284
    %v3139 = vpack.c.b16 %v2287, %v2285
    %v3140 = vpack.c.b16 %v2290, %v2288
    %v3141 = vpack.c.b16 %v2291, %v2289
    %v3142 = vpack.c.b16 %v2294, %v2292
    %v3143 = vpack.c.b16 %v2295, %v2293
    %v3144 = vpack.c.b16 %v2298, %v2296
    %v3145 = vpack.c.b16 %v2299, %v2297
    %v3146 = vpack.c.b16 %v2302, %v2300
    %v3147 = vpack.c.b16 %v2303, %v2301
    %v3148 = vpack.c.b16 %v2306, %v2304
    %v3149 = vpack.c.b16 %v2307, %v2305
    %v3150 = vpack.c.b16 %v2310, %v2308
    %v3151 = vpack.c.b16 %v2311, %v2309
    %v3152 = vpack.c.b16 %v2314, %v2312
    %v3153 = vpack.c.b16 %v2315, %v2313
    %v3154 = vpack.c.b16 %v2318, %v2316
    %v3155 = vpack.c.b16 %v2319, %v2317
    %v3156 = vpack.c.b16 %v2322, %v2320
    %v3157 = vpack.c.b16 %v2323, %v2321
    %v3158 = vpack.c.b16 %v2326, %v2324
    %v3159 = vpack.c.b16 %v2327, %v2325
    %v3160 = vpack.c.b16 %v2330, %v2328
    %v3161 = vpack.c.b16 %v2331, %v2329
    %v3162 = vpack.c.b16 %v2334, %v2332
    %v3163 = vpack.c.b16 %v2335, %v2333
    %v3164 = vpack.c.b16 %v2338, %v2336
    %v3165 = vpack.c.b16 %v2339, %v2337
    %v3166 = vpack.c.b16 %v2342, %v2340
    %v3167 = vpack.c.b16 %v2343, %v2341
    %v3168 = vpack.c.b16 %v2346, %v2344
    %v3169 = vpack.c.b16 %v2347, %v2345
    %v3170 = vpack.c.b16 %v2350, %v2348
    %v3171 = vpack.c.b16 %v2351, %v2349
    %v3172 = vpack.c.b16 %v2354, %v2352
    %v3173 = vpack.c.b16 %v2355, %v2353
    %v3174 = vpack.c.b16 %v2358, %v2356
    %v3175 = vpack.c.b16 %v2359, %v2357
    %v3176 = vpack.c.b16 %v2362, %v2360
    %v3177 = vpack.c.b16 %v2363, %v2361
    %v3178 = vpack.c.b16 %v2366, %v2364
    %v3179 = vpack.c.b16 %v2367, %v2365
    %v3180 = vpack.c.b16 %v2370, %v2368
    %v3181 = vpack.c.b16 %v2371, %v2369
    %v3182 = vpack.c.b16 %v2374, %v2372
    %v3183 = vpack.c.b16 %v2375, %v2373
    %v3184 = vpack.c.b16 %v2378, %v2376
    %v3185 = vpack.c.b16 %v2379, %v2377
    %v3186 = vpack.c.b16 %v2382, %v2380
    %v3187 = vpack.c.b16 %v2383, %v2381
    %v3188 = vpack.c.b16 %v2386, %v2384
    %v3189 = vpack.c.b16 %v2387, %v2385
    %v3190 = vpack.c.b16 %v2390, %v2388
    %v3191 = vpack.c.b16 %v2391, %v2389
    %v3192 = vpack.c.b16 %v2394, %v2392
    %v3193 = vpack.c.b16 %v2395, %v2393
    %v3194 = vpack.c.b16 %v2398, %v2396
    %v3195 = vpack.c.b16 %v2399, %v2397
    %v3196 = vpack.c.b16 %v2402, %v2400
    %v3197 = vpack.c.b16 %v2403, %v2401
    %v3198 = vpack.c.b16 %v2406, %v2404
    %v3199 = vpack.c.b16 %v2407, %v2405
    %v3200 = vpack.c.b16 %v2410, %v2408
    %v3201 = vpack.c.b16 %v2411, %v2409
    %v3202 = vpack.c.b16 %v2414, %v2412
    %v3203 = vpack.c.b16 %v2415, %v2413
    %v3204 = vpack.c.b16 %v2418, %v2416
    %v3205 = vpack.c.b16 %v2419, %v2417
    %v3206 = vpack.c.b16 %v2422, %v2420
    %v3207 = vpack.c.b16 %v2423, %v2421
    %v3208 = vpack.c.b16 %v2426, %v2424
    %v3209 = vpack.c.b16 %v2427, %v2425
    %v3210 = vpack.c.b16 %v2430, %v2428
    %v3211 = vpack.c.b16 %v2431, %v2429
    %v3212 = vpack.c.b16 %v2434, %v2432
    %v3213 = vpack.c.b16 %v2435, %v2433
    %v3214 = vpack.c.b16 %v2438, %v2436
    %v3215 = vpack.c.b16 %v2439, %v2437
    %v3216 = vpack.c.b16 %v2442, %v2440
    %v3217 = vpack.c.b16 %v2443, %v2441
    %v3218 = vpack.c.b16 %v2446, %v2444
    %v3219 = vpack.c.b16 %v2447, %v2445
    %v3220 = vpack.c.b16 %v2450, %v2448
    %v3221 = vpack.c.b16 %v2451, %v2449
    %v3222 = vpack.c.b16 %v2454, %v2452
    %v3223 = vpack.c.b16 %v2455, %v2453
    %v3224 = vpack.c.b16 %v2458, %v2456
    %v3225 = vpack.c.b16 %v2459, %v2457
    %v3226 = vpack.c.b16 %v2462, %v2460
    %v3227 = vpack.c.b16 %v2463, %v2461
    %v3228 = vpack.c.b16 %v2466, %v2464
    %v3229 = vpack.c.b16 %v2467, %v2465
    %v3230 = vpack.c.b16 %v2470, %v2468
    %v3231 = vpack.c.b16 %v2471, %v2469
    %v3232 = vpack.c.b16 %v2474, %v2472
    %v3233 = vpack.c.b16 %v2475, %v2473
    %v3234 = vpack.c.b16 %v2478, %v2476
    %v3235 = vpack.c.b16 %v2479, %v2477
    %v3236 = vpack.c.b16 %v2482, %v2480
    %v3237 = vpack.c.b16 %v2483, %v2481
    %v3238 = vpack.c.b16 %v2486, %v2484
    %v3239 = vpack.c.b16 %v2487, %v2485
    %v3240 = vpack.c.b16 %v2490, %v2488
    %v3241 = vpack.c.b16 %v2491, %v2489
    %v3242 = vpack.c.b16 %v2494, %v2492
    %v3243 = vpack.c.b16 %v2495, %v2493
    %v3244 = vpack.c.b16 %v2498, %v2496
    %v3245 = vpack.c.b16 %v2499, %v2497
    %v3246 = vpack.c.b16 %v2502, %v2500
    %v3247 = vpack.c.b16 %v2503, %v2501
    %v3248 = vpack.c.b16 %v2506, %v2504
    %v3249 = vpack.c.b16 %v2507, %v2505
    %v3250 = vpack.c.b16 %v2510, %v2508
    %v3251 = vpack.c.b16 %v2511, %v2509
    %v3252 = vpack.c.b16 %v2514, %v2512
    %v3253 = vpack.c.b16 %v2515, %v2513
    %v3254 = vpack.c.b16 %v2518, %v2516
    %v3255 = vpack.c.b16 %v2519, %v2517
    %v3256 = vpack.c.b16 %v2522, %v2520
    %v3257 = vpack.c.b16 %v2523, %v2521
    %v3258 = vpack.c.b16 %v2526, %v2524
    %v3259 = vpack.c.b16 %v2527, %v2525
    %v3260 = vpack.c.b16 %v2530, %v2528
    %v3261 = vpack.c.b16 %v2531, %v2529
    %v3262 = vpack.c.b16 %v2534, %v2532
    %v3263 = vpack.c.b16 %v2535, %v2533
    %v3264 = vpack.c.b16 %v2538, %v2536
    %v3265 = vpack.c.b16 %v2539, %v2537
    %v3266 = vpack.c.b16 %v2542, %v2540
    %v3267 = vpack.c.b16 %v2543, %v2541
    %v3268 = vpack.c.b16 %v2546, %v2544
    %v3269 = vpack.c.b16 %v2547, %v2545
    %v3270 = vpack.c.b16 %v2550, %v2548
    %v3271 = vpack.c.b16 %v2551, %v2549
    %v3272 = vpack.c.b16 %v2554, %v2552
    %v3273 = vpack.c.b16 %v2555, %v2553
    %v3274 = vpack.c.b16 %v2558, %v2556
    %v3275 = vpack.c.b16 %v2559, %v2557
    %v3276 = vpack.c.b16 %v2562, %v2560
    %v3277 = vpack.c.b16 %v2563, %v2561
    %v3278 = vpack.c.b16 %v2566, %v2564
    %v3279 = vpack.c.b16 %v2567, %v2565
    %v3280 = vpack.c.b16 %v2570, %v2568
    %v3281 = vpack.c.b16 %v2571, %v2569
    %v3282 = vpack.c.b16 %v2574, %v2572
    %v3283 = vpack.c.b16 %v2575, %v2573
    %v3284 = vpack.c.b16 %v2578, %v2576
    %v3285 = vpack.c.b16 %v2579, %v2577
    %v3286 = vpack.c.b16 %v2582, %v2580
    %v3287 = vpack.c.b16 %v2583, %v2581
    %v3288 = vpack.c.b16 %v2586, %v2584
    %v3289 = vpack.c.b16 %v2587, %v2585
    %v3290 = vpack.c.b16 %v2590, %v2588
    %v3291 = vpack.c.b16 %v2591, %v2589
    %v3292 = vpack.c.b16 %v2594, %v2592
    %v3293 = vpack.c.b16 %v2595, %v2593
    %v3294 = vpack.c.b16 %v2598, %v2596
    %v3295 = vpack.c.b16 %v2599, %v2597
    %v3296 = vpack.c.b16 %v2602, %v2600
    %v3297 = vpack.c.b16 %v2603, %v2601
    %v3298 = vpack.c.b16 %v2606, %v2604
    %v3299 = vpack.c.b16 %v2607, %v2605
    %v3300 = vpack.c.b16 %v2610, %v2608
    %v3301 = vpack.c.b16 %v2611, %v2609
    %v3302 = vpack.c.b16 %v2614, %v2612
    %v3303 = vpack.c.b16 %v2615, %v2613
    %v3304 = vpack.c.b16 %v2618, %v2616
    %v3305 = vpack.c.b16 %v2619, %v2617
    %v3306 = vpack.c.b16 %v2622, %v2620
    %v3307 = vpack.c.b16 %v2623, %v2621
    %v3308 = vpack.c.b16 %v2626, %v2624
    %v3309 = vpack.c.b16 %v2627, %v2625
    %v3310 = vpack.c.b16 %v2630, %v2628
    %v3311 = vpack.c.b16 %v2631, %v2629
    %v3312 = vpack.c.b16 %v2634, %v2632
    %v3313 = vpack.c.b16 %v2635, %v2633
    %v3314 = vpack.c.b16 %v2638, %v2636
    %v3315 = vpack.c.b16 %v2639, %v2637
    %v3316 = vpack.c.b16 %v2642, %v2640
    %v3317 = vpack.c.b16 %v2643, %v2641
    %v3318 = vpack.c.b16 %v2646, %v2644
    %v3319 = vpack.c.b16 %v2647, %v2645
    %v3320 = vpack.c.b16 %v2650, %v2648
    %v3321 = vpack.c.b16 %v2651, %v2649
    %v3322 = vpack.c.b16 %v2654, %v2652
    %v3323 = vpack.c.b16 %v2655, %v2653
    %v3324 = vpack.c.b16 %v2658, %v2656
    %v3325 = vpack.c.b16 %v2659, %v2657
    %v3326 = vpack.c.b16 %v2662, %v2660
    %v3327 = vpack.c.b16 %v2663, %v2661
    %v3328 = vpack.c.b16 %v2666, %v2664
    %v3329 = vpack.c.b16 %v2667, %v2665
    %v3330 = vpack.c.b16 %v2670, %v2668
    %v3331 = vpack.c.b16 %v2671, %v2669
    %v3332 = vpack.c.b16 %v2674, %v2672
    %v3333 = vpack.c.b16 %v2675, %v2673
    %v3334 = vpack.c.b16 %v2678, %v2676
    %v3335 = vpack.c.b16 %v2679, %v2677
    %v3336 = vpack.c.b16 %v2682, %v2680
    %v3337 = vpack.c.b16 %v2683, %v2681
    %v3338 = vpack.c.b16 %v2686, %v2684
    %v3339 = vpack.c.b16 %v2687, %v2685
    %v3340 = vpack.c.b16 %v2690, %v2688
    %v3341 = vpack.c.b16 %v2691, %v2689
    %v3342 = vpack.c.b16 %v2694, %v2692
    %v3343 = vpack.c.b16 %v2695, %v2693
    %v3344 = vpack.c.b16 %v2698, %v2696
    %v3345 = vpack.c.b16 %v2699, %v2697
    %v3346 = vpack.c.b16 %v2702, %v2700
    %v3347 = vpack.c.b16 %v2703, %v2701
    %v3348 = vpack.c.b16 %v2706, %v2704
    %v3349 = vpack.c.b16 %v2707, %v2705
    %v3350 = vpack.c.b16 %v2710, %v2708
    %v3351 = vpack.c.b16 %v2711, %v2709
    %v3352 = vpack.c.b16 %v2714, %v2712
    %v3353 = vpack.c.b16 %v2715, %v2713
    %v3354 = vpack.c.b16 %v2718, %v2716
    %v3355 = vpack.c.b16 %v2719, %v2717
    %v3356 = vpack.c.b16 %v2722, %v2720
    %v3357 = vpack.c.b16 %v2723, %v2721
    %v3358 = vpack.c.b16 %v2726, %v2724
    %v3359 = vpack.c.b16 %v2727, %v2725
    %v3360 = vpack.c.b16 %v2730, %v2728
    %v3361 = vpack.c.b16 %v2731, %v2729
    %v3362 = vpack.c.b16 %v2734, %v2732
    %v3363 = vpack.c.b16 %v2735, %v2733
    %v3364 = vpack.c.b16 %v2738, %v2736
    %v3365 = vpack.c.b16 %v2739, %v2737
    %v3366 = vpack.c.b16 %v2742, %v2740
    %v3367 = vpack.c.b16 %v2743, %v2741
    %v3368 = vpack.c.b16 %v2746, %v2744
    %v3369 = vpack.c.b16 %v2747, %v2745
    %v3370 = vpack.c.b16 %v2750, %v2748
    %v3371 = vpack.c.b16 %v2751, %v2749
    %v3372 = vpack.c.b16 %v2754, %v2752
    %v3373 = vpack.c.b16 %v2755, %v2753
    %v3374 = vpack.c.b16 %v2758, %v2756
    %v3375 = vpack.c.b16 %v2759, %v2757
    %v3376 = vpack.c.b16 %v2762, %v2760
    %v3377 = vpack.c.b16 %v2763, %v2761
    %v3378 = vpack.c.b16 %v2766, %v2764
    %v3379 = vpack.c.b16 %v2767, %v2765
    %v3380 = vpack.c.b16 %v2770, %v2768
    %v3381 = vpack.c.b16 %v2771, %v2769
    %v3382 = vpack.c.b16 %v2774, %v2772
    %v3383 = vpack.c.b16 %v2775, %v2773
    %v3384 = vpack.c.b16 %v2778, %v2776
    %v3385 = vpack.c.b16 %v2779, %v2777
    %v3386 = vpack.c.b16 %v2782, %v2780
    %v3387 = vpack.c.b16 %v2783, %v2781
    %v3388 = vpack.c.b16 %v2786, %v2784
    %v3389 = vpack.c.b16 %v2787, %v2785
    %v3390 = vpack.c.b16 %v2790, %v2788
    %v3391 = vpack.c.b16 %v2791, %v2789
    %v3392 = vpack.c.b16 %v2794, %v2792
    %v3393 = vpack.c.b16 %v2795, %v2793
    %v3394 = vpack.c.b16 %v2798, %v2796
    %v3395 = vpack.c.b16 %v2799, %v2797
    %v3396 = vpack.c.b16 %v2802, %v2800
    %v3397 = vpack.c.b16 %v2803, %v2801
    %v3398 = vpack.c.b16 %v2806, %v2804
    %v3399 = vpack.c.b16 %v2807, %v2805
    %v3400 = vpack.c.b16 %v2810, %v2808
    %v3401 = vpack.c.b16 %v2811, %v2809
    %v3402 = vpack.c.b16 %v2814, %v2812
    %v3403 = vpack.c.b16 %v2815, %v2813
    %v3404 = vpack.c.b16 %v2818, %v2816
    %v3405 = vpack.c.b16 %v2819, %v2817
    %v3406 = vpack.c.b16 %v2822, %v2820
    %v3407 = vpack.c.b16 %v2823, %v2821
    %v3408 = vpack.c.b16 %v2826, %v2824
    %v3409 = vpack.c.b16 %v2827, %v2825
    %v3410 = vpack.c.b16 %v2830, %v2828
    %v3411 = vpack.c.b16 %v2831, %v2829
    %v3412 = vpack.c.b16 %v2834, %v2832
    %v3413 = vpack.c.b16 %v2835, %v2833
    %v3414 = vpack.c.b16 %v2838, %v2836
    %v3415 = vpack.c.b16 %v2839, %v2837
    %v3416 = vpack.c.b16 %v2842, %v2840
    %v3417 = vpack.c.b16 %v2843, %v2841
    %v3418 = vpack.c.b16 %v2846, %v2844
    %v3419 = vpack.c.b16 %v2847, %v2845
    %v3420 = vpack.c.b16 %v2850, %v2848
    %v3421 = vpack.c.b16 %v2851, %v2849
    %v3422 = vpack.c.b16 %v2854, %v2852
    %v3423 = vpack.c.b16 %v2855, %v2853
    %v3424 = vpack.c.b16 %v2858, %v2856
    %v3425 = vpack.c.b16 %v2859, %v2857
    %v3426 = vpack.c.b16 %v2862, %v2860
    %v3427 = vpack.c.b16 %v2863, %v2861
    %v3428 = vpack.c.b16 %v2866, %v2864
    %v3429 = vpack.c.b16 %v2867, %v2865
    %v3430 = vpack.c.b16 %v2870, %v2868
    %v3431 = vpack.c.b16 %v2871, %v2869
    %v3432 = vpack.c.b16 %v2874, %v2872
    %v3433 = vpack.c.b16 %v2875, %v2873
    %v3434 = vpack.c.b16 %v2878, %v2876
    %v3435 = vpack.c.b16 %v2879, %v2877
    %v3436 = vpack.c.b16 %v2882, %v2880
    %v3437 = vpack.c.b16 %v2883, %v2881
    %v3438 = vpack.c.b16 %v2886, %v2884
    %v3439 = vpack.c.b16 %v2887, %v2885
    %v3440 = vpack.c.b16 %v2890, %v2888
    %v3441 = vpack.c.b16 %v2891, %v2889
    %v3442 = vpack.c.b16 %v2894, %v2892
    %v3443 = vpack.c.b16 %v2895, %v2893
    %v3444 = vpack.c.b16 %v2898, %v2896
    %v3445 = vpack.c.b16 %v2899, %v2897
    %v3446 = vpack.c.b16 %v2902, %v2900
    %v3447 = vpack.c.b16 %v2903, %v2901
    %v3448 = vpack.c.b16 %v2906, %v2904
    %v3449 = vpack.c.b16 %v2907, %v2905
    %v3450 = vpack.c.b16 %v2910, %v2908
    %v3451 = vpack.c.b16 %v2911, %v2909
    %v3452 = vpack.c.b16 %v2914, %v2912
    %v3453 = vpack.c.b16 %v2915, %v2913
    %v3454 = vpack.c.b16 %v2918, %v2916
    %v3455 = vpack.c.b16 %v2919, %v2917
    %v3456 = vpack.c.b16 %v2922, %v2920
    %v3457 = vpack.c.b16 %v2923, %v2921
    %v3458 = vpack.c.b16 %v2926, %v2924
    %v3459 = vpack.c.b16 %v2927, %v2925
    %v3460 = vpack.c.b16 %v2930, %v2928
    %v3461 = vpack.c.b16 %v2931, %v2929
    %v3462 = vpack.c.b16 %v2934, %v2932
    %v3463 = vpack.c.b16 %v2935, %v2933
    %v3464 = vpack.c.b16 %v2938, %v2936
    %v3465 = vpack.c.b16 %v2939, %v2937
    %v3466 = vpack.c.b16 %v2942, %v2940
    %v3467 = vpack.c.b16 %v2943, %v2941
    %v3468 = vpack.c.b16 %v2946, %v2944
    %v3469 = vpack.c.b16 %v2947, %v2945
    %v3470 = vpack.c.b16 %v2950, %v2948
    %v3471 = vpack.c.b16 %v2951, %v2949
    %v3472 = vpack.c.b16 %v2954, %v2952
    %v3473 = vpack.c.b16 %v2955, %v2953
    %v3474 = vpack.c.b16 %v2958, %v2956
    %v3475 = vpack.c.b16 %v2959, %v2957
    %v3476 = vpack.c.b16 %v2962, %v2960
    %v3477 = vpack.c.b16 %v2963, %v2961
    %v3478 = vpack.c.b16 %v2966, %v2964
    %v3479 = vpack.c.b16 %v2967, %v2965
    %3992 = vmatprep.subr.bf16.mxu0 %v2969
    %3993 = vmatpush1.bf16.msra.mxu0 %v2968
    %3994 = vmatprep.subr.bf16.mxu0 %v2971
    %3995 = vmatpush1.bf16.msra.mxu0 %v2970
    %3996 = vmatprep.subr.bf16.mxu0 %v2973
    %3997 = vmatpush1.bf16.msra.mxu0 %v2972
    %3998 = vmatprep.subr.bf16.mxu0 %v2975
    %3999 = vmatpush1.bf16.msra.mxu0 %v2974
    %4000 = vmatprep.subr.bf16.mxu0 %v2977
    %4001 = vmatpush1.bf16.msra.mxu0 %v2976
    %4002 = vmatprep.subr.bf16.mxu0 %v2979
    %4003 = vmatpush1.bf16.msra.mxu0 %v2978
    %4004 = vmatprep.subr.bf16.mxu0 %v2981
    %4005 = vmatpush1.bf16.msra.mxu0 %v2980
    %4006 = vmatprep.subr.bf16.mxu0 %v2983
    %4007 = vmatpush1.bf16.msra.mxu0 %v2982
    %4008 = vmatprep.subr.bf16.mxu0 %v2985
    %4009 = vmatpush1.bf16.msra.mxu0 %v2984
    %4010 = vmatprep.subr.bf16.mxu0 %v2987
    %4011 = vmatpush1.bf16.msra.mxu0 %v2986
    %4012 = vmatprep.subr.bf16.mxu0 %v2989
    %4013 = vmatpush1.bf16.msra.mxu0 %v2988
    %4014 = vmatprep.subr.bf16.mxu0 %v2991
    %4015 = vmatpush1.bf16.msra.mxu0 %v2990
    %4016 = vmatprep.subr.bf16.mxu0 %v2993
    %4017 = vmatpush1.bf16.msra.mxu0 %v2992
    %4018 = vmatprep.subr.bf16.mxu0 %v2995
    %4019 = vmatpush1.bf16.msra.mxu0 %v2994
    %4020 = vmatprep.subr.bf16.mxu0 %v2997
    %4021 = vmatpush1.bf16.msra.mxu0 %v2996
    %4022 = vmatprep.subr.bf16.mxu0 %v2999
    %4023 = vmatpush1.bf16.msra.mxu0 %v2998
    %4024 = vmatprep.mubr.bf16.mxu0 %v1241
    %4025 = vmatmul.mubr.bf16.gmra.mrb[0].mxu0 %v1227
    %v4026 = vpop.f32.mrb[0].mxu0
    %v4027 = vadd.f32 0.0, %v4026
    %v4028 = vpop.f32.mrb[0].mxu0
    %v4029 = vadd.f32 0.0, %v4028
    %v4030 = vpop.f32.mrb[0].mxu0
    %v4031 = vpop.f32.mrb[0].mxu0
    %4032 = vdwg.mxu0
    %4033 = vmatprep.subr.bf16.mxu0 %v3001
    %4034 = vmatpush1.bf16.msra.mxu0 %v3000
    %4035 = vmatprep.subr.bf16.mxu0 %v3003
    %4036 = vmatpush1.bf16.msra.mxu0 %v3002
    %4037 = vmatprep.subr.bf16.mxu0 %v3005
    %4038 = vmatpush1.bf16.msra.mxu0 %v3004
    %4039 = vmatprep.subr.bf16.mxu0 %v3007
    %4040 = vmatpush1.bf16.msra.mxu0 %v3006
    %4041 = vmatprep.subr.bf16.mxu0 %v3009
    %4042 = vmatpush1.bf16.msra.mxu0 %v3008
    %4043 = vmatprep.subr.bf16.mxu0 %v3011
    %4044 = vmatpush1.bf16.msra.mxu0 %v3010
    %4045 = vmatprep.subr.bf16.mxu0 %v3013
    %4046 = vmatpush1.bf16.msra.mxu0 %v3012
    %4047 = vmatprep.subr.bf16.mxu0 %v3015
    %4048 = vmatpush1.bf16.msra.mxu0 %v3014
    %4049 = vmatprep.subr.bf16.mxu0 %v3017
    %4050 = vmatpush1.bf16.msra.mxu0 %v3016
    %4051 = vmatprep.subr.bf16.mxu0 %v3019
    %4052 = vmatpush1.bf16.msra.mxu0 %v3018
    %4053 = vmatprep.subr.bf16.mxu0 %v3021
    %4054 = vmatpush1.bf16.msra.mxu0 %v3020
    %4055 = vmatprep.subr.bf16.mxu0 %v3023
    %4056 = vmatpush1.bf16.msra.mxu0 %v3022
    %4057 = vmatprep.subr.bf16.mxu0 %v3025
    %4058 = vmatpush1.bf16.msra.mxu0 %v3024
    %4059 = vmatprep.subr.bf16.mxu0 %v3027
    %4060 = vmatpush1.bf16.msra.mxu0 %v3026
    %4061 = vmatprep.subr.bf16.mxu0 %v3029
    %4062 = vmatpush1.bf16.msra.mxu0 %v3028
    %4063 = vmatprep.subr.bf16.mxu0 %v3031
    %4064 = vmatpush1.bf16.msra.mxu0 %v3030
    %4065 = vmatprep.mubr.bf16.mxu0 %v1251
    %4066 = vmatmul.mubr.bf16.gmra.mrb[0].mxu0 %v1249
    %v4067 = vpop.f32.mrb[0].mxu0
    %v4068 = vadd.f32 %v4027, %v4067
    %v4069 = vpop.f32.mrb[0].mxu0
    %v4070 = vadd.f32 %v4029, %v4069
    %v4071 = vpop.f32.mrb[0].mxu0
    %v4072 = vpop.f32.mrb[0].mxu0
    %4073 = vdwg.mxu0
    %4074 = vmatprep.subr.bf16.mxu0 %v3033
    %4075 = vmatpush1.bf16.msra.mxu0 %v3032
    %4076 = vmatprep.subr.bf16.mxu0 %v3035
    %4077 = vmatpush1.bf16.msra.mxu0 %v3034
    %4078 = vmatprep.subr.bf16.mxu0 %v3037
    %4079 = vmatpush1.bf16.msra.mxu0 %v3036
    %4080 = vmatprep.subr.bf16.mxu0 %v3039
    %4081 = vmatpush1.bf16.msra.mxu0 %v3038
    %4082 = vmatprep.subr.bf16.mxu0 %v3041
    %4083 = vmatpush1.bf16.msra.mxu0 %v3040
    %4084 = vmatprep.subr.bf16.mxu0 %v3043
    %4085 = vmatpush1.bf16.msra.mxu0 %v3042
    %4086 = vmatprep.subr.bf16.mxu0 %v3045
    %4087 = vmatpush1.bf16.msra.mxu0 %v3044
    %4088 = vmatprep.subr.bf16.mxu0 %v3047
    %4089 = vmatpush1.bf16.msra.mxu0 %v3046
    %4090 = vmatprep.subr.bf16.mxu0 %v3049
    %4091 = vmatpush1.bf16.msra.mxu0 %v3048
    %4092 = vmatprep.subr.bf16.mxu0 %v3051
    %4093 = vmatpush1.bf16.msra.mxu0 %v3050
    %4094 = vmatprep.subr.bf16.mxu0 %v3053
    %4095 = vmatpush1.bf16.msra.mxu0 %v3052
    %4096 = vmatprep.subr.bf16.mxu0 %v3055
    %4097 = vmatpush1.bf16.msra.mxu0 %v3054
    %4098 = vmatprep.subr.bf16.mxu0 %v3057
    %4099 = vmatpush1.bf16.msra.mxu0 %v3056
    %4100 = vmatprep.subr.bf16.mxu0 %v3059
    %4101 = vmatpush1.bf16.msra.mxu0 %v3058
    %4102 = vmatprep.subr.bf16.mxu0 %v3061
    %4103 = vmatpush1.bf16.msra.mxu0 %v3060
    %4104 = vmatprep.subr.bf16.mxu0 %v3063
    %4105 = vmatpush1.bf16.msra.mxu0 %v3062
    %4106 = vmatprep.mubr.bf16.mxu0 %v1248
    %4107 = vmatmul.mubr.bf16.gmra.mrb[0].mxu0 %v1234
    %v4108 = vpop.f32.mrb[0].mxu0
    %v4109 = vadd.f32 %v4068, %v4108
    %v4110 = vpop.f32.mrb[0].mxu0
    %v4111 = vadd.f32 %v4070, %v4110
    %v4112 = vpop.f32.mrb[0].mxu0
    %v4113 = vpop.f32.mrb[0].mxu0
    %4114 = vdwg.mxu0
    %4115 = vmatprep.subr.bf16.mxu0 %v3065
    %4116 = vmatpush1.bf16.msra.mxu0 %v3064
    %4117 = vmatprep.subr.bf16.mxu0 %v3067
    %4118 = vmatpush1.bf16.msra.mxu0 %v3066
    %4119 = vmatprep.subr.bf16.mxu0 %v3069
    %4120 = vmatpush1.bf16.msra.mxu0 %v3068
    %4121 = vmatprep.subr.bf16.mxu0 %v3071
    %4122 = vmatpush1.bf16.msra.mxu0 %v3070
    %4123 = vmatprep.subr.bf16.mxu0 %v3073
    %4124 = vmatpush1.bf16.msra.mxu0 %v3072
    %4125 = vmatprep.subr.bf16.mxu0 %v3075
    %4126 = vmatpush1.bf16.msra.mxu0 %v3074
    %4127 = vmatprep.subr.bf16.mxu0 %v3077
    %4128 = vmatpush1.bf16.msra.mxu0 %v3076
    %4129 = vmatprep.subr.bf16.mxu0 %v3079
    %4130 = vmatpush1.bf16.msra.mxu0 %v3078
    %4131 = vmatprep.subr.bf16.mxu0 %v3081
    %4132 = vmatpush1.bf16.msra.mxu0 %v3080
    %4133 = vmatprep.subr.bf16.mxu0 %v3083
    %4134 = vmatpush1.bf16.msra.mxu0 %v3082
    %4135 = vmatprep.subr.bf16.mxu0 %v3085
    %4136 = vmatpush1.bf16.msra.mxu0 %v3084
    %4137 = vmatprep.subr.bf16.mxu0 %v3087
    %4138 = vmatpush1.bf16.msra.mxu0 %v3086
    %4139 = vmatprep.subr.bf16.mxu0 %v3089
    %4140 = vmatpush1.bf16.msra.mxu0 %v3088
    %4141 = vmatprep.subr.bf16.mxu0 %v3091
    %4142 = vmatpush1.bf16.msra.mxu0 %v3090
    %4143 = vmatprep.subr.bf16.mxu0 %v3093
    %4144 = vmatpush1.bf16.msra.mxu0 %v3092
    %4145 = vmatprep.subr.bf16.mxu0 %v3095
    %4146 = vmatpush1.bf16.msra.mxu0 %v3094
    %4147 = vmatprep.mubr.bf16.mxu0 %v1252
    %4148 = vmatmul.mubr.bf16.gmra.mrb[0].mxu0 %v1250
    %v4149 = vpop.f32.mrb[0].mxu0
    %v4150 = vadd.f32 %v4109, %v4149
    %v4151 = vpop.f32.mrb[0].mxu0
    %v4152 = vadd.f32 %v4111, %v4151
    %v4153 = vpop.f32.mrb[0].mxu0
    %v4154 = vpop.f32.mrb[0].mxu0
    %4155 = vdwg.mxu0
    %4156 = vmatprep.subr.bf16.mxu0 %v3097
    %4157 = vmatpush1.bf16.msra.mxu0 %v3096
    %4158 = vmatprep.subr.bf16.mxu0 %v3099
    %4159 = vmatpush1.bf16.msra.mxu0 %v3098
    %4160 = vmatprep.subr.bf16.mxu0 %v3101
    %4161 = vmatpush1.bf16.msra.mxu0 %v3100
    %4162 = vmatprep.subr.bf16.mxu0 %v3103
    %4163 = vmatpush1.bf16.msra.mxu0 %v3102
    %4164 = vmatprep.subr.bf16.mxu0 %v3105
    %4165 = vmatpush1.bf16.msra.mxu0 %v3104
    %4166 = vmatprep.subr.bf16.mxu0 %v3107
    %4167 = vmatpush1.bf16.msra.mxu0 %v3106
    %4168 = vmatprep.subr.bf16.mxu0 %v3109
    %4169 = vmatpush1.bf16.msra.mxu0 %v3108
    %4170 = vmatprep.subr.bf16.mxu0 %v3111
    %4171 = vmatpush1.bf16.msra.mxu0 %v3110
    %4172 = vmatprep.subr.bf16.mxu0 %v3113
    %4173 = vmatpush1.bf16.msra.mxu0 %v3112
    %4174 = vmatprep.subr.bf16.mxu0 %v3115
    %4175 = vmatpush1.bf16.msra.mxu0 %v3114
    %4176 = vmatprep.subr.bf16.mxu0 %v3117
    %4177 = vmatpush1.bf16.msra.mxu0 %v3116
    %4178 = vmatprep.subr.bf16.mxu0 %v3119
    %4179 = vmatpush1.bf16.msra.mxu0 %v3118
    %4180 = vmatprep.subr.bf16.mxu0 %v3121
    %4181 = vmatpush1.bf16.msra.mxu0 %v3120
    %4182 = vmatprep.subr.bf16.mxu0 %v3123
    %4183 = vmatpush1.bf16.msra.mxu0 %v3122
    %4184 = vmatprep.subr.bf16.mxu0 %v3125
    %4185 = vmatpush1.bf16.msra.mxu0 %v3124
    %4186 = vmatprep.subr.bf16.mxu0 %v3127
    %4187 = vmatpush1.bf16.msra.mxu0 %v3126
    %4188 = vmatprep.mubr.bf16.mxu0 %v1290
    %4189 = vmatmul.mubr.bf16.gmra.mrb[0].mxu0 %v1276
    %v4190 = vpop.f32.mrb[0].mxu0
    %v4191 = vadd.f32 %v4150, %v4190
    %v4192 = vpop.f32.mrb[0].mxu0
    %v4193 = vadd.f32 %v4152, %v4192
    %v4194 = vpop.f32.mrb[0].mxu0
    %v4195 = vpop.f32.mrb[0].mxu0
    %4196 = vdwg.mxu0
    %4197 = vmatprep.subr.bf16.mxu0 %v3129
    %4198 = vmatpush1.bf16.msra.mxu0 %v3128
    %4199 = vmatprep.subr.bf16.mxu0 %v3131
    %4200 = vmatpush1.bf16.msra.mxu0 %v3130
    %4201 = vmatprep.subr.bf16.mxu0 %v3133
    %4202 = vmatpush1.bf16.msra.mxu0 %v3132
    %4203 = vmatprep.subr.bf16.mxu0 %v3135
    %4204 = vmatpush1.bf16.msra.mxu0 %v3134
    %4205 = vmatprep.subr.bf16.mxu0 %v3137
    %4206 = vmatpush1.bf16.msra.mxu0 %v3136
    %4207 = vmatprep.subr.bf16.mxu0 %v3139
    %4208 = vmatpush1.bf16.msra.mxu0 %v3138
    %4209 = vmatprep.subr.bf16.mxu0 %v3141
    %4210 = vmatpush1.bf16.msra.mxu0 %v3140
    %4211 = vmatprep.subr.bf16.mxu0 %v3143
    %4212 = vmatpush1.bf16.msra.mxu0 %v3142
    %4213 = vmatprep.subr.bf16.mxu0 %v3145
    %4214 = vmatpush1.bf16.msra.mxu0 %v3144
    %4215 = vmatprep.subr.bf16.mxu0 %v3147
    %4216 = vmatpush1.bf16.msra.mxu0 %v3146
    %4217 = vmatprep.subr.bf16.mxu0 %v3149
    %4218 = vmatpush1.bf16.msra.mxu0 %v3148
    %4219 = vmatprep.subr.bf16.mxu0 %v3151
    %4220 = vmatpush1.bf16.msra.mxu0 %v3150
    %4221 = vmatprep.subr.bf16.mxu0 %v3153
    %4222 = vmatpush1.bf16.msra.mxu0 %v3152
    %4223 = vmatprep.subr.bf16.mxu0 %v3155
    %4224 = vmatpush1.bf16.msra.mxu0 %v3154
    %4225 = vmatprep.subr.bf16.mxu0 %v3157
    %4226 = vmatpush1.bf16.msra.mxu0 %v3156
    %4227 = vmatprep.subr.bf16.mxu0 %v3159
    %4228 = vmatpush1.bf16.msra.mxu0 %v3158
    %4229 = vmatprep.mubr.bf16.mxu0 %v1300
    %4230 = vmatmul.mubr.bf16.gmra.mrb[0].mxu0 %v1298
    %v4231 = vpop.f32.mrb[0].mxu0
    %v4232 = vadd.f32 %v4191, %v4231
    %v4233 = vpop.f32.mrb[0].mxu0
    %v4234 = vadd.f32 %v4193, %v4233
    %v4235 = vpop.f32.mrb[0].mxu0
    %v4236 = vpop.f32.mrb[0].mxu0
    %4237 = vdwg.mxu0
    %4238 = vmatprep.subr.bf16.mxu0 %v3161
    %4239 = vmatpush1.bf16.msra.mxu0 %v3160
    %4240 = vmatprep.subr.bf16.mxu0 %v3163
    %4241 = vmatpush1.bf16.msra.mxu0 %v3162
    %4242 = vmatprep.subr.bf16.mxu0 %v3165
    %4243 = vmatpush1.bf16.msra.mxu0 %v3164
    %4244 = vmatprep.subr.bf16.mxu0 %v3167
    %4245 = vmatpush1.bf16.msra.mxu0 %v3166
    %4246 = vmatprep.subr.bf16.mxu0 %v3169
    %4247 = vmatpush1.bf16.msra.mxu0 %v3168
    %4248 = vmatprep.subr.bf16.mxu0 %v3171
    %4249 = vmatpush1.bf16.msra.mxu0 %v3170
    %4250 = vmatprep.subr.bf16.mxu0 %v3173
    %4251 = vmatpush1.bf16.msra.mxu0 %v3172
    %4252 = vmatprep.subr.bf16.mxu0 %v3175
    %4253 = vmatpush1.bf16.msra.mxu0 %v3174
    %4254 = vmatprep.subr.bf16.mxu0 %v3177
    %4255 = vmatpush1.bf16.msra.mxu0 %v3176
    %4256 = vmatprep.subr.bf16.mxu0 %v3179
    %4257 = vmatpush1.bf16.msra.mxu0 %v3178
    %4258 = vmatprep.subr.bf16.mxu0 %v3181
    %4259 = vmatpush1.bf16.msra.mxu0 %v3180
    %4260 = vmatprep.subr.bf16.mxu0 %v3183
    %4261 = vmatpush1.bf16.msra.mxu0 %v3182
    %4262 = vmatprep.subr.bf16.mxu0 %v3185
    %4263 = vmatpush1.bf16.msra.mxu0 %v3184
    %4264 = vmatprep.subr.bf16.mxu0 %v3187
    %4265 = vmatpush1.bf16.msra.mxu0 %v3186
    %4266 = vmatprep.subr.bf16.mxu0 %v3189
    %4267 = vmatpush1.bf16.msra.mxu0 %v3188
    %4268 = vmatprep.subr.bf16.mxu0 %v3191
    %4269 = vmatpush1.bf16.msra.mxu0 %v3190
    %4270 = vmatprep.mubr.bf16.mxu0 %v1297
    %4271 = vmatmul.mubr.bf16.gmra.mrb[0].mxu0 %v1283
    %v4272 = vpop.f32.mrb[0].mxu0
    %v4273 = vadd.f32 %v4232, %v4272
    %v4274 = vpop.f32.mrb[0].mxu0
    %v4275 = vadd.f32 %v4234, %v4274
    %v4276 = vpop.f32.mrb[0].mxu0
    %v4277 = vpop.f32.mrb[0].mxu0
    %4278 = vdwg.mxu0
    %4279 = vmatprep.subr.bf16.mxu0 %v3193
    %4280 = vmatpush1.bf16.msra.mxu0 %v3192
    %4281 = vmatprep.subr.bf16.mxu0 %v3195
    %4282 = vmatpush1.bf16.msra.mxu0 %v3194
    %4283 = vmatprep.subr.bf16.mxu0 %v3197
    %4284 = vmatpush1.bf16.msra.mxu0 %v3196
    %4285 = vmatprep.subr.bf16.mxu0 %v3199
    %4286 = vmatpush1.bf16.msra.mxu0 %v3198
    %4287 = vmatprep.subr.bf16.mxu0 %v3201
    %4288 = vmatpush1.bf16.msra.mxu0 %v3200
    %4289 = vmatprep.subr.bf16.mxu0 %v3203
    %4290 = vmatpush1.bf16.msra.mxu0 %v3202
    %4291 = vmatprep.subr.bf16.mxu0 %v3205
    %4292 = vmatpush1.bf16.msra.mxu0 %v3204
    %4293 = vmatprep.subr.bf16.mxu0 %v3207
    %4294 = vmatpush1.bf16.msra.mxu0 %v3206
    %4295 = vmatprep.subr.bf16.mxu0 %v3209
    %4296 = vmatpush1.bf16.msra.mxu0 %v3208
    %4297 = vmatprep.subr.bf16.mxu0 %v3211
    %4298 = vmatpush1.bf16.msra.mxu0 %v3210
    %4299 = vmatprep.subr.bf16.mxu0 %v3213
    %4300 = vmatpush1.bf16.msra.mxu0 %v3212
    %4301 = vmatprep.subr.bf16.mxu0 %v3215
    %4302 = vmatpush1.bf16.msra.mxu0 %v3214
    %4303 = vmatprep.subr.bf16.mxu0 %v3217
    %4304 = vmatpush1.bf16.msra.mxu0 %v3216
    %4305 = vmatprep.subr.bf16.mxu0 %v3219
    %4306 = vmatpush1.bf16.msra.mxu0 %v3218
    %4307 = vmatprep.subr.bf16.mxu0 %v3221
    %4308 = vmatpush1.bf16.msra.mxu0 %v3220
    %4309 = vmatprep.subr.bf16.mxu0 %v3223
    %4310 = vmatpush1.bf16.msra.mxu0 %v3222
    %4311 = vmatprep.mubr.bf16.mxu0 %v1301
    %4312 = vmatmul.mubr.bf16.gmra.mrb[0].mxu0 %v1299
    %v4313 = vpop.f32.mrb[0].mxu0
    %v4314 = vadd.f32 %v4273, %v4313
    %v4315 = vpop.f32.mrb[0].mxu0
    %v4316 = vadd.f32 %v4275, %v4315
    %v4317 = vpop.f32.mrb[0].mxu0
    %v4318 = vpop.f32.mrb[0].mxu0
    %4319 = vdwg.mxu0
    %4320 = vmatprep.subr.bf16.mxu0 %v3225
    %4321 = vmatpush1.bf16.msra.mxu0 %v3224
    %4322 = vmatprep.subr.bf16.mxu0 %v3227
    %4323 = vmatpush1.bf16.msra.mxu0 %v3226
    %4324 = vmatprep.subr.bf16.mxu0 %v3229
    %4325 = vmatpush1.bf16.msra.mxu0 %v3228
    %4326 = vmatprep.subr.bf16.mxu0 %v3231
    %4327 = vmatpush1.bf16.msra.mxu0 %v3230
    %4328 = vmatprep.subr.bf16.mxu0 %v3233
    %4329 = vmatpush1.bf16.msra.mxu0 %v3232
    %4330 = vmatprep.subr.bf16.mxu0 %v3235
    %4331 = vmatpush1.bf16.msra.mxu0 %v3234
    %4332 = vmatprep.subr.bf16.mxu0 %v3237
    %4333 = vmatpush1.bf16.msra.mxu0 %v3236
    %4334 = vmatprep.subr.bf16.mxu0 %v3239
    %4335 = vmatpush1.bf16.msra.mxu0 %v3238
    %4336 = vmatprep.subr.bf16.mxu0 %v3241
    %4337 = vmatpush1.bf16.msra.mxu0 %v3240
    %4338 = vmatprep.subr.bf16.mxu0 %v3243
    %4339 = vmatpush1.bf16.msra.mxu0 %v3242
    %4340 = vmatprep.subr.bf16.mxu0 %v3245
    %4341 = vmatpush1.bf16.msra.mxu0 %v3244
    %4342 = vmatprep.subr.bf16.mxu0 %v3247
    %4343 = vmatpush1.bf16.msra.mxu0 %v3246
    %4344 = vmatprep.subr.bf16.mxu0 %v3249
    %4345 = vmatpush1.bf16.msra.mxu0 %v3248
    %4346 = vmatprep.subr.bf16.mxu0 %v3251
    %4347 = vmatpush1.bf16.msra.mxu0 %v3250
    %4348 = vmatprep.subr.bf16.mxu0 %v3253
    %4349 = vmatpush1.bf16.msra.mxu0 %v3252
    %4350 = vmatprep.subr.bf16.mxu0 %v3255
    %4351 = vmatpush1.bf16.msra.mxu0 %v3254
    %4352 = vmatprep.mubr.bf16.mxu0 %v1339
    %4353 = vmatmul.mubr.bf16.gmra.mrb[0].mxu0 %v1325
    %v4354 = vpop.f32.mrb[0].mxu0
    %v4355 = vadd.f32 %v4314, %v4354
    %v4356 = vpop.f32.mrb[0].mxu0
    %v4357 = vadd.f32 %v4316, %v4356
    %v4358 = vpop.f32.mrb[0].mxu0
    %v4359 = vpop.f32.mrb[0].mxu0
    %4360 = vdwg.mxu0
    %4361 = vmatprep.subr.bf16.mxu0 %v3257
    %4362 = vmatpush1.bf16.msra.mxu0 %v3256
    %4363 = vmatprep.subr.bf16.mxu0 %v3259
    %4364 = vmatpush1.bf16.msra.mxu0 %v3258
    %4365 = vmatprep.subr.bf16.mxu0 %v3261
    %4366 = vmatpush1.bf16.msra.mxu0 %v3260
    %4367 = vmatprep.subr.bf16.mxu0 %v3263
    %4368 = vmatpush1.bf16.msra.mxu0 %v3262
    %4369 = vmatprep.subr.bf16.mxu0 %v3265
    %4370 = vmatpush1.bf16.msra.mxu0 %v3264
    %4371 = vmatprep.subr.bf16.mxu0 %v3267
    %4372 = vmatpush1.bf16.msra.mxu0 %v3266
    %4373 = vmatprep.subr.bf16.mxu0 %v3269
    %4374 = vmatpush1.bf16.msra.mxu0 %v3268
    %4375 = vmatprep.subr.bf16.mxu0 %v3271
    %4376 = vmatpush1.bf16.msra.mxu0 %v3270
    %4377 = vmatprep.subr.bf16.mxu0 %v3273
    %4378 = vmatpush1.bf16.msra.mxu0 %v3272
    %4379 = vmatprep.subr.bf16.mxu0 %v3275
    %4380 = vmatpush1.bf16.msra.mxu0 %v3274
    %4381 = vmatprep.subr.bf16.mxu0 %v3277
    %4382 = vmatpush1.bf16.msra.mxu0 %v3276
    %4383 = vmatprep.subr.bf16.mxu0 %v3279
    %4384 = vmatpush1.bf16.msra.mxu0 %v3278
    %4385 = vmatprep.subr.bf16.mxu0 %v3281
    %4386 = vmatpush1.bf16.msra.mxu0 %v3280
    %4387 = vmatprep.subr.bf16.mxu0 %v3283
    %4388 = vmatpush1.bf16.msra.mxu0 %v3282
    %4389 = vmatprep.subr.bf16.mxu0 %v3285
    %4390 = vmatpush1.bf16.msra.mxu0 %v3284
    %4391 = vmatprep.subr.bf16.mxu0 %v3287
    %4392 = vmatpush1.bf16.msra.mxu0 %v3286
    %4393 = vmatprep.mubr.bf16.mxu0 %v1349
    %4394 = vmatmul.mubr.bf16.gmra.mrb[0].mxu0 %v1347
    %v4395 = vpop.f32.mrb[0].mxu0
    %v4396 = vadd.f32 %v4355, %v4395
    %v4397 = vpop.f32.mrb[0].mxu0
    %v4398 = vadd.f32 %v4357, %v4397
    %v4399 = vpop.f32.mrb[0].mxu0
    %v4400 = vpop.f32.mrb[0].mxu0
    %4401 = vdwg.mxu0
    %4402 = vmatprep.subr.bf16.mxu0 %v3289
    %4403 = vmatpush1.bf16.msra.mxu0 %v3288
    %4404 = vmatprep.subr.bf16.mxu0 %v3291
    %4405 = vmatpush1.bf16.msra.mxu0 %v3290
    %4406 = vmatprep.subr.bf16.mxu0 %v3293
    %4407 = vmatpush1.bf16.msra.mxu0 %v3292
    %4408 = vmatprep.subr.bf16.mxu0 %v3295
    %4409 = vmatpush1.bf16.msra.mxu0 %v3294
    %4410 = vmatprep.subr.bf16.mxu0 %v3297
    %4411 = vmatpush1.bf16.msra.mxu0 %v3296
    %4412 = vmatprep.subr.bf16.mxu0 %v3299
    %4413 = vmatpush1.bf16.msra.mxu0 %v3298
    %4414 = vmatprep.subr.bf16.mxu0 %v3301
    %4415 = vmatpush1.bf16.msra.mxu0 %v3300
    %4416 = vmatprep.subr.bf16.mxu0 %v3303
    %4417 = vmatpush1.bf16.msra.mxu0 %v3302
    %4418 = vmatprep.subr.bf16.mxu0 %v3305
    %4419 = vmatpush1.bf16.msra.mxu0 %v3304
    %4420 = vmatprep.subr.bf16.mxu0 %v3307
    %4421 = vmatpush1.bf16.msra.mxu0 %v3306
    %4422 = vmatprep.subr.bf16.mxu0 %v3309
    %4423 = vmatpush1.bf16.msra.mxu0 %v3308
    %4424 = vmatprep.subr.bf16.mxu0 %v3311
    %4425 = vmatpush1.bf16.msra.mxu0 %v3310
    %4426 = vmatprep.subr.bf16.mxu0 %v3313
    %4427 = vmatpush1.bf16.msra.mxu0 %v3312
    %4428 = vmatprep.subr.bf16.mxu0 %v3315
    %4429 = vmatpush1.bf16.msra.mxu0 %v3314
    %4430 = vmatprep.subr.bf16.mxu0 %v3317
    %4431 = vmatpush1.bf16.msra.mxu0 %v3316
    %4432 = vmatprep.subr.bf16.mxu0 %v3319
    %4433 = vmatpush1.bf16.msra.mxu0 %v3318
    %4434 = vmatprep.mubr.bf16.mxu0 %v1346
    %4435 = vmatmul.mubr.bf16.gmra.mrb[0].mxu0 %v1332
    %v4436 = vpop.f32.mrb[0].mxu0
    %v4437 = vadd.f32 %v4396, %v4436
    %v4438 = vpop.f32.mrb[0].mxu0
    %v4439 = vadd.f32 %v4398, %v4438
    %v4440 = vpop.f32.mrb[0].mxu0
    %v4441 = vpop.f32.mrb[0].mxu0
    %4442 = vdwg.mxu0
    %4443 = vmatprep.subr.bf16.mxu0 %v3321
    %4444 = vmatpush1.bf16.msra.mxu0 %v3320
    %4445 = vmatprep.subr.bf16.mxu0 %v3323
    %4446 = vmatpush1.bf16.msra.mxu0 %v3322
    %4447 = vmatprep.subr.bf16.mxu0 %v3325
    %4448 = vmatpush1.bf16.msra.mxu0 %v3324
    %4449 = vmatprep.subr.bf16.mxu0 %v3327
    %4450 = vmatpush1.bf16.msra.mxu0 %v3326
    %4451 = vmatprep.subr.bf16.mxu0 %v3329
    %4452 = vmatpush1.bf16.msra.mxu0 %v3328
    %4453 = vmatprep.subr.bf16.mxu0 %v3331
    %4454 = vmatpush1.bf16.msra.mxu0 %v3330
    %4455 = vmatprep.subr.bf16.mxu0 %v3333
    %4456 = vmatpush1.bf16.msra.mxu0 %v3332
    %4457 = vmatprep.subr.bf16.mxu0 %v3335
    %4458 = vmatpush1.bf16.msra.mxu0 %v3334
    %4459 = vmatprep.subr.bf16.mxu0 %v3337
    %4460 = vmatpush1.bf16.msra.mxu0 %v3336
    %4461 = vmatprep.subr.bf16.mxu0 %v3339
    %4462 = vmatpush1.bf16.msra.mxu0 %v3338
    %4463 = vmatprep.subr.bf16.mxu0 %v3341
    %4464 = vmatpush1.bf16.msra.mxu0 %v3340
    %4465 = vmatprep.subr.bf16.mxu0 %v3343
    %4466 = vmatpush1.bf16.msra.mxu0 %v3342
    %4467 = vmatprep.subr.bf16.mxu0 %v3345
    %4468 = vmatpush1.bf16.msra.mxu0 %v3344
    %4469 = vmatprep.subr.bf16.mxu0 %v3347
    %4470 = vmatpush1.bf16.msra.mxu0 %v3346
    %4471 = vmatprep.subr.bf16.mxu0 %v3349
    %4472 = vmatpush1.bf16.msra.mxu0 %v3348
    %4473 = vmatprep.subr.bf16.mxu0 %v3351
    %4474 = vmatpush1.bf16.msra.mxu0 %v3350
    %4475 = vmatprep.mubr.bf16.mxu0 %v1350
    %4476 = vmatmul.mubr.bf16.gmra.mrb[0].mxu0 %v1348
    %v4477 = vpop.f32.mrb[0].mxu0
    %v4478 = vadd.f32 %v4437, %v4477
    %v4479 = vpop.f32.mrb[0].mxu0
    %v4480 = vadd.f32 %v4439, %v4479
    %v4481 = vpop.f32.mrb[0].mxu0
    %v4482 = vpop.f32.mrb[0].mxu0
    %4483 = vdwg.mxu0
    %4484 = vmatprep.subr.bf16.mxu0 %v3353
    %4485 = vmatpush1.bf16.msra.mxu0 %v3352
    %4486 = vmatprep.subr.bf16.mxu0 %v3355
    %4487 = vmatpush1.bf16.msra.mxu0 %v3354
    %4488 = vmatprep.subr.bf16.mxu0 %v3357
    %4489 = vmatpush1.bf16.msra.mxu0 %v3356
    %4490 = vmatprep.subr.bf16.mxu0 %v3359
    %4491 = vmatpush1.bf16.msra.mxu0 %v3358
    %4492 = vmatprep.subr.bf16.mxu0 %v3361
    %4493 = vmatpush1.bf16.msra.mxu0 %v3360
    %4494 = vmatprep.subr.bf16.mxu0 %v3363
    %4495 = vmatpush1.bf16.msra.mxu0 %v3362
    %4496 = vmatprep.subr.bf16.mxu0 %v3365
    %4497 = vmatpush1.bf16.msra.mxu0 %v3364
    %4498 = vmatprep.subr.bf16.mxu0 %v3367
    %4499 = vmatpush1.bf16.msra.mxu0 %v3366
    %4500 = vmatprep.subr.bf16.mxu0 %v3369
    %4501 = vmatpush1.bf16.msra.mxu0 %v3368
    %4502 = vmatprep.subr.bf16.mxu0 %v3371
    %4503 = vmatpush1.bf16.msra.mxu0 %v3370
    %4504 = vmatprep.subr.bf16.mxu0 %v3373
    %4505 = vmatpush1.bf16.msra.mxu0 %v3372
    %4506 = vmatprep.subr.bf16.mxu0 %v3375
    %4507 = vmatpush1.bf16.msra.mxu0 %v3374
    %4508 = vmatprep.subr.bf16.mxu0 %v3377
    %4509 = vmatpush1.bf16.msra.mxu0 %v3376
    %4510 = vmatprep.subr.bf16.mxu0 %v3379
    %4511 = vmatpush1.bf16.msra.mxu0 %v3378
    %4512 = vmatprep.subr.bf16.mxu0 %v3381
    %4513 = vmatpush1.bf16.msra.mxu0 %v3380
    %4514 = vmatprep.subr.bf16.mxu0 %v3383
    %4515 = vmatpush1.bf16.msra.mxu0 %v3382
    %4516 = vmatprep.mubr.bf16.mxu0 %v1388
    %4517 = vmatmul.mubr.bf16.gmra.mrb[0].mxu0 %v1374
    %v4518 = vpop.f32.mrb[0].mxu0
    %v4519 = vadd.f32 %v4478, %v4518
    %v4520 = vpop.f32.mrb[0].mxu0
    %v4521 = vadd.f32 %v4480, %v4520
    %v4522 = vpop.f32.mrb[0].mxu0
    %v4523 = vpop.f32.mrb[0].mxu0
    %4524 = vdwg.mxu0
    %4525 = vmatprep.subr.bf16.mxu0 %v3385
    %4526 = vmatpush1.bf16.msra.mxu0 %v3384
    %4527 = vmatprep.subr.bf16.mxu0 %v3387
    %4528 = vmatpush1.bf16.msra.mxu0 %v3386
    %4529 = vmatprep.subr.bf16.mxu0 %v3389
    %4530 = vmatpush1.bf16.msra.mxu0 %v3388
    %4531 = vmatprep.subr.bf16.mxu0 %v3391
    %4532 = vmatpush1.bf16.msra.mxu0 %v3390
    %4533 = vmatprep.subr.bf16.mxu0 %v3393
    %4534 = vmatpush1.bf16.msra.mxu0 %v3392
    %4535 = vmatprep.subr.bf16.mxu0 %v3395
    %4536 = vmatpush1.bf16.msra.mxu0 %v3394
    %4537 = vmatprep.subr.bf16.mxu0 %v3397
    %4538 = vmatpush1.bf16.msra.mxu0 %v3396
    %4539 = vmatprep.subr.bf16.mxu0 %v3399
    %4540 = vmatpush1.bf16.msra.mxu0 %v3398
    %4541 = vmatprep.subr.bf16.mxu0 %v3401
    %4542 = vmatpush1.bf16.msra.mxu0 %v3400
    %4543 = vmatprep.subr.bf16.mxu0 %v3403
    %4544 = vmatpush1.bf16.msra.mxu0 %v3402
    %4545 = vmatprep.subr.bf16.mxu0 %v3405
    %4546 = vmatpush1.bf16.msra.mxu0 %v3404
    %4547 = vmatprep.subr.bf16.mxu0 %v3407
    %4548 = vmatpush1.bf16.msra.mxu0 %v3406
    %4549 = vmatprep.subr.bf16.mxu0 %v3409
    %4550 = vmatpush1.bf16.msra.mxu0 %v3408
    %4551 = vmatprep.subr.bf16.mxu0 %v3411
    %4552 = vmatpush1.bf16.msra.mxu0 %v3410
    %4553 = vmatprep.subr.bf16.mxu0 %v3413
    %4554 = vmatpush1.bf16.msra.mxu0 %v3412
    %4555 = vmatprep.subr.bf16.mxu0 %v3415
    %4556 = vmatpush1.bf16.msra.mxu0 %v3414
    %4557 = vmatprep.mubr.bf16.mxu0 %v1398
    %4558 = vmatmul.mubr.bf16.gmra.mrb[0].mxu0 %v1396
    %v4559 = vpop.f32.mrb[0].mxu0
    %v4560 = vadd.f32 %v4519, %v4559
    %v4561 = vpop.f32.mrb[0].mxu0
    %v4562 = vadd.f32 %v4521, %v4561
    %v4563 = vpop.f32.mrb[0].mxu0
    %v4564 = vpop.f32.mrb[0].mxu0
    %4565 = vdwg.mxu0
    %4566 = vmatprep.subr.bf16.mxu0 %v3417
    %4567 = vmatpush1.bf16.msra.mxu0 %v3416
    %4568 = vmatprep.subr.bf16.mxu0 %v3419
    %4569 = vmatpush1.bf16.msra.mxu0 %v3418
    %4570 = vmatprep.subr.bf16.mxu0 %v3421
    %4571 = vmatpush1.bf16.msra.mxu0 %v3420
    %4572 = vmatprep.subr.bf16.mxu0 %v3423
    %4573 = vmatpush1.bf16.msra.mxu0 %v3422
    %4574 = vmatprep.subr.bf16.mxu0 %v3425
    %4575 = vmatpush1.bf16.msra.mxu0 %v3424
    %4576 = vmatprep.subr.bf16.mxu0 %v3427
    %4577 = vmatpush1.bf16.msra.mxu0 %v3426
    %4578 = vmatprep.subr.bf16.mxu0 %v3429
    %4579 = vmatpush1.bf16.msra.mxu0 %v3428
    %4580 = vmatprep.subr.bf16.mxu0 %v3431
    %4581 = vmatpush1.bf16.msra.mxu0 %v3430
    %4582 = vmatprep.subr.bf16.mxu0 %v3433
    %4583 = vmatpush1.bf16.msra.mxu0 %v3432
    %4584 = vmatprep.subr.bf16.mxu0 %v3435
    %4585 = vmatpush1.bf16.msra.mxu0 %v3434
    %4586 = vmatprep.subr.bf16.mxu0 %v3437
    %4587 = vmatpush1.bf16.msra.mxu0 %v3436
    %4588 = vmatprep.subr.bf16.mxu0 %v3439
    %4589 = vmatpush1.bf16.msra.mxu0 %v3438
    %4590 = vmatprep.subr.bf16.mxu0 %v3441
    %4591 = vmatpush1.bf16.msra.mxu0 %v3440
    %4592 = vmatprep.subr.bf16.mxu0 %v3443
    %4593 = vmatpush1.bf16.msra.mxu0 %v3442
    %4594 = vmatprep.subr.bf16.mxu0 %v3445
    %4595 = vmatpush1.bf16.msra.mxu0 %v3444
    %4596 = vmatprep.subr.bf16.mxu0 %v3447
    %4597 = vmatpush1.bf16.msra.mxu0 %v3446
    %4598 = vmatprep.mubr.bf16.mxu0 %v1395
    %4599 = vmatmul.mubr.bf16.gmra.mrb[0].mxu0 %v1381
    %v4600 = vpop.f32.mrb[0].mxu0
    %v4601 = vadd.f32 %v4560, %v4600
    %v4602 = vpop.f32.mrb[0].mxu0
    %v4603 = vadd.f32 %v4562, %v4602
    %v4604 = vpop.f32.mrb[0].mxu0
    %v4605 = vpop.f32.mrb[0].mxu0
    %4606 = vdwg.mxu0
    %4607 = vmatprep.subr.bf16.mxu0 %v3449
    %4608 = vmatpush1.bf16.msra.mxu0 %v3448
    %4609 = vmatprep.subr.bf16.mxu0 %v3451
    %4610 = vmatpush1.bf16.msra.mxu0 %v3450
    %4611 = vmatprep.subr.bf16.mxu0 %v3453
    %4612 = vmatpush1.bf16.msra.mxu0 %v3452
    %4613 = vmatprep.subr.bf16.mxu0 %v3455
    %4614 = vmatpush1.bf16.msra.mxu0 %v3454
    %4615 = vmatprep.subr.bf16.mxu0 %v3457
    %4616 = vmatpush1.bf16.msra.mxu0 %v3456
    %4617 = vmatprep.subr.bf16.mxu0 %v3459
    %4618 = vmatpush1.bf16.msra.mxu0 %v3458
    %4619 = vmatprep.subr.bf16.mxu0 %v3461
    %4620 = vmatpush1.bf16.msra.mxu0 %v3460
    %4621 = vmatprep.subr.bf16.mxu0 %v3463
    %4622 = vmatpush1.bf16.msra.mxu0 %v3462
    %4623 = vmatprep.subr.bf16.mxu0 %v3465
    %4624 = vmatpush1.bf16.msra.mxu0 %v3464
    %4625 = vmatprep.subr.bf16.mxu0 %v3467
    %4626 = vmatpush1.bf16.msra.mxu0 %v3466
    %4627 = vmatprep.subr.bf16.mxu0 %v3469
    %4628 = vmatpush1.bf16.msra.mxu0 %v3468
    %4629 = vmatprep.subr.bf16.mxu0 %v3471
    %4630 = vmatpush1.bf16.msra.mxu0 %v3470
    %4631 = vmatprep.subr.bf16.mxu0 %v3473
    %4632 = vmatpush1.bf16.msra.mxu0 %v3472
    %4633 = vmatprep.subr.bf16.mxu0 %v3475
    %4634 = vmatpush1.bf16.msra.mxu0 %v3474
    %4635 = vmatprep.subr.bf16.mxu0 %v3477
    %4636 = vmatpush1.bf16.msra.mxu0 %v3476
    %4637 = vmatprep.subr.bf16.mxu0 %v3479
    %4638 = vmatpush1.bf16.msra.mxu0 %v3478
    %4639 = vmatprep.mubr.bf16.mxu0 %v1399
    %4640 = vmatmul.mubr.bf16.gmra.mrb[0].mxu0 %v1397
    %v4641 = vpop.f32.mrb[0].mxu0
    %v4642 = vadd.f32 %v4601, %v4641
    %v4643 = vpop.f32.mrb[0].mxu0
    %v4644 = vadd.f32 %v4603, %v4643
    %v4645 = vpop.f32.mrb[0].mxu0
    %v4646 = vpop.f32.mrb[0].mxu0
    %4647 = vdwg.mxu0
    %v4652 = vcombine.high %v168, %v168
    %v4654 = vunpack.c.l.s4 1966171168
    %v4655 = vunpack.c.0.s8 %v4654
    %v4656 = vlaneseq
    %v4657 = vshrl.u32 %v4656, 7
    %v4658 = vsub.s32 %v4655, %v4657
    %v4659 = vrot.slane %v168, %v4658
    %v4661 = vunpack.c.l.s4 1966171168
    %v4662 = vunpack.c.0.s8 %v4661
    %v4663 = vlaneseq
    %v4664 = vshrl.u32 %v4663, 7
    %v4665 = vsub.s32 %v4662, %v4664
    %v4666 = vrot.slane %v4652, %v4665
    %v4667 = vcombine.high %v4659, %v4659
    %v4668 = vcombine.high %v4666, %v4666
    %v4670 = vunpack.c.l.s4 1966171168
    %v4671 = vunpack.c.0.s8 %v4670
    %v4672 = vlaneseq
    %v4673 = vshrl.u32 %v4672, 7
    %v4674 = vsub.s32 %v4671, %v4673
    %v4675 = vrot.slane %v4659, %v4674
    %v4677 = vunpack.c.l.s4 1966171168
    %v4678 = vunpack.c.0.s8 %v4677
    %v4679 = vlaneseq
    %v4680 = vshrl.u32 %v4679, 7
    %v4681 = vsub.s32 %v4678, %v4680
    %v4682 = vrot.slane %v4666, %v4681
    %v4684 = vunpack.c.l.s4 1966171168
    %v4685 = vunpack.c.0.s8 %v4684
    %v4686 = vlaneseq
    %v4687 = vshrl.u32 %v4686, 7
    %v4688 = vsub.s32 %v4685, %v4687
    %v4689 = vrot.slane %v4667, %v4688
    %v4691 = vunpack.c.l.s4 1966171168
    %v4692 = vunpack.c.0.s8 %v4691
    %v4693 = vlaneseq
    %v4694 = vshrl.u32 %v4693, 7
    %v4695 = vsub.s32 %v4692, %v4694
    %v4696 = vrot.slane %v4668, %v4695
    %v4697 = vcombine.high %v4675, %v4675
    %v4698 = vcombine.high %v4682, %v4682
    %v4699 = vcombine.high %v4689, %v4689
    %v4700 = vcombine.high %v4696, %v4696
    %v4701 = vcombine.high %v169, %v169
    %v4703 = vunpack.c.l.s4 1966171168
    %v4704 = vunpack.c.0.s8 %v4703
    %v4705 = vlaneseq
    %v4706 = vshrl.u32 %v4705, 7
    %v4707 = vsub.s32 %v4704, %v4706
    %v4708 = vrot.slane %v169, %v4707
    %v4710 = vunpack.c.l.s4 1966171168
    %v4711 = vunpack.c.0.s8 %v4710
    %v4712 = vlaneseq
    %v4713 = vshrl.u32 %v4712, 7
    %v4714 = vsub.s32 %v4711, %v4713
    %v4715 = vrot.slane %v4701, %v4714
    %v4716 = vcombine.high %v4708, %v4708
    %v4717 = vcombine.high %v4715, %v4715
    %v4719 = vunpack.c.l.s4 1966171168
    %v4720 = vunpack.c.0.s8 %v4719
    %v4721 = vlaneseq
    %v4722 = vshrl.u32 %v4721, 7
    %v4723 = vsub.s32 %v4720, %v4722
    %v4724 = vrot.slane %v4708, %v4723
    %v4726 = vunpack.c.l.s4 1966171168
    %v4727 = vunpack.c.0.s8 %v4726
    %v4728 = vlaneseq
    %v4729 = vshrl.u32 %v4728, 7
    %v4730 = vsub.s32 %v4727, %v4729
    %v4731 = vrot.slane %v4715, %v4730
    %v4733 = vunpack.c.l.s4 1966171168
    %v4734 = vunpack.c.0.s8 %v4733
    %v4735 = vlaneseq
    %v4736 = vshrl.u32 %v4735, 7
    %v4737 = vsub.s32 %v4734, %v4736
    %v4738 = vrot.slane %v4716, %v4737
    %v4740 = vunpack.c.l.s4 1966171168
    %v4741 = vunpack.c.0.s8 %v4740
    %v4742 = vlaneseq
    %v4743 = vshrl.u32 %v4742, 7
    %v4744 = vsub.s32 %v4741, %v4743
    %v4745 = vrot.slane %v4717, %v4744
    %v4746 = vcombine.high %v4724, %v4724
    %v4747 = vcombine.high %v4731, %v4731
    %v4748 = vcombine.high %v4738, %v4738
    %v4749 = vcombine.high %v4745, %v4745
    %v4750 = vcombine.high %v170, %v170
    %v4752 = vunpack.c.l.s4 1966171168
    %v4753 = vunpack.c.0.s8 %v4752
    %v4754 = vlaneseq
    %v4755 = vshrl.u32 %v4754, 7
    %v4756 = vsub.s32 %v4753, %v4755
    %v4757 = vrot.slane %v170, %v4756
    %v4759 = vunpack.c.l.s4 1966171168
    %v4760 = vunpack.c.0.s8 %v4759
    %v4761 = vlaneseq
    %v4762 = vshrl.u32 %v4761, 7
    %v4763 = vsub.s32 %v4760, %v4762
    %v4764 = vrot.slane %v4750, %v4763
    %v4765 = vcombine.high %v4757, %v4757
    %v4766 = vcombine.high %v4764, %v4764
    %v4768 = vunpack.c.l.s4 1966171168
    %v4769 = vunpack.c.0.s8 %v4768
    %v4770 = vlaneseq
    %v4771 = vshrl.u32 %v4770, 7
    %v4772 = vsub.s32 %v4769, %v4771
    %v4773 = vrot.slane %v4757, %v4772
    %v4775 = vunpack.c.l.s4 1966171168
    %v4776 = vunpack.c.0.s8 %v4775
    %v4777 = vlaneseq
    %v4778 = vshrl.u32 %v4777, 7
    %v4779 = vsub.s32 %v4776, %v4778
    %v4780 = vrot.slane %v4764, %v4779
    %v4782 = vunpack.c.l.s4 1966171168
    %v4783 = vunpack.c.0.s8 %v4782
    %v4784 = vlaneseq
    %v4785 = vshrl.u32 %v4784, 7
    %v4786 = vsub.s32 %v4783, %v4785
    %v4787 = vrot.slane %v4765, %v4786
    %v4789 = vunpack.c.l.s4 1966171168
    %v4790 = vunpack.c.0.s8 %v4789
    %v4791 = vlaneseq
    %v4792 = vshrl.u32 %v4791, 7
    %v4793 = vsub.s32 %v4790, %v4792
    %v4794 = vrot.slane %v4766, %v4793
    %v4795 = vcombine.high %v4773, %v4773
    %v4796 = vcombine.high %v4780, %v4780
    %v4797 = vcombine.high %v4787, %v4787
    %v4798 = vcombine.high %v4794, %v4794
    %v4799 = vcombine.high %v171, %v171
    %v4801 = vunpack.c.l.s4 1966171168
    %v4802 = vunpack.c.0.s8 %v4801
    %v4803 = vlaneseq
    %v4804 = vshrl.u32 %v4803, 7
    %v4805 = vsub.s32 %v4802, %v4804
    %v4806 = vrot.slane %v171, %v4805
    %v4808 = vunpack.c.l.s4 1966171168
    %v4809 = vunpack.c.0.s8 %v4808
    %v4810 = vlaneseq
    %v4811 = vshrl.u32 %v4810, 7
    %v4812 = vsub.s32 %v4809, %v4811
    %v4813 = vrot.slane %v4799, %v4812
    %v4814 = vcombine.high %v4806, %v4806
    %v4815 = vcombine.high %v4813, %v4813
    %v4817 = vunpack.c.l.s4 1966171168
    %v4818 = vunpack.c.0.s8 %v4817
    %v4819 = vlaneseq
    %v4820 = vshrl.u32 %v4819, 7
    %v4821 = vsub.s32 %v4818, %v4820
    %v4822 = vrot.slane %v4806, %v4821
    %v4824 = vunpack.c.l.s4 1966171168
    %v4825 = vunpack.c.0.s8 %v4824
    %v4826 = vlaneseq
    %v4827 = vshrl.u32 %v4826, 7
    %v4828 = vsub.s32 %v4825, %v4827
    %v4829 = vrot.slane %v4813, %v4828
    %v4831 = vunpack.c.l.s4 1966171168
    %v4832 = vunpack.c.0.s8 %v4831
    %v4833 = vlaneseq
    %v4834 = vshrl.u32 %v4833, 7
    %v4835 = vsub.s32 %v4832, %v4834
    %v4836 = vrot.slane %v4814, %v4835
    %v4838 = vunpack.c.l.s4 1966171168
    %v4839 = vunpack.c.0.s8 %v4838
    %v4840 = vlaneseq
    %v4841 = vshrl.u32 %v4840, 7
    %v4842 = vsub.s32 %v4839, %v4841
    %v4843 = vrot.slane %v4815, %v4842
    %v4844 = vcombine.high %v4822, %v4822
    %v4845 = vcombine.high %v4829, %v4829
    %v4846 = vcombine.high %v4836, %v4836
    %v4847 = vcombine.high %v4843, %v4843
    %v5392 = vunpack.c.l.b16 %v172
    %v5393 = vunpack.c.h.b16 %v172
    %v5394 = vunpack.c.l.b16 %v173
    %v5395 = vunpack.c.h.b16 %v173
    %v5396 = vunpack.c.l.b16 %v174
    %v5397 = vunpack.c.h.b16 %v174
    %v5398 = vunpack.c.l.b16 %v175
    %v5399 = vunpack.c.h.b16 %v175
    %v5400 = vunpack.c.l.b16 %v176
    %v5401 = vunpack.c.h.b16 %v176
    %v5402 = vunpack.c.l.b16 %v177
    %v5403 = vunpack.c.h.b16 %v177
    %v5404 = vunpack.c.l.b16 %v178
    %v5405 = vunpack.c.h.b16 %v178
    %v5406 = vunpack.c.l.b16 %v179
    %v5407 = vunpack.c.h.b16 %v179
    %v5408 = vunpack.c.l.b16 %v180
    %v5409 = vunpack.c.h.b16 %v180
    %v5410 = vunpack.c.l.b16 %v181
    %v5411 = vunpack.c.h.b16 %v181
    %v5412 = vunpack.c.l.b16 %v182
    %v5413 = vunpack.c.h.b16 %v182
    %v5414 = vunpack.c.l.b16 %v183
    %v5415 = vunpack.c.h.b16 %v183
    %v5416 = vunpack.c.l.b16 %v184
    %v5417 = vunpack.c.h.b16 %v184
    %v5418 = vunpack.c.l.b16 %v185
    %v5419 = vunpack.c.h.b16 %v185
    %v5420 = vunpack.c.l.b16 %v186
    %v5421 = vunpack.c.h.b16 %v186
    %v5422 = vunpack.c.l.b16 %v187
    %v5423 = vunpack.c.h.b16 %v187
    %v5424 = vunpack.c.l.b16 %v188
    %v5425 = vunpack.c.h.b16 %v188
    %v5426 = vunpack.c.l.b16 %v189
    %v5427 = vunpack.c.h.b16 %v189
    %v5428 = vunpack.c.l.b16 %v190
    %v5429 = vunpack.c.h.b16 %v190
    %v5430 = vunpack.c.l.b16 %v191
    %v5431 = vunpack.c.h.b16 %v191
    %v5432 = vunpack.c.l.b16 %v192
    %v5433 = vunpack.c.h.b16 %v192
    %v5434 = vunpack.c.l.b16 %v193
    %v5435 = vunpack.c.h.b16 %v193
    %v5436 = vunpack.c.l.b16 %v194
    %v5437 = vunpack.c.h.b16 %v194
    %v5438 = vunpack.c.l.b16 %v195
    %v5439 = vunpack.c.h.b16 %v195
    %v5440 = vunpack.c.l.b16 %v196
    %v5441 = vunpack.c.h.b16 %v196
    %v5442 = vunpack.c.l.b16 %v197
    %v5443 = vunpack.c.h.b16 %v197
    %v5444 = vunpack.c.l.b16 %v198
    %v5445 = vunpack.c.h.b16 %v198
    %v5446 = vunpack.c.l.b16 %v199
    %v5447 = vunpack.c.h.b16 %v199
    %v5448 = vunpack.c.l.b16 %v200
    %v5449 = vunpack.c.h.b16 %v200
    %v5450 = vunpack.c.l.b16 %v201
    %v5451 = vunpack.c.h.b16 %v201
    %v5452 = vunpack.c.l.b16 %v202
    %v5453 = vunpack.c.h.b16 %v202
    %v5454 = vunpack.c.l.b16 %v203
    %v5455 = vunpack.c.h.b16 %v203
    %v5456 = vunpack.c.l.b16 %v204
    %v5457 = vunpack.c.h.b16 %v204
    %v5458 = vunpack.c.l.b16 %v205
    %v5459 = vunpack.c.h.b16 %v205
    %v5460 = vunpack.c.l.b16 %v206
    %v5461 = vunpack.c.h.b16 %v206
    %v5462 = vunpack.c.l.b16 %v207
    %v5463 = vunpack.c.h.b16 %v207
    %v5464 = vunpack.c.l.b16 %v208
    %v5465 = vunpack.c.h.b16 %v208
    %v5466 = vunpack.c.l.b16 %v209
    %v5467 = vunpack.c.h.b16 %v209
    %v5468 = vunpack.c.l.b16 %v210
    %v5469 = vunpack.c.h.b16 %v210
    %v5470 = vunpack.c.l.b16 %v211
    %v5471 = vunpack.c.h.b16 %v211
    %v5472 = vunpack.c.l.b16 %v212
    %v5473 = vunpack.c.h.b16 %v212
    %v5474 = vunpack.c.l.b16 %v213
    %v5475 = vunpack.c.h.b16 %v213
    %v5476 = vunpack.c.l.b16 %v214
    %v5477 = vunpack.c.h.b16 %v214
    %v5478 = vunpack.c.l.b16 %v215
    %v5479 = vunpack.c.h.b16 %v215
    %v5480 = vunpack.c.l.b16 %v216
    %v5481 = vunpack.c.h.b16 %v216
    %v5482 = vunpack.c.l.b16 %v217
    %v5483 = vunpack.c.h.b16 %v217
    %v5484 = vunpack.c.l.b16 %v218
    %v5485 = vunpack.c.h.b16 %v218
    %v5486 = vunpack.c.l.b16 %v219
    %v5487 = vunpack.c.h.b16 %v219
    %v5488 = vunpack.c.l.b16 %v220
    %v5489 = vunpack.c.h.b16 %v220
    %v5490 = vunpack.c.l.b16 %v221
    %v5491 = vunpack.c.h.b16 %v221
    %v5492 = vunpack.c.l.b16 %v222
    %v5493 = vunpack.c.h.b16 %v222
    %v5494 = vunpack.c.l.b16 %v223
    %v5495 = vunpack.c.h.b16 %v223
    %v5496 = vunpack.c.l.b16 %v224
    %v5497 = vunpack.c.h.b16 %v224
    %v5498 = vunpack.c.l.b16 %v225
    %v5499 = vunpack.c.h.b16 %v225
    %v5500 = vunpack.c.l.b16 %v226
    %v5501 = vunpack.c.h.b16 %v226
    %v5502 = vunpack.c.l.b16 %v227
    %v5503 = vunpack.c.h.b16 %v227
    %v5504 = vunpack.c.l.b16 %v228
    %v5505 = vunpack.c.h.b16 %v228
    %v5506 = vunpack.c.l.b16 %v229
    %v5507 = vunpack.c.h.b16 %v229
    %v5508 = vunpack.c.l.b16 %v230
    %v5509 = vunpack.c.h.b16 %v230
    %v5510 = vunpack.c.l.b16 %v231
    %v5511 = vunpack.c.h.b16 %v231
    %v5512 = vunpack.c.l.b16 %v232
    %v5513 = vunpack.c.h.b16 %v232
    %v5514 = vunpack.c.l.b16 %v233
    %v5515 = vunpack.c.h.b16 %v233
    %v5516 = vunpack.c.l.b16 %v234
    %v5517 = vunpack.c.h.b16 %v234
    %v5518 = vunpack.c.l.b16 %v235
    %v5519 = vunpack.c.h.b16 %v235
    %v5520 = vunpack.c.l.b16 %v236
    %v5521 = vunpack.c.h.b16 %v236
    %v5522 = vunpack.c.l.b16 %v237
    %v5523 = vunpack.c.h.b16 %v237
    %v5524 = vunpack.c.l.b16 %v238
    %v5525 = vunpack.c.h.b16 %v238
    %v5526 = vunpack.c.l.b16 %v239
    %v5527 = vunpack.c.h.b16 %v239
    %v5528 = vunpack.c.l.b16 %v240
    %v5529 = vunpack.c.h.b16 %v240
    %v5530 = vunpack.c.l.b16 %v241
    %v5531 = vunpack.c.h.b16 %v241
    %v5532 = vunpack.c.l.b16 %v242
    %v5533 = vunpack.c.h.b16 %v242
    %v5534 = vunpack.c.l.b16 %v243
    %v5535 = vunpack.c.h.b16 %v243
    %v5536 = vunpack.c.l.b16 %v244
    %v5537 = vunpack.c.h.b16 %v244
    %v5538 = vunpack.c.l.b16 %v245
    %v5539 = vunpack.c.h.b16 %v245
    %v5540 = vunpack.c.l.b16 %v246
    %v5541 = vunpack.c.h.b16 %v246
    %v5542 = vunpack.c.l.b16 %v247
    %v5543 = vunpack.c.h.b16 %v247
    %v5544 = vunpack.c.l.b16 %v248
    %v5545 = vunpack.c.h.b16 %v248
    %v5546 = vunpack.c.l.b16 %v249
    %v5547 = vunpack.c.h.b16 %v249
    %v5548 = vunpack.c.l.b16 %v250
    %v5549 = vunpack.c.h.b16 %v250
    %v5550 = vunpack.c.l.b16 %v251
    %v5551 = vunpack.c.h.b16 %v251
    %v5552 = vunpack.c.l.b16 %v252
    %v5553 = vunpack.c.h.b16 %v252
    %v5554 = vunpack.c.l.b16 %v253
    %v5555 = vunpack.c.h.b16 %v253
    %v5556 = vunpack.c.l.b16 %v254
    %v5557 = vunpack.c.h.b16 %v254
    %v5558 = vunpack.c.l.b16 %v255
    %v5559 = vunpack.c.h.b16 %v255
    %v5560 = vunpack.c.l.b16 %v256
    %v5561 = vunpack.c.h.b16 %v256
    %v5562 = vunpack.c.l.b16 %v257
    %v5563 = vunpack.c.h.b16 %v257
    %v5564 = vunpack.c.l.b16 %v258
    %v5565 = vunpack.c.h.b16 %v258
    %v5566 = vunpack.c.l.b16 %v259
    %v5567 = vunpack.c.h.b16 %v259
    %v5568 = vunpack.c.l.b16 %v260
    %v5569 = vunpack.c.h.b16 %v260
    %v5570 = vunpack.c.l.b16 %v261
    %v5571 = vunpack.c.h.b16 %v261
    %v5572 = vunpack.c.l.b16 %v262
    %v5573 = vunpack.c.h.b16 %v262
    %v5574 = vunpack.c.l.b16 %v263
    %v5575 = vunpack.c.h.b16 %v263
    %v5576 = vunpack.c.l.b16 %v264
    %v5577 = vunpack.c.h.b16 %v264
    %v5578 = vunpack.c.l.b16 %v265
    %v5579 = vunpack.c.h.b16 %v265
    %v5580 = vunpack.c.l.b16 %v266
    %v5581 = vunpack.c.h.b16 %v266
    %v5582 = vunpack.c.l.b16 %v267
    %v5583 = vunpack.c.h.b16 %v267
    %v5584 = vunpack.c.l.b16 %v268
    %v5585 = vunpack.c.h.b16 %v268
    %v5586 = vunpack.c.l.b16 %v269
    %v5587 = vunpack.c.h.b16 %v269
    %v5588 = vunpack.c.l.b16 %v270
    %v5589 = vunpack.c.h.b16 %v270
    %v5590 = vunpack.c.l.b16 %v271
    %v5591 = vunpack.c.h.b16 %v271
    %v5592 = vunpack.c.l.b16 %v272
    %v5593 = vunpack.c.h.b16 %v272
    %v5594 = vunpack.c.l.b16 %v273
    %v5595 = vunpack.c.h.b16 %v273
    %v5596 = vunpack.c.l.b16 %v274
    %v5597 = vunpack.c.h.b16 %v274
    %v5598 = vunpack.c.l.b16 %v275
    %v5599 = vunpack.c.h.b16 %v275
    %v5600 = vunpack.c.l.b16 %v276
    %v5601 = vunpack.c.h.b16 %v276
    %v5602 = vunpack.c.l.b16 %v277
    %v5603 = vunpack.c.h.b16 %v277
    %v5604 = vunpack.c.l.b16 %v278
    %v5605 = vunpack.c.h.b16 %v278
    %v5606 = vunpack.c.l.b16 %v279
    %v5607 = vunpack.c.h.b16 %v279
    %v5608 = vunpack.c.l.b16 %v280
    %v5609 = vunpack.c.h.b16 %v280
    %v5610 = vunpack.c.l.b16 %v281
    %v5611 = vunpack.c.h.b16 %v281
    %v5612 = vunpack.c.l.b16 %v282
    %v5613 = vunpack.c.h.b16 %v282
    %v5614 = vunpack.c.l.b16 %v283
    %v5615 = vunpack.c.h.b16 %v283
    %v5616 = vunpack.c.l.b16 %v284
    %v5617 = vunpack.c.h.b16 %v284
    %v5618 = vunpack.c.l.b16 %v285
    %v5619 = vunpack.c.h.b16 %v285
    %v5620 = vunpack.c.l.b16 %v286
    %v5621 = vunpack.c.h.b16 %v286
    %v5622 = vunpack.c.l.b16 %v287
    %v5623 = vunpack.c.h.b16 %v287
    %v5624 = vunpack.c.l.b16 %v288
    %v5625 = vunpack.c.h.b16 %v288
    %v5626 = vunpack.c.l.b16 %v289
    %v5627 = vunpack.c.h.b16 %v289
    %v5628 = vunpack.c.l.b16 %v290
    %v5629 = vunpack.c.h.b16 %v290
    %v5630 = vunpack.c.l.b16 %v291
    %v5631 = vunpack.c.h.b16 %v291
    %v5632 = vunpack.c.l.b16 %v292
    %v5633 = vunpack.c.h.b16 %v292
    %v5634 = vunpack.c.l.b16 %v293
    %v5635 = vunpack.c.h.b16 %v293
    %v5636 = vunpack.c.l.b16 %v294
    %v5637 = vunpack.c.h.b16 %v294
    %v5638 = vunpack.c.l.b16 %v295
    %v5639 = vunpack.c.h.b16 %v295
    %v5640 = vunpack.c.l.b16 %v296
    %v5641 = vunpack.c.h.b16 %v296
    %v5642 = vunpack.c.l.b16 %v297
    %v5643 = vunpack.c.h.b16 %v297
    %v5644 = vunpack.c.l.b16 %v298
    %v5645 = vunpack.c.h.b16 %v298
    %v5646 = vunpack.c.l.b16 %v299
    %v5647 = vunpack.c.h.b16 %v299
    %v5648 = vunpack.c.l.b16 %v300
    %v5649 = vunpack.c.h.b16 %v300
    %v5650 = vunpack.c.l.b16 %v301
    %v5651 = vunpack.c.h.b16 %v301
    %v5652 = vunpack.c.l.b16 %v302
    %v5653 = vunpack.c.h.b16 %v302
    %v5654 = vunpack.c.l.b16 %v303
    %v5655 = vunpack.c.h.b16 %v303
    %v5656 = vunpack.c.l.b16 %v304
    %v5657 = vunpack.c.h.b16 %v304
    %v5658 = vunpack.c.l.b16 %v305
    %v5659 = vunpack.c.h.b16 %v305
    %v5660 = vunpack.c.l.b16 %v306
    %v5661 = vunpack.c.h.b16 %v306
    %v5662 = vunpack.c.l.b16 %v307
    %v5663 = vunpack.c.h.b16 %v307
    %v5664 = vunpack.c.l.b16 %v308
    %v5665 = vunpack.c.h.b16 %v308
    %v5666 = vunpack.c.l.b16 %v309
    %v5667 = vunpack.c.h.b16 %v309
    %v5668 = vunpack.c.l.b16 %v310
    %v5669 = vunpack.c.h.b16 %v310
    %v5670 = vunpack.c.l.b16 %v311
    %v5671 = vunpack.c.h.b16 %v311
    %v5672 = vunpack.c.l.b16 %v312
    %v5673 = vunpack.c.h.b16 %v312
    %v5674 = vunpack.c.l.b16 %v313
    %v5675 = vunpack.c.h.b16 %v313
    %v5676 = vunpack.c.l.b16 %v314
    %v5677 = vunpack.c.h.b16 %v314
    %v5678 = vunpack.c.l.b16 %v315
    %v5679 = vunpack.c.h.b16 %v315
    %v5680 = vunpack.c.l.b16 %v316
    %v5681 = vunpack.c.h.b16 %v316
    %v5682 = vunpack.c.l.b16 %v317
    %v5683 = vunpack.c.h.b16 %v317
    %v5684 = vunpack.c.l.b16 %v318
    %v5685 = vunpack.c.h.b16 %v318
    %v5686 = vunpack.c.l.b16 %v319
    %v5687 = vunpack.c.h.b16 %v319
    %v5688 = vunpack.c.l.b16 %v320
    %v5689 = vunpack.c.h.b16 %v320
    %v5690 = vunpack.c.l.b16 %v321
    %v5691 = vunpack.c.h.b16 %v321
    %v5692 = vunpack.c.l.b16 %v322
    %v5693 = vunpack.c.h.b16 %v322
    %v5694 = vunpack.c.l.b16 %v323
    %v5695 = vunpack.c.h.b16 %v323
    %v5696 = vunpack.c.l.b16 %v324
    %v5697 = vunpack.c.h.b16 %v324
    %v5698 = vunpack.c.l.b16 %v325
    %v5699 = vunpack.c.h.b16 %v325
    %v5700 = vunpack.c.l.b16 %v326
    %v5701 = vunpack.c.h.b16 %v326
    %v5702 = vunpack.c.l.b16 %v327
    %v5703 = vunpack.c.h.b16 %v327
    %v5704 = vunpack.c.l.b16 %v328
    %v5705 = vunpack.c.h.b16 %v328
    %v5706 = vunpack.c.l.b16 %v329
    %v5707 = vunpack.c.h.b16 %v329
    %v5708 = vunpack.c.l.b16 %v330
    %v5709 = vunpack.c.h.b16 %v330
    %v5710 = vunpack.c.l.b16 %v331
    %v5711 = vunpack.c.h.b16 %v331
    %v5712 = vunpack.c.l.b16 %v332
    %v5713 = vunpack.c.h.b16 %v332
    %v5714 = vunpack.c.l.b16 %v333
    %v5715 = vunpack.c.h.b16 %v333
    %v5716 = vunpack.c.l.b16 %v334
    %v5717 = vunpack.c.h.b16 %v334
    %v5718 = vunpack.c.l.b16 %v335
    %v5719 = vunpack.c.h.b16 %v335
    %v5720 = vunpack.c.l.b16 %v336
    %v5721 = vunpack.c.h.b16 %v336
    %v5722 = vunpack.c.l.b16 %v337
    %v5723 = vunpack.c.h.b16 %v337
    %v5724 = vunpack.c.l.b16 %v338
    %v5725 = vunpack.c.h.b16 %v338
    %v5726 = vunpack.c.l.b16 %v339
    %v5727 = vunpack.c.h.b16 %v339
    %v5728 = vunpack.c.l.b16 %v340
    %v5729 = vunpack.c.h.b16 %v340
    %v5730 = vunpack.c.l.b16 %v341
    %v5731 = vunpack.c.h.b16 %v341
    %v5732 = vunpack.c.l.b16 %v342
    %v5733 = vunpack.c.h.b16 %v342
    %v5734 = vunpack.c.l.b16 %v343
    %v5735 = vunpack.c.h.b16 %v343
    %v5736 = vunpack.c.l.b16 %v344
    %v5737 = vunpack.c.h.b16 %v344
    %v5738 = vunpack.c.l.b16 %v345
    %v5739 = vunpack.c.h.b16 %v345
    %v5740 = vunpack.c.l.b16 %v346
    %v5741 = vunpack.c.h.b16 %v346
    %v5742 = vunpack.c.l.b16 %v347
    %v5743 = vunpack.c.h.b16 %v347
    %v5744 = vunpack.c.l.b16 %v348
    %v5745 = vunpack.c.h.b16 %v348
    %v5746 = vunpack.c.l.b16 %v349
    %v5747 = vunpack.c.h.b16 %v349
    %v5748 = vunpack.c.l.b16 %v350
    %v5749 = vunpack.c.h.b16 %v350
    %v5750 = vunpack.c.l.b16 %v351
    %v5751 = vunpack.c.h.b16 %v351
    %v5752 = vunpack.c.l.b16 %v352
    %v5753 = vunpack.c.h.b16 %v352
    %v5754 = vunpack.c.l.b16 %v353
    %v5755 = vunpack.c.h.b16 %v353
    %v5756 = vunpack.c.l.b16 %v354
    %v5757 = vunpack.c.h.b16 %v354
    %v5758 = vunpack.c.l.b16 %v355
    %v5759 = vunpack.c.h.b16 %v355
    %v5760 = vunpack.c.l.b16 %v356
    %v5761 = vunpack.c.h.b16 %v356
    %v5762 = vunpack.c.l.b16 %v357
    %v5763 = vunpack.c.h.b16 %v357
    %v5764 = vunpack.c.l.b16 %v358
    %v5765 = vunpack.c.h.b16 %v358
    %v5766 = vunpack.c.l.b16 %v359
    %v5767 = vunpack.c.h.b16 %v359
    %v5768 = vunpack.c.l.b16 %v360
    %v5769 = vunpack.c.h.b16 %v360
    %v5770 = vunpack.c.l.b16 %v361
    %v5771 = vunpack.c.h.b16 %v361
    %v5772 = vunpack.c.l.b16 %v362
    %v5773 = vunpack.c.h.b16 %v362
    %v5774 = vunpack.c.l.b16 %v363
    %v5775 = vunpack.c.h.b16 %v363
    %v5776 = vunpack.c.l.b16 %v364
    %v5777 = vunpack.c.h.b16 %v364
    %v5778 = vunpack.c.l.b16 %v365
    %v5779 = vunpack.c.h.b16 %v365
    %v5780 = vunpack.c.l.b16 %v366
    %v5781 = vunpack.c.h.b16 %v366
    %v5782 = vunpack.c.l.b16 %v367
    %v5783 = vunpack.c.h.b16 %v367
    %v5784 = vunpack.c.l.b16 %v368
    %v5785 = vunpack.c.h.b16 %v368
    %v5786 = vunpack.c.l.b16 %v369
    %v5787 = vunpack.c.h.b16 %v369
    %v5788 = vunpack.c.l.b16 %v370
    %v5789 = vunpack.c.h.b16 %v370
    %v5790 = vunpack.c.l.b16 %v371
    %v5791 = vunpack.c.h.b16 %v371
    %v5792 = vunpack.c.l.b16 %v372
    %v5793 = vunpack.c.h.b16 %v372
    %v5794 = vunpack.c.l.b16 %v373
    %v5795 = vunpack.c.h.b16 %v373
    %v5796 = vunpack.c.l.b16 %v374
    %v5797 = vunpack.c.h.b16 %v374
    %v5798 = vunpack.c.l.b16 %v375
    %v5799 = vunpack.c.h.b16 %v375
    %v5800 = vunpack.c.l.b16 %v376
    %v5801 = vunpack.c.h.b16 %v376
    %v5802 = vunpack.c.l.b16 %v377
    %v5803 = vunpack.c.h.b16 %v377
    %v5804 = vunpack.c.l.b16 %v378
    %v5805 = vunpack.c.h.b16 %v378
    %v5806 = vunpack.c.l.b16 %v379
    %v5807 = vunpack.c.h.b16 %v379
    %v5808 = vunpack.c.l.b16 %v380
    %v5809 = vunpack.c.h.b16 %v380
    %v5810 = vunpack.c.l.b16 %v381
    %v5811 = vunpack.c.h.b16 %v381
    %v5812 = vunpack.c.l.b16 %v382
    %v5813 = vunpack.c.h.b16 %v382
    %v5814 = vunpack.c.l.b16 %v383
    %v5815 = vunpack.c.h.b16 %v383
    %v5816 = vunpack.c.l.b16 %v384
    %v5817 = vunpack.c.h.b16 %v384
    %v5818 = vunpack.c.l.b16 %v385
    %v5819 = vunpack.c.h.b16 %v385
    %v5820 = vunpack.c.l.b16 %v386
    %v5821 = vunpack.c.h.b16 %v386
    %v5822 = vunpack.c.l.b16 %v387
    %v5823 = vunpack.c.h.b16 %v387
    %v5824 = vunpack.c.l.b16 %v388
    %v5825 = vunpack.c.h.b16 %v388
    %v5826 = vunpack.c.l.b16 %v389
    %v5827 = vunpack.c.h.b16 %v389
    %v5828 = vunpack.c.l.b16 %v390
    %v5829 = vunpack.c.h.b16 %v390
    %v5830 = vunpack.c.l.b16 %v391
    %v5831 = vunpack.c.h.b16 %v391
    %v5832 = vunpack.c.l.b16 %v392
    %v5833 = vunpack.c.h.b16 %v392
    %v5834 = vunpack.c.l.b16 %v393
    %v5835 = vunpack.c.h.b16 %v393
    %v5836 = vunpack.c.l.b16 %v394
    %v5837 = vunpack.c.h.b16 %v394
    %v5838 = vunpack.c.l.b16 %v395
    %v5839 = vunpack.c.h.b16 %v395
    %v5840 = vunpack.c.l.b16 %v396
    %v5841 = vunpack.c.h.b16 %v396
    %v5842 = vunpack.c.l.b16 %v397
    %v5843 = vunpack.c.h.b16 %v397
    %v5844 = vunpack.c.l.b16 %v398
    %v5845 = vunpack.c.h.b16 %v398
    %v5846 = vunpack.c.l.b16 %v399
    %v5847 = vunpack.c.h.b16 %v399
    %v5848 = vunpack.c.l.b16 %v400
    %v5849 = vunpack.c.h.b16 %v400
    %v5850 = vunpack.c.l.b16 %v401
    %v5851 = vunpack.c.h.b16 %v401
    %v5852 = vunpack.c.l.b16 %v402
    %v5853 = vunpack.c.h.b16 %v402
    %v5854 = vunpack.c.l.b16 %v403
    %v5855 = vunpack.c.h.b16 %v403
    %v5856 = vunpack.c.l.b16 %v404
    %v5857 = vunpack.c.h.b16 %v404
    %v5858 = vunpack.c.l.b16 %v405
    %v5859 = vunpack.c.h.b16 %v405
    %v5860 = vunpack.c.l.b16 %v406
    %v5861 = vunpack.c.h.b16 %v406
    %v5862 = vunpack.c.l.b16 %v407
    %v5863 = vunpack.c.h.b16 %v407
    %v5864 = vunpack.c.l.b16 %v408
    %v5865 = vunpack.c.h.b16 %v408
    %v5866 = vunpack.c.l.b16 %v409
    %v5867 = vunpack.c.h.b16 %v409
    %v5868 = vunpack.c.l.b16 %v410
    %v5869 = vunpack.c.h.b16 %v410
    %v5870 = vunpack.c.l.b16 %v411
    %v5871 = vunpack.c.h.b16 %v411
    %v5872 = vunpack.c.l.b16 %v412
    %v5873 = vunpack.c.h.b16 %v412
    %v5874 = vunpack.c.l.b16 %v413
    %v5875 = vunpack.c.h.b16 %v413
    %v5876 = vunpack.c.l.b16 %v414
    %v5877 = vunpack.c.h.b16 %v414
    %v5878 = vunpack.c.l.b16 %v415
    %v5879 = vunpack.c.h.b16 %v415
    %v5880 = vunpack.c.l.b16 %v416
    %v5881 = vunpack.c.h.b16 %v416
    %v5882 = vunpack.c.l.b16 %v417
    %v5883 = vunpack.c.h.b16 %v417
    %v5884 = vunpack.c.l.b16 %v418
    %v5885 = vunpack.c.h.b16 %v418
    %v5886 = vunpack.c.l.b16 %v419
    %v5887 = vunpack.c.h.b16 %v419
    %v5888 = vunpack.c.l.b16 %v420
    %v5889 = vunpack.c.h.b16 %v420
    %v5890 = vunpack.c.l.b16 %v421
    %v5891 = vunpack.c.h.b16 %v421
    %v5892 = vunpack.c.l.b16 %v422
    %v5893 = vunpack.c.h.b16 %v422
    %v5894 = vunpack.c.l.b16 %v423
    %v5895 = vunpack.c.h.b16 %v423
    %v5896 = vunpack.c.l.b16 %v424
    %v5897 = vunpack.c.h.b16 %v424
    %v5898 = vunpack.c.l.b16 %v425
    %v5899 = vunpack.c.h.b16 %v425
    %v5900 = vunpack.c.l.b16 %v426
    %v5901 = vunpack.c.h.b16 %v426
    %v5902 = vunpack.c.l.b16 %v427
    %v5903 = vunpack.c.h.b16 %v427
    %v5904 = vunpack.c.l.b16 %v428
    %v5905 = vunpack.c.h.b16 %v428
    %v5906 = vunpack.c.l.b16 %v429
    %v5907 = vunpack.c.h.b16 %v429
    %v5908 = vunpack.c.l.b16 %v430
    %v5909 = vunpack.c.h.b16 %v430
    %v5910 = vunpack.c.l.b16 %v431
    %v5911 = vunpack.c.h.b16 %v431
    %v5912 = vunpack.c.l.b16 %v432
    %v5913 = vunpack.c.h.b16 %v432
    %v5914 = vunpack.c.l.b16 %v433
    %v5915 = vunpack.c.h.b16 %v433
    %v5916 = vunpack.c.l.b16 %v434
    %v5917 = vunpack.c.h.b16 %v434
    %v5918 = vunpack.c.l.b16 %v435
    %v5919 = vunpack.c.h.b16 %v435
    %v5920 = vunpack.c.l.b16 %v436
    %v5921 = vunpack.c.h.b16 %v436
    %v5922 = vunpack.c.l.b16 %v437
    %v5923 = vunpack.c.h.b16 %v437
    %v5924 = vunpack.c.l.b16 %v438
    %v5925 = vunpack.c.h.b16 %v438
    %v5926 = vunpack.c.l.b16 %v439
    %v5927 = vunpack.c.h.b16 %v439
    %v5928 = vunpack.c.l.b16 %v440
    %v5929 = vunpack.c.h.b16 %v440
    %v5930 = vunpack.c.l.b16 %v441
    %v5931 = vunpack.c.h.b16 %v441
    %v5932 = vunpack.c.l.b16 %v442
    %v5933 = vunpack.c.h.b16 %v442
    %v5934 = vunpack.c.l.b16 %v443
    %v5935 = vunpack.c.h.b16 %v443
    %v5936 = vunpack.c.l.b16 %v444
    %v5937 = vunpack.c.h.b16 %v444
    %v5938 = vunpack.c.l.b16 %v445
    %v5939 = vunpack.c.h.b16 %v445
    %v5940 = vunpack.c.l.b16 %v446
    %v5941 = vunpack.c.h.b16 %v446
    %v5942 = vunpack.c.l.b16 %v447
    %v5943 = vunpack.c.h.b16 %v447
    %v5944 = vunpack.c.l.b16 %v448
    %v5945 = vunpack.c.h.b16 %v448
    %v5946 = vunpack.c.l.b16 %v449
    %v5947 = vunpack.c.h.b16 %v449
    %v5948 = vunpack.c.l.b16 %v450
    %v5949 = vunpack.c.h.b16 %v450
    %v5950 = vunpack.c.l.b16 %v451
    %v5951 = vunpack.c.h.b16 %v451
    %v5952 = vunpack.c.l.b16 %v452
    %v5953 = vunpack.c.h.b16 %v452
    %v5954 = vunpack.c.l.b16 %v453
    %v5955 = vunpack.c.h.b16 %v453
    %v5956 = vunpack.c.l.b16 %v454
    %v5957 = vunpack.c.h.b16 %v454
    %v5958 = vunpack.c.l.b16 %v455
    %v5959 = vunpack.c.h.b16 %v455
    %v5960 = vunpack.c.l.b16 %v456
    %v5961 = vunpack.c.h.b16 %v456
    %v5962 = vunpack.c.l.b16 %v457
    %v5963 = vunpack.c.h.b16 %v457
    %v5964 = vunpack.c.l.b16 %v458
    %v5965 = vunpack.c.h.b16 %v458
    %v5966 = vunpack.c.l.b16 %v459
    %v5967 = vunpack.c.h.b16 %v459
    %v5968 = vunpack.c.l.b16 %v460
    %v5969 = vunpack.c.h.b16 %v460
    %v5970 = vunpack.c.l.b16 %v461
    %v5971 = vunpack.c.h.b16 %v461
    %v5972 = vunpack.c.l.b16 %v462
    %v5973 = vunpack.c.h.b16 %v462
    %v5974 = vunpack.c.l.b16 %v463
    %v5975 = vunpack.c.h.b16 %v463
    %v5976 = vunpack.c.l.b16 %v464
    %v5977 = vunpack.c.h.b16 %v464
    %v5978 = vunpack.c.l.b16 %v465
    %v5979 = vunpack.c.h.b16 %v465
    %v5980 = vunpack.c.l.b16 %v466
    %v5981 = vunpack.c.h.b16 %v466
    %v5982 = vunpack.c.l.b16 %v467
    %v5983 = vunpack.c.h.b16 %v467
    %v5984 = vunpack.c.l.b16 %v468
    %v5985 = vunpack.c.h.b16 %v468
    %v5986 = vunpack.c.l.b16 %v469
    %v5987 = vunpack.c.h.b16 %v469
    %v5988 = vunpack.c.l.b16 %v470
    %v5989 = vunpack.c.h.b16 %v470
    %v5990 = vunpack.c.l.b16 %v471
    %v5991 = vunpack.c.h.b16 %v471
    %v5992 = vunpack.c.l.b16 %v472
    %v5993 = vunpack.c.h.b16 %v472
    %v5994 = vunpack.c.l.b16 %v473
    %v5995 = vunpack.c.h.b16 %v473
    %v5996 = vunpack.c.l.b16 %v474
    %v5997 = vunpack.c.h.b16 %v474
    %v5998 = vunpack.c.l.b16 %v475
    %v5999 = vunpack.c.h.b16 %v475
    %v6000 = vunpack.c.l.b16 %v476
    %v6001 = vunpack.c.h.b16 %v476
    %v6002 = vunpack.c.l.b16 %v477
    %v6003 = vunpack.c.h.b16 %v477
    %v6004 = vunpack.c.l.b16 %v478
    %v6005 = vunpack.c.h.b16 %v478
    %v6006 = vunpack.c.l.b16 %v479
    %v6007 = vunpack.c.h.b16 %v479
    %v6008 = vunpack.c.l.b16 %v480
    %v6009 = vunpack.c.h.b16 %v480
    %v6010 = vunpack.c.l.b16 %v481
    %v6011 = vunpack.c.h.b16 %v481
    %v6012 = vunpack.c.l.b16 %v482
    %v6013 = vunpack.c.h.b16 %v482
    %v6014 = vunpack.c.l.b16 %v483
    %v6015 = vunpack.c.h.b16 %v483
    %v6016 = vunpack.c.l.b16 %v484
    %v6017 = vunpack.c.h.b16 %v484
    %v6018 = vunpack.c.l.b16 %v485
    %v6019 = vunpack.c.h.b16 %v485
    %v6020 = vunpack.c.l.b16 %v486
    %v6021 = vunpack.c.h.b16 %v486
    %v6022 = vunpack.c.l.b16 %v487
    %v6023 = vunpack.c.h.b16 %v487
    %v6024 = vunpack.c.l.b16 %v488
    %v6025 = vunpack.c.h.b16 %v488
    %v6026 = vunpack.c.l.b16 %v489
    %v6027 = vunpack.c.h.b16 %v489
    %v6028 = vunpack.c.l.b16 %v490
    %v6029 = vunpack.c.h.b16 %v490
    %v6030 = vunpack.c.l.b16 %v491
    %v6031 = vunpack.c.h.b16 %v491
    %v6032 = vunpack.c.l.b16 %v492
    %v6033 = vunpack.c.h.b16 %v492
    %v6034 = vunpack.c.l.b16 %v493
    %v6035 = vunpack.c.h.b16 %v493
    %v6036 = vunpack.c.l.b16 %v494
    %v6037 = vunpack.c.h.b16 %v494
    %v6038 = vunpack.c.l.b16 %v495
    %v6039 = vunpack.c.h.b16 %v495
    %v6040 = vunpack.c.l.b16 %v496
    %v6041 = vunpack.c.h.b16 %v496
    %v6042 = vunpack.c.l.b16 %v497
    %v6043 = vunpack.c.h.b16 %v497
    %v6044 = vunpack.c.l.b16 %v498
    %v6045 = vunpack.c.h.b16 %v498
    %v6046 = vunpack.c.l.b16 %v499
    %v6047 = vunpack.c.h.b16 %v499
    %v6048 = vunpack.c.l.b16 %v500
    %v6049 = vunpack.c.h.b16 %v500
    %v6050 = vunpack.c.l.b16 %v501
    %v6051 = vunpack.c.h.b16 %v501
    %v6052 = vunpack.c.l.b16 %v502
    %v6053 = vunpack.c.h.b16 %v502
    %v6054 = vunpack.c.l.b16 %v503
    %v6055 = vunpack.c.h.b16 %v503
    %v6056 = vunpack.c.l.b16 %v504
    %v6057 = vunpack.c.h.b16 %v504
    %v6058 = vunpack.c.l.b16 %v505
    %v6059 = vunpack.c.h.b16 %v505
    %v6060 = vunpack.c.l.b16 %v506
    %v6061 = vunpack.c.h.b16 %v506
    %v6062 = vunpack.c.l.b16 %v507
    %v6063 = vunpack.c.h.b16 %v507
    %v6064 = vunpack.c.l.b16 %v508
    %v6065 = vunpack.c.h.b16 %v508
    %v6066 = vunpack.c.l.b16 %v509
    %v6067 = vunpack.c.h.b16 %v509
    %v6068 = vunpack.c.l.b16 %v510
    %v6069 = vunpack.c.h.b16 %v510
    %v6070 = vunpack.c.l.b16 %v511
    %v6071 = vunpack.c.h.b16 %v511
    %v6072 = vunpack.c.l.b16 %v512
    %v6073 = vunpack.c.h.b16 %v512
    %v6074 = vunpack.c.l.b16 %v513
    %v6075 = vunpack.c.h.b16 %v513
    %v6076 = vunpack.c.l.b16 %v514
    %v6077 = vunpack.c.h.b16 %v514
    %v6078 = vunpack.c.l.b16 %v515
    %v6079 = vunpack.c.h.b16 %v515
    %v6080 = vunpack.c.l.b16 %v516
    %v6081 = vunpack.c.h.b16 %v516
    %v6082 = vunpack.c.l.b16 %v517
    %v6083 = vunpack.c.h.b16 %v517
    %v6084 = vunpack.c.l.b16 %v518
    %v6085 = vunpack.c.h.b16 %v518
    %v6086 = vunpack.c.l.b16 %v519
    %v6087 = vunpack.c.h.b16 %v519
    %v6088 = vunpack.c.l.b16 %v520
    %v6089 = vunpack.c.h.b16 %v520
    %v6090 = vunpack.c.l.b16 %v521
    %v6091 = vunpack.c.h.b16 %v521
    %v6092 = vunpack.c.l.b16 %v522
    %v6093 = vunpack.c.h.b16 %v522
    %v6094 = vunpack.c.l.b16 %v523
    %v6095 = vunpack.c.h.b16 %v523
    %v6096 = vunpack.c.l.b16 %v524
    %v6097 = vunpack.c.h.b16 %v524
    %v6098 = vunpack.c.l.b16 %v525
    %v6099 = vunpack.c.h.b16 %v525
    %v6100 = vunpack.c.l.b16 %v526
    %v6101 = vunpack.c.h.b16 %v526
    %v6102 = vunpack.c.l.b16 %v527
    %v6103 = vunpack.c.h.b16 %v527
    %v6104 = vunpack.c.l.b16 %v528
    %v6105 = vunpack.c.h.b16 %v528
    %v6106 = vunpack.c.l.b16 %v529
    %v6107 = vunpack.c.h.b16 %v529
    %v6108 = vunpack.c.l.b16 %v530
    %v6109 = vunpack.c.h.b16 %v530
    %v6110 = vunpack.c.l.b16 %v531
    %v6111 = vunpack.c.h.b16 %v531
    %v6112 = vunpack.c.l.b16 %v532
    %v6113 = vunpack.c.h.b16 %v532
    %v6114 = vunpack.c.l.b16 %v533
    %v6115 = vunpack.c.h.b16 %v533
    %v6116 = vunpack.c.l.b16 %v534
    %v6117 = vunpack.c.h.b16 %v534
    %v6118 = vunpack.c.l.b16 %v535
    %v6119 = vunpack.c.h.b16 %v535
    %v6120 = vunpack.c.l.b16 %v536
    %v6121 = vunpack.c.h.b16 %v536
    %v6122 = vunpack.c.l.b16 %v537
    %v6123 = vunpack.c.h.b16 %v537
    %v6124 = vunpack.c.l.b16 %v538
    %v6125 = vunpack.c.h.b16 %v538
    %v6126 = vunpack.c.l.b16 %v539
    %v6127 = vunpack.c.h.b16 %v539
    %v6128 = vunpack.c.l.b16 %v540
    %v6129 = vunpack.c.h.b16 %v540
    %v6130 = vunpack.c.l.b16 %v541
    %v6131 = vunpack.c.h.b16 %v541
    %v6132 = vunpack.c.l.b16 %v542
    %v6133 = vunpack.c.h.b16 %v542
    %v6134 = vunpack.c.l.b16 %v543
    %v6135 = vunpack.c.h.b16 %v543
    %v6136 = vunpack.c.l.b16 %v544
    %v6137 = vunpack.c.h.b16 %v544
    %v6138 = vunpack.c.l.b16 %v545
    %v6139 = vunpack.c.h.b16 %v545
    %v6140 = vunpack.c.l.b16 %v546
    %v6141 = vunpack.c.h.b16 %v546
    %v6142 = vunpack.c.l.b16 %v547
    %v6143 = vunpack.c.h.b16 %v547
    %v6144 = vunpack.c.l.b16 %v548
    %v6145 = vunpack.c.h.b16 %v548
    %v6146 = vunpack.c.l.b16 %v549
    %v6147 = vunpack.c.h.b16 %v549
    %v6148 = vunpack.c.l.b16 %v550
    %v6149 = vunpack.c.h.b16 %v550
    %v6150 = vunpack.c.l.b16 %v551
    %v6151 = vunpack.c.h.b16 %v551
    %v6152 = vunpack.c.l.b16 %v552
    %v6153 = vunpack.c.h.b16 %v552
    %v6154 = vunpack.c.l.b16 %v553
    %v6155 = vunpack.c.h.b16 %v553
    %v6156 = vunpack.c.l.b16 %v554
    %v6157 = vunpack.c.h.b16 %v554
    %v6158 = vunpack.c.l.b16 %v555
    %v6159 = vunpack.c.h.b16 %v555
    %v6160 = vunpack.c.l.b16 %v556
    %v6161 = vunpack.c.h.b16 %v556
    %v6162 = vunpack.c.l.b16 %v557
    %v6163 = vunpack.c.h.b16 %v557
    %v6164 = vunpack.c.l.b16 %v558
    %v6165 = vunpack.c.h.b16 %v558
    %v6166 = vunpack.c.l.b16 %v559
    %v6167 = vunpack.c.h.b16 %v559
    %v6168 = vunpack.c.l.b16 %v560
    %v6169 = vunpack.c.h.b16 %v560
    %v6170 = vunpack.c.l.b16 %v561
    %v6171 = vunpack.c.h.b16 %v561
    %v6172 = vunpack.c.l.b16 %v562
    %v6173 = vunpack.c.h.b16 %v562
    %v6174 = vunpack.c.l.b16 %v563
    %v6175 = vunpack.c.h.b16 %v563
    %v6176 = vunpack.c.l.b16 %v564
    %v6177 = vunpack.c.h.b16 %v564
    %v6178 = vunpack.c.l.b16 %v565
    %v6179 = vunpack.c.h.b16 %v565
    %v6180 = vunpack.c.l.b16 %v566
    %v6181 = vunpack.c.h.b16 %v566
    %v6182 = vunpack.c.l.b16 %v567
    %v6183 = vunpack.c.h.b16 %v567
    %v6184 = vunpack.c.l.b16 %v568
    %v6185 = vunpack.c.h.b16 %v568
    %v6186 = vunpack.c.l.b16 %v569
    %v6187 = vunpack.c.h.b16 %v569
    %v6188 = vunpack.c.l.b16 %v570
    %v6189 = vunpack.c.h.b16 %v570
    %v6190 = vunpack.c.l.b16 %v571
    %v6191 = vunpack.c.h.b16 %v571
    %v6192 = vunpack.c.l.b16 %v572
    %v6193 = vunpack.c.h.b16 %v572
    %v6194 = vunpack.c.l.b16 %v573
    %v6195 = vunpack.c.h.b16 %v573
    %v6196 = vunpack.c.l.b16 %v574
    %v6197 = vunpack.c.h.b16 %v574
    %v6198 = vunpack.c.l.b16 %v575
    %v6199 = vunpack.c.h.b16 %v575
    %v6200 = vunpack.c.l.b16 %v576
    %v6201 = vunpack.c.h.b16 %v576
    %v6202 = vunpack.c.l.b16 %v577
    %v6203 = vunpack.c.h.b16 %v577
    %v6204 = vunpack.c.l.b16 %v578
    %v6205 = vunpack.c.h.b16 %v578
    %v6206 = vunpack.c.l.b16 %v579
    %v6207 = vunpack.c.h.b16 %v579
    %v6208 = vunpack.c.l.b16 %v580
    %v6209 = vunpack.c.h.b16 %v580
    %v6210 = vunpack.c.l.b16 %v581
    %v6211 = vunpack.c.h.b16 %v581
    %v6212 = vunpack.c.l.b16 %v582
    %v6213 = vunpack.c.h.b16 %v582
    %v6214 = vunpack.c.l.b16 %v583
    %v6215 = vunpack.c.h.b16 %v583
    %v6216 = vunpack.c.l.b16 %v584
    %v6217 = vunpack.c.h.b16 %v584
    %v6218 = vunpack.c.l.b16 %v585
    %v6219 = vunpack.c.h.b16 %v585
    %v6220 = vunpack.c.l.b16 %v586
    %v6221 = vunpack.c.h.b16 %v586
    %v6222 = vunpack.c.l.b16 %v587
    %v6223 = vunpack.c.h.b16 %v587
    %v6224 = vunpack.c.l.b16 %v588
    %v6225 = vunpack.c.h.b16 %v588
    %v6226 = vunpack.c.l.b16 %v589
    %v6227 = vunpack.c.h.b16 %v589
    %v6228 = vunpack.c.l.b16 %v590
    %v6229 = vunpack.c.h.b16 %v590
    %v6230 = vunpack.c.l.b16 %v591
    %v6231 = vunpack.c.h.b16 %v591
    %v6232 = vunpack.c.l.b16 %v592
    %v6233 = vunpack.c.h.b16 %v592
    %v6234 = vunpack.c.l.b16 %v593
    %v6235 = vunpack.c.h.b16 %v593
    %v6236 = vunpack.c.l.b16 %v594
    %v6237 = vunpack.c.h.b16 %v594
    %v6238 = vunpack.c.l.b16 %v595
    %v6239 = vunpack.c.h.b16 %v595
    %v6240 = vunpack.c.l.b16 %v596
    %v6241 = vunpack.c.h.b16 %v596
    %v6242 = vunpack.c.l.b16 %v597
    %v6243 = vunpack.c.h.b16 %v597
    %v6244 = vunpack.c.l.b16 %v598
    %v6245 = vunpack.c.h.b16 %v598
    %v6246 = vunpack.c.l.b16 %v599
    %v6247 = vunpack.c.h.b16 %v599
    %v6248 = vunpack.c.l.b16 %v600
    %v6249 = vunpack.c.h.b16 %v600
    %v6250 = vunpack.c.l.b16 %v601
    %v6251 = vunpack.c.h.b16 %v601
    %v6252 = vunpack.c.l.b16 %v602
    %v6253 = vunpack.c.h.b16 %v602
    %v6254 = vunpack.c.l.b16 %v603
    %v6255 = vunpack.c.h.b16 %v603
    %v6256 = vunpack.c.l.b16 %v604
    %v6257 = vunpack.c.h.b16 %v604
    %v6258 = vunpack.c.l.b16 %v605
    %v6259 = vunpack.c.h.b16 %v605
    %v6260 = vunpack.c.l.b16 %v606
    %v6261 = vunpack.c.h.b16 %v606
    %v6262 = vunpack.c.l.b16 %v607
    %v6263 = vunpack.c.h.b16 %v607
    %v6264 = vunpack.c.l.b16 %v608
    %v6265 = vunpack.c.h.b16 %v608
    %v6266 = vunpack.c.l.b16 %v609
    %v6267 = vunpack.c.h.b16 %v609
    %v6268 = vunpack.c.l.b16 %v610
    %v6269 = vunpack.c.h.b16 %v610
    %v6270 = vunpack.c.l.b16 %v611
    %v6271 = vunpack.c.h.b16 %v611
    %v6272 = vunpack.c.l.b16 %v612
    %v6273 = vunpack.c.h.b16 %v612
    %v6274 = vunpack.c.l.b16 %v613
    %v6275 = vunpack.c.h.b16 %v613
    %v6276 = vunpack.c.l.b16 %v614
    %v6277 = vunpack.c.h.b16 %v614
    %v6278 = vunpack.c.l.b16 %v615
    %v6279 = vunpack.c.h.b16 %v615
    %v6280 = vunpack.c.l.b16 %v616
    %v6281 = vunpack.c.h.b16 %v616
    %v6282 = vunpack.c.l.b16 %v617
    %v6283 = vunpack.c.h.b16 %v617
    %v6284 = vunpack.c.l.b16 %v618
    %v6285 = vunpack.c.h.b16 %v618
    %v6286 = vunpack.c.l.b16 %v619
    %v6287 = vunpack.c.h.b16 %v619
    %v6288 = vunpack.c.l.b16 %v620
    %v6289 = vunpack.c.h.b16 %v620
    %v6290 = vunpack.c.l.b16 %v621
    %v6291 = vunpack.c.h.b16 %v621
    %v6292 = vunpack.c.l.b16 %v622
    %v6293 = vunpack.c.h.b16 %v622
    %v6294 = vunpack.c.l.b16 %v623
    %v6295 = vunpack.c.h.b16 %v623
    %v6296 = vunpack.c.l.b16 %v624
    %v6297 = vunpack.c.h.b16 %v624
    %v6298 = vunpack.c.l.b16 %v625
    %v6299 = vunpack.c.h.b16 %v625
    %v6300 = vunpack.c.l.b16 %v626
    %v6301 = vunpack.c.h.b16 %v626
    %v6302 = vunpack.c.l.b16 %v627
    %v6303 = vunpack.c.h.b16 %v627
    %v6304 = vunpack.c.l.b16 %v628
    %v6305 = vunpack.c.h.b16 %v628
    %v6306 = vunpack.c.l.b16 %v629
    %v6307 = vunpack.c.h.b16 %v629
    %v6308 = vunpack.c.l.b16 %v630
    %v6309 = vunpack.c.h.b16 %v630
    %v6310 = vunpack.c.l.b16 %v631
    %v6311 = vunpack.c.h.b16 %v631
    %v6312 = vunpack.c.l.b16 %v632
    %v6313 = vunpack.c.h.b16 %v632
    %v6314 = vunpack.c.l.b16 %v633
    %v6315 = vunpack.c.h.b16 %v633
    %v6316 = vunpack.c.l.b16 %v634
    %v6317 = vunpack.c.h.b16 %v634
    %v6318 = vunpack.c.l.b16 %v635
    %v6319 = vunpack.c.h.b16 %v635
    %v6320 = vunpack.c.l.b16 %v636
    %v6321 = vunpack.c.h.b16 %v636
    %v6322 = vunpack.c.l.b16 %v637
    %v6323 = vunpack.c.h.b16 %v637
    %v6324 = vunpack.c.l.b16 %v638
    %v6325 = vunpack.c.h.b16 %v638
    %v6326 = vunpack.c.l.b16 %v639
    %v6327 = vunpack.c.h.b16 %v639
    %v6328 = vunpack.c.l.b16 %v640
    %v6329 = vunpack.c.h.b16 %v640
    %v6330 = vunpack.c.l.b16 %v641
    %v6331 = vunpack.c.h.b16 %v641
    %v6332 = vunpack.c.l.b16 %v642
    %v6333 = vunpack.c.h.b16 %v642
    %v6334 = vunpack.c.l.b16 %v643
    %v6335 = vunpack.c.h.b16 %v643
    %v6336 = vunpack.c.l.b16 %v644
    %v6337 = vunpack.c.h.b16 %v644
    %v6338 = vunpack.c.l.b16 %v645
    %v6339 = vunpack.c.h.b16 %v645
    %v6340 = vunpack.c.l.b16 %v646
    %v6341 = vunpack.c.h.b16 %v646
    %v6342 = vunpack.c.l.b16 %v647
    %v6343 = vunpack.c.h.b16 %v647
    %v6344 = vunpack.c.l.b16 %v648
    %v6345 = vunpack.c.h.b16 %v648
    %v6346 = vunpack.c.l.b16 %v649
    %v6347 = vunpack.c.h.b16 %v649
    %v6348 = vunpack.c.l.b16 %v650
    %v6349 = vunpack.c.h.b16 %v650
    %v6350 = vunpack.c.l.b16 %v651
    %v6351 = vunpack.c.h.b16 %v651
    %v6352 = vunpack.c.l.b16 %v652
    %v6353 = vunpack.c.h.b16 %v652
    %v6354 = vunpack.c.l.b16 %v653
    %v6355 = vunpack.c.h.b16 %v653
    %v6356 = vunpack.c.l.b16 %v654
    %v6357 = vunpack.c.h.b16 %v654
    %v6358 = vunpack.c.l.b16 %v655
    %v6359 = vunpack.c.h.b16 %v655
    %v6360 = vunpack.c.l.b16 %v656
    %v6361 = vunpack.c.h.b16 %v656
    %v6362 = vunpack.c.l.b16 %v657
    %v6363 = vunpack.c.h.b16 %v657
    %v6364 = vunpack.c.l.b16 %v658
    %v6365 = vunpack.c.h.b16 %v658
    %v6366 = vunpack.c.l.b16 %v659
    %v6367 = vunpack.c.h.b16 %v659
    %v6368 = vunpack.c.l.b16 %v660
    %v6369 = vunpack.c.h.b16 %v660
    %v6370 = vunpack.c.l.b16 %v661
    %v6371 = vunpack.c.h.b16 %v661
    %v6372 = vunpack.c.l.b16 %v662
    %v6373 = vunpack.c.h.b16 %v662
    %v6374 = vunpack.c.l.b16 %v663
    %v6375 = vunpack.c.h.b16 %v663
    %v6376 = vunpack.c.l.b16 %v664
    %v6377 = vunpack.c.h.b16 %v664
    %v6378 = vunpack.c.l.b16 %v665
    %v6379 = vunpack.c.h.b16 %v665
    %v6380 = vunpack.c.l.b16 %v666
    %v6381 = vunpack.c.h.b16 %v666
    %v6382 = vunpack.c.l.b16 %v667
    %v6383 = vunpack.c.h.b16 %v667
    %v6384 = vunpack.c.l.b16 %v668
    %v6385 = vunpack.c.h.b16 %v668
    %v6386 = vunpack.c.l.b16 %v669
    %v6387 = vunpack.c.h.b16 %v669
    %v6388 = vunpack.c.l.b16 %v670
    %v6389 = vunpack.c.h.b16 %v670
    %v6390 = vunpack.c.l.b16 %v671
    %v6391 = vunpack.c.h.b16 %v671
    %v6392 = vunpack.c.l.b16 %v672
    %v6393 = vunpack.c.h.b16 %v672
    %v6394 = vunpack.c.l.b16 %v673
    %v6395 = vunpack.c.h.b16 %v673
    %v6396 = vunpack.c.l.b16 %v674
    %v6397 = vunpack.c.h.b16 %v674
    %v6398 = vunpack.c.l.b16 %v675
    %v6399 = vunpack.c.h.b16 %v675
    %v6400 = vunpack.c.l.b16 %v676
    %v6401 = vunpack.c.h.b16 %v676
    %v6402 = vunpack.c.l.b16 %v677
    %v6403 = vunpack.c.h.b16 %v677
    %v6404 = vunpack.c.l.b16 %v678
    %v6405 = vunpack.c.h.b16 %v678
    %v6406 = vunpack.c.l.b16 %v679
    %v6407 = vunpack.c.h.b16 %v679
    %v6408 = vunpack.c.l.b16 %v680
    %v6409 = vunpack.c.h.b16 %v680
    %v6410 = vunpack.c.l.b16 %v681
    %v6411 = vunpack.c.h.b16 %v681
    %v6412 = vunpack.c.l.b16 %v682
    %v6413 = vunpack.c.h.b16 %v682
    %v6414 = vunpack.c.l.b16 %v683
    %v6415 = vunpack.c.h.b16 %v683
    %v6416 = vpack.c.b16 %v5394, %v5392
    %v6417 = vpack.c.b16 %v5395, %v5393
    %v6418 = vpack.c.b16 %v5398, %v5396
    %v6419 = vpack.c.b16 %v5399, %v5397
    %v6420 = vpack.c.b16 %v5402, %v5400
    %v6421 = vpack.c.b16 %v5403, %v5401
    %v6422 = vpack.c.b16 %v5406, %v5404
    %v6423 = vpack.c.b16 %v5407, %v5405
    %v6424 = vpack.c.b16 %v5410, %v5408
    %v6425 = vpack.c.b16 %v5411, %v5409
    %v6426 = vpack.c.b16 %v5414, %v5412
    %v6427 = vpack.c.b16 %v5415, %v5413
    %v6428 = vpack.c.b16 %v5418, %v5416
    %v6429 = vpack.c.b16 %v5419, %v5417
    %v6430 = vpack.c.b16 %v5422, %v5420
    %v6431 = vpack.c.b16 %v5423, %v5421
    %v6432 = vpack.c.b16 %v5426, %v5424
    %v6433 = vpack.c.b16 %v5427, %v5425
    %v6434 = vpack.c.b16 %v5430, %v5428
    %v6435 = vpack.c.b16 %v5431, %v5429
    %v6436 = vpack.c.b16 %v5434, %v5432
    %v6437 = vpack.c.b16 %v5435, %v5433
    %v6438 = vpack.c.b16 %v5438, %v5436
    %v6439 = vpack.c.b16 %v5439, %v5437
    %v6440 = vpack.c.b16 %v5442, %v5440
    %v6441 = vpack.c.b16 %v5443, %v5441
    %v6442 = vpack.c.b16 %v5446, %v5444
    %v6443 = vpack.c.b16 %v5447, %v5445
    %v6444 = vpack.c.b16 %v5450, %v5448
    %v6445 = vpack.c.b16 %v5451, %v5449
    %v6446 = vpack.c.b16 %v5454, %v5452
    %v6447 = vpack.c.b16 %v5455, %v5453
    %v6448 = vpack.c.b16 %v5458, %v5456
    %v6449 = vpack.c.b16 %v5459, %v5457
    %v6450 = vpack.c.b16 %v5462, %v5460
    %v6451 = vpack.c.b16 %v5463, %v5461
    %v6452 = vpack.c.b16 %v5466, %v5464
    %v6453 = vpack.c.b16 %v5467, %v5465
    %v6454 = vpack.c.b16 %v5470, %v5468
    %v6455 = vpack.c.b16 %v5471, %v5469
    %v6456 = vpack.c.b16 %v5474, %v5472
    %v6457 = vpack.c.b16 %v5475, %v5473
    %v6458 = vpack.c.b16 %v5478, %v5476
    %v6459 = vpack.c.b16 %v5479, %v5477
    %v6460 = vpack.c.b16 %v5482, %v5480
    %v6461 = vpack.c.b16 %v5483, %v5481
    %v6462 = vpack.c.b16 %v5486, %v5484
    %v6463 = vpack.c.b16 %v5487, %v5485
    %v6464 = vpack.c.b16 %v5490, %v5488
    %v6465 = vpack.c.b16 %v5491, %v5489
    %v6466 = vpack.c.b16 %v5494, %v5492
    %v6467 = vpack.c.b16 %v5495, %v5493
    %v6468 = vpack.c.b16 %v5498, %v5496
    %v6469 = vpack.c.b16 %v5499, %v5497
    %v6470 = vpack.c.b16 %v5502, %v5500
    %v6471 = vpack.c.b16 %v5503, %v5501
    %v6472 = vpack.c.b16 %v5506, %v5504
    %v6473 = vpack.c.b16 %v5507, %v5505
    %v6474 = vpack.c.b16 %v5510, %v5508
    %v6475 = vpack.c.b16 %v5511, %v5509
    %v6476 = vpack.c.b16 %v5514, %v5512
    %v6477 = vpack.c.b16 %v5515, %v5513
    %v6478 = vpack.c.b16 %v5518, %v5516
    %v6479 = vpack.c.b16 %v5519, %v5517
    %v6480 = vpack.c.b16 %v5522, %v5520
    %v6481 = vpack.c.b16 %v5523, %v5521
    %v6482 = vpack.c.b16 %v5526, %v5524
    %v6483 = vpack.c.b16 %v5527, %v5525
    %v6484 = vpack.c.b16 %v5530, %v5528
    %v6485 = vpack.c.b16 %v5531, %v5529
    %v6486 = vpack.c.b16 %v5534, %v5532
    %v6487 = vpack.c.b16 %v5535, %v5533
    %v6488 = vpack.c.b16 %v5538, %v5536
    %v6489 = vpack.c.b16 %v5539, %v5537
    %v6490 = vpack.c.b16 %v5542, %v5540
    %v6491 = vpack.c.b16 %v5543, %v5541
    %v6492 = vpack.c.b16 %v5546, %v5544
    %v6493 = vpack.c.b16 %v5547, %v5545
    %v6494 = vpack.c.b16 %v5550, %v5548
    %v6495 = vpack.c.b16 %v5551, %v5549
    %v6496 = vpack.c.b16 %v5554, %v5552
    %v6497 = vpack.c.b16 %v5555, %v5553
    %v6498 = vpack.c.b16 %v5558, %v5556
    %v6499 = vpack.c.b16 %v5559, %v5557
    %v6500 = vpack.c.b16 %v5562, %v5560
    %v6501 = vpack.c.b16 %v5563, %v5561
    %v6502 = vpack.c.b16 %v5566, %v5564
    %v6503 = vpack.c.b16 %v5567, %v5565
    %v6504 = vpack.c.b16 %v5570, %v5568
    %v6505 = vpack.c.b16 %v5571, %v5569
    %v6506 = vpack.c.b16 %v5574, %v5572
    %v6507 = vpack.c.b16 %v5575, %v5573
    %v6508 = vpack.c.b16 %v5578, %v5576
    %v6509 = vpack.c.b16 %v5579, %v5577
    %v6510 = vpack.c.b16 %v5582, %v5580
    %v6511 = vpack.c.b16 %v5583, %v5581
    %v6512 = vpack.c.b16 %v5586, %v5584
    %v6513 = vpack.c.b16 %v5587, %v5585
    %v6514 = vpack.c.b16 %v5590, %v5588
    %v6515 = vpack.c.b16 %v5591, %v5589
    %v6516 = vpack.c.b16 %v5594, %v5592
    %v6517 = vpack.c.b16 %v5595, %v5593
    %v6518 = vpack.c.b16 %v5598, %v5596
    %v6519 = vpack.c.b16 %v5599, %v5597
    %v6520 = vpack.c.b16 %v5602, %v5600
    %v6521 = vpack.c.b16 %v5603, %v5601
    %v6522 = vpack.c.b16 %v5606, %v5604
    %v6523 = vpack.c.b16 %v5607, %v5605
    %v6524 = vpack.c.b16 %v5610, %v5608
    %v6525 = vpack.c.b16 %v5611, %v5609
    %v6526 = vpack.c.b16 %v5614, %v5612
    %v6527 = vpack.c.b16 %v5615, %v5613
    %v6528 = vpack.c.b16 %v5618, %v5616
    %v6529 = vpack.c.b16 %v5619, %v5617
    %v6530 = vpack.c.b16 %v5622, %v5620
    %v6531 = vpack.c.b16 %v5623, %v5621
    %v6532 = vpack.c.b16 %v5626, %v5624
    %v6533 = vpack.c.b16 %v5627, %v5625
    %v6534 = vpack.c.b16 %v5630, %v5628
    %v6535 = vpack.c.b16 %v5631, %v5629
    %v6536 = vpack.c.b16 %v5634, %v5632
    %v6537 = vpack.c.b16 %v5635, %v5633
    %v6538 = vpack.c.b16 %v5638, %v5636
    %v6539 = vpack.c.b16 %v5639, %v5637
    %v6540 = vpack.c.b16 %v5642, %v5640
    %v6541 = vpack.c.b16 %v5643, %v5641
    %v6542 = vpack.c.b16 %v5646, %v5644
    %v6543 = vpack.c.b16 %v5647, %v5645
    %v6544 = vpack.c.b16 %v5650, %v5648
    %v6545 = vpack.c.b16 %v5651, %v5649
    %v6546 = vpack.c.b16 %v5654, %v5652
    %v6547 = vpack.c.b16 %v5655, %v5653
    %v6548 = vpack.c.b16 %v5658, %v5656
    %v6549 = vpack.c.b16 %v5659, %v5657
    %v6550 = vpack.c.b16 %v5662, %v5660
    %v6551 = vpack.c.b16 %v5663, %v5661
    %v6552 = vpack.c.b16 %v5666, %v5664
    %v6553 = vpack.c.b16 %v5667, %v5665
    %v6554 = vpack.c.b16 %v5670, %v5668
    %v6555 = vpack.c.b16 %v5671, %v5669
    %v6556 = vpack.c.b16 %v5674, %v5672
    %v6557 = vpack.c.b16 %v5675, %v5673
    %v6558 = vpack.c.b16 %v5678, %v5676
    %v6559 = vpack.c.b16 %v5679, %v5677
    %v6560 = vpack.c.b16 %v5682, %v5680
    %v6561 = vpack.c.b16 %v5683, %v5681
    %v6562 = vpack.c.b16 %v5686, %v5684
    %v6563 = vpack.c.b16 %v5687, %v5685
    %v6564 = vpack.c.b16 %v5690, %v5688
    %v6565 = vpack.c.b16 %v5691, %v5689
    %v6566 = vpack.c.b16 %v5694, %v5692
    %v6567 = vpack.c.b16 %v5695, %v5693
    %v6568 = vpack.c.b16 %v5698, %v5696
    %v6569 = vpack.c.b16 %v5699, %v5697
    %v6570 = vpack.c.b16 %v5702, %v5700
    %v6571 = vpack.c.b16 %v5703, %v5701
    %v6572 = vpack.c.b16 %v5706, %v5704
    %v6573 = vpack.c.b16 %v5707, %v5705
    %v6574 = vpack.c.b16 %v5710, %v5708
    %v6575 = vpack.c.b16 %v5711, %v5709
    %v6576 = vpack.c.b16 %v5714, %v5712
    %v6577 = vpack.c.b16 %v5715, %v5713
    %v6578 = vpack.c.b16 %v5718, %v5716
    %v6579 = vpack.c.b16 %v5719, %v5717
    %v6580 = vpack.c.b16 %v5722, %v5720
    %v6581 = vpack.c.b16 %v5723, %v5721
    %v6582 = vpack.c.b16 %v5726, %v5724
    %v6583 = vpack.c.b16 %v5727, %v5725
    %v6584 = vpack.c.b16 %v5730, %v5728
    %v6585 = vpack.c.b16 %v5731, %v5729
    %v6586 = vpack.c.b16 %v5734, %v5732
    %v6587 = vpack.c.b16 %v5735, %v5733
    %v6588 = vpack.c.b16 %v5738, %v5736
    %v6589 = vpack.c.b16 %v5739, %v5737
    %v6590 = vpack.c.b16 %v5742, %v5740
    %v6591 = vpack.c.b16 %v5743, %v5741
    %v6592 = vpack.c.b16 %v5746, %v5744
    %v6593 = vpack.c.b16 %v5747, %v5745
    %v6594 = vpack.c.b16 %v5750, %v5748
    %v6595 = vpack.c.b16 %v5751, %v5749
    %v6596 = vpack.c.b16 %v5754, %v5752
    %v6597 = vpack.c.b16 %v5755, %v5753
    %v6598 = vpack.c.b16 %v5758, %v5756
    %v6599 = vpack.c.b16 %v5759, %v5757
    %v6600 = vpack.c.b16 %v5762, %v5760
    %v6601 = vpack.c.b16 %v5763, %v5761
    %v6602 = vpack.c.b16 %v5766, %v5764
    %v6603 = vpack.c.b16 %v5767, %v5765
    %v6604 = vpack.c.b16 %v5770, %v5768
    %v6605 = vpack.c.b16 %v5771, %v5769
    %v6606 = vpack.c.b16 %v5774, %v5772
    %v6607 = vpack.c.b16 %v5775, %v5773
    %v6608 = vpack.c.b16 %v5778, %v5776
    %v6609 = vpack.c.b16 %v5779, %v5777
    %v6610 = vpack.c.b16 %v5782, %v5780
    %v6611 = vpack.c.b16 %v5783, %v5781
    %v6612 = vpack.c.b16 %v5786, %v5784
    %v6613 = vpack.c.b16 %v5787, %v5785
    %v6614 = vpack.c.b16 %v5790, %v5788
    %v6615 = vpack.c.b16 %v5791, %v5789
    %v6616 = vpack.c.b16 %v5794, %v5792
    %v6617 = vpack.c.b16 %v5795, %v5793
    %v6618 = vpack.c.b16 %v5798, %v5796
    %v6619 = vpack.c.b16 %v5799, %v5797
    %v6620 = vpack.c.b16 %v5802, %v5800
    %v6621 = vpack.c.b16 %v5803, %v5801
    %v6622 = vpack.c.b16 %v5806, %v5804
    %v6623 = vpack.c.b16 %v5807, %v5805
    %v6624 = vpack.c.b16 %v5810, %v5808
    %v6625 = vpack.c.b16 %v5811, %v5809
    %v6626 = vpack.c.b16 %v5814, %v5812
    %v6627 = vpack.c.b16 %v5815, %v5813
    %v6628 = vpack.c.b16 %v5818, %v5816
    %v6629 = vpack.c.b16 %v5819, %v5817
    %v6630 = vpack.c.b16 %v5822, %v5820
    %v6631 = vpack.c.b16 %v5823, %v5821
    %v6632 = vpack.c.b16 %v5826, %v5824
    %v6633 = vpack.c.b16 %v5827, %v5825
    %v6634 = vpack.c.b16 %v5830, %v5828
    %v6635 = vpack.c.b16 %v5831, %v5829
    %v6636 = vpack.c.b16 %v5834, %v5832
    %v6637 = vpack.c.b16 %v5835, %v5833
    %v6638 = vpack.c.b16 %v5838, %v5836
    %v6639 = vpack.c.b16 %v5839, %v5837
    %v6640 = vpack.c.b16 %v5842, %v5840
    %v6641 = vpack.c.b16 %v5843, %v5841
    %v6642 = vpack.c.b16 %v5846, %v5844
    %v6643 = vpack.c.b16 %v5847, %v5845
    %v6644 = vpack.c.b16 %v5850, %v5848
    %v6645 = vpack.c.b16 %v5851, %v5849
    %v6646 = vpack.c.b16 %v5854, %v5852
    %v6647 = vpack.c.b16 %v5855, %v5853
    %v6648 = vpack.c.b16 %v5858, %v5856
    %v6649 = vpack.c.b16 %v5859, %v5857
    %v6650 = vpack.c.b16 %v5862, %v5860
    %v6651 = vpack.c.b16 %v5863, %v5861
    %v6652 = vpack.c.b16 %v5866, %v5864
    %v6653 = vpack.c.b16 %v5867, %v5865
    %v6654 = vpack.c.b16 %v5870, %v5868
    %v6655 = vpack.c.b16 %v5871, %v5869
    %v6656 = vpack.c.b16 %v5874, %v5872
    %v6657 = vpack.c.b16 %v5875, %v5873
    %v6658 = vpack.c.b16 %v5878, %v5876
    %v6659 = vpack.c.b16 %v5879, %v5877
    %v6660 = vpack.c.b16 %v5882, %v5880
    %v6661 = vpack.c.b16 %v5883, %v5881
    %v6662 = vpack.c.b16 %v5886, %v5884
    %v6663 = vpack.c.b16 %v5887, %v5885
    %v6664 = vpack.c.b16 %v5890, %v5888
    %v6665 = vpack.c.b16 %v5891, %v5889
    %v6666 = vpack.c.b16 %v5894, %v5892
    %v6667 = vpack.c.b16 %v5895, %v5893
    %v6668 = vpack.c.b16 %v5898, %v5896
    %v6669 = vpack.c.b16 %v5899, %v5897
    %v6670 = vpack.c.b16 %v5902, %v5900
    %v6671 = vpack.c.b16 %v5903, %v5901
    %v6672 = vpack.c.b16 %v5906, %v5904
    %v6673 = vpack.c.b16 %v5907, %v5905
    %v6674 = vpack.c.b16 %v5910, %v5908
    %v6675 = vpack.c.b16 %v5911, %v5909
    %v6676 = vpack.c.b16 %v5914, %v5912
    %v6677 = vpack.c.b16 %v5915, %v5913
    %v6678 = vpack.c.b16 %v5918, %v5916
    %v6679 = vpack.c.b16 %v5919, %v5917
    %v6680 = vpack.c.b16 %v5922, %v5920
    %v6681 = vpack.c.b16 %v5923, %v5921
    %v6682 = vpack.c.b16 %v5926, %v5924
    %v6683 = vpack.c.b16 %v5927, %v5925
    %v6684 = vpack.c.b16 %v5930, %v5928
    %v6685 = vpack.c.b16 %v5931, %v5929
    %v6686 = vpack.c.b16 %v5934, %v5932
    %v6687 = vpack.c.b16 %v5935, %v5933
    %v6688 = vpack.c.b16 %v5938, %v5936
    %v6689 = vpack.c.b16 %v5939, %v5937
    %v6690 = vpack.c.b16 %v5942, %v5940
    %v6691 = vpack.c.b16 %v5943, %v5941
    %v6692 = vpack.c.b16 %v5946, %v5944
    %v6693 = vpack.c.b16 %v5947, %v5945
    %v6694 = vpack.c.b16 %v5950, %v5948
    %v6695 = vpack.c.b16 %v5951, %v5949
    %v6696 = vpack.c.b16 %v5954, %v5952
    %v6697 = vpack.c.b16 %v5955, %v5953
    %v6698 = vpack.c.b16 %v5958, %v5956
    %v6699 = vpack.c.b16 %v5959, %v5957
    %v6700 = vpack.c.b16 %v5962, %v5960
    %v6701 = vpack.c.b16 %v5963, %v5961
    %v6702 = vpack.c.b16 %v5966, %v5964
    %v6703 = vpack.c.b16 %v5967, %v5965
    %v6704 = vpack.c.b16 %v5970, %v5968
    %v6705 = vpack.c.b16 %v5971, %v5969
    %v6706 = vpack.c.b16 %v5974, %v5972
    %v6707 = vpack.c.b16 %v5975, %v5973
    %v6708 = vpack.c.b16 %v5978, %v5976
    %v6709 = vpack.c.b16 %v5979, %v5977
    %v6710 = vpack.c.b16 %v5982, %v5980
    %v6711 = vpack.c.b16 %v5983, %v5981
    %v6712 = vpack.c.b16 %v5986, %v5984
    %v6713 = vpack.c.b16 %v5987, %v5985
    %v6714 = vpack.c.b16 %v5990, %v5988
    %v6715 = vpack.c.b16 %v5991, %v5989
    %v6716 = vpack.c.b16 %v5994, %v5992
    %v6717 = vpack.c.b16 %v5995, %v5993
    %v6718 = vpack.c.b16 %v5998, %v5996
    %v6719 = vpack.c.b16 %v5999, %v5997
    %v6720 = vpack.c.b16 %v6002, %v6000
    %v6721 = vpack.c.b16 %v6003, %v6001
    %v6722 = vpack.c.b16 %v6006, %v6004
    %v6723 = vpack.c.b16 %v6007, %v6005
    %v6724 = vpack.c.b16 %v6010, %v6008
    %v6725 = vpack.c.b16 %v6011, %v6009
    %v6726 = vpack.c.b16 %v6014, %v6012
    %v6727 = vpack.c.b16 %v6015, %v6013
    %v6728 = vpack.c.b16 %v6018, %v6016
    %v6729 = vpack.c.b16 %v6019, %v6017
    %v6730 = vpack.c.b16 %v6022, %v6020
    %v6731 = vpack.c.b16 %v6023, %v6021
    %v6732 = vpack.c.b16 %v6026, %v6024
    %v6733 = vpack.c.b16 %v6027, %v6025
    %v6734 = vpack.c.b16 %v6030, %v6028
    %v6735 = vpack.c.b16 %v6031, %v6029
    %v6736 = vpack.c.b16 %v6034, %v6032
    %v6737 = vpack.c.b16 %v6035, %v6033
    %v6738 = vpack.c.b16 %v6038, %v6036
    %v6739 = vpack.c.b16 %v6039, %v6037
    %v6740 = vpack.c.b16 %v6042, %v6040
    %v6741 = vpack.c.b16 %v6043, %v6041
    %v6742 = vpack.c.b16 %v6046, %v6044
    %v6743 = vpack.c.b16 %v6047, %v6045
    %v6744 = vpack.c.b16 %v6050, %v6048
    %v6745 = vpack.c.b16 %v6051, %v6049
    %v6746 = vpack.c.b16 %v6054, %v6052
    %v6747 = vpack.c.b16 %v6055, %v6053
    %v6748 = vpack.c.b16 %v6058, %v6056
    %v6749 = vpack.c.b16 %v6059, %v6057
    %v6750 = vpack.c.b16 %v6062, %v6060
    %v6751 = vpack.c.b16 %v6063, %v6061
    %v6752 = vpack.c.b16 %v6066, %v6064
    %v6753 = vpack.c.b16 %v6067, %v6065
    %v6754 = vpack.c.b16 %v6070, %v6068
    %v6755 = vpack.c.b16 %v6071, %v6069
    %v6756 = vpack.c.b16 %v6074, %v6072
    %v6757 = vpack.c.b16 %v6075, %v6073
    %v6758 = vpack.c.b16 %v6078, %v6076
    %v6759 = vpack.c.b16 %v6079, %v6077
    %v6760 = vpack.c.b16 %v6082, %v6080
    %v6761 = vpack.c.b16 %v6083, %v6081
    %v6762 = vpack.c.b16 %v6086, %v6084
    %v6763 = vpack.c.b16 %v6087, %v6085
    %v6764 = vpack.c.b16 %v6090, %v6088
    %v6765 = vpack.c.b16 %v6091, %v6089
    %v6766 = vpack.c.b16 %v6094, %v6092
    %v6767 = vpack.c.b16 %v6095, %v6093
    %v6768 = vpack.c.b16 %v6098, %v6096
    %v6769 = vpack.c.b16 %v6099, %v6097
    %v6770 = vpack.c.b16 %v6102, %v6100
    %v6771 = vpack.c.b16 %v6103, %v6101
    %v6772 = vpack.c.b16 %v6106, %v6104
    %v6773 = vpack.c.b16 %v6107, %v6105
    %v6774 = vpack.c.b16 %v6110, %v6108
    %v6775 = vpack.c.b16 %v6111, %v6109
    %v6776 = vpack.c.b16 %v6114, %v6112
    %v6777 = vpack.c.b16 %v6115, %v6113
    %v6778 = vpack.c.b16 %v6118, %v6116
    %v6779 = vpack.c.b16 %v6119, %v6117
    %v6780 = vpack.c.b16 %v6122, %v6120
    %v6781 = vpack.c.b16 %v6123, %v6121
    %v6782 = vpack.c.b16 %v6126, %v6124
    %v6783 = vpack.c.b16 %v6127, %v6125
    %v6784 = vpack.c.b16 %v6130, %v6128
    %v6785 = vpack.c.b16 %v6131, %v6129
    %v6786 = vpack.c.b16 %v6134, %v6132
    %v6787 = vpack.c.b16 %v6135, %v6133
    %v6788 = vpack.c.b16 %v6138, %v6136
    %v6789 = vpack.c.b16 %v6139, %v6137
    %v6790 = vpack.c.b16 %v6142, %v6140
    %v6791 = vpack.c.b16 %v6143, %v6141
    %v6792 = vpack.c.b16 %v6146, %v6144
    %v6793 = vpack.c.b16 %v6147, %v6145
    %v6794 = vpack.c.b16 %v6150, %v6148
    %v6795 = vpack.c.b16 %v6151, %v6149
    %v6796 = vpack.c.b16 %v6154, %v6152
    %v6797 = vpack.c.b16 %v6155, %v6153
    %v6798 = vpack.c.b16 %v6158, %v6156
    %v6799 = vpack.c.b16 %v6159, %v6157
    %v6800 = vpack.c.b16 %v6162, %v6160
    %v6801 = vpack.c.b16 %v6163, %v6161
    %v6802 = vpack.c.b16 %v6166, %v6164
    %v6803 = vpack.c.b16 %v6167, %v6165
    %v6804 = vpack.c.b16 %v6170, %v6168
    %v6805 = vpack.c.b16 %v6171, %v6169
    %v6806 = vpack.c.b16 %v6174, %v6172
    %v6807 = vpack.c.b16 %v6175, %v6173
    %v6808 = vpack.c.b16 %v6178, %v6176
    %v6809 = vpack.c.b16 %v6179, %v6177
    %v6810 = vpack.c.b16 %v6182, %v6180
    %v6811 = vpack.c.b16 %v6183, %v6181
    %v6812 = vpack.c.b16 %v6186, %v6184
    %v6813 = vpack.c.b16 %v6187, %v6185
    %v6814 = vpack.c.b16 %v6190, %v6188
    %v6815 = vpack.c.b16 %v6191, %v6189
    %v6816 = vpack.c.b16 %v6194, %v6192
    %v6817 = vpack.c.b16 %v6195, %v6193
    %v6818 = vpack.c.b16 %v6198, %v6196
    %v6819 = vpack.c.b16 %v6199, %v6197
    %v6820 = vpack.c.b16 %v6202, %v6200
    %v6821 = vpack.c.b16 %v6203, %v6201
    %v6822 = vpack.c.b16 %v6206, %v6204
    %v6823 = vpack.c.b16 %v6207, %v6205
    %v6824 = vpack.c.b16 %v6210, %v6208
    %v6825 = vpack.c.b16 %v6211, %v6209
    %v6826 = vpack.c.b16 %v6214, %v6212
    %v6827 = vpack.c.b16 %v6215, %v6213
    %v6828 = vpack.c.b16 %v6218, %v6216
    %v6829 = vpack.c.b16 %v6219, %v6217
    %v6830 = vpack.c.b16 %v6222, %v6220
    %v6831 = vpack.c.b16 %v6223, %v6221
    %v6832 = vpack.c.b16 %v6226, %v6224
    %v6833 = vpack.c.b16 %v6227, %v6225
    %v6834 = vpack.c.b16 %v6230, %v6228
    %v6835 = vpack.c.b16 %v6231, %v6229
    %v6836 = vpack.c.b16 %v6234, %v6232
    %v6837 = vpack.c.b16 %v6235, %v6233
    %v6838 = vpack.c.b16 %v6238, %v6236
    %v6839 = vpack.c.b16 %v6239, %v6237
    %v6840 = vpack.c.b16 %v6242, %v6240
    %v6841 = vpack.c.b16 %v6243, %v6241
    %v6842 = vpack.c.b16 %v6246, %v6244
    %v6843 = vpack.c.b16 %v6247, %v6245
    %v6844 = vpack.c.b16 %v6250, %v6248
    %v6845 = vpack.c.b16 %v6251, %v6249
    %v6846 = vpack.c.b16 %v6254, %v6252
    %v6847 = vpack.c.b16 %v6255, %v6253
    %v6848 = vpack.c.b16 %v6258, %v6256
    %v6849 = vpack.c.b16 %v6259, %v6257
    %v6850 = vpack.c.b16 %v6262, %v6260
    %v6851 = vpack.c.b16 %v6263, %v6261
    %v6852 = vpack.c.b16 %v6266, %v6264
    %v6853 = vpack.c.b16 %v6267, %v6265
    %v6854 = vpack.c.b16 %v6270, %v6268
    %v6855 = vpack.c.b16 %v6271, %v6269
    %v6856 = vpack.c.b16 %v6274, %v6272
    %v6857 = vpack.c.b16 %v6275, %v6273
    %v6858 = vpack.c.b16 %v6278, %v6276
    %v6859 = vpack.c.b16 %v6279, %v6277
    %v6860 = vpack.c.b16 %v6282, %v6280
    %v6861 = vpack.c.b16 %v6283, %v6281
    %v6862 = vpack.c.b16 %v6286, %v6284
    %v6863 = vpack.c.b16 %v6287, %v6285
    %v6864 = vpack.c.b16 %v6290, %v6288
    %v6865 = vpack.c.b16 %v6291, %v6289
    %v6866 = vpack.c.b16 %v6294, %v6292
    %v6867 = vpack.c.b16 %v6295, %v6293
    %v6868 = vpack.c.b16 %v6298, %v6296
    %v6869 = vpack.c.b16 %v6299, %v6297
    %v6870 = vpack.c.b16 %v6302, %v6300
    %v6871 = vpack.c.b16 %v6303, %v6301
    %v6872 = vpack.c.b16 %v6306, %v6304
    %v6873 = vpack.c.b16 %v6307, %v6305
    %v6874 = vpack.c.b16 %v6310, %v6308
    %v6875 = vpack.c.b16 %v6311, %v6309
    %v6876 = vpack.c.b16 %v6314, %v6312
    %v6877 = vpack.c.b16 %v6315, %v6313
    %v6878 = vpack.c.b16 %v6318, %v6316
    %v6879 = vpack.c.b16 %v6319, %v6317
    %v6880 = vpack.c.b16 %v6322, %v6320
    %v6881 = vpack.c.b16 %v6323, %v6321
    %v6882 = vpack.c.b16 %v6326, %v6324
    %v6883 = vpack.c.b16 %v6327, %v6325
    %v6884 = vpack.c.b16 %v6330, %v6328
    %v6885 = vpack.c.b16 %v6331, %v6329
    %v6886 = vpack.c.b16 %v6334, %v6332
    %v6887 = vpack.c.b16 %v6335, %v6333
    %v6888 = vpack.c.b16 %v6338, %v6336
    %v6889 = vpack.c.b16 %v6339, %v6337
    %v6890 = vpack.c.b16 %v6342, %v6340
    %v6891 = vpack.c.b16 %v6343, %v6341
    %v6892 = vpack.c.b16 %v6346, %v6344
    %v6893 = vpack.c.b16 %v6347, %v6345
    %v6894 = vpack.c.b16 %v6350, %v6348
    %v6895 = vpack.c.b16 %v6351, %v6349
    %v6896 = vpack.c.b16 %v6354, %v6352
    %v6897 = vpack.c.b16 %v6355, %v6353
    %v6898 = vpack.c.b16 %v6358, %v6356
    %v6899 = vpack.c.b16 %v6359, %v6357
    %v6900 = vpack.c.b16 %v6362, %v6360
    %v6901 = vpack.c.b16 %v6363, %v6361
    %v6902 = vpack.c.b16 %v6366, %v6364
    %v6903 = vpack.c.b16 %v6367, %v6365
    %v6904 = vpack.c.b16 %v6370, %v6368
    %v6905 = vpack.c.b16 %v6371, %v6369
    %v6906 = vpack.c.b16 %v6374, %v6372
    %v6907 = vpack.c.b16 %v6375, %v6373
    %v6908 = vpack.c.b16 %v6378, %v6376
    %v6909 = vpack.c.b16 %v6379, %v6377
    %v6910 = vpack.c.b16 %v6382, %v6380
    %v6911 = vpack.c.b16 %v6383, %v6381
    %v6912 = vpack.c.b16 %v6386, %v6384
    %v6913 = vpack.c.b16 %v6387, %v6385
    %v6914 = vpack.c.b16 %v6390, %v6388
    %v6915 = vpack.c.b16 %v6391, %v6389
    %v6916 = vpack.c.b16 %v6394, %v6392
    %v6917 = vpack.c.b16 %v6395, %v6393
    %v6918 = vpack.c.b16 %v6398, %v6396
    %v6919 = vpack.c.b16 %v6399, %v6397
    %v6920 = vpack.c.b16 %v6402, %v6400
    %v6921 = vpack.c.b16 %v6403, %v6401
    %v6922 = vpack.c.b16 %v6406, %v6404
    %v6923 = vpack.c.b16 %v6407, %v6405
    %v6924 = vpack.c.b16 %v6410, %v6408
    %v6925 = vpack.c.b16 %v6411, %v6409
    %v6926 = vpack.c.b16 %v6414, %v6412
    %v6927 = vpack.c.b16 %v6415, %v6413
    %7440 = vmatprep.subr.bf16.mxu0 %v6417
    %7441 = vmatpush1.bf16.msra.mxu0 %v6416
    %7442 = vmatprep.subr.bf16.mxu0 %v6419
    %7443 = vmatpush1.bf16.msra.mxu0 %v6418
    %7444 = vmatprep.subr.bf16.mxu0 %v6421
    %7445 = vmatpush1.bf16.msra.mxu0 %v6420
    %7446 = vmatprep.subr.bf16.mxu0 %v6423
    %7447 = vmatpush1.bf16.msra.mxu0 %v6422
    %7448 = vmatprep.subr.bf16.mxu0 %v6425
    %7449 = vmatpush1.bf16.msra.mxu0 %v6424
    %7450 = vmatprep.subr.bf16.mxu0 %v6427
    %7451 = vmatpush1.bf16.msra.mxu0 %v6426
    %7452 = vmatprep.subr.bf16.mxu0 %v6429
    %7453 = vmatpush1.bf16.msra.mxu0 %v6428
    %7454 = vmatprep.subr.bf16.mxu0 %v6431
    %7455 = vmatpush1.bf16.msra.mxu0 %v6430
    %7456 = vmatprep.subr.bf16.mxu0 %v6433
    %7457 = vmatpush1.bf16.msra.mxu0 %v6432
    %7458 = vmatprep.subr.bf16.mxu0 %v6435
    %7459 = vmatpush1.bf16.msra.mxu0 %v6434
    %7460 = vmatprep.subr.bf16.mxu0 %v6437
    %7461 = vmatpush1.bf16.msra.mxu0 %v6436
    %7462 = vmatprep.subr.bf16.mxu0 %v6439
    %7463 = vmatpush1.bf16.msra.mxu0 %v6438
    %7464 = vmatprep.subr.bf16.mxu0 %v6441
    %7465 = vmatpush1.bf16.msra.mxu0 %v6440
    %7466 = vmatprep.subr.bf16.mxu0 %v6443
    %7467 = vmatpush1.bf16.msra.mxu0 %v6442
    %7468 = vmatprep.subr.bf16.mxu0 %v6445
    %7469 = vmatpush1.bf16.msra.mxu0 %v6444
    %7470 = vmatprep.subr.bf16.mxu0 %v6447
    %7471 = vmatpush1.bf16.msra.mxu0 %v6446
    %7472 = vmatprep.mubr.bf16.mxu0 %v4689
    %7473 = vmatmul.mubr.bf16.gmra.mrb[0].mxu0 %v4675
    %v7474 = vpop.f32.mrb[0].mxu0
    %v7475 = vadd.f32 %v4642, %v7474
    %v7476 = vpop.f32.mrb[0].mxu0
    %v7477 = vadd.f32 %v4644, %v7476
    %v7478 = vpop.f32.mrb[0].mxu0
    %v7479 = vpop.f32.mrb[0].mxu0
    %7480 = vdwg.mxu0
    %7481 = vmatprep.subr.bf16.mxu0 %v6449
    %7482 = vmatpush1.bf16.msra.mxu0 %v6448
    %7483 = vmatprep.subr.bf16.mxu0 %v6451
    %7484 = vmatpush1.bf16.msra.mxu0 %v6450
    %7485 = vmatprep.subr.bf16.mxu0 %v6453
    %7486 = vmatpush1.bf16.msra.mxu0 %v6452
    %7487 = vmatprep.subr.bf16.mxu0 %v6455
    %7488 = vmatpush1.bf16.msra.mxu0 %v6454
    %7489 = vmatprep.subr.bf16.mxu0 %v6457
    %7490 = vmatpush1.bf16.msra.mxu0 %v6456
    %7491 = vmatprep.subr.bf16.mxu0 %v6459
    %7492 = vmatpush1.bf16.msra.mxu0 %v6458
    %7493 = vmatprep.subr.bf16.mxu0 %v6461
    %7494 = vmatpush1.bf16.msra.mxu0 %v6460
    %7495 = vmatprep.subr.bf16.mxu0 %v6463
    %7496 = vmatpush1.bf16.msra.mxu0 %v6462
    %7497 = vmatprep.subr.bf16.mxu0 %v6465
    %7498 = vmatpush1.bf16.msra.mxu0 %v6464
    %7499 = vmatprep.subr.bf16.mxu0 %v6467
    %7500 = vmatpush1.bf16.msra.mxu0 %v6466
    %7501 = vmatprep.subr.bf16.mxu0 %v6469
    %7502 = vmatpush1.bf16.msra.mxu0 %v6468
    %7503 = vmatprep.subr.bf16.mxu0 %v6471
    %7504 = vmatpush1.bf16.msra.mxu0 %v6470
    %7505 = vmatprep.subr.bf16.mxu0 %v6473
    %7506 = vmatpush1.bf16.msra.mxu0 %v6472
    %7507 = vmatprep.subr.bf16.mxu0 %v6475
    %7508 = vmatpush1.bf16.msra.mxu0 %v6474
    %7509 = vmatprep.subr.bf16.mxu0 %v6477
    %7510 = vmatpush1.bf16.msra.mxu0 %v6476
    %7511 = vmatprep.subr.bf16.mxu0 %v6479
    %7512 = vmatpush1.bf16.msra.mxu0 %v6478
    %7513 = vmatprep.mubr.bf16.mxu0 %v4699
    %7514 = vmatmul.mubr.bf16.gmra.mrb[0].mxu0 %v4697
    %v7515 = vpop.f32.mrb[0].mxu0
    %v7516 = vadd.f32 %v7475, %v7515
    %v7517 = vpop.f32.mrb[0].mxu0
    %v7518 = vadd.f32 %v7477, %v7517
    %v7519 = vpop.f32.mrb[0].mxu0
    %v7520 = vpop.f32.mrb[0].mxu0
    %7521 = vdwg.mxu0
    %7522 = vmatprep.subr.bf16.mxu0 %v6481
    %7523 = vmatpush1.bf16.msra.mxu0 %v6480
    %7524 = vmatprep.subr.bf16.mxu0 %v6483
    %7525 = vmatpush1.bf16.msra.mxu0 %v6482
    %7526 = vmatprep.subr.bf16.mxu0 %v6485
    %7527 = vmatpush1.bf16.msra.mxu0 %v6484
    %7528 = vmatprep.subr.bf16.mxu0 %v6487
    %7529 = vmatpush1.bf16.msra.mxu0 %v6486
    %7530 = vmatprep.subr.bf16.mxu0 %v6489
    %7531 = vmatpush1.bf16.msra.mxu0 %v6488
    %7532 = vmatprep.subr.bf16.mxu0 %v6491
    %7533 = vmatpush1.bf16.msra.mxu0 %v6490
    %7534 = vmatprep.subr.bf16.mxu0 %v6493
    %7535 = vmatpush1.bf16.msra.mxu0 %v6492
    %7536 = vmatprep.subr.bf16.mxu0 %v6495
    %7537 = vmatpush1.bf16.msra.mxu0 %v6494
    %7538 = vmatprep.subr.bf16.mxu0 %v6497
    %7539 = vmatpush1.bf16.msra.mxu0 %v6496
    %7540 = vmatprep.subr.bf16.mxu0 %v6499
    %7541 = vmatpush1.bf16.msra.mxu0 %v6498
    %7542 = vmatprep.subr.bf16.mxu0 %v6501
    %7543 = vmatpush1.bf16.msra.mxu0 %v6500
    %7544 = vmatprep.subr.bf16.mxu0 %v6503
    %7545 = vmatpush1.bf16.msra.mxu0 %v6502
    %7546 = vmatprep.subr.bf16.mxu0 %v6505
    %7547 = vmatpush1.bf16.msra.mxu0 %v6504
    %7548 = vmatprep.subr.bf16.mxu0 %v6507
    %7549 = vmatpush1.bf16.msra.mxu0 %v6506
    %7550 = vmatprep.subr.bf16.mxu0 %v6509
    %7551 = vmatpush1.bf16.msra.mxu0 %v6508
    %7552 = vmatprep.subr.bf16.mxu0 %v6511
    %7553 = vmatpush1.bf16.msra.mxu0 %v6510
    %7554 = vmatprep.mubr.bf16.mxu0 %v4696
    %7555 = vmatmul.mubr.bf16.gmra.mrb[0].mxu0 %v4682
    %v7556 = vpop.f32.mrb[0].mxu0
    %v7557 = vadd.f32 %v7516, %v7556
    %v7558 = vpop.f32.mrb[0].mxu0
    %v7559 = vadd.f32 %v7518, %v7558
    %v7560 = vpop.f32.mrb[0].mxu0
    %v7561 = vpop.f32.mrb[0].mxu0
    %7562 = vdwg.mxu0
    %7563 = vmatprep.subr.bf16.mxu0 %v6513
    %7564 = vmatpush1.bf16.msra.mxu0 %v6512
    %7565 = vmatprep.subr.bf16.mxu0 %v6515
    %7566 = vmatpush1.bf16.msra.mxu0 %v6514
    %7567 = vmatprep.subr.bf16.mxu0 %v6517
    %7568 = vmatpush1.bf16.msra.mxu0 %v6516
    %7569 = vmatprep.subr.bf16.mxu0 %v6519
    %7570 = vmatpush1.bf16.msra.mxu0 %v6518
    %7571 = vmatprep.subr.bf16.mxu0 %v6521
    %7572 = vmatpush1.bf16.msra.mxu0 %v6520
    %7573 = vmatprep.subr.bf16.mxu0 %v6523
    %7574 = vmatpush1.bf16.msra.mxu0 %v6522
    %7575 = vmatprep.subr.bf16.mxu0 %v6525
    %7576 = vmatpush1.bf16.msra.mxu0 %v6524
    %7577 = vmatprep.subr.bf16.mxu0 %v6527
    %7578 = vmatpush1.bf16.msra.mxu0 %v6526
    %7579 = vmatprep.subr.bf16.mxu0 %v6529
    %7580 = vmatpush1.bf16.msra.mxu0 %v6528
    %7581 = vmatprep.subr.bf16.mxu0 %v6531
    %7582 = vmatpush1.bf16.msra.mxu0 %v6530
    %7583 = vmatprep.subr.bf16.mxu0 %v6533
    %7584 = vmatpush1.bf16.msra.mxu0 %v6532
    %7585 = vmatprep.subr.bf16.mxu0 %v6535
    %7586 = vmatpush1.bf16.msra.mxu0 %v6534
    %7587 = vmatprep.subr.bf16.mxu0 %v6537
    %7588 = vmatpush1.bf16.msra.mxu0 %v6536
    %7589 = vmatprep.subr.bf16.mxu0 %v6539
    %7590 = vmatpush1.bf16.msra.mxu0 %v6538
    %7591 = vmatprep.subr.bf16.mxu0 %v6541
    %7592 = vmatpush1.bf16.msra.mxu0 %v6540
    %7593 = vmatprep.subr.bf16.mxu0 %v6543
    %7594 = vmatpush1.bf16.msra.mxu0 %v6542
    %7595 = vmatprep.mubr.bf16.mxu0 %v4700
    %7596 = vmatmul.mubr.bf16.gmra.mrb[0].mxu0 %v4698
    %v7597 = vpop.f32.mrb[0].mxu0
    %v7598 = vadd.f32 %v7557, %v7597
    %v7599 = vpop.f32.mrb[0].mxu0
    %v7600 = vadd.f32 %v7559, %v7599
    %v7601 = vpop.f32.mrb[0].mxu0
    %v7602 = vpop.f32.mrb[0].mxu0
    %7603 = vdwg.mxu0
    %7604 = vmatprep.subr.bf16.mxu0 %v6545
    %7605 = vmatpush1.bf16.msra.mxu0 %v6544
    %7606 = vmatprep.subr.bf16.mxu0 %v6547
    %7607 = vmatpush1.bf16.msra.mxu0 %v6546
    %7608 = vmatprep.subr.bf16.mxu0 %v6549
    %7609 = vmatpush1.bf16.msra.mxu0 %v6548
    %7610 = vmatprep.subr.bf16.mxu0 %v6551
    %7611 = vmatpush1.bf16.msra.mxu0 %v6550
    %7612 = vmatprep.subr.bf16.mxu0 %v6553
    %7613 = vmatpush1.bf16.msra.mxu0 %v6552
    %7614 = vmatprep.subr.bf16.mxu0 %v6555
    %7615 = vmatpush1.bf16.msra.mxu0 %v6554
    %7616 = vmatprep.subr.bf16.mxu0 %v6557
    %7617 = vmatpush1.bf16.msra.mxu0 %v6556
    %7618 = vmatprep.subr.bf16.mxu0 %v6559
    %7619 = vmatpush1.bf16.msra.mxu0 %v6558
    %7620 = vmatprep.subr.bf16.mxu0 %v6561
    %7621 = vmatpush1.bf16.msra.mxu0 %v6560
    %7622 = vmatprep.subr.bf16.mxu0 %v6563
    %7623 = vmatpush1.bf16.msra.mxu0 %v6562
    %7624 = vmatprep.subr.bf16.mxu0 %v6565
    %7625 = vmatpush1.bf16.msra.mxu0 %v6564
    %7626 = vmatprep.subr.bf16.mxu0 %v6567
    %7627 = vmatpush1.bf16.msra.mxu0 %v6566
    %7628 = vmatprep.subr.bf16.mxu0 %v6569
    %7629 = vmatpush1.bf16.msra.mxu0 %v6568
    %7630 = vmatprep.subr.bf16.mxu0 %v6571
    %7631 = vmatpush1.bf16.msra.mxu0 %v6570
    %7632 = vmatprep.subr.bf16.mxu0 %v6573
    %7633 = vmatpush1.bf16.msra.mxu0 %v6572
    %7634 = vmatprep.subr.bf16.mxu0 %v6575
    %7635 = vmatpush1.bf16.msra.mxu0 %v6574
    %7636 = vmatprep.mubr.bf16.mxu0 %v4738
    %7637 = vmatmul.mubr.bf16.gmra.mrb[0].mxu0 %v4724
    %v7638 = vpop.f32.mrb[0].mxu0
    %v7639 = vadd.f32 %v7598, %v7638
    %v7640 = vpop.f32.mrb[0].mxu0
    %v7641 = vadd.f32 %v7600, %v7640
    %v7642 = vpop.f32.mrb[0].mxu0
    %v7643 = vpop.f32.mrb[0].mxu0
    %7644 = vdwg.mxu0
    %7645 = vmatprep.subr.bf16.mxu0 %v6577
    %7646 = vmatpush1.bf16.msra.mxu0 %v6576
    %7647 = vmatprep.subr.bf16.mxu0 %v6579
    %7648 = vmatpush1.bf16.msra.mxu0 %v6578
    %7649 = vmatprep.subr.bf16.mxu0 %v6581
    %7650 = vmatpush1.bf16.msra.mxu0 %v6580
    %7651 = vmatprep.subr.bf16.mxu0 %v6583
    %7652 = vmatpush1.bf16.msra.mxu0 %v6582
    %7653 = vmatprep.subr.bf16.mxu0 %v6585
    %7654 = vmatpush1.bf16.msra.mxu0 %v6584
    %7655 = vmatprep.subr.bf16.mxu0 %v6587
    %7656 = vmatpush1.bf16.msra.mxu0 %v6586
    %7657 = vmatprep.subr.bf16.mxu0 %v6589
    %7658 = vmatpush1.bf16.msra.mxu0 %v6588
    %7659 = vmatprep.subr.bf16.mxu0 %v6591
    %7660 = vmatpush1.bf16.msra.mxu0 %v6590
    %7661 = vmatprep.subr.bf16.mxu0 %v6593
    %7662 = vmatpush1.bf16.msra.mxu0 %v6592
    %7663 = vmatprep.subr.bf16.mxu0 %v6595
    %7664 = vmatpush1.bf16.msra.mxu0 %v6594
    %7665 = vmatprep.subr.bf16.mxu0 %v6597
    %7666 = vmatpush1.bf16.msra.mxu0 %v6596
    %7667 = vmatprep.subr.bf16.mxu0 %v6599
    %7668 = vmatpush1.bf16.msra.mxu0 %v6598
    %7669 = vmatprep.subr.bf16.mxu0 %v6601
    %7670 = vmatpush1.bf16.msra.mxu0 %v6600
    %7671 = vmatprep.subr.bf16.mxu0 %v6603
    %7672 = vmatpush1.bf16.msra.mxu0 %v6602
    %7673 = vmatprep.subr.bf16.mxu0 %v6605
    %7674 = vmatpush1.bf16.msra.mxu0 %v6604
    %7675 = vmatprep.subr.bf16.mxu0 %v6607
    %7676 = vmatpush1.bf16.msra.mxu0 %v6606
    %7677 = vmatprep.mubr.bf16.mxu0 %v4748
    %7678 = vmatmul.mubr.bf16.gmra.mrb[0].mxu0 %v4746
    %v7679 = vpop.f32.mrb[0].mxu0
    %v7680 = vadd.f32 %v7639, %v7679
    %v7681 = vpop.f32.mrb[0].mxu0
    %v7682 = vadd.f32 %v7641, %v7681
    %v7683 = vpop.f32.mrb[0].mxu0
    %v7684 = vpop.f32.mrb[0].mxu0
    %7685 = vdwg.mxu0
    %7686 = vmatprep.subr.bf16.mxu0 %v6609
    %7687 = vmatpush1.bf16.msra.mxu0 %v6608
    %7688 = vmatprep.subr.bf16.mxu0 %v6611
    %7689 = vmatpush1.bf16.msra.mxu0 %v6610
    %7690 = vmatprep.subr.bf16.mxu0 %v6613
    %7691 = vmatpush1.bf16.msra.mxu0 %v6612
    %7692 = vmatprep.subr.bf16.mxu0 %v6615
    %7693 = vmatpush1.bf16.msra.mxu0 %v6614
    %7694 = vmatprep.subr.bf16.mxu0 %v6617
    %7695 = vmatpush1.bf16.msra.mxu0 %v6616
    %7696 = vmatprep.subr.bf16.mxu0 %v6619
    %7697 = vmatpush1.bf16.msra.mxu0 %v6618
    %7698 = vmatprep.subr.bf16.mxu0 %v6621
    %7699 = vmatpush1.bf16.msra.mxu0 %v6620
    %7700 = vmatprep.subr.bf16.mxu0 %v6623
    %7701 = vmatpush1.bf16.msra.mxu0 %v6622
    %7702 = vmatprep.subr.bf16.mxu0 %v6625
    %7703 = vmatpush1.bf16.msra.mxu0 %v6624
    %7704 = vmatprep.subr.bf16.mxu0 %v6627
    %7705 = vmatpush1.bf16.msra.mxu0 %v6626
    %7706 = vmatprep.subr.bf16.mxu0 %v6629
    %7707 = vmatpush1.bf16.msra.mxu0 %v6628
    %7708 = vmatprep.subr.bf16.mxu0 %v6631
    %7709 = vmatpush1.bf16.msra.mxu0 %v6630
    %7710 = vmatprep.subr.bf16.mxu0 %v6633
    %7711 = vmatpush1.bf16.msra.mxu0 %v6632
    %7712 = vmatprep.subr.bf16.mxu0 %v6635
    %7713 = vmatpush1.bf16.msra.mxu0 %v6634
    %7714 = vmatprep.subr.bf16.mxu0 %v6637
    %7715 = vmatpush1.bf16.msra.mxu0 %v6636
    %7716 = vmatprep.subr.bf16.mxu0 %v6639
    %7717 = vmatpush1.bf16.msra.mxu0 %v6638
    %7718 = vmatprep.mubr.bf16.mxu0 %v4745
    %7719 = vmatmul.mubr.bf16.gmra.mrb[0].mxu0 %v4731
    %v7720 = vpop.f32.mrb[0].mxu0
    %v7721 = vadd.f32 %v7680, %v7720
    %v7722 = vpop.f32.mrb[0].mxu0
    %v7723 = vadd.f32 %v7682, %v7722
    %v7724 = vpop.f32.mrb[0].mxu0
    %v7725 = vpop.f32.mrb[0].mxu0
    %7726 = vdwg.mxu0
    %7727 = vmatprep.subr.bf16.mxu0 %v6641
    %7728 = vmatpush1.bf16.msra.mxu0 %v6640
    %7729 = vmatprep.subr.bf16.mxu0 %v6643
    %7730 = vmatpush1.bf16.msra.mxu0 %v6642
    %7731 = vmatprep.subr.bf16.mxu0 %v6645
    %7732 = vmatpush1.bf16.msra.mxu0 %v6644
    %7733 = vmatprep.subr.bf16.mxu0 %v6647
    %7734 = vmatpush1.bf16.msra.mxu0 %v6646
    %7735 = vmatprep.subr.bf16.mxu0 %v6649
    %7736 = vmatpush1.bf16.msra.mxu0 %v6648
    %7737 = vmatprep.subr.bf16.mxu0 %v6651
    %7738 = vmatpush1.bf16.msra.mxu0 %v6650
    %7739 = vmatprep.subr.bf16.mxu0 %v6653
    %7740 = vmatpush1.bf16.msra.mxu0 %v6652
    %7741 = vmatprep.subr.bf16.mxu0 %v6655
    %7742 = vmatpush1.bf16.msra.mxu0 %v6654
    %7743 = vmatprep.subr.bf16.mxu0 %v6657
    %7744 = vmatpush1.bf16.msra.mxu0 %v6656
    %7745 = vmatprep.subr.bf16.mxu0 %v6659
    %7746 = vmatpush1.bf16.msra.mxu0 %v6658
    %7747 = vmatprep.subr.bf16.mxu0 %v6661
    %7748 = vmatpush1.bf16.msra.mxu0 %v6660
    %7749 = vmatprep.subr.bf16.mxu0 %v6663
    %7750 = vmatpush1.bf16.msra.mxu0 %v6662
    %7751 = vmatprep.subr.bf16.mxu0 %v6665
    %7752 = vmatpush1.bf16.msra.mxu0 %v6664
    %7753 = vmatprep.subr.bf16.mxu0 %v6667
    %7754 = vmatpush1.bf16.msra.mxu0 %v6666
    %7755 = vmatprep.subr.bf16.mxu0 %v6669
    %7756 = vmatpush1.bf16.msra.mxu0 %v6668
    %7757 = vmatprep.subr.bf16.mxu0 %v6671
    %7758 = vmatpush1.bf16.msra.mxu0 %v6670
    %7759 = vmatprep.mubr.bf16.mxu0 %v4749
    %7760 = vmatmul.mubr.bf16.gmra.mrb[0].mxu0 %v4747
    %v7761 = vpop.f32.mrb[0].mxu0
    %v7762 = vadd.f32 %v7721, %v7761
    %v7763 = vpop.f32.mrb[0].mxu0
    %v7764 = vadd.f32 %v7723, %v7763
    %v7765 = vpop.f32.mrb[0].mxu0
    %v7766 = vpop.f32.mrb[0].mxu0
    %7767 = vdwg.mxu0
    %7768 = vmatprep.subr.bf16.mxu0 %v6673
    %7769 = vmatpush1.bf16.msra.mxu0 %v6672
    %7770 = vmatprep.subr.bf16.mxu0 %v6675
    %7771 = vmatpush1.bf16.msra.mxu0 %v6674
    %7772 = vmatprep.subr.bf16.mxu0 %v6677
    %7773 = vmatpush1.bf16.msra.mxu0 %v6676
    %7774 = vmatprep.subr.bf16.mxu0 %v6679
    %7775 = vmatpush1.bf16.msra.mxu0 %v6678
    %7776 = vmatprep.subr.bf16.mxu0 %v6681
    %7777 = vmatpush1.bf16.msra.mxu0 %v6680
    %7778 = vmatprep.subr.bf16.mxu0 %v6683
    %7779 = vmatpush1.bf16.msra.mxu0 %v6682
    %7780 = vmatprep.subr.bf16.mxu0 %v6685
    %7781 = vmatpush1.bf16.msra.mxu0 %v6684
    %7782 = vmatprep.subr.bf16.mxu0 %v6687
    %7783 = vmatpush1.bf16.msra.mxu0 %v6686
    %7784 = vmatprep.subr.bf16.mxu0 %v6689
    %7785 = vmatpush1.bf16.msra.mxu0 %v6688
    %7786 = vmatprep.subr.bf16.mxu0 %v6691
    %7787 = vmatpush1.bf16.msra.mxu0 %v6690
    %7788 = vmatprep.subr.bf16.mxu0 %v6693
    %7789 = vmatpush1.bf16.msra.mxu0 %v6692
    %7790 = vmatprep.subr.bf16.mxu0 %v6695
    %7791 = vmatpush1.bf16.msra.mxu0 %v6694
    %7792 = vmatprep.subr.bf16.mxu0 %v6697
    %7793 = vmatpush1.bf16.msra.mxu0 %v6696
    %7794 = vmatprep.subr.bf16.mxu0 %v6699
    %7795 = vmatpush1.bf16.msra.mxu0 %v6698
    %7796 = vmatprep.subr.bf16.mxu0 %v6701
    %7797 = vmatpush1.bf16.msra.mxu0 %v6700
    %7798 = vmatprep.subr.bf16.mxu0 %v6703
    %7799 = vmatpush1.bf16.msra.mxu0 %v6702
    %7800 = vmatprep.mubr.bf16.mxu0 %v4787
    %7801 = vmatmul.mubr.bf16.gmra.mrb[0].mxu0 %v4773
    %v7802 = vpop.f32.mrb[0].mxu0
    %v7803 = vadd.f32 %v7762, %v7802
    %v7804 = vpop.f32.mrb[0].mxu0
    %v7805 = vadd.f32 %v7764, %v7804
    %v7806 = vpop.f32.mrb[0].mxu0
    %v7807 = vpop.f32.mrb[0].mxu0
    %7808 = vdwg.mxu0
    %7809 = vmatprep.subr.bf16.mxu0 %v6705
    %7810 = vmatpush1.bf16.msra.mxu0 %v6704
    %7811 = vmatprep.subr.bf16.mxu0 %v6707
    %7812 = vmatpush1.bf16.msra.mxu0 %v6706
    %7813 = vmatprep.subr.bf16.mxu0 %v6709
    %7814 = vmatpush1.bf16.msra.mxu0 %v6708
    %7815 = vmatprep.subr.bf16.mxu0 %v6711
    %7816 = vmatpush1.bf16.msra.mxu0 %v6710
    %7817 = vmatprep.subr.bf16.mxu0 %v6713
    %7818 = vmatpush1.bf16.msra.mxu0 %v6712
    %7819 = vmatprep.subr.bf16.mxu0 %v6715
    %7820 = vmatpush1.bf16.msra.mxu0 %v6714
    %7821 = vmatprep.subr.bf16.mxu0 %v6717
    %7822 = vmatpush1.bf16.msra.mxu0 %v6716
    %7823 = vmatprep.subr.bf16.mxu0 %v6719
    %7824 = vmatpush1.bf16.msra.mxu0 %v6718
    %7825 = vmatprep.subr.bf16.mxu0 %v6721
    %7826 = vmatpush1.bf16.msra.mxu0 %v6720
    %7827 = vmatprep.subr.bf16.mxu0 %v6723
    %7828 = vmatpush1.bf16.msra.mxu0 %v6722
    %7829 = vmatprep.subr.bf16.mxu0 %v6725
    %7830 = vmatpush1.bf16.msra.mxu0 %v6724
    %7831 = vmatprep.subr.bf16.mxu0 %v6727
    %7832 = vmatpush1.bf16.msra.mxu0 %v6726
    %7833 = vmatprep.subr.bf16.mxu0 %v6729
    %7834 = vmatpush1.bf16.msra.mxu0 %v6728
    %7835 = vmatprep.subr.bf16.mxu0 %v6731
    %7836 = vmatpush1.bf16.msra.mxu0 %v6730
    %7837 = vmatprep.subr.bf16.mxu0 %v6733
    %7838 = vmatpush1.bf16.msra.mxu0 %v6732
    %7839 = vmatprep.subr.bf16.mxu0 %v6735
    %7840 = vmatpush1.bf16.msra.mxu0 %v6734
    %7841 = vmatprep.mubr.bf16.mxu0 %v4797
    %7842 = vmatmul.mubr.bf16.gmra.mrb[0].mxu0 %v4795
    %v7843 = vpop.f32.mrb[0].mxu0
    %v7844 = vadd.f32 %v7803, %v7843
    %v7845 = vpop.f32.mrb[0].mxu0
    %v7846 = vadd.f32 %v7805, %v7845
    %v7847 = vpop.f32.mrb[0].mxu0
    %v7848 = vpop.f32.mrb[0].mxu0
    %7849 = vdwg.mxu0
    %7850 = vmatprep.subr.bf16.mxu0 %v6737
    %7851 = vmatpush1.bf16.msra.mxu0 %v6736
    %7852 = vmatprep.subr.bf16.mxu0 %v6739
    %7853 = vmatpush1.bf16.msra.mxu0 %v6738
    %7854 = vmatprep.subr.bf16.mxu0 %v6741
    %7855 = vmatpush1.bf16.msra.mxu0 %v6740
    %7856 = vmatprep.subr.bf16.mxu0 %v6743
    %7857 = vmatpush1.bf16.msra.mxu0 %v6742
    %7858 = vmatprep.subr.bf16.mxu0 %v6745
    %7859 = vmatpush1.bf16.msra.mxu0 %v6744
    %7860 = vmatprep.subr.bf16.mxu0 %v6747
    %7861 = vmatpush1.bf16.msra.mxu0 %v6746
    %7862 = vmatprep.subr.bf16.mxu0 %v6749
    %7863 = vmatpush1.bf16.msra.mxu0 %v6748
    %7864 = vmatprep.subr.bf16.mxu0 %v6751
    %7865 = vmatpush1.bf16.msra.mxu0 %v6750
    %7866 = vmatprep.subr.bf16.mxu0 %v6753
    %7867 = vmatpush1.bf16.msra.mxu0 %v6752
    %7868 = vmatprep.subr.bf16.mxu0 %v6755
    %7869 = vmatpush1.bf16.msra.mxu0 %v6754
    %7870 = vmatprep.subr.bf16.mxu0 %v6757
    %7871 = vmatpush1.bf16.msra.mxu0 %v6756
    %7872 = vmatprep.subr.bf16.mxu0 %v6759
    %7873 = vmatpush1.bf16.msra.mxu0 %v6758
    %7874 = vmatprep.subr.bf16.mxu0 %v6761
    %7875 = vmatpush1.bf16.msra.mxu0 %v6760
    %7876 = vmatprep.subr.bf16.mxu0 %v6763
    %7877 = vmatpush1.bf16.msra.mxu0 %v6762
    %7878 = vmatprep.subr.bf16.mxu0 %v6765
    %7879 = vmatpush1.bf16.msra.mxu0 %v6764
    %7880 = vmatprep.subr.bf16.mxu0 %v6767
    %7881 = vmatpush1.bf16.msra.mxu0 %v6766
    %7882 = vmatprep.mubr.bf16.mxu0 %v4794
    %7883 = vmatmul.mubr.bf16.gmra.mrb[0].mxu0 %v4780
    %v7884 = vpop.f32.mrb[0].mxu0
    %v7885 = vadd.f32 %v7844, %v7884
    %v7886 = vpop.f32.mrb[0].mxu0
    %v7887 = vadd.f32 %v7846, %v7886
    %v7888 = vpop.f32.mrb[0].mxu0
    %v7889 = vpop.f32.mrb[0].mxu0
    %7890 = vdwg.mxu0
    %7891 = vmatprep.subr.bf16.mxu0 %v6769
    %7892 = vmatpush1.bf16.msra.mxu0 %v6768
    %7893 = vmatprep.subr.bf16.mxu0 %v6771
    %7894 = vmatpush1.bf16.msra.mxu0 %v6770
    %7895 = vmatprep.subr.bf16.mxu0 %v6773
    %7896 = vmatpush1.bf16.msra.mxu0 %v6772
    %7897 = vmatprep.subr.bf16.mxu0 %v6775
    %7898 = vmatpush1.bf16.msra.mxu0 %v6774
    %7899 = vmatprep.subr.bf16.mxu0 %v6777
    %7900 = vmatpush1.bf16.msra.mxu0 %v6776
    %7901 = vmatprep.subr.bf16.mxu0 %v6779
    %7902 = vmatpush1.bf16.msra.mxu0 %v6778
    %7903 = vmatprep.subr.bf16.mxu0 %v6781
    %7904 = vmatpush1.bf16.msra.mxu0 %v6780
    %7905 = vmatprep.subr.bf16.mxu0 %v6783
    %7906 = vmatpush1.bf16.msra.mxu0 %v6782
    %7907 = vmatprep.subr.bf16.mxu0 %v6785
    %7908 = vmatpush1.bf16.msra.mxu0 %v6784
    %7909 = vmatprep.subr.bf16.mxu0 %v6787
    %7910 = vmatpush1.bf16.msra.mxu0 %v6786
    %7911 = vmatprep.subr.bf16.mxu0 %v6789
    %7912 = vmatpush1.bf16.msra.mxu0 %v6788
    %7913 = vmatprep.subr.bf16.mxu0 %v6791
    %7914 = vmatpush1.bf16.msra.mxu0 %v6790
    %7915 = vmatprep.subr.bf16.mxu0 %v6793
    %7916 = vmatpush1.bf16.msra.mxu0 %v6792
    %7917 = vmatprep.subr.bf16.mxu0 %v6795
    %7918 = vmatpush1.bf16.msra.mxu0 %v6794
    %7919 = vmatprep.subr.bf16.mxu0 %v6797
    %7920 = vmatpush1.bf16.msra.mxu0 %v6796
    %7921 = vmatprep.subr.bf16.mxu0 %v6799
    %7922 = vmatpush1.bf16.msra.mxu0 %v6798
    %7923 = vmatprep.mubr.bf16.mxu0 %v4798
    %7924 = vmatmul.mubr.bf16.gmra.mrb[0].mxu0 %v4796
    %v7925 = vpop.f32.mrb[0].mxu0
    %v7926 = vadd.f32 %v7885, %v7925
    %v7927 = vpop.f32.mrb[0].mxu0
    %v7928 = vadd.f32 %v7887, %v7927
    %v7929 = vpop.f32.mrb[0].mxu0
    %v7930 = vpop.f32.mrb[0].mxu0
    %7931 = vdwg.mxu0
    %7932 = vmatprep.subr.bf16.mxu0 %v6801
    %7933 = vmatpush1.bf16.msra.mxu0 %v6800
    %7934 = vmatprep.subr.bf16.mxu0 %v6803
    %7935 = vmatpush1.bf16.msra.mxu0 %v6802
    %7936 = vmatprep.subr.bf16.mxu0 %v6805
    %7937 = vmatpush1.bf16.msra.mxu0 %v6804
    %7938 = vmatprep.subr.bf16.mxu0 %v6807
    %7939 = vmatpush1.bf16.msra.mxu0 %v6806
    %7940 = vmatprep.subr.bf16.mxu0 %v6809
    %7941 = vmatpush1.bf16.msra.mxu0 %v6808
    %7942 = vmatprep.subr.bf16.mxu0 %v6811
    %7943 = vmatpush1.bf16.msra.mxu0 %v6810
    %7944 = vmatprep.subr.bf16.mxu0 %v6813
    %7945 = vmatpush1.bf16.msra.mxu0 %v6812
    %7946 = vmatprep.subr.bf16.mxu0 %v6815
    %7947 = vmatpush1.bf16.msra.mxu0 %v6814
    %7948 = vmatprep.subr.bf16.mxu0 %v6817
    %7949 = vmatpush1.bf16.msra.mxu0 %v6816
    %7950 = vmatprep.subr.bf16.mxu0 %v6819
    %7951 = vmatpush1.bf16.msra.mxu0 %v6818
    %7952 = vmatprep.subr.bf16.mxu0 %v6821
    %7953 = vmatpush1.bf16.msra.mxu0 %v6820
    %7954 = vmatprep.subr.bf16.mxu0 %v6823
    %7955 = vmatpush1.bf16.msra.mxu0 %v6822
    %7956 = vmatprep.subr.bf16.mxu0 %v6825
    %7957 = vmatpush1.bf16.msra.mxu0 %v6824
    %7958 = vmatprep.subr.bf16.mxu0 %v6827
    %7959 = vmatpush1.bf16.msra.mxu0 %v6826
    %7960 = vmatprep.subr.bf16.mxu0 %v6829
    %7961 = vmatpush1.bf16.msra.mxu0 %v6828
    %7962 = vmatprep.subr.bf16.mxu0 %v6831
    %7963 = vmatpush1.bf16.msra.mxu0 %v6830
    %7964 = vmatprep.mubr.bf16.mxu0 %v4836
    %7965 = vmatmul.mubr.bf16.gmra.mrb[0].mxu0 %v4822
    %v7966 = vpop.f32.mrb[0].mxu0
    %v7967 = vadd.f32 %v7926, %v7966
    %v7968 = vpop.f32.mrb[0].mxu0
    %v7969 = vadd.f32 %v7928, %v7968
    %v7970 = vpop.f32.mrb[0].mxu0
    %v7971 = vpop.f32.mrb[0].mxu0
    %7972 = vdwg.mxu0
    %7973 = vmatprep.subr.bf16.mxu0 %v6833
    %7974 = vmatpush1.bf16.msra.mxu0 %v6832
    %7975 = vmatprep.subr.bf16.mxu0 %v6835
    %7976 = vmatpush1.bf16.msra.mxu0 %v6834
    %7977 = vmatprep.subr.bf16.mxu0 %v6837
    %7978 = vmatpush1.bf16.msra.mxu0 %v6836
    %7979 = vmatprep.subr.bf16.mxu0 %v6839
    %7980 = vmatpush1.bf16.msra.mxu0 %v6838
    %7981 = vmatprep.subr.bf16.mxu0 %v6841
    %7982 = vmatpush1.bf16.msra.mxu0 %v6840
    %7983 = vmatprep.subr.bf16.mxu0 %v6843
    %7984 = vmatpush1.bf16.msra.mxu0 %v6842
    %7985 = vmatprep.subr.bf16.mxu0 %v6845
    %7986 = vmatpush1.bf16.msra.mxu0 %v6844
    %7987 = vmatprep.subr.bf16.mxu0 %v6847
    %7988 = vmatpush1.bf16.msra.mxu0 %v6846
    %7989 = vmatprep.subr.bf16.mxu0 %v6849
    %7990 = vmatpush1.bf16.msra.mxu0 %v6848
    %7991 = vmatprep.subr.bf16.mxu0 %v6851
    %7992 = vmatpush1.bf16.msra.mxu0 %v6850
    %7993 = vmatprep.subr.bf16.mxu0 %v6853
    %7994 = vmatpush1.bf16.msra.mxu0 %v6852
    %7995 = vmatprep.subr.bf16.mxu0 %v6855
    %7996 = vmatpush1.bf16.msra.mxu0 %v6854
    %7997 = vmatprep.subr.bf16.mxu0 %v6857
    %7998 = vmatpush1.bf16.msra.mxu0 %v6856
    %7999 = vmatprep.subr.bf16.mxu0 %v6859
    %8000 = vmatpush1.bf16.msra.mxu0 %v6858
    %8001 = vmatprep.subr.bf16.mxu0 %v6861
    %8002 = vmatpush1.bf16.msra.mxu0 %v6860
    %8003 = vmatprep.subr.bf16.mxu0 %v6863
    %8004 = vmatpush1.bf16.msra.mxu0 %v6862
    %8005 = vmatprep.mubr.bf16.mxu0 %v4846
    %8006 = vmatmul.mubr.bf16.gmra.mrb[0].mxu0 %v4844
    %v8007 = vpop.f32.mrb[0].mxu0
    %v8008 = vadd.f32 %v7967, %v8007
    %v8009 = vpop.f32.mrb[0].mxu0
    %v8010 = vadd.f32 %v7969, %v8009
    %v8011 = vpop.f32.mrb[0].mxu0
    %v8012 = vpop.f32.mrb[0].mxu0
    %8013 = vdwg.mxu0
    %8014 = vmatprep.subr.bf16.mxu0 %v6865
    %8015 = vmatpush1.bf16.msra.mxu0 %v6864
    %8016 = vmatprep.subr.bf16.mxu0 %v6867
    %8017 = vmatpush1.bf16.msra.mxu0 %v6866
    %8018 = vmatprep.subr.bf16.mxu0 %v6869
    %8019 = vmatpush1.bf16.msra.mxu0 %v6868
    %8020 = vmatprep.subr.bf16.mxu0 %v6871
    %8021 = vmatpush1.bf16.msra.mxu0 %v6870
    %8022 = vmatprep.subr.bf16.mxu0 %v6873
    %8023 = vmatpush1.bf16.msra.mxu0 %v6872
    %8024 = vmatprep.subr.bf16.mxu0 %v6875
    %8025 = vmatpush1.bf16.msra.mxu0 %v6874
    %8026 = vmatprep.subr.bf16.mxu0 %v6877
    %8027 = vmatpush1.bf16.msra.mxu0 %v6876
    %8028 = vmatprep.subr.bf16.mxu0 %v6879
    %8029 = vmatpush1.bf16.msra.mxu0 %v6878
    %8030 = vmatprep.subr.bf16.mxu0 %v6881
    %8031 = vmatpush1.bf16.msra.mxu0 %v6880
    %8032 = vmatprep.subr.bf16.mxu0 %v6883
    %8033 = vmatpush1.bf16.msra.mxu0 %v6882
    %8034 = vmatprep.subr.bf16.mxu0 %v6885
    %8035 = vmatpush1.bf16.msra.mxu0 %v6884
    %8036 = vmatprep.subr.bf16.mxu0 %v6887
    %8037 = vmatpush1.bf16.msra.mxu0 %v6886
    %8038 = vmatprep.subr.bf16.mxu0 %v6889
    %8039 = vmatpush1.bf16.msra.mxu0 %v6888
    %8040 = vmatprep.subr.bf16.mxu0 %v6891
    %8041 = vmatpush1.bf16.msra.mxu0 %v6890
    %8042 = vmatprep.subr.bf16.mxu0 %v6893
    %8043 = vmatpush1.bf16.msra.mxu0 %v6892
    %8044 = vmatprep.subr.bf16.mxu0 %v6895
    %8045 = vmatpush1.bf16.msra.mxu0 %v6894
    %8046 = vmatprep.mubr.bf16.mxu0 %v4843
    %8047 = vmatmul.mubr.bf16.gmra.mrb[0].mxu0 %v4829
    %v8048 = vpop.f32.mrb[0].mxu0
    %v8049 = vadd.f32 %v8008, %v8048
    %v8050 = vpop.f32.mrb[0].mxu0
    %v8051 = vadd.f32 %v8010, %v8050
    %v8052 = vpop.f32.mrb[0].mxu0
    %v8053 = vpop.f32.mrb[0].mxu0
    %8054 = vdwg.mxu0
    %8055 = vmatprep.subr.bf16.mxu0 %v6897
    %8056 = vmatpush1.bf16.msra.mxu0 %v6896
    %8057 = vmatprep.subr.bf16.mxu0 %v6899
    %8058 = vmatpush1.bf16.msra.mxu0 %v6898
    %8059 = vmatprep.subr.bf16.mxu0 %v6901
    %8060 = vmatpush1.bf16.msra.mxu0 %v6900
    %8061 = vmatprep.subr.bf16.mxu0 %v6903
    %8062 = vmatpush1.bf16.msra.mxu0 %v6902
    %8063 = vmatprep.subr.bf16.mxu0 %v6905
    %8064 = vmatpush1.bf16.msra.mxu0 %v6904
    %8065 = vmatprep.subr.bf16.mxu0 %v6907
    %8066 = vmatpush1.bf16.msra.mxu0 %v6906
    %8067 = vmatprep.subr.bf16.mxu0 %v6909
    %8068 = vmatpush1.bf16.msra.mxu0 %v6908
    %8069 = vmatprep.subr.bf16.mxu0 %v6911
    %8070 = vmatpush1.bf16.msra.mxu0 %v6910
    %8071 = vmatprep.subr.bf16.mxu0 %v6913
    %8072 = vmatpush1.bf16.msra.mxu0 %v6912
    %8073 = vmatprep.subr.bf16.mxu0 %v6915
    %8074 = vmatpush1.bf16.msra.mxu0 %v6914
    %8075 = vmatprep.subr.bf16.mxu0 %v6917
    %8076 = vmatpush1.bf16.msra.mxu0 %v6916
    %8077 = vmatprep.subr.bf16.mxu0 %v6919
    %8078 = vmatpush1.bf16.msra.mxu0 %v6918
    %8079 = vmatprep.subr.bf16.mxu0 %v6921
    %8080 = vmatpush1.bf16.msra.mxu0 %v6920
    %8081 = vmatprep.subr.bf16.mxu0 %v6923
    %8082 = vmatpush1.bf16.msra.mxu0 %v6922
    %8083 = vmatprep.subr.bf16.mxu0 %v6925
    %8084 = vmatpush1.bf16.msra.mxu0 %v6924
    %8085 = vmatprep.subr.bf16.mxu0 %v6927
    %8086 = vmatpush1.bf16.msra.mxu0 %v6926
    %8087 = vmatprep.mubr.bf16.mxu0 %v4847
    %8088 = vmatmul.mubr.bf16.gmra.mrb[0].mxu0 %v4845
    %v8089 = vpop.f32.mrb[0].mxu0
    %v8090 = vadd.f32 %v8049, %v8089
    %v8091 = vpop.f32.mrb[0].mxu0
    %v8092 = vadd.f32 %v8051, %v8091
    %v8093 = vpop.f32.mrb[0].mxu0
    %v8094 = vpop.f32.mrb[0].mxu0
    %8095 = vdwg.mxu0
    %v8096 = vld [vmem:[#allocation14] sm:$0x3]
    %v8098 = vlaneseq
    %v8099 = vshrl.u32 %v8098, 7
    %v8100 = vsub.s32 0, %v8099
    %v8101 = vrot.slane %v8096, %v8100
    %v8102 = vlaneseq
    %v8103 = vshrl.u32 %v8102, 7
    %v8104 = vsub.s32 1, %v8103
    %v8105 = vrot.slane %v8096, %v8104
    %v8108 = vadd.f32 %v8090, %v8101
    %v8109 = vadd.f32 %v8092, %v8105
    %vm8110 = vcmp.ge.f32.partialorder %v8108, 0.0
    %vm8111 = vcmp.ge.f32.partialorder %v8109, 0.0
    %v8112 = vmul.f32 %v8108, 0.2
    %v8113 = vmul.f32 %v8109, 0.2
    %v8114 = vsel %vm8110, %v8108, %v8112
    %v8115 = vsel %vm8111, %v8109, %v8113
    %v8116 = vpack.c.bf16 %v8114, %v8114
    %v8117 = vpack.c.bf16 %v8115, %v8115
    %v8118 = vld [vmem:[#allocation3] sm:$0x3]
    %v8119 = vld [vmem:[#allocation9] sm:$0xff]
    %v8120 = vld [vmem:[#allocation11] sm:$0x3]
    %v8122 = vlaneseq
    %v8123 = vshrl.u32 %v8122, 7
    %v8124 = vsub.s32 0, %v8123
    %v8125 = vrot.slane %v8120, %v8124
    %v8126 = vlaneseq
    %v8127 = vshrl.u32 %v8126, 7
    %v8128 = vsub.s32 1, %v8127
    %v8129 = vrot.slane %v8120, %v8128
    %v8133 = vunpack.c.l.b16 %v8119
    %v8134 = vunpack.c.h.b16 %v8119
    %v8135 = vpack.c.b16 %v8133, %v8133
    %v8136 = vpack.c.b16 %v8134, %v8134
    %vm8137 = vcmask 64512
    %v8139 = vsel %vm8137, %v8118, 0
    %vm8141 = vcmask 1043456
    %v8143 = vsel %vm8141, %v8135, 0
    %v8146 = vsel %vm8141, %v8136, 0
    %8148 = vmatprep.subr.bf16.mxu0 %v8146
    %8149 = vmatpush1.bf16.msra.mxu0 %v8143
    %8150 = vmatprep.subr.bf16.mxu0 0
    %8151 = vmatpush1.bf16.msra.mxu0 0
    %8152 = vmatprep.subr.bf16.mxu0 0
    %8153 = vmatpush1.bf16.msra.mxu0 0
    %8154 = vmatprep.subr.bf16.mxu0 0
    %8155 = vmatpush1.bf16.msra.mxu0 0
    %8156 = vmatprep.subr.bf16.mxu0 0
    %8157 = vmatpush1.bf16.msra.mxu0 0
    %8158 = vmatprep.subr.bf16.mxu0 0
    %8159 = vmatpush1.bf16.msra.mxu0 0
    %8160 = vmatprep.subr.bf16.mxu0 0
    %8161 = vmatpush1.bf16.msra.mxu0 0
    %8162 = vmatprep.subr.bf16.mxu0 0
    %8163 = vmatpush1.bf16.msra.mxu0 0
    %8164 = vmatprep.subr.bf16.mxu0 0
    %8165 = vmatpush1.bf16.msra.mxu0 0
    %8166 = vmatprep.subr.bf16.mxu0 0
    %8167 = vmatpush1.bf16.msra.mxu0 0
    %8168 = vmatprep.subr.bf16.mxu0 0
    %8169 = vmatpush1.bf16.msra.mxu0 0
    %8170 = vmatprep.subr.bf16.mxu0 0
    %8171 = vmatpush1.bf16.msra.mxu0 0
    %8172 = vmatprep.subr.bf16.mxu0 0
    %8173 = vmatpush1.bf16.msra.mxu0 0
    %8174 = vmatprep.subr.bf16.mxu0 0
    %8175 = vmatpush1.bf16.msra.mxu0 0
    %8176 = vmatprep.subr.bf16.mxu0 0
    %8177 = vmatpush1.bf16.msra.mxu0 0
    %8178 = vmatprep.subr.bf16.mxu0 0
    %8179 = vmatpush1.bf16.msra.mxu0 0
    %8180 = vmatprep.mubr.bf16.mxu0 0
    %8181 = vmatmul.mubr.bf16.gmra.mrb[0].mxu0 %v8139
    %v8182 = vpop.f32.mrb[0].mxu0
    %v8183 = vadd.f32 %v8125, %v8182
    %v8184 = vpop.f32.mrb[0].mxu0
    %v8185 = vadd.f32 %v8129, %v8184
    %v8186 = vpop.f32.mrb[0].mxu0
    %v8187 = vpop.f32.mrb[0].mxu0
    %8188 = vdwg.mxu0
    %v8189 = vld [vmem:[#allocation15 + $0x200] sm:$0xff]
    %v8190 = vld [vmem:[#allocation15 + $0x208] sm:$0xff]
    %v8191 = vld [vmem:[#allocation15 + $0x210] sm:$0xff]
    %v8192 = vld [vmem:[#allocation15 + $0x218] sm:$0xff]
    %v8193 = vld [vmem:[#allocation15 + $0x220] sm:$0xff]
    %v8194 = vld [vmem:[#allocation15 + $0x228] sm:$0xff]
    %v8195 = vld [vmem:[#allocation15 + $0x230] sm:$0xff]
    %v8196 = vld [vmem:[#allocation15 + $0x238] sm:$0xff]
    %v8197 = vld [vmem:[#allocation15 + $0x240] sm:$0xff]
    %v8198 = vld [vmem:[#allocation15 + $0x248] sm:$0xff]
    %v8199 = vld [vmem:[#allocation15 + $0x250] sm:$0xff]
    %v8200 = vld [vmem:[#allocation15 + $0x258] sm:$0xff]
    %v8201 = vld [vmem:[#allocation15 + $0x260] sm:$0xff]
    %v8202 = vld [vmem:[#allocation15 + $0x268] sm:$0xff]
    %v8203 = vld [vmem:[#allocation15 + $0x270] sm:$0xff]
    %v8204 = vld [vmem:[#allocation15 + $0x278] sm:$0xff]
    %v8205 = vld [vmem:[#allocation15 + $0x280] sm:$0xff]
    %v8206 = vld [vmem:[#allocation15 + $0x288] sm:$0xff]
    %v8207 = vld [vmem:[#allocation15 + $0x290] sm:$0xff]
    %v8208 = vld [vmem:[#allocation15 + $0x298] sm:$0xff]
    %v8209 = vld [vmem:[#allocation15 + $0x2a0] sm:$0xff]
    %v8210 = vld [vmem:[#allocation15 + $0x2a8] sm:$0xff]
    %v8211 = vld [vmem:[#allocation15 + $0x2b0] sm:$0xff]
    %v8212 = vld [vmem:[#allocation15 + $0x2b8] sm:$0xff]
    %v8213 = vld [vmem:[#allocation15 + $0x2c0] sm:$0xff]
    %v8214 = vld [vmem:[#allocation15 + $0x2c8] sm:$0xff]
    %v8215 = vld [vmem:[#allocation15 + $0x2d0] sm:$0xff]
    %v8216 = vld [vmem:[#allocation15 + $0x2d8] sm:$0xff]
    %v8217 = vld [vmem:[#allocation15 + $0x2e0] sm:$0xff]
    %v8218 = vld [vmem:[#allocation15 + $0x2e8] sm:$0xff]
    %v8219 = vld [vmem:[#allocation15 + $0x2f0] sm:$0xff]
    %v8220 = vld [vmem:[#allocation15 + $0x2f8] sm:$0xff]
    %v8221 = vld [vmem:[#allocation15 + $0x300] sm:$0xff]
    %v8222 = vld [vmem:[#allocation15 + $0x308] sm:$0xff]
    %v8223 = vld [vmem:[#allocation15 + $0x310] sm:$0xff]
    %v8224 = vld [vmem:[#allocation15 + $0x318] sm:$0xff]
    %v8225 = vld [vmem:[#allocation15 + $0x320] sm:$0xff]
    %v8226 = vld [vmem:[#allocation15 + $0x328] sm:$0xff]
    %v8227 = vld [vmem:[#allocation15 + $0x330] sm:$0xff]
    %v8228 = vld [vmem:[#allocation15 + $0x338] sm:$0xff]
    %v8229 = vld [vmem:[#allocation15 + $0x340] sm:$0xff]
    %v8230 = vld [vmem:[#allocation15 + $0x348] sm:$0xff]
    %v8231 = vld [vmem:[#allocation15 + $0x350] sm:$0xff]
    %v8232 = vld [vmem:[#allocation15 + $0x358] sm:$0xff]
    %v8233 = vld [vmem:[#allocation15 + $0x360] sm:$0xff]
    %v8234 = vld [vmem:[#allocation15 + $0x368] sm:$0xff]
    %v8235 = vld [vmem:[#allocation15 + $0x370] sm:$0xff]
    %v8236 = vld [vmem:[#allocation15 + $0x378] sm:$0xff]
    %v8237 = vld [vmem:[#allocation15 + $0x380] sm:$0xff]
    %v8238 = vld [vmem:[#allocation15 + $0x388] sm:$0xff]
    %v8239 = vld [vmem:[#allocation15 + $0x390] sm:$0xff]
    %v8240 = vld [vmem:[#allocation15 + $0x398] sm:$0xff]
    %v8241 = vld [vmem:[#allocation15 + $0x3a0] sm:$0xff]
    %v8242 = vld [vmem:[#allocation15 + $0x3a8] sm:$0xff]
    %v8243 = vld [vmem:[#allocation15 + $0x3b0] sm:$0xff]
    %v8244 = vld [vmem:[#allocation15 + $0x3b8] sm:$0xff]
    %v8245 = vld [vmem:[#allocation15 + $0x3c0] sm:$0xff]
    %v8246 = vld [vmem:[#allocation15 + $0x3c8] sm:$0xff]
    %v8247 = vld [vmem:[#allocation15 + $0x3d0] sm:$0xff]
    %v8248 = vld [vmem:[#allocation15 + $0x3d8] sm:$0xff]
    %v8249 = vld [vmem:[#allocation15 + $0x3e0] sm:$0xff]
    %v8250 = vld [vmem:[#allocation15 + $0x3e8] sm:$0xff]
    %v8251 = vld [vmem:[#allocation15 + $0x3f0] sm:$0xff]
    %v8252 = vld [vmem:[#allocation15 + $0x3f8] sm:$0xff]
    %v8253 = vld [vmem:[#allocation17] sm:$0xf]
    %v8255 = vlaneseq
    %v8256 = vshrl.u32 %v8255, 7
    %v8257 = vsub.s32 0, %v8256
    %v8258 = vrot.slane %v8253, %v8257
    %v8259 = vlaneseq
    %v8260 = vshrl.u32 %v8259, 7
    %v8261 = vsub.s32 1, %v8260
    %v8262 = vrot.slane %v8253, %v8261
    %v8263 = vlaneseq
    %v8264 = vshrl.u32 %v8263, 7
    %v8265 = vsub.s32 2, %v8264
    %v8266 = vrot.slane %v8253, %v8265
    %v8267 = vlaneseq
    %v8268 = vshrl.u32 %v8267, 7
    %v8269 = vsub.s32 3, %v8268
    %v8270 = vrot.slane %v8253, %v8269
    %v8339 = vunpack.c.l.b16 %v8189
    %v8340 = vunpack.c.h.b16 %v8189
    %v8341 = vunpack.c.l.b16 %v8190
    %v8342 = vunpack.c.h.b16 %v8190
    %v8343 = vunpack.c.l.b16 %v8191
    %v8344 = vunpack.c.h.b16 %v8191
    %v8345 = vunpack.c.l.b16 %v8192
    %v8346 = vunpack.c.h.b16 %v8192
    %v8347 = vunpack.c.l.b16 %v8193
    %v8348 = vunpack.c.h.b16 %v8193
    %v8349 = vunpack.c.l.b16 %v8194
    %v8350 = vunpack.c.h.b16 %v8194
    %v8351 = vunpack.c.l.b16 %v8195
    %v8352 = vunpack.c.h.b16 %v8195
    %v8353 = vunpack.c.l.b16 %v8196
    %v8354 = vunpack.c.h.b16 %v8196
    %v8355 = vunpack.c.l.b16 %v8197
    %v8356 = vunpack.c.h.b16 %v8197
    %v8357 = vunpack.c.l.b16 %v8198
    %v8358 = vunpack.c.h.b16 %v8198
    %v8359 = vunpack.c.l.b16 %v8199
    %v8360 = vunpack.c.h.b16 %v8199
    %v8361 = vunpack.c.l.b16 %v8200
    %v8362 = vunpack.c.h.b16 %v8200
    %v8363 = vunpack.c.l.b16 %v8201
    %v8364 = vunpack.c.h.b16 %v8201
    %v8365 = vunpack.c.l.b16 %v8202
    %v8366 = vunpack.c.h.b16 %v8202
    %v8367 = vunpack.c.l.b16 %v8203
    %v8368 = vunpack.c.h.b16 %v8203
    %v8369 = vunpack.c.l.b16 %v8204
    %v8370 = vunpack.c.h.b16 %v8204
    %v8371 = vunpack.c.l.b16 %v8205
    %v8372 = vunpack.c.h.b16 %v8205
    %v8373 = vunpack.c.l.b16 %v8206
    %v8374 = vunpack.c.h.b16 %v8206
    %v8375 = vunpack.c.l.b16 %v8207
    %v8376 = vunpack.c.h.b16 %v8207
    %v8377 = vunpack.c.l.b16 %v8208
    %v8378 = vunpack.c.h.b16 %v8208
    %v8379 = vunpack.c.l.b16 %v8209
    %v8380 = vunpack.c.h.b16 %v8209
    %v8381 = vunpack.c.l.b16 %v8210
    %v8382 = vunpack.c.h.b16 %v8210
    %v8383 = vunpack.c.l.b16 %v8211
    %v8384 = vunpack.c.h.b16 %v8211
    %v8385 = vunpack.c.l.b16 %v8212
    %v8386 = vunpack.c.h.b16 %v8212
    %v8387 = vunpack.c.l.b16 %v8213
    %v8388 = vunpack.c.h.b16 %v8213
    %v8389 = vunpack.c.l.b16 %v8214
    %v8390 = vunpack.c.h.b16 %v8214
    %v8391 = vunpack.c.l.b16 %v8215
    %v8392 = vunpack.c.h.b16 %v8215
    %v8393 = vunpack.c.l.b16 %v8216
    %v8394 = vunpack.c.h.b16 %v8216
    %v8395 = vunpack.c.l.b16 %v8217
    %v8396 = vunpack.c.h.b16 %v8217
    %v8397 = vunpack.c.l.b16 %v8218
    %v8398 = vunpack.c.h.b16 %v8218
    %v8399 = vunpack.c.l.b16 %v8219
    %v8400 = vunpack.c.h.b16 %v8219
    %v8401 = vunpack.c.l.b16 %v8220
    %v8402 = vunpack.c.h.b16 %v8220
    %v8403 = vunpack.c.l.b16 %v8221
    %v8404 = vunpack.c.h.b16 %v8221
    %v8405 = vunpack.c.l.b16 %v8222
    %v8406 = vunpack.c.h.b16 %v8222
    %v8407 = vunpack.c.l.b16 %v8223
    %v8408 = vunpack.c.h.b16 %v8223
    %v8409 = vunpack.c.l.b16 %v8224
    %v8410 = vunpack.c.h.b16 %v8224
    %v8411 = vunpack.c.l.b16 %v8225
    %v8412 = vunpack.c.h.b16 %v8225
    %v8413 = vunpack.c.l.b16 %v8226
    %v8414 = vunpack.c.h.b16 %v8226
    %v8415 = vunpack.c.l.b16 %v8227
    %v8416 = vunpack.c.h.b16 %v8227
    %v8417 = vunpack.c.l.b16 %v8228
    %v8418 = vunpack.c.h.b16 %v8228
    %v8419 = vunpack.c.l.b16 %v8229
    %v8420 = vunpack.c.h.b16 %v8229
    %v8421 = vunpack.c.l.b16 %v8230
    %v8422 = vunpack.c.h.b16 %v8230
    %v8423 = vunpack.c.l.b16 %v8231
    %v8424 = vunpack.c.h.b16 %v8231
    %v8425 = vunpack.c.l.b16 %v8232
    %v8426 = vunpack.c.h.b16 %v8232
    %v8427 = vunpack.c.l.b16 %v8233
    %v8428 = vunpack.c.h.b16 %v8233
    %v8429 = vunpack.c.l.b16 %v8234
    %v8430 = vunpack.c.h.b16 %v8234
    %v8431 = vunpack.c.l.b16 %v8235
    %v8432 = vunpack.c.h.b16 %v8235
    %v8433 = vunpack.c.l.b16 %v8236
    %v8434 = vunpack.c.h.b16 %v8236
    %v8435 = vunpack.c.l.b16 %v8237
    %v8436 = vunpack.c.h.b16 %v8237
    %v8437 = vunpack.c.l.b16 %v8238
    %v8438 = vunpack.c.h.b16 %v8238
    %v8439 = vunpack.c.l.b16 %v8239
    %v8440 = vunpack.c.h.b16 %v8239
    %v8441 = vunpack.c.l.b16 %v8240
    %v8442 = vunpack.c.h.b16 %v8240
    %v8443 = vunpack.c.l.b16 %v8241
    %v8444 = vunpack.c.h.b16 %v8241
    %v8445 = vunpack.c.l.b16 %v8242
    %v8446 = vunpack.c.h.b16 %v8242
    %v8447 = vunpack.c.l.b16 %v8243
    %v8448 = vunpack.c.h.b16 %v8243
    %v8449 = vunpack.c.l.b16 %v8244
    %v8450 = vunpack.c.h.b16 %v8244
    %v8451 = vunpack.c.l.b16 %v8245
    %v8452 = vunpack.c.h.b16 %v8245
    %v8453 = vunpack.c.l.b16 %v8246
    %v8454 = vunpack.c.h.b16 %v8246
    %v8455 = vunpack.c.l.b16 %v8247
    %v8456 = vunpack.c.h.b16 %v8247
    %v8457 = vunpack.c.l.b16 %v8248
    %v8458 = vunpack.c.h.b16 %v8248
    %v8459 = vunpack.c.l.b16 %v8249
    %v8460 = vunpack.c.h.b16 %v8249
    %v8461 = vunpack.c.l.b16 %v8250
    %v8462 = vunpack.c.h.b16 %v8250
    %v8463 = vunpack.c.l.b16 %v8251
    %v8464 = vunpack.c.h.b16 %v8251
    %v8465 = vunpack.c.l.b16 %v8252
    %v8466 = vunpack.c.h.b16 %v8252
    %v8467 = vpack.c.b16 %v8343, %v8339
    %v8468 = vpack.c.b16 %v8344, %v8340
    %v8469 = vpack.c.b16 %v8345, %v8341
    %v8470 = vpack.c.b16 %v8346, %v8342
    %v8471 = vpack.c.b16 %v8351, %v8347
    %v8472 = vpack.c.b16 %v8352, %v8348
    %v8473 = vpack.c.b16 %v8353, %v8349
    %v8474 = vpack.c.b16 %v8354, %v8350
    %v8475 = vpack.c.b16 %v8359, %v8355
    %v8476 = vpack.c.b16 %v8360, %v8356
    %v8477 = vpack.c.b16 %v8361, %v8357
    %v8478 = vpack.c.b16 %v8362, %v8358
    %v8479 = vpack.c.b16 %v8367, %v8363
    %v8480 = vpack.c.b16 %v8368, %v8364
    %v8481 = vpack.c.b16 %v8369, %v8365
    %v8482 = vpack.c.b16 %v8370, %v8366
    %v8483 = vpack.c.b16 %v8375, %v8371
    %v8484 = vpack.c.b16 %v8376, %v8372
    %v8485 = vpack.c.b16 %v8377, %v8373
    %v8486 = vpack.c.b16 %v8378, %v8374
    %v8487 = vpack.c.b16 %v8383, %v8379
    %v8488 = vpack.c.b16 %v8384, %v8380
    %v8489 = vpack.c.b16 %v8385, %v8381
    %v8490 = vpack.c.b16 %v8386, %v8382
    %v8491 = vpack.c.b16 %v8391, %v8387
    %v8492 = vpack.c.b16 %v8392, %v8388
    %v8493 = vpack.c.b16 %v8393, %v8389
    %v8494 = vpack.c.b16 %v8394, %v8390
    %v8495 = vpack.c.b16 %v8399, %v8395
    %v8496 = vpack.c.b16 %v8400, %v8396
    %v8497 = vpack.c.b16 %v8401, %v8397
    %v8498 = vpack.c.b16 %v8402, %v8398
    %v8499 = vpack.c.b16 %v8407, %v8403
    %v8500 = vpack.c.b16 %v8408, %v8404
    %v8501 = vpack.c.b16 %v8409, %v8405
    %v8502 = vpack.c.b16 %v8410, %v8406
    %v8503 = vpack.c.b16 %v8415, %v8411
    %v8504 = vpack.c.b16 %v8416, %v8412
    %v8505 = vpack.c.b16 %v8417, %v8413
    %v8506 = vpack.c.b16 %v8418, %v8414
    %v8507 = vpack.c.b16 %v8423, %v8419
    %v8508 = vpack.c.b16 %v8424, %v8420
    %v8509 = vpack.c.b16 %v8425, %v8421
    %v8510 = vpack.c.b16 %v8426, %v8422
    %v8511 = vpack.c.b16 %v8431, %v8427
    %v8512 = vpack.c.b16 %v8432, %v8428
    %v8513 = vpack.c.b16 %v8433, %v8429
    %v8514 = vpack.c.b16 %v8434, %v8430
    %v8515 = vpack.c.b16 %v8439, %v8435
    %v8516 = vpack.c.b16 %v8440, %v8436
    %v8517 = vpack.c.b16 %v8441, %v8437
    %v8518 = vpack.c.b16 %v8442, %v8438
    %v8519 = vpack.c.b16 %v8447, %v8443
    %v8520 = vpack.c.b16 %v8448, %v8444
    %v8521 = vpack.c.b16 %v8449, %v8445
    %v8522 = vpack.c.b16 %v8450, %v8446
    %v8523 = vpack.c.b16 %v8455, %v8451
    %v8524 = vpack.c.b16 %v8456, %v8452
    %v8525 = vpack.c.b16 %v8457, %v8453
    %v8526 = vpack.c.b16 %v8458, %v8454
    %v8527 = vpack.c.b16 %v8463, %v8459
    %v8528 = vpack.c.b16 %v8464, %v8460
    %v8529 = vpack.c.b16 %v8465, %v8461
    %v8530 = vpack.c.b16 %v8466, %v8462
    %8595 = vmatprep.subr.bf16.mxu0 %v8468
    %8596 = vmatpush1.bf16.msra.mxu0 %v8467
    %8597 = vmatprep.subr.bf16.mxu0 %v8472
    %8598 = vmatpush1.bf16.msra.mxu0 %v8471
    %8599 = vmatprep.subr.bf16.mxu0 %v8476
    %8600 = vmatpush1.bf16.msra.mxu0 %v8475
    %8601 = vmatprep.subr.bf16.mxu0 %v8480
    %8602 = vmatpush1.bf16.msra.mxu0 %v8479
    %8603 = vmatprep.subr.bf16.mxu0 %v8484
    %8604 = vmatpush1.bf16.msra.mxu0 %v8483
    %8605 = vmatprep.subr.bf16.mxu0 %v8488
    %8606 = vmatpush1.bf16.msra.mxu0 %v8487
    %8607 = vmatprep.subr.bf16.mxu0 %v8492
    %8608 = vmatpush1.bf16.msra.mxu0 %v8491
    %8609 = vmatprep.subr.bf16.mxu0 %v8496
    %8610 = vmatpush1.bf16.msra.mxu0 %v8495
    %8611 = vmatprep.subr.bf16.mxu0 %v8500
    %8612 = vmatpush1.bf16.msra.mxu0 %v8499
    %8613 = vmatprep.subr.bf16.mxu0 %v8504
    %8614 = vmatpush1.bf16.msra.mxu0 %v8503
    %8615 = vmatprep.subr.bf16.mxu0 %v8508
    %8616 = vmatpush1.bf16.msra.mxu0 %v8507
    %8617 = vmatprep.subr.bf16.mxu0 %v8512
    %8618 = vmatpush1.bf16.msra.mxu0 %v8511
    %8619 = vmatprep.subr.bf16.mxu0 %v8516
    %8620 = vmatpush1.bf16.msra.mxu0 %v8515
    %8621 = vmatprep.subr.bf16.mxu0 %v8520
    %8622 = vmatpush1.bf16.msra.mxu0 %v8519
    %8623 = vmatprep.subr.bf16.mxu0 %v8524
    %8624 = vmatpush1.bf16.msra.mxu0 %v8523
    %8625 = vmatprep.subr.bf16.mxu0 %v8528
    %8626 = vmatpush1.bf16.msra.mxu0 %v8527
    %8627 = vmatprep.mubr.bf16.mxu0 %v8117
    %8628 = vmatmul.mubr.bf16.gmra.mrb[0].mxu0 %v8116
    %v8629 = vpop.f32.mrb[0].mxu0
    %v8630 = vadd.f32 %v8258, %v8629
    %v8631 = vpop.f32.mrb[0].mxu0
    %v8632 = vadd.f32 %v8262, %v8631
    %v8633 = vpop.f32.mrb[0].mxu0
    %v8634 = vpop.f32.mrb[0].mxu0
    %8635 = vdwg.mxu0
    %8636 = vmatprep.subr.bf16.mxu0 %v8470
    %8637 = vmatpush1.bf16.msra.mxu0 %v8469
    %8638 = vmatprep.subr.bf16.mxu0 %v8474
    %8639 = vmatpush1.bf16.msra.mxu0 %v8473
    %8640 = vmatprep.subr.bf16.mxu0 %v8478
    %8641 = vmatpush1.bf16.msra.mxu0 %v8477
    %8642 = vmatprep.subr.bf16.mxu0 %v8482
    %8643 = vmatpush1.bf16.msra.mxu0 %v8481
    %8644 = vmatprep.subr.bf16.mxu0 %v8486
    %8645 = vmatpush1.bf16.msra.mxu0 %v8485
    %8646 = vmatprep.subr.bf16.mxu0 %v8490
    %8647 = vmatpush1.bf16.msra.mxu0 %v8489
    %8648 = vmatprep.subr.bf16.mxu0 %v8494
    %8649 = vmatpush1.bf16.msra.mxu0 %v8493
    %8650 = vmatprep.subr.bf16.mxu0 %v8498
    %8651 = vmatpush1.bf16.msra.mxu0 %v8497
    %8652 = vmatprep.subr.bf16.mxu0 %v8502
    %8653 = vmatpush1.bf16.msra.mxu0 %v8501
    %8654 = vmatprep.subr.bf16.mxu0 %v8506
    %8655 = vmatpush1.bf16.msra.mxu0 %v8505
    %8656 = vmatprep.subr.bf16.mxu0 %v8510
    %8657 = vmatpush1.bf16.msra.mxu0 %v8509
    %8658 = vmatprep.subr.bf16.mxu0 %v8514
    %8659 = vmatpush1.bf16.msra.mxu0 %v8513
    %8660 = vmatprep.subr.bf16.mxu0 %v8518
    %8661 = vmatpush1.bf16.msra.mxu0 %v8517
    %8662 = vmatprep.subr.bf16.mxu0 %v8522
    %8663 = vmatpush1.bf16.msra.mxu0 %v8521
    %8664 = vmatprep.subr.bf16.mxu0 %v8526
    %8665 = vmatpush1.bf16.msra.mxu0 %v8525
    %8666 = vmatprep.subr.bf16.mxu0 %v8530
    %8667 = vmatpush1.bf16.msra.mxu0 %v8529
    %8668 = vmatprep.mubr.bf16.mxu0 %v8117
    %8669 = vmatmul.mubr.bf16.gmra.mrb[0].mxu0 %v8116
    %v8670 = vpop.f32.mrb[0].mxu0
    %v8671 = vadd.f32 %v8266, %v8670
    %v8672 = vpop.f32.mrb[0].mxu0
    %v8673 = vadd.f32 %v8270, %v8672
    %v8674 = vpop.f32.mrb[0].mxu0
    %v8675 = vpop.f32.mrb[0].mxu0
    %8676 = vdwg.mxu0
    %v8681 = vrot.slane %v8630, 6
    %v8682 = vrot.slane %v8632, 6
    %v8683 = vrot.slane %v8671, 6
    %v8684 = vrot.slane %v8673, 6
    %vm8689 = vcmask 1041408
    %v8690 = vsel %vm8689, %v8630, %v8681
    %v8691 = vsel %vm8689, %v8632, %v8682
    %v8692 = vsel %vm8689, %v8671, %v8683
    %v8693 = vsel %vm8689, %v8673, %v8684
    %v8694 = vpack.c.bf16 %v8183, %v8183
    %v8695 = vpack.c.bf16 %v8185, %v8185
    %v8696 = vld [vmem:[#allocation15] sm:$0xff]
    %v8697 = vld [vmem:[#allocation15 + $0x8] sm:$0xff]
    %v8698 = vld [vmem:[#allocation15 + $0x10] sm:$0xff]
    %v8699 = vld [vmem:[#allocation15 + $0x18] sm:$0xff]
    %v8700 = vld [vmem:[#allocation15 + $0x20] sm:$0xff]
    %v8701 = vld [vmem:[#allocation15 + $0x28] sm:$0xff]
    %v8702 = vld [vmem:[#allocation15 + $0x30] sm:$0xff]
    %v8703 = vld [vmem:[#allocation15 + $0x38] sm:$0xff]
    %v8704 = vld [vmem:[#allocation15 + $0x40] sm:$0xff]
    %v8705 = vld [vmem:[#allocation15 + $0x48] sm:$0xff]
    %v8706 = vld [vmem:[#allocation15 + $0x50] sm:$0xff]
    %v8707 = vld [vmem:[#allocation15 + $0x58] sm:$0xff]
    %v8708 = vld [vmem:[#allocation15 + $0x60] sm:$0xff]
    %v8709 = vld [vmem:[#allocation15 + $0x68] sm:$0xff]
    %v8710 = vld [vmem:[#allocation15 + $0x70] sm:$0xff]
    %v8711 = vld [vmem:[#allocation15 + $0x78] sm:$0xff]
    %v8712 = vld [vmem:[#allocation15 + $0x80] sm:$0xff]
    %v8713 = vld [vmem:[#allocation15 + $0x88] sm:$0xff]
    %v8714 = vld [vmem:[#allocation15 + $0x90] sm:$0xff]
    %v8715 = vld [vmem:[#allocation15 + $0x98] sm:$0xff]
    %v8716 = vld [vmem:[#allocation15 + $0xa0] sm:$0xff]
    %v8717 = vld [vmem:[#allocation15 + $0xa8] sm:$0xff]
    %v8718 = vld [vmem:[#allocation15 + $0xb0] sm:$0xff]
    %v8719 = vld [vmem:[#allocation15 + $0xb8] sm:$0xff]
    %v8720 = vld [vmem:[#allocation15 + $0xc0] sm:$0xff]
    %v8721 = vld [vmem:[#allocation15 + $0xc8] sm:$0xff]
    %v8722 = vld [vmem:[#allocation15 + $0xd0] sm:$0xff]
    %v8723 = vld [vmem:[#allocation15 + $0xd8] sm:$0xff]
    %v8724 = vld [vmem:[#allocation15 + $0xe0] sm:$0xff]
    %v8725 = vld [vmem:[#allocation15 + $0xe8] sm:$0xff]
    %v8726 = vld [vmem:[#allocation15 + $0xf0] sm:$0xff]
    %v8727 = vld [vmem:[#allocation15 + $0xf8] sm:$0xff]
    %v8728 = vld [vmem:[#allocation15 + $0x100] sm:$0xff]
    %v8729 = vld [vmem:[#allocation15 + $0x108] sm:$0xff]
    %v8730 = vld [vmem:[#allocation15 + $0x110] sm:$0xff]
    %v8731 = vld [vmem:[#allocation15 + $0x118] sm:$0xff]
    %v8732 = vld [vmem:[#allocation15 + $0x120] sm:$0xff]
    %v8733 = vld [vmem:[#allocation15 + $0x128] sm:$0xff]
    %v8734 = vld [vmem:[#allocation15 + $0x130] sm:$0xff]
    %v8735 = vld [vmem:[#allocation15 + $0x138] sm:$0xff]
    %v8736 = vld [vmem:[#allocation15 + $0x140] sm:$0xff]
    %v8737 = vld [vmem:[#allocation15 + $0x148] sm:$0xff]
    %v8738 = vld [vmem:[#allocation15 + $0x150] sm:$0xff]
    %v8739 = vld [vmem:[#allocation15 + $0x158] sm:$0xff]
    %v8740 = vld [vmem:[#allocation15 + $0x160] sm:$0xff]
    %v8741 = vld [vmem:[#allocation15 + $0x168] sm:$0xff]
    %v8742 = vld [vmem:[#allocation15 + $0x170] sm:$0xff]
    %v8743 = vld [vmem:[#allocation15 + $0x178] sm:$0xff]
    %v8744 = vld [vmem:[#allocation15 + $0x180] sm:$0xff]
    %v8745 = vld [vmem:[#allocation15 + $0x188] sm:$0xff]
    %v8746 = vld [vmem:[#allocation15 + $0x190] sm:$0xff]
    %v8747 = vld [vmem:[#allocation15 + $0x198] sm:$0xff]
    %v8748 = vld [vmem:[#allocation15 + $0x1a0] sm:$0xff]
    %v8749 = vld [vmem:[#allocation15 + $0x1a8] sm:$0xff]
    %v8750 = vld [vmem:[#allocation15 + $0x1b0] sm:$0xff]
    %v8751 = vld [vmem:[#allocation15 + $0x1b8] sm:$0xff]
    %v8752 = vld [vmem:[#allocation15 + $0x1c0] sm:$0xff]
    %v8753 = vld [vmem:[#allocation15 + $0x1c8] sm:$0xff]
    %v8754 = vld [vmem:[#allocation15 + $0x1d0] sm:$0xff]
    %v8755 = vld [vmem:[#allocation15 + $0x1d8] sm:$0xff]
    %v8756 = vld [vmem:[#allocation15 + $0x1e0] sm:$0xff]
    %v8757 = vld [vmem:[#allocation15 + $0x1e8] sm:$0xff]
    %v8758 = vld [vmem:[#allocation15 + $0x1f0] sm:$0xff]
    %v8759 = vld [vmem:[#allocation15 + $0x1f8] sm:$0xff]
    %v8824 = vunpack.c.l.b16 %v8696
    %v8825 = vunpack.c.h.b16 %v8696
    %v8826 = vunpack.c.l.b16 %v8697
    %v8827 = vunpack.c.h.b16 %v8697
    %v8828 = vunpack.c.l.b16 %v8698
    %v8829 = vunpack.c.h.b16 %v8698
    %v8830 = vunpack.c.l.b16 %v8699
    %v8831 = vunpack.c.h.b16 %v8699
    %v8832 = vunpack.c.l.b16 %v8700
    %v8833 = vunpack.c.h.b16 %v8700
    %v8834 = vunpack.c.l.b16 %v8701
    %v8835 = vunpack.c.h.b16 %v8701
    %v8836 = vunpack.c.l.b16 %v8702
    %v8837 = vunpack.c.h.b16 %v8702
    %v8838 = vunpack.c.l.b16 %v8703
    %v8839 = vunpack.c.h.b16 %v8703
    %v8840 = vunpack.c.l.b16 %v8704
    %v8841 = vunpack.c.h.b16 %v8704
    %v8842 = vunpack.c.l.b16 %v8705
    %v8843 = vunpack.c.h.b16 %v8705
    %v8844 = vunpack.c.l.b16 %v8706
    %v8845 = vunpack.c.h.b16 %v8706
    %v8846 = vunpack.c.l.b16 %v8707
    %v8847 = vunpack.c.h.b16 %v8707
    %v8848 = vunpack.c.l.b16 %v8708
    %v8849 = vunpack.c.h.b16 %v8708
    %v8850 = vunpack.c.l.b16 %v8709
    %v8851 = vunpack.c.h.b16 %v8709
    %v8852 = vunpack.c.l.b16 %v8710
    %v8853 = vunpack.c.h.b16 %v8710
    %v8854 = vunpack.c.l.b16 %v8711
    %v8855 = vunpack.c.h.b16 %v8711
    %v8856 = vunpack.c.l.b16 %v8712
    %v8857 = vunpack.c.h.b16 %v8712
    %v8858 = vunpack.c.l.b16 %v8713
    %v8859 = vunpack.c.h.b16 %v8713
    %v8860 = vunpack.c.l.b16 %v8714
    %v8861 = vunpack.c.h.b16 %v8714
    %v8862 = vunpack.c.l.b16 %v8715
    %v8863 = vunpack.c.h.b16 %v8715
    %v8864 = vunpack.c.l.b16 %v8716
    %v8865 = vunpack.c.h.b16 %v8716
    %v8866 = vunpack.c.l.b16 %v8717
    %v8867 = vunpack.c.h.b16 %v8717
    %v8868 = vunpack.c.l.b16 %v8718
    %v8869 = vunpack.c.h.b16 %v8718
    %v8870 = vunpack.c.l.b16 %v8719
    %v8871 = vunpack.c.h.b16 %v8719
    %v8872 = vunpack.c.l.b16 %v8720
    %v8873 = vunpack.c.h.b16 %v8720
    %v8874 = vunpack.c.l.b16 %v8721
    %v8875 = vunpack.c.h.b16 %v8721
    %v8876 = vunpack.c.l.b16 %v8722
    %v8877 = vunpack.c.h.b16 %v8722
    %v8878 = vunpack.c.l.b16 %v8723
    %v8879 = vunpack.c.h.b16 %v8723
    %v8880 = vunpack.c.l.b16 %v8724
    %v8881 = vunpack.c.h.b16 %v8724
    %v8882 = vunpack.c.l.b16 %v8725
    %v8883 = vunpack.c.h.b16 %v8725
    %v8884 = vunpack.c.l.b16 %v8726
    %v8885 = vunpack.c.h.b16 %v8726
    %v8886 = vunpack.c.l.b16 %v8727
    %v8887 = vunpack.c.h.b16 %v8727
    %v8888 = vunpack.c.l.b16 %v8728
    %v8889 = vunpack.c.h.b16 %v8728
    %v8890 = vunpack.c.l.b16 %v8729
    %v8891 = vunpack.c.h.b16 %v8729
    %v8892 = vunpack.c.l.b16 %v8730
    %v8893 = vunpack.c.h.b16 %v8730
    %v8894 = vunpack.c.l.b16 %v8731
    %v8895 = vunpack.c.h.b16 %v8731
    %v8896 = vunpack.c.l.b16 %v8732
    %v8897 = vunpack.c.h.b16 %v8732
    %v8898 = vunpack.c.l.b16 %v8733
    %v8899 = vunpack.c.h.b16 %v8733
    %v8900 = vunpack.c.l.b16 %v8734
    %v8901 = vunpack.c.h.b16 %v8734
    %v8902 = vunpack.c.l.b16 %v8735
    %v8903 = vunpack.c.h.b16 %v8735
    %v8904 = vunpack.c.l.b16 %v8736
    %v8905 = vunpack.c.h.b16 %v8736
    %v8906 = vunpack.c.l.b16 %v8737
    %v8907 = vunpack.c.h.b16 %v8737
    %v8908 = vunpack.c.l.b16 %v8738
    %v8909 = vunpack.c.h.b16 %v8738
    %v8910 = vunpack.c.l.b16 %v8739
    %v8911 = vunpack.c.h.b16 %v8739
    %v8912 = vunpack.c.l.b16 %v8740
    %v8913 = vunpack.c.h.b16 %v8740
    %v8914 = vunpack.c.l.b16 %v8741
    %v8915 = vunpack.c.h.b16 %v8741
    %v8916 = vunpack.c.l.b16 %v8742
    %v8917 = vunpack.c.h.b16 %v8742
    %v8918 = vunpack.c.l.b16 %v8743
    %v8919 = vunpack.c.h.b16 %v8743
    %v8920 = vunpack.c.l.b16 %v8744
    %v8921 = vunpack.c.h.b16 %v8744
    %v8922 = vunpack.c.l.b16 %v8745
    %v8923 = vunpack.c.h.b16 %v8745
    %v8924 = vunpack.c.l.b16 %v8746
    %v8925 = vunpack.c.h.b16 %v8746
    %v8926 = vunpack.c.l.b16 %v8747
    %v8927 = vunpack.c.h.b16 %v8747
    %v8928 = vunpack.c.l.b16 %v8748
    %v8929 = vunpack.c.h.b16 %v8748
    %v8930 = vunpack.c.l.b16 %v8749
    %v8931 = vunpack.c.h.b16 %v8749
    %v8932 = vunpack.c.l.b16 %v8750
    %v8933 = vunpack.c.h.b16 %v8750
    %v8934 = vunpack.c.l.b16 %v8751
    %v8935 = vunpack.c.h.b16 %v8751
    %v8936 = vunpack.c.l.b16 %v8752
    %v8937 = vunpack.c.h.b16 %v8752
    %v8938 = vunpack.c.l.b16 %v8753
    %v8939 = vunpack.c.h.b16 %v8753
    %v8940 = vunpack.c.l.b16 %v8754
    %v8941 = vunpack.c.h.b16 %v8754
    %v8942 = vunpack.c.l.b16 %v8755
    %v8943 = vunpack.c.h.b16 %v8755
    %v8944 = vunpack.c.l.b16 %v8756
    %v8945 = vunpack.c.h.b16 %v8756
    %v8946 = vunpack.c.l.b16 %v8757
    %v8947 = vunpack.c.h.b16 %v8757
    %v8948 = vunpack.c.l.b16 %v8758
    %v8949 = vunpack.c.h.b16 %v8758
    %v8950 = vunpack.c.l.b16 %v8759
    %v8951 = vunpack.c.h.b16 %v8759
    %v8952 = vpack.c.b16 %v8828, %v8824
    %v8953 = vpack.c.b16 %v8829, %v8825
    %v8954 = vpack.c.b16 %v8830, %v8826
    %v8955 = vpack.c.b16 %v8831, %v8827
    %v8956 = vpack.c.b16 %v8836, %v8832
    %v8957 = vpack.c.b16 %v8837, %v8833
    %v8958 = vpack.c.b16 %v8838, %v8834
    %v8959 = vpack.c.b16 %v8839, %v8835
    %v8960 = vpack.c.b16 %v8844, %v8840
    %v8961 = vpack.c.b16 %v8845, %v8841
    %v8962 = vpack.c.b16 %v8846, %v8842
    %v8963 = vpack.c.b16 %v8847, %v8843
    %v8964 = vpack.c.b16 %v8852, %v8848
    %v8965 = vpack.c.b16 %v8853, %v8849
    %v8966 = vpack.c.b16 %v8854, %v8850
    %v8967 = vpack.c.b16 %v8855, %v8851
    %v8968 = vpack.c.b16 %v8860, %v8856
    %v8969 = vpack.c.b16 %v8861, %v8857
    %v8970 = vpack.c.b16 %v8862, %v8858
    %v8971 = vpack.c.b16 %v8863, %v8859
    %v8972 = vpack.c.b16 %v8868, %v8864
    %v8973 = vpack.c.b16 %v8869, %v8865
    %v8974 = vpack.c.b16 %v8870, %v8866
    %v8975 = vpack.c.b16 %v8871, %v8867
    %v8976 = vpack.c.b16 %v8876, %v8872
    %v8977 = vpack.c.b16 %v8877, %v8873
    %v8978 = vpack.c.b16 %v8878, %v8874
    %v8979 = vpack.c.b16 %v8879, %v8875
    %v8980 = vpack.c.b16 %v8884, %v8880
    %v8981 = vpack.c.b16 %v8885, %v8881
    %v8982 = vpack.c.b16 %v8886, %v8882
    %v8983 = vpack.c.b16 %v8887, %v8883
    %v8984 = vpack.c.b16 %v8892, %v8888
    %v8985 = vpack.c.b16 %v8893, %v8889
    %v8986 = vpack.c.b16 %v8894, %v8890
    %v8987 = vpack.c.b16 %v8895, %v8891
    %v8988 = vpack.c.b16 %v8900, %v8896
    %v8989 = vpack.c.b16 %v8901, %v8897
    %v8990 = vpack.c.b16 %v8902, %v8898
    %v8991 = vpack.c.b16 %v8903, %v8899
    %v8992 = vpack.c.b16 %v8908, %v8904
    %v8993 = vpack.c.b16 %v8909, %v8905
    %v8994 = vpack.c.b16 %v8910, %v8906
    %v8995 = vpack.c.b16 %v8911, %v8907
    %v8996 = vpack.c.b16 %v8916, %v8912
    %v8997 = vpack.c.b16 %v8917, %v8913
    %v8998 = vpack.c.b16 %v8918, %v8914
    %v8999 = vpack.c.b16 %v8919, %v8915
    %v9000 = vpack.c.b16 %v8924, %v8920
    %v9001 = vpack.c.b16 %v8925, %v8921
    %v9002 = vpack.c.b16 %v8926, %v8922
    %v9003 = vpack.c.b16 %v8927, %v8923
    %v9004 = vpack.c.b16 %v8932, %v8928
    %v9005 = vpack.c.b16 %v8933, %v8929
    %v9006 = vpack.c.b16 %v8934, %v8930
    %v9007 = vpack.c.b16 %v8935, %v8931
    %v9008 = vpack.c.b16 %v8940, %v8936
    %v9009 = vpack.c.b16 %v8941, %v8937
    %v9010 = vpack.c.b16 %v8942, %v8938
    %v9011 = vpack.c.b16 %v8943, %v8939
    %v9012 = vpack.c.b16 %v8948, %v8944
    %v9013 = vpack.c.b16 %v8949, %v8945
    %v9014 = vpack.c.b16 %v8950, %v8946
    %v9015 = vpack.c.b16 %v8951, %v8947
    %9080 = vmatprep.subr.bf16.mxu0 %v8953
    %9081 = vmatpush1.bf16.msra.mxu0 %v8952
    %9082 = vmatprep.subr.bf16.mxu0 %v8957
    %9083 = vmatpush1.bf16.msra.mxu0 %v8956
    %9084 = vmatprep.subr.bf16.mxu0 %v8961
    %9085 = vmatpush1.bf16.msra.mxu0 %v8960
    %9086 = vmatprep.subr.bf16.mxu0 %v8965
    %9087 = vmatpush1.bf16.msra.mxu0 %v8964
    %9088 = vmatprep.subr.bf16.mxu0 %v8969
    %9089 = vmatpush1.bf16.msra.mxu0 %v8968
    %9090 = vmatprep.subr.bf16.mxu0 %v8973
    %9091 = vmatpush1.bf16.msra.mxu0 %v8972
    %9092 = vmatprep.subr.bf16.mxu0 %v8977
    %9093 = vmatpush1.bf16.msra.mxu0 %v8976
    %9094 = vmatprep.subr.bf16.mxu0 %v8981
    %9095 = vmatpush1.bf16.msra.mxu0 %v8980
    %9096 = vmatprep.subr.bf16.mxu0 %v8985
    %9097 = vmatpush1.bf16.msra.mxu0 %v8984
    %9098 = vmatprep.subr.bf16.mxu0 %v8989
    %9099 = vmatpush1.bf16.msra.mxu0 %v8988
    %9100 = vmatprep.subr.bf16.mxu0 %v8993
    %9101 = vmatpush1.bf16.msra.mxu0 %v8992
    %9102 = vmatprep.subr.bf16.mxu0 %v8997
    %9103 = vmatpush1.bf16.msra.mxu0 %v8996
    %9104 = vmatprep.subr.bf16.mxu0 %v9001
    %9105 = vmatpush1.bf16.msra.mxu0 %v9000
    %9106 = vmatprep.subr.bf16.mxu0 %v9005
    %9107 = vmatpush1.bf16.msra.mxu0 %v9004
    %9108 = vmatprep.subr.bf16.mxu0 %v9009
    %9109 = vmatpush1.bf16.msra.mxu0 %v9008
    %9110 = vmatprep.subr.bf16.mxu0 %v9013
    %9111 = vmatpush1.bf16.msra.mxu0 %v9012
    %9112 = vmatprep.mubr.bf16.mxu0 %v8695
    %9113 = vmatmul.mubr.bf16.gmra.mrb[0].mxu0 %v8694
    %v9114 = vpop.f32.mrb[0].mxu0
    %v9115 = vadd.f32 %v8690, %v9114
    %v9116 = vpop.f32.mrb[0].mxu0
    %v9117 = vadd.f32 %v8691, %v9116
    %v9118 = vpop.f32.mrb[0].mxu0
    %v9119 = vpop.f32.mrb[0].mxu0
    %9120 = vdwg.mxu0
    %9121 = vmatprep.subr.bf16.mxu0 %v8955
    %9122 = vmatpush1.bf16.msra.mxu0 %v8954
    %9123 = vmatprep.subr.bf16.mxu0 %v8959
    %9124 = vmatpush1.bf16.msra.mxu0 %v8958
    %9125 = vmatprep.subr.bf16.mxu0 %v8963
    %9126 = vmatpush1.bf16.msra.mxu0 %v8962
    %9127 = vmatprep.subr.bf16.mxu0 %v8967
    %9128 = vmatpush1.bf16.msra.mxu0 %v8966
    %9129 = vmatprep.subr.bf16.mxu0 %v8971
    %9130 = vmatpush1.bf16.msra.mxu0 %v8970
    %9131 = vmatprep.subr.bf16.mxu0 %v8975
    %9132 = vmatpush1.bf16.msra.mxu0 %v8974
    %9133 = vmatprep.subr.bf16.mxu0 %v8979
    %9134 = vmatpush1.bf16.msra.mxu0 %v8978
    %9135 = vmatprep.subr.bf16.mxu0 %v8983
    %9136 = vmatpush1.bf16.msra.mxu0 %v8982
    %9137 = vmatprep.subr.bf16.mxu0 %v8987
    %9138 = vmatpush1.bf16.msra.mxu0 %v8986
    %9139 = vmatprep.subr.bf16.mxu0 %v8991
    %9140 = vmatpush1.bf16.msra.mxu0 %v8990
    %9141 = vmatprep.subr.bf16.mxu0 %v8995
    %9142 = vmatpush1.bf16.msra.mxu0 %v8994
    %9143 = vmatprep.subr.bf16.mxu0 %v8999
    %9144 = vmatpush1.bf16.msra.mxu0 %v8998
    %9145 = vmatprep.subr.bf16.mxu0 %v9003
    %9146 = vmatpush1.bf16.msra.mxu0 %v9002
    %9147 = vmatprep.subr.bf16.mxu0 %v9007
    %9148 = vmatpush1.bf16.msra.mxu0 %v9006
    %9149 = vmatprep.subr.bf16.mxu0 %v9011
    %9150 = vmatpush1.bf16.msra.mxu0 %v9010
    %9151 = vmatprep.subr.bf16.mxu0 %v9015
    %9152 = vmatpush1.bf16.msra.mxu0 %v9014
    %9153 = vmatprep.mubr.bf16.mxu0 %v8695
    %9154 = vmatmul.mubr.bf16.gmra.mrb[0].mxu0 %v8694
    %v9155 = vpop.f32.mrb[0].mxu0
    %v9156 = vadd.f32 %v8692, %v9155
    %v9157 = vpop.f32.mrb[0].mxu0
    %v9158 = vadd.f32 %v8693, %v9157
    %v9159 = vpop.f32.mrb[0].mxu0
    %v9160 = vpop.f32.mrb[0].mxu0
    %9161 = vdwg.mxu0
    %vm9162 = vcmp.ge.f32.partialorder %v9115, 0.0
    %vm9163 = vcmp.ge.f32.partialorder %v9117, 0.0
    %vm9164 = vcmp.ge.f32.partialorder %v9156, 0.0
    %vm9165 = vcmp.ge.f32.partialorder %v9158, 0.0
    %v9166 = vmul.f32 %v9115, 0.2
    %v9167 = vmul.f32 %v9117, 0.2
    %v9168 = vmul.f32 %v9156, 0.2
    %v9169 = vmul.f32 %v9158, 0.2
    %v9170 = vsel %vm9162, %v9115, %v9166
    %v9171 = vsel %vm9163, %v9117, %v9167
    %v9172 = vsel %vm9164, %v9156, %v9168
    %v9173 = vsel %vm9165, %v9158, %v9169
    %v9174 = vpack.c.bf16 %v9170, %v9170
    %v9175 = vpack.c.bf16 %v9171, %v9171
    %v9176 = vpack.c.bf16 %v9172, %v9172
    %v9177 = vpack.c.bf16 %v9173, %v9173
    %v9178 = vld [vmem:[%s9] sm:$0xf]
    %v9179 = vld [vmem:[%s9 + $0x4] sm:$0xf]
    %v9180 = vld [vmem:[%s9 + $0x8] sm:$0xf]
    %v9181 = vld [vmem:[%s9 + $0xc] sm:$0xf]
    %v9182 = vld [vmem:[%s9 + $0x10] sm:$0xf]
    %v9183 = vld [vmem:[%s9 + $0x14] sm:$0xf]
    %v9184 = vld [vmem:[%s9 + $0x18] sm:$0xf]
    %v9185 = vld [vmem:[%s9 + $0x1c] sm:$0xf]
    %v9186 = vld [vmem:[%s9 + $0x20] sm:$0xf]
    %v9187 = vld [vmem:[%s9 + $0x24] sm:$0xf]
    %v9188 = vld [vmem:[%s9 + $0x28] sm:$0xf]
    %v9189 = vld [vmem:[%s9 + $0x2c] sm:$0xf]
    %v9190 = vld [vmem:[%s9 + $0x30] sm:$0xf]
    %v9191 = vld [vmem:[%s9 + $0x34] sm:$0xf]
    %v9192 = vld [vmem:[%s9 + $0x38] sm:$0xf]
    %v9193 = vld [vmem:[%s9 + $0x3c] sm:$0xf]
    %v9194 = vld [vmem:[%s9 + $0x40] sm:$0xf]
    %v9195 = vld [vmem:[%s9 + $0x44] sm:$0xf]
    %v9196 = vld [vmem:[%s9 + $0x48] sm:$0xf]
    %v9197 = vld [vmem:[%s9 + $0x4c] sm:$0xf]
    %v9198 = vld [vmem:[%s9 + $0x50] sm:$0xf]
    %v9199 = vld [vmem:[%s9 + $0x54] sm:$0xf]
    %v9200 = vld [vmem:[%s9 + $0x58] sm:$0xf]
    %v9201 = vld [vmem:[%s9 + $0x5c] sm:$0xf]
    %v9202 = vld [vmem:[%s9 + $0x60] sm:$0xf]
    %v9203 = vld [vmem:[%s9 + $0x64] sm:$0xf]
    %v9204 = vld [vmem:[%s9 + $0x68] sm:$0xf]
    %v9205 = vld [vmem:[%s9 + $0x6c] sm:$0xf]
    %v9206 = vld [vmem:[%s9 + $0x70] sm:$0xf]
    %v9207 = vld [vmem:[%s9 + $0x74] sm:$0xf]
    %v9208 = vld [vmem:[%s9 + $0x78] sm:$0xf]
    %v9209 = vld [vmem:[%s9 + $0x7c] sm:$0xf]
    %v9210 = vld [vmem:[%s9 + $0x80] sm:$0xf]
    %v9211 = vld [vmem:[%s9 + $0x84] sm:$0xf]
    %v9212 = vld [vmem:[%s9 + $0x88] sm:$0xf]
    %v9213 = vld [vmem:[%s9 + $0x8c] sm:$0xf]
    %v9214 = vld [vmem:[%s9 + $0x90] sm:$0xf]
    %v9215 = vld [vmem:[%s9 + $0x94] sm:$0xf]
    %v9216 = vld [vmem:[%s9 + $0x98] sm:$0xf]
    %v9217 = vld [vmem:[%s9 + $0x9c] sm:$0xf]
    %v9218 = vld [vmem:[%s9 + $0xa0] sm:$0xf]
    %v9219 = vld [vmem:[%s9 + $0xa4] sm:$0xf]
    %v9220 = vld [vmem:[%s9 + $0xa8] sm:$0xf]
    %v9221 = vld [vmem:[%s9 + $0xac] sm:$0xf]
    %v9222 = vld [vmem:[%s9 + $0xb0] sm:$0xf]
    %v9223 = vld [vmem:[%s9 + $0xb4] sm:$0xf]
    %v9224 = vld [vmem:[%s9 + $0xb8] sm:$0xf]
    %v9225 = vld [vmem:[%s9 + $0xbc] sm:$0xf]
    %v9226 = vld [vmem:[%s9 + $0xc0] sm:$0xf]
    %v9227 = vld [vmem:[%s9 + $0xc4] sm:$0xf]
    %v9228 = vld [vmem:[%s9 + $0xc8] sm:$0xf]
    %v9229 = vld [vmem:[%s9 + $0xcc] sm:$0xf]
    %v9230 = vld [vmem:[%s9 + $0xd0] sm:$0xf]
    %v9231 = vld [vmem:[%s9 + $0xd4] sm:$0xf]
    %v9232 = vld [vmem:[%s9 + $0xd8] sm:$0xf]
    %v9233 = vld [vmem:[%s9 + $0xdc] sm:$0xf]
    %v9234 = vld [vmem:[%s9 + $0xe0] sm:$0xf]
    %v9235 = vld [vmem:[%s9 + $0xe4] sm:$0xf]
    %v9236 = vld [vmem:[%s9 + $0xe8] sm:$0xf]
    %v9237 = vld [vmem:[%s9 + $0xec] sm:$0xf]
    %v9238 = vld [vmem:[%s9 + $0xf0] sm:$0xf]
    %v9239 = vld [vmem:[%s9 + $0xf4] sm:$0xf]
    %v9240 = vld [vmem:[%s9 + $0xf8] sm:$0xf]
    %v9241 = vld [vmem:[%s9 + $0xfc] sm:$0xf]
    %v9242 = vld [vmem:[#allocation2] sm:$0x1]
    %v9244 = vlaneseq
    %v9245 = vshrl.u32 %v9244, 7
    %v9246 = vsub.s32 0, %v9245
    %v9247 = vrot.slane %v9242, %v9246
    %v9313 = vunpack.c.l.b16 %v9178
    %v9314 = vunpack.c.l.b16 %v9179
    %v9315 = vunpack.c.l.b16 %v9180
    %v9316 = vunpack.c.l.b16 %v9181
    %v9317 = vunpack.c.l.b16 %v9182
    %v9318 = vunpack.c.l.b16 %v9183
    %v9319 = vunpack.c.l.b16 %v9184
    %v9320 = vunpack.c.l.b16 %v9185
    %v9321 = vunpack.c.l.b16 %v9186
    %v9322 = vunpack.c.l.b16 %v9187
    %v9323 = vunpack.c.l.b16 %v9188
    %v9324 = vunpack.c.l.b16 %v9189
    %v9325 = vunpack.c.l.b16 %v9190
    %v9326 = vunpack.c.l.b16 %v9191
    %v9327 = vunpack.c.l.b16 %v9192
    %v9328 = vunpack.c.l.b16 %v9193
    %v9329 = vunpack.c.l.b16 %v9194
    %v9330 = vunpack.c.l.b16 %v9195
    %v9331 = vunpack.c.l.b16 %v9196
    %v9332 = vunpack.c.l.b16 %v9197
    %v9333 = vunpack.c.l.b16 %v9198
    %v9334 = vunpack.c.l.b16 %v9199
    %v9335 = vunpack.c.l.b16 %v9200
    %v9336 = vunpack.c.l.b16 %v9201
    %v9337 = vunpack.c.l.b16 %v9202
    %v9338 = vunpack.c.l.b16 %v9203
    %v9339 = vunpack.c.l.b16 %v9204
    %v9340 = vunpack.c.l.b16 %v9205
    %v9341 = vunpack.c.l.b16 %v9206
    %v9342 = vunpack.c.l.b16 %v9207
    %v9343 = vunpack.c.l.b16 %v9208
    %v9344 = vunpack.c.l.b16 %v9209
    %v9345 = vunpack.c.l.b16 %v9210
    %v9346 = vunpack.c.l.b16 %v9211
    %v9347 = vunpack.c.l.b16 %v9212
    %v9348 = vunpack.c.l.b16 %v9213
    %v9349 = vunpack.c.l.b16 %v9214
    %v9350 = vunpack.c.l.b16 %v9215
    %v9351 = vunpack.c.l.b16 %v9216
    %v9352 = vunpack.c.l.b16 %v9217
    %v9353 = vunpack.c.l.b16 %v9218
    %v9354 = vunpack.c.l.b16 %v9219
    %v9355 = vunpack.c.l.b16 %v9220
    %v9356 = vunpack.c.l.b16 %v9221
    %v9357 = vunpack.c.l.b16 %v9222
    %v9358 = vunpack.c.l.b16 %v9223
    %v9359 = vunpack.c.l.b16 %v9224
    %v9360 = vunpack.c.l.b16 %v9225
    %v9361 = vunpack.c.l.b16 %v9226
    %v9362 = vunpack.c.l.b16 %v9227
    %v9363 = vunpack.c.l.b16 %v9228
    %v9364 = vunpack.c.l.b16 %v9229
    %v9365 = vunpack.c.l.b16 %v9230
    %v9366 = vunpack.c.l.b16 %v9231
    %v9367 = vunpack.c.l.b16 %v9232
    %v9368 = vunpack.c.l.b16 %v9233
    %v9369 = vunpack.c.l.b16 %v9234
    %v9370 = vunpack.c.l.b16 %v9235
    %v9371 = vunpack.c.l.b16 %v9236
    %v9372 = vunpack.c.l.b16 %v9237
    %v9373 = vunpack.c.l.b16 %v9238
    %v9374 = vunpack.c.l.b16 %v9239
    %v9375 = vunpack.c.l.b16 %v9240
    %v9376 = vunpack.c.l.b16 %v9241
    %v9377 = vpack.c.b16 %v9314, %v9313
    %v9378 = vpack.c.b16 %v9316, %v9315
    %v9379 = vpack.c.b16 %v9318, %v9317
    %v9380 = vpack.c.b16 %v9320, %v9319
    %v9381 = vpack.c.b16 %v9322, %v9321
    %v9382 = vpack.c.b16 %v9324, %v9323
    %v9383 = vpack.c.b16 %v9326, %v9325
    %v9384 = vpack.c.b16 %v9328, %v9327
    %v9385 = vpack.c.b16 %v9330, %v9329
    %v9386 = vpack.c.b16 %v9332, %v9331
    %v9387 = vpack.c.b16 %v9334, %v9333
    %v9388 = vpack.c.b16 %v9336, %v9335
    %v9389 = vpack.c.b16 %v9338, %v9337
    %v9390 = vpack.c.b16 %v9340, %v9339
    %v9391 = vpack.c.b16 %v9342, %v9341
    %v9392 = vpack.c.b16 %v9344, %v9343
    %v9393 = vpack.c.b16 %v9346, %v9345
    %v9394 = vpack.c.b16 %v9348, %v9347
    %v9395 = vpack.c.b16 %v9350, %v9349
    %v9396 = vpack.c.b16 %v9352, %v9351
    %v9397 = vpack.c.b16 %v9354, %v9353
    %v9398 = vpack.c.b16 %v9356, %v9355
    %v9399 = vpack.c.b16 %v9358, %v9357
    %v9400 = vpack.c.b16 %v9360, %v9359
    %v9401 = vpack.c.b16 %v9362, %v9361
    %v9402 = vpack.c.b16 %v9364, %v9363
    %v9403 = vpack.c.b16 %v9366, %v9365
    %v9404 = vpack.c.b16 %v9368, %v9367
    %v9405 = vpack.c.b16 %v9370, %v9369
    %v9406 = vpack.c.b16 %v9372, %v9371
    %v9407 = vpack.c.b16 %v9374, %v9373
    %v9408 = vpack.c.b16 %v9376, %v9375
    %9441 = vmatprep.subr.bf16.mxu0 0
    %9442 = vmatpush1.bf16.msra.mxu0 %v9377
    %9443 = vmatprep.subr.bf16.mxu0 0
    %9444 = vmatpush1.bf16.msra.mxu0 %v9378
    %9445 = vmatprep.subr.bf16.mxu0 0
    %9446 = vmatpush1.bf16.msra.mxu0 %v9379
    %9447 = vmatprep.subr.bf16.mxu0 0
    %9448 = vmatpush1.bf16.msra.mxu0 %v9380
    %9449 = vmatprep.subr.bf16.mxu0 0
    %9450 = vmatpush1.bf16.msra.mxu0 %v9381
    %9451 = vmatprep.subr.bf16.mxu0 0
    %9452 = vmatpush1.bf16.msra.mxu0 %v9382
    %9453 = vmatprep.subr.bf16.mxu0 0
    %9454 = vmatpush1.bf16.msra.mxu0 %v9383
    %9455 = vmatprep.subr.bf16.mxu0 0
    %9456 = vmatpush1.bf16.msra.mxu0 %v9384
    %9457 = vmatprep.subr.bf16.mxu0 0
    %9458 = vmatpush1.bf16.msra.mxu0 %v9385
    %9459 = vmatprep.subr.bf16.mxu0 0
    %9460 = vmatpush1.bf16.msra.mxu0 %v9386
    %9461 = vmatprep.subr.bf16.mxu0 0
    %9462 = vmatpush1.bf16.msra.mxu0 %v9387
    %9463 = vmatprep.subr.bf16.mxu0 0
    %9464 = vmatpush1.bf16.msra.mxu0 %v9388
    %9465 = vmatprep.subr.bf16.mxu0 0
    %9466 = vmatpush1.bf16.msra.mxu0 %v9389
    %9467 = vmatprep.subr.bf16.mxu0 0
    %9468 = vmatpush1.bf16.msra.mxu0 %v9390
    %9469 = vmatprep.subr.bf16.mxu0 0
    %9470 = vmatpush1.bf16.msra.mxu0 %v9391
    %9471 = vmatprep.subr.bf16.mxu0 0
    %9472 = vmatpush1.bf16.msra.mxu0 %v9392
    %9473 = vmatprep.mubr.bf16.mxu0 %v9175
    %9474 = vmatmul.mubr.bf16.gmra.mrb[0].mxu0 %v9174
    %v9475 = vpop.f32.mrb[0].mxu0
    %v9476 = vadd.f32 %v9247, %v9475
    %v9477 = vpop.f32.mrb[0].mxu0
    %v9478 = vpop.f32.mrb[0].mxu0
    %v9479 = vpop.f32.mrb[0].mxu0
    %9480 = vdwg.mxu0
    %9481 = vmatprep.subr.bf16.mxu0 0
    %9482 = vmatpush1.bf16.msra.mxu0 %v9393
    %9483 = vmatprep.subr.bf16.mxu0 0
    %9484 = vmatpush1.bf16.msra.mxu0 %v9394
    %9485 = vmatprep.subr.bf16.mxu0 0
    %9486 = vmatpush1.bf16.msra.mxu0 %v9395
    %9487 = vmatprep.subr.bf16.mxu0 0
    %9488 = vmatpush1.bf16.msra.mxu0 %v9396
    %9489 = vmatprep.subr.bf16.mxu0 0
    %9490 = vmatpush1.bf16.msra.mxu0 %v9397
    %9491 = vmatprep.subr.bf16.mxu0 0
    %9492 = vmatpush1.bf16.msra.mxu0 %v9398
    %9493 = vmatprep.subr.bf16.mxu0 0
    %9494 = vmatpush1.bf16.msra.mxu0 %v9399
    %9495 = vmatprep.subr.bf16.mxu0 0
    %9496 = vmatpush1.bf16.msra.mxu0 %v9400
    %9497 = vmatprep.subr.bf16.mxu0 0
    %9498 = vmatpush1.bf16.msra.mxu0 %v9401
    %9499 = vmatprep.subr.bf16.mxu0 0
    %9500 = vmatpush1.bf16.msra.mxu0 %v9402
    %9501 = vmatprep.subr.bf16.mxu0 0
    %9502 = vmatpush1.bf16.msra.mxu0 %v9403
    %9503 = vmatprep.subr.bf16.mxu0 0
    %9504 = vmatpush1.bf16.msra.mxu0 %v9404
    %9505 = vmatprep.subr.bf16.mxu0 0
    %9506 = vmatpush1.bf16.msra.mxu0 %v9405
    %9507 = vmatprep.subr.bf16.mxu0 0
    %9508 = vmatpush1.bf16.msra.mxu0 %v9406
    %9509 = vmatprep.subr.bf16.mxu0 0
    %9510 = vmatpush1.bf16.msra.mxu0 %v9407
    %9511 = vmatprep.subr.bf16.mxu0 0
    %9512 = vmatpush1.bf16.msra.mxu0 %v9408
    %9513 = vmatprep.mubr.bf16.mxu0 %v9177
    %9514 = vmatmul.mubr.bf16.gmra.mrb[0].mxu0 %v9176
    %v9515 = vpop.f32.mrb[0].mxu0
    %v9516 = vadd.f32 %v9476, %v9515
    %v9517 = vpop.f32.mrb[0].mxu0
    %v9518 = vpop.f32.mrb[0].mxu0
    %v9519 = vpop.f32.mrb[0].mxu0
    %9520 = vdwg.mxu0
    %v9521 = vld [vmem:[%s11] sm:$0xf]
    %v9522 = vld [vmem:[%s11 + $0x4] sm:$0xf]
    %v9523 = vld [vmem:[%s11 + $0x8] sm:$0xf]
    %v9524 = vld [vmem:[%s11 + $0xc] sm:$0xf]
    %v9525 = vld [vmem:[%s11 + $0x10] sm:$0xf]
    %v9526 = vld [vmem:[%s11 + $0x14] sm:$0xf]
    %v9527 = vld [vmem:[%s11 + $0x18] sm:$0xf]
    %v9528 = vld [vmem:[%s11 + $0x1c] sm:$0xf]
    %v9529 = vld [vmem:[%s11 + $0x20] sm:$0xf]
    %v9530 = vld [vmem:[%s11 + $0x24] sm:$0xf]
    %v9531 = vld [vmem:[%s11 + $0x28] sm:$0xf]
    %v9532 = vld [vmem:[%s11 + $0x2c] sm:$0xf]
    %v9533 = vld [vmem:[%s11 + $0x30] sm:$0xf]
    %v9534 = vld [vmem:[%s11 + $0x34] sm:$0xf]
    %v9535 = vld [vmem:[%s11 + $0x38] sm:$0xf]
    %v9536 = vld [vmem:[%s11 + $0x3c] sm:$0xf]
    %v9537 = vld [vmem:[%s11 + $0x40] sm:$0xf]
    %v9538 = vld [vmem:[%s11 + $0x44] sm:$0xf]
    %v9539 = vld [vmem:[%s11 + $0x48] sm:$0xf]
    %v9540 = vld [vmem:[%s11 + $0x4c] sm:$0xf]
    %v9541 = vld [vmem:[%s11 + $0x50] sm:$0xf]
    %v9542 = vld [vmem:[%s11 + $0x54] sm:$0xf]
    %v9543 = vld [vmem:[%s11 + $0x58] sm:$0xf]
    %v9544 = vld [vmem:[%s11 + $0x5c] sm:$0xf]
    %v9545 = vld [vmem:[%s11 + $0x60] sm:$0xf]
    %v9546 = vld [vmem:[%s11 + $0x64] sm:$0xf]
    %v9547 = vld [vmem:[%s11 + $0x68] sm:$0xf]
    %v9548 = vld [vmem:[%s11 + $0x6c] sm:$0xf]
    %v9549 = vld [vmem:[%s11 + $0x70] sm:$0xf]
    %v9550 = vld [vmem:[%s11 + $0x74] sm:$0xf]
    %v9551 = vld [vmem:[%s11 + $0x78] sm:$0xf]
    %v9552 = vld [vmem:[%s11 + $0x7c] sm:$0xf]
    %v9553 = vld [vmem:[#allocation18] sm:$0x1]
    %v9555 = vlaneseq
    %v9556 = vshrl.u32 %v9555, 7
    %v9557 = vsub.s32 0, %v9556
    %v9558 = vrot.slane %v9553, %v9557
    %v9592 = vunpack.c.l.b16 %v9521
    %v9593 = vunpack.c.l.b16 %v9522
    %v9594 = vunpack.c.l.b16 %v9523
    %v9595 = vunpack.c.l.b16 %v9524
    %v9596 = vunpack.c.l.b16 %v9525
    %v9597 = vunpack.c.l.b16 %v9526
    %v9598 = vunpack.c.l.b16 %v9527
    %v9599 = vunpack.c.l.b16 %v9528
    %v9600 = vunpack.c.l.b16 %v9529
    %v9601 = vunpack.c.l.b16 %v9530
    %v9602 = vunpack.c.l.b16 %v9531
    %v9603 = vunpack.c.l.b16 %v9532
    %v9604 = vunpack.c.l.b16 %v9533
    %v9605 = vunpack.c.l.b16 %v9534
    %v9606 = vunpack.c.l.b16 %v9535
    %v9607 = vunpack.c.l.b16 %v9536
    %v9608 = vunpack.c.l.b16 %v9537
    %v9609 = vunpack.c.l.b16 %v9538
    %v9610 = vunpack.c.l.b16 %v9539
    %v9611 = vunpack.c.l.b16 %v9540
    %v9612 = vunpack.c.l.b16 %v9541
    %v9613 = vunpack.c.l.b16 %v9542
    %v9614 = vunpack.c.l.b16 %v9543
    %v9615 = vunpack.c.l.b16 %v9544
    %v9616 = vunpack.c.l.b16 %v9545
    %v9617 = vunpack.c.l.b16 %v9546
    %v9618 = vunpack.c.l.b16 %v9547
    %v9619 = vunpack.c.l.b16 %v9548
    %v9620 = vunpack.c.l.b16 %v9549
    %v9621 = vunpack.c.l.b16 %v9550
    %v9622 = vunpack.c.l.b16 %v9551
    %v9623 = vunpack.c.l.b16 %v9552
    %v9624 = vpack.c.b16 %v9593, %v9592
    %v9625 = vpack.c.b16 %v9595, %v9594
    %v9626 = vpack.c.b16 %v9597, %v9596
    %v9627 = vpack.c.b16 %v9599, %v9598
    %v9628 = vpack.c.b16 %v9601, %v9600
    %v9629 = vpack.c.b16 %v9603, %v9602
    %v9630 = vpack.c.b16 %v9605, %v9604
    %v9631 = vpack.c.b16 %v9607, %v9606
    %v9632 = vpack.c.b16 %v9609, %v9608
    %v9633 = vpack.c.b16 %v9611, %v9610
    %v9634 = vpack.c.b16 %v9613, %v9612
    %v9635 = vpack.c.b16 %v9615, %v9614
    %v9636 = vpack.c.b16 %v9617, %v9616
    %v9637 = vpack.c.b16 %v9619, %v9618
    %v9638 = vpack.c.b16 %v9621, %v9620
    %v9639 = vpack.c.b16 %v9623, %v9622
    %9656 = vmatprep.subr.bf16.mxu0 0
    %9657 = vmatpush1.bf16.msra.mxu0 %v9624
    %9658 = vmatprep.subr.bf16.mxu0 0
    %9659 = vmatpush1.bf16.msra.mxu0 %v9625
    %9660 = vmatprep.subr.bf16.mxu0 0
    %9661 = vmatpush1.bf16.msra.mxu0 %v9626
    %9662 = vmatprep.subr.bf16.mxu0 0
    %9663 = vmatpush1.bf16.msra.mxu0 %v9627
    %9664 = vmatprep.subr.bf16.mxu0 0
    %9665 = vmatpush1.bf16.msra.mxu0 %v9628
    %9666 = vmatprep.subr.bf16.mxu0 0
    %9667 = vmatpush1.bf16.msra.mxu0 %v9629
    %9668 = vmatprep.subr.bf16.mxu0 0
    %9669 = vmatpush1.bf16.msra.mxu0 %v9630
    %9670 = vmatprep.subr.bf16.mxu0 0
    %9671 = vmatpush1.bf16.msra.mxu0 %v9631
    %9672 = vmatprep.subr.bf16.mxu0 0
    %9673 = vmatpush1.bf16.msra.mxu0 %v9632
    %9674 = vmatprep.subr.bf16.mxu0 0
    %9675 = vmatpush1.bf16.msra.mxu0 %v9633
    %9676 = vmatprep.subr.bf16.mxu0 0
    %9677 = vmatpush1.bf16.msra.mxu0 %v9634
    %9678 = vmatprep.subr.bf16.mxu0 0
    %9679 = vmatpush1.bf16.msra.mxu0 %v9635
    %9680 = vmatprep.subr.bf16.mxu0 0
    %9681 = vmatpush1.bf16.msra.mxu0 %v9636
    %9682 = vmatprep.subr.bf16.mxu0 0
    %9683 = vmatpush1.bf16.msra.mxu0 %v9637
    %9684 = vmatprep.subr.bf16.mxu0 0
    %9685 = vmatpush1.bf16.msra.mxu0 %v9638
    %9686 = vmatprep.subr.bf16.mxu0 0
    %9687 = vmatpush1.bf16.msra.mxu0 %v9639
    %9688 = vmatprep.mubr.bf16.mxu0 %v8117
    %9689 = vmatmul.mubr.bf16.gmra.mrb[0].mxu0 %v8116
    %v9690 = vpop.f32.mrb[0].mxu0
    %v9691 = vadd.f32 %v9558, %v9690
    %v9692 = vpop.f32.mrb[0].mxu0
    %v9693 = vpop.f32.mrb[0].mxu0
    %v9694 = vpop.f32.mrb[0].mxu0
    %9695 = vdwg.mxu0
    %v9697 = vrot.slane %v9516, 2
    %9698 = vrot.lane.b32.xlu0 %v9697, 1
    %v9699 = vpop.permute.xlu0 %9698
    %9702 = vrot.lane.b32.xlu0 %v9691, 2
    %v9703 = vpop.permute.xlu0 %9702
    %vm9705 = vcmask 7168
    %v9706 = vsel %vm9705, %v9516, %v9699
    %vm9707 = vcmask 15360
    %v9708 = vsel %vm9707, %v9706, %v9703
    %vm9709 = vcmask 146432
    %v9710 = vsel %vm9709, %v9708, 0.0
    %9711 = vst [vmem:[#allocation20] sm:$0x3] %v9710
    // Predicated region
    $region94: #{tpu_custom_call.1} parent=1 // pred_check
      _
    $region95: #{tpu_custom_call.1} parent=1 // pred_check_branch
      %9713 = sbr.rel (0) target = $region97
    $region96: #{tpu_custom_call.1} parent=1 // pred_region
      %s9715 = ssub.s32 32, 32
      %9716 = vsyncadd [#allocation5], %s9715
      %s9718 = sshll.u32 [#allocation20], 4
      %s9719 = int_to_ptr.vmem [resolvable:$true] %s9718
      %9721 = dma.vmem_to_hbm [thread:$0]  %s9719, 32, %s13, [#allocation5]
    $region97: #{tpu_custom_call.1} parent=1 // pred_fallthru
      _
    // Predicated region
    $region98: #{tpu_custom_call.1} parent=1 // pred_check
      _
    $region99: #{tpu_custom_call.1} parent=1 // pred_check_branch
      %9723 = sbr.rel (0) target = $region101
    $region100: #{tpu_custom_call.1} parent=1 // pred_region
      %9724 = dma.done [#allocation5], 32
    $region101: #{tpu_custom_call.1} parent=1 // pred_fallthru
      _
    %9725 = vsyncpa [#allocation4], 1
    %9726 = vsyncpa [#allocation7], 1
    %9727 = vsyncpa [#allocation10], 1
    %9728 = vsyncpa [#allocation13], 1
    %9729 = vsyncpa [#allocation16], 1
    %9730 = vsyncpa [#allocation19], 1
    %9731 = vsyncpa [#allocation5], 1

</llo_original>
